<compile_context>
chip_gen: v6e
topology: v6e:2x2x1
jax: 0.10.0
libtpu: 0.0.40
codegen_flags: <defaults>
</compile_context>

<pallas_src>
import jax
import jax.numpy as jnp
from jax import lax
from jax.experimental import pallas as pl
from jax.experimental.pallas import tpu as pltpu

D = 33  # number of variables (fixed by the module's parameter shapes)


def _tmgru_kernel(lhs_ref, H_ref, x_ref, chi_ref, clo_ref, ux_ref, b_ref, out_ref):
    """Single grid step over the whole problem.

    Block layouts (full arrays, single step):
      lhs_ref : [D, 1, 2P]  per row: [H[d, :] | h]   (f32)
      H_ref   : [D, P]      hidden-state rows (for the final blend)
      x_ref   : [D, 1]      per-row scalar input
      chi_ref : [D, 2P, 4P] bf16 "hi" half of the fused gate weights
      clo_ref : [D, 2P, 4P] bf16 "lo" half (f32 residual of the hi cast)
      ux_ref  : [D, 4P]     [U_zx | U_rx | 0 | U_hx]
      b_ref   : [1, 4P]     [b_z  | b_r  | 0 | b_h ]
      out_ref : [D, P]
    """
    Dn, P = H_ref.shape
    f32 = jnp.float32

    # f32 -> (bf16 hi, bf16 lo) split of the small activation operand; the weight
    # pack was split identically once at pack time.  hi*hi + hi*lo + lo*hi on the
    # MXU (f32 accumulation) reproduces the f32 contraction to ~1e-4 absolute with
    # three single-pass bf16 matmuls (no HIGHEST multi-pass expansion).
    lhs = lhs_ref[...]                                       # [D, 1, 2P] f32
    lhs_hi = lhs.astype(jnp.bfloat16)
    lhs_lo = (lhs - lhs_hi.astype(f32)).astype(jnp.bfloat16)

    def bmm(a, w):                                           # [D,1,2P] x [D,2P,4P] -> [D,1,4P]
        return jnp.einsum("dxp,dpq->dxq", a, w, preferred_element_type=f32)

    chi = chi_ref[...]
    pre3 = bmm(lhs_hi, chi) + bmm(lhs_hi, clo_ref[...]) + bmm(lhs_lo, chi)
    pre = pre3.reshape(Dn, 4 * P)                            # [D, 4P]; minor dim stays 128

    # pre = [ W_z@H + U_zh@h | W_r@H + U_rh@h | W_h@H | U_hh@h ]
    # add the U_*x * x[d] column scale and the broadcast biases (VPU only).
    rest = pre + ux_ref[...] * x_ref[...] + b_ref[...]       # [D, 4P]

    z = jax.nn.sigmoid(rest[:, 0:P])
    r = jax.nn.sigmoid(rest[:, P:2 * P])
    H_hat = jnp.tanh(r * rest[:, 2 * P:3 * P] + rest[:, 3 * P:4 * P])

    H_blk = H_ref[...]
    out_ref[...] = (z * H_blk + (1.0 - z) * H_hat).astype(out_ref.dtype)


def pack_params(params):
    """One-time gate fusion of the module parameters (run at init/load time, NOT per call).

    Builds C[d] in [2P, 4P] with row blocks (contracted against [H[d,:] | h]):
        rows 0:P   (H side): [ W_z^T | W_r^T | W_h^T |   0    ]
        rows P:2P  (h side): [ U_zh^T| U_rh^T|   0   | U_hh^T ]
    stored as a bf16 hi/lo pair, plus the fused [U_*x] columns and biases.
    """
    P = params["W_z"].shape[1]
    f32 = jnp.float32
    T = lambda w: jnp.transpose(w, (0, 2, 1))                # per-row transpose
    zblk = jnp.zeros((D, P, P), f32)

    top = jnp.concatenate([T(params["W_z"]), T(params["W_r"]), T(params["W_h"]), zblk], axis=2)
    bot = jnp.concatenate([T(params["U_zh"]), T(params["U_rh"]), zblk, T(params["U_hh"])], axis=2)
    C = jnp.concatenate([top, bot], axis=1).astype(f32)      # [D, 2P, 4P]
    C_hi = C.astype(jnp.bfloat16)
    C_lo = (C - C_hi.astype(f32)).astype(jnp.bfloat16)

    zcol = jnp.zeros((D, P), f32)
    Ux = jnp.concatenate([params["U_zx"][:, :, 0], params["U_rx"][:, :, 0],
                          zcol, params["U_hx"][:, :, 0]], axis=1)          # [D, 4P]
    zb = jnp.zeros((P,), f32)
    b = jnp.concatenate([params["b_z"][:, 0], params["b_r"][:, 0],
                         zb, params["b_h"][:, 0]])[None, :]                # [1, 4P]
    return {"C_hi": C_hi, "C_lo": C_lo, "Ux": Ux, "b": b}


@jax.jit
def tmgru_forward(packed, H, x, h):
    """packed: output of pack_params.  H: [D, P] f32, x: [D] f32, h: [P] f32 -> [D, P]."""
    Dn, P = H.shape
    P2, P4 = 2 * P, 4 * P

    # Per-call activation glue only (~8 KB): the fused contraction operand [H[d,:] | h].
    lhs = jnp.concatenate([H, jnp.broadcast_to(h[None, :], (Dn, P))], axis=1)
    lhs = lhs.astype(jnp.float32)[:, None, :]                # [D, 1, 2P]
    x2 = x.astype(jnp.float32).reshape(Dn, 1)                # [D, 1]

    # Advisory roofline: the two bf16 weight packs (~1.05 MB total) dominate HBM.
    cost = pl.CostEstimate(
        flops=3 * 2 * Dn * P2 * P4 + 16 * Dn * P4,
        transcendentals=3 * Dn * P,
        bytes_accessed=(2 * 2 * Dn * P2 * P4
                        + 4 * (Dn * P2 + Dn * P + Dn + Dn * P4 + P4 + Dn * P)),
    )

    return pl.pallas_call(
        _tmgru_kernel,
        out_shape=jax.ShapeDtypeStruct((Dn, P), H.dtype),
        grid=(1,),  # whole problem in one step: working set ~1.1 MB << VMEM everywhere
        in_specs=[
            pl.BlockSpec((Dn, 1, P2), lambda i: (0, 0, 0)),   # [H | h]
            pl.BlockSpec((Dn, P), lambda i: (0, 0)),          # H (final blend)
            pl.BlockSpec((Dn, 1), lambda i: (0, 0)),          # x
            pl.BlockSpec((Dn, P2, P4), lambda i: (0, 0, 0)),  # C hi (bf16)
            pl.BlockSpec((Dn, P2, P4), lambda i: (0, 0, 0)),  # C lo (bf16)
            pl.BlockSpec((Dn, P4), lambda i: (0, 0)),         # [U_zx|U_rx|0|U_hx]
            pl.BlockSpec((1, P4), lambda i: (0, 0)),          # [b_z |b_r |0|b_h ]
        ],
        out_specs=pl.BlockSpec((Dn, P), lambda i: (0, 0)),
        compiler_params=pltpu.CompilerParams(
            dimension_semantics=("arbitrary",),
        ),
        cost_estimate=cost,
    )(lhs, H, x2, packed["C_hi"], packed["C_lo"], packed["Ux"], packed["b"])


def tmgru_reference(params, H, x, h):
    """Pure-JAX mirror of the PyTorch forward (correctness check against unpacked params)."""
    D_, P = H.shape
    mm = lambda a, b: jnp.matmul(a, b, precision=lax.Precision.HIGHEST)
    Hr = H.reshape(D_, P, 1)
    xr = x.reshape(D_, 1, 1)
    hr = h.reshape(P, 1)
    z = jax.nn.sigmoid(mm(params["W_z"], Hr) + mm(params["U_zx"], xr)
                       + mm(params["U_zh"], hr) + params["b_z"])
    r = jax.nn.sigmoid(mm(params["W_r"], Hr) + mm(params["U_rx"], xr)
                       + mm(params["U_rh"], hr) + params["b_r"])
    Hh = jnp.tanh(r * mm(params["W_h"], Hr) + mm(params["U_hx"], xr)
                  + mm(params["U_hh"], hr) + params["b_h"])
    Ht = z * Hr + (1.0 - z) * Hh
    return Ht.reshape(D_, P)


def init_params(key, hidden):
    ks = jax.random.split(key, 12)
    return {
        "W_z":  jax.random.normal(ks[0],  (D, hidden, hidden), jnp.float32),
        "U_zx": jax.random.normal(ks[1],  (D, hidden, 1),      jnp.float32),
        "U_zh": jax.random.normal(ks[2],  (D, hidden, hidden), jnp.float32),
        "W_r":  jax.random.normal(ks[3],  (D, hidden, hidden), jnp.float32),
        "U_rx": jax.random.normal(ks[4],  (D, hidden, 1),      jnp.float32),
        "U_rh": jax.random.normal(ks[5],  (D, hidden, hidden), jnp.float32),
        "W_h":  jax.random.normal(ks[6],  (D, hidden, hidden), jnp.float32),
        "U_hx": jax.random.normal(ks[7],  (D, hidden, 1),      jnp.float32),
        "U_hh": jax.random.normal(ks[8],  (D, hidden, hidden), jnp.float32),
        "b_z":  jax.random.normal(ks[9],  (hidden, 1),         jnp.float32),
        "b_r":  jax.random.normal(ks[10], (hidden, 1),         jnp.float32),
        "b_h":  jax.random.normal(ks[11], (hidden, 1),         jnp.float32),
    }


if __name__ == "__main__":
    hidden = 32
    key = jax.random.PRNGKey(0)
    k_params, k_H, k_x, k_h = jax.random.split(key, 4)

    params = init_params(k_params, hidden)
    H = jax.random.normal(k_H, (D, hidden), jnp.float32)
    x = jax.random.normal(k_x, (D,), jnp.float32)
    h = jax.random.normal(k_h, (hidden,), jnp.float32)

    # One-time gate fusion (NOT on the per-call path).
    packed = jax.block_until_ready(pack_params(params))

    out = jax.block_until_ready(tmgru_forward(packed, H, x, h))
    ref = tmgru_reference(params, H, x, h)

    assert out.shape == (D, hidden)
    assert jnp.allclose(out, ref, atol=2e-3, rtol=2e-3), "mismatch vs reference"

    print("KERNEL_OK")
</pallas_src>

<mosaic_0001>
module attributes {stable_mosaic.version = 11 : i64} {
  func.func @_tmgru_kernel(%arg0: i32, %arg1: memref<33x1x64xf32, #tpu.memory_space<vmem>>, %arg2: memref<33x32xf32, #tpu.memory_space<vmem>>, %arg3: memref<33x1xf32, #tpu.memory_space<vmem>>, %arg4: memref<33x64x128xbf16, #tpu.memory_space<vmem>>, %arg5: memref<33x64x128xbf16, #tpu.memory_space<vmem>>, %arg6: memref<33x128xf32, #tpu.memory_space<vmem>>, %arg7: memref<1x128xf32, #tpu.memory_space<vmem>>, %arg8: memref<33x32xf32, #tpu.memory_space<vmem>>) attributes {dimension_semantics = [#tpu.dimension_semantics<arbitrary>], iteration_bounds = array<i64: 1>, scalar_prefetch = 0 : i64, scratch_operands = 0 : i64, tpu.core_type = #tpu.core_type<tc>, window_params = [{pipeline_mode = #tpu.pipeline_mode<synchronous>, transform_indices = @transform_0, window_bounds = array<i64: 33, 1, 64>}, {pipeline_mode = #tpu.pipeline_mode<synchronous>, transform_indices = @transform_1, window_bounds = array<i64: 33, 32>}, {pipeline_mode = #tpu.pipeline_mode<synchronous>, transform_indices = @transform_2, window_bounds = array<i64: 33, 1>}, {pipeline_mode = #tpu.pipeline_mode<synchronous>, transform_indices = @transform_3, window_bounds = array<i64: 33, 64, 128>}, {pipeline_mode = #tpu.pipeline_mode<synchronous>, transform_indices = @transform_4, window_bounds = array<i64: 33, 64, 128>}, {pipeline_mode = #tpu.pipeline_mode<synchronous>, transform_indices = @transform_5, window_bounds = array<i64: 33, 128>}, {pipeline_mode = #tpu.pipeline_mode<synchronous>, transform_indices = @transform_6, window_bounds = array<i64: 1, 128>}, {pipeline_mode = #tpu.pipeline_mode<synchronous>, transform_indices = @transform_7, window_bounds = array<i64: 33, 32>}]} {
    %c0 = arith.constant 0 : index
    %c0_0 = arith.constant 0 : index
    %c0_1 = arith.constant 0 : index
    %0 = vector.load %arg1[%c0, %c0_0, %c0_1] : memref<33x1x64xf32, #tpu.memory_space<vmem>>, vector<33x1x64xf32>
    %1 = arith.truncf %0 : vector<33x1x64xf32> to vector<33x1x64xbf16>
    %2 = arith.extf %1 : vector<33x1x64xbf16> to vector<33x1x64xf32>
    %3 = arith.subf %0, %2 : vector<33x1x64xf32>
    %4 = arith.truncf %3 : vector<33x1x64xf32> to vector<33x1x64xbf16>
    %c0_2 = arith.constant 0 : index
    %c0_3 = arith.constant 0 : index
    %c0_4 = arith.constant 0 : index
    %5 = vector.load %arg4[%c0_2, %c0_3, %c0_4] : memref<33x64x128xbf16, #tpu.memory_space<vmem>>, vector<33x64x128xbf16>
    "tpu.trace_start"() <{level = 10 : i32, message = "dxp,dpq->dxq"}> : () -> ()
    %cst = arith.constant dense<0.000000e+00> : vector<33x1x128xf32>
    %6 = tpu.matmul %1, %5, %cst {dimension_numbers = #tpu.dot_dimension_numbers<[2], [1], [1], [2], [0, 0, 0, 1, 1, 2], [0], [0]>} : vector<33x1x64xbf16>, vector<33x64x128xbf16>, vector<33x1x128xf32> -> vector<33x1x128xf32>
    "tpu.trace_stop"() : () -> ()
    %c0_5 = arith.constant 0 : index
    %c0_6 = arith.constant 0 : index
    %c0_7 = arith.constant 0 : index
    %7 = vector.load %arg5[%c0_5, %c0_6, %c0_7] : memref<33x64x128xbf16, #tpu.memory_space<vmem>>, vector<33x64x128xbf16>
    "tpu.trace_start"() <{level = 10 : i32, message = "dxp,dpq->dxq"}> : () -> ()
    %cst_8 = arith.constant dense<0.000000e+00> : vector<33x1x128xf32>
    %8 = tpu.matmul %1, %7, %cst_8 {dimension_numbers = #tpu.dot_dimension_numbers<[2], [1], [1], [2], [0, 0, 0, 1, 1, 2], [0], [0]>} : vector<33x1x64xbf16>, vector<33x64x128xbf16>, vector<33x1x128xf32> -> vector<33x1x128xf32>
    "tpu.trace_stop"() : () -> ()
    %9 = arith.addf %6, %8 : vector<33x1x128xf32>
    "tpu.trace_start"() <{level = 10 : i32, message = "dxp,dpq->dxq"}> : () -> ()
    %cst_9 = arith.constant dense<0.000000e+00> : vector<33x1x128xf32>
    %10 = tpu.matmul %4, %5, %cst_9 {dimension_numbers = #tpu.dot_dimension_numbers<[2], [1], [1], [2], [0, 0, 0, 1, 1, 2], [0], [0]>} : vector<33x1x64xbf16>, vector<33x64x128xbf16>, vector<33x1x128xf32> -> vector<33x1x128xf32>
    "tpu.trace_stop"() : () -> ()
    %11 = arith.addf %9, %10 : vector<33x1x128xf32>
    %12 = vector.shape_cast %11 : vector<33x1x128xf32> to vector<33x128xf32>
    %c0_10 = arith.constant 0 : index
    %c0_11 = arith.constant 0 : index
    %13 = vector.load %arg6[%c0_10, %c0_11] : memref<33x128xf32, #tpu.memory_space<vmem>>, vector<33x128xf32>
    %c0_12 = arith.constant 0 : index
    %c0_13 = arith.constant 0 : index
    %14 = vector.load %arg3[%c0_12, %c0_13] : memref<33x1xf32, #tpu.memory_space<vmem>>, vector<33x1xf32>
    %15 = vector.broadcast %14 : vector<33x1xf32> to vector<33x128xf32>
    %16 = arith.mulf %13, %15 : vector<33x128xf32>
    %17 = arith.addf %12, %16 : vector<33x128xf32>
    %c0_14 = arith.constant 0 : index
    %c0_15 = arith.constant 0 : index
    %18 = vector.load %arg7[%c0_14, %c0_15] : memref<1x128xf32, #tpu.memory_space<vmem>>, vector<1x128xf32>
    %19 = vector.broadcast %18 : vector<1x128xf32> to vector<33x128xf32>
    %20 = arith.addf %17, %19 : vector<33x128xf32>
    %21 = vector.extract_strided_slice %20 {offsets = [0, 0], sizes = [33, 32], strides = [1, 1]} : vector<33x128xf32> to vector<33x32xf32>
    %22 = arith.negf %21 : vector<33x32xf32>
    %23 = math.exp %22 : vector<33x32xf32>
    %cst_16 = arith.constant 1.000000e+00 : f32
    %24 = vector.broadcast %cst_16 : f32 to vector<33x32xf32>
    %25 = arith.addf %24, %23 : vector<33x32xf32>
    %26 = arith.divf %24, %25 : vector<33x32xf32>
    %27 = vector.extract_strided_slice %20 {offsets = [0, 32], sizes = [33, 32], strides = [1, 1]} : vector<33x128xf32> to vector<33x32xf32>
    %28 = arith.negf %27 : vector<33x32xf32>
    %29 = math.exp %28 : vector<33x32xf32>
    %cst_17 = arith.constant 1.000000e+00 : f32
    %30 = vector.broadcast %cst_17 : f32 to vector<33x32xf32>
    %31 = arith.addf %30, %29 : vector<33x32xf32>
    %32 = arith.divf %30, %31 : vector<33x32xf32>
    %33 = vector.extract_strided_slice %20 {offsets = [0, 64], sizes = [33, 32], strides = [1, 1]} : vector<33x128xf32> to vector<33x32xf32>
    %34 = arith.mulf %32, %33 : vector<33x32xf32>
    %35 = vector.extract_strided_slice %20 {offsets = [0, 96], sizes = [33, 32], strides = [1, 1]} : vector<33x128xf32> to vector<33x32xf32>
    %36 = arith.addf %34, %35 : vector<33x32xf32>
    %37 = math.tanh %36 : vector<33x32xf32>
    %c0_18 = arith.constant 0 : index
    %c0_19 = arith.constant 0 : index
    %38 = vector.load %arg2[%c0_18, %c0_19] : memref<33x32xf32, #tpu.memory_space<vmem>>, vector<33x32xf32>
    %39 = arith.mulf %26, %38 : vector<33x32xf32>
    %cst_20 = arith.constant 1.000000e+00 : f32
    %40 = vector.broadcast %cst_20 : f32 to vector<33x32xf32>
    %41 = arith.subf %40, %26 : vector<33x32xf32>
    %42 = arith.mulf %41, %37 : vector<33x32xf32>
    %43 = arith.addf %39, %42 : vector<33x32xf32>
    %c0_21 = arith.constant 0 : index
    %c0_22 = arith.constant 0 : index
    %44 = vector.load %arg8[%c0_21, %c0_22] : memref<33x32xf32, #tpu.memory_space<vmem>>, vector<33x32xf32>
    tpu.vector_store %arg8[%c0_21, %c0_22], %43 {strides = array<i32>} : memref<33x32xf32, #tpu.memory_space<vmem>>, vector<33x32xf32>,
    return
  }
  func.func @transform_0(%arg0: i32) -> (i32, i32, i32) {
    %c0_i32 = arith.constant 0 : i32
    %c0_i32_0 = arith.constant 0 : i32
    %c0_i32_1 = arith.constant 0 : i32
    %c0_i32_2 = arith.constant 0 : i32
    return %c0_i32, %c0_i32_0, %c0_i32_1 : i32, i32, i32
  }
  func.func @transform_1(%arg0: i32) -> (i32, i32) {
    %c0_i32 = arith.constant 0 : i32
    %c0_i32_0 = arith.constant 0 : i32
    %c0_i32_1 = arith.constant 0 : i32
    return %c0_i32, %c0_i32_0 : i32, i32
  }
  func.func @transform_2(%arg0: i32) -> (i32, i32) {
    %c0_i32 = arith.constant 0 : i32
    %c0_i32_0 = arith.constant 0 : i32
    %c0_i32_1 = arith.constant 0 : i32
    return %c0_i32, %c0_i32_0 : i32, i32
  }
  func.func @transform_3(%arg0: i32) -> (i32, i32, i32) {
    %c0_i32 = arith.constant 0 : i32
    %c0_i32_0 = arith.constant 0 : i32
    %c0_i32_1 = arith.constant 0 : i32
    %c0_i32_2 = arith.constant 0 : i32
    return %c0_i32, %c0_i32_0, %c0_i32_1 : i32, i32, i32
  }
  func.func @transform_4(%arg0: i32) -> (i32, i32, i32) {
    %c0_i32 = arith.constant 0 : i32
    %c0_i32_0 = arith.constant 0 : i32
    %c0_i32_1 = arith.constant 0 : i32
    %c0_i32_2 = arith.constant 0 : i32
    return %c0_i32, %c0_i32_0, %c0_i32_1 : i32, i32, i32
  }
  func.func @transform_5(%arg0: i32) -> (i32, i32) {
    %c0_i32 = arith.constant 0 : i32
    %c0_i32_0 = arith.constant 0 : i32
    %c0_i32_1 = arith.constant 0 : i32
    return %c0_i32, %c0_i32_0 : i32, i32
  }
  func.func @transform_6(%arg0: i32) -> (i32, i32) {
    %c0_i32 = arith.constant 0 : i32
    %c0_i32_0 = arith.constant 0 : i32
    %c0_i32_1 = arith.constant 0 : i32
    return %c0_i32, %c0_i32_0 : i32, i32
  }
  func.func @transform_7(%arg0: i32) -> (i32, i32) {
    %c0_i32 = arith.constant 0 : i32
    %c0_i32_0 = arith.constant 0 : i32
    %c0_i32_1 = arith.constant 0 : i32
    return %c0_i32, %c0_i32_0 : i32, i32
  }
}

</mosaic_0001>

<llo_original>
// kernel: tmgru_forward.1
$region0: #{tmgru_forward.1}
  #allocation0 [shape = 'u32[]', space=smem, size = 0x4, offset = 0x4, fixed_abs, tag = 'smem constant byte address 0x4 - core index']
  #allocation1 [shape = 'u32[144,128]{1,0:T(1,128)}', space=vmem, size = 0x12000, scoped, tag = 'internal scratch']
  %s0 = inlined_call_operand.vmem [shape: f32[33,1,64], index: 0, kind: input, shape index: {}]
  %s1 = inlined_call_operand.vmem [shape: f32[33,32], index: 1, kind: input, shape index: {}]
  %s2 = inlined_call_operand.vmem [shape: f32[33,1], index: 2, kind: input, shape index: {}]
  %s3 = inlined_call_operand.hbm [shape: bf16[33,64,128], index: 3, kind: input, shape index: {}]
  %s4 = inlined_call_operand.hbm [shape: bf16[33,64,128], index: 4, kind: input, shape index: {}]
  %s5 = inlined_call_operand.vmem [shape: f32[33,128], index: 5, kind: input, shape index: {}]
  %s6 = inlined_call_operand.vmem [shape: f32[1,128], index: 6, kind: input, shape index: {}]
  %s7 = inlined_call_operand.vmem [shape: f32[33,32], index: 7, kind: output, shape index: {}]
  %s8 = sld [smem:[#allocation0]]
  $region46: #{tmgru_forward.1} parent=0
    _
  %s10 = ssub.s32 1, %s8
  %s11 = scalar_select 0, %s10, %s8
  $region1: #{tmgru_forward.1} parent=0
    #allocation2 [shape = 'u8[540672]{0}', space=vmem, size = 0x84000, scoped, tag = 'input window, operand 3, single buffered']
    #allocation3 [shape = 's32[1]{0}', space=sflag, size = 0x4, scoped, tag = 'scoped memory for tmgru_forward.1']
    #allocation4 [shape = 'u8[540672]{0}', space=vmem, size = 0x84000, scoped, tag = 'input window, operand 4, single buffered']
    #allocation5 [shape = 's32[1]{0}', space=sflag, size = 0x4, scoped, tag = 'scoped memory for tmgru_forward.1']
    %12 = vsyncpa [#allocation3], 0
    %13 = vsyncpa [#allocation5], 0
    // Predicated region
    $region2: #{tmgru_forward.1} parent=1 // pred_check
      _
    $region3: #{tmgru_forward.1} parent=1 // pred_check_branch
      %15 = sbr.rel (0) target = $region5
    $region4: #{tmgru_forward.1} parent=1 // pred_region
      _
    $region5: #{tmgru_forward.1} parent=1 // pred_fallthru
      _
    // Predicated region
    $region6: #{tmgru_forward.1} parent=1 // pred_check
      _
    $region7: #{tmgru_forward.1} parent=1 // pred_check_branch
      %17 = sbr.rel (0) target = $region9
    $region8: #{tmgru_forward.1} parent=1 // pred_region
      _
    $region9: #{tmgru_forward.1} parent=1 // pred_fallthru
      _
    // Predicated region
    $region10: #{tmgru_forward.1} parent=1 // pred_check
      _
    $region11: #{tmgru_forward.1} parent=1 // pred_check_branch
      %19 = sbr.rel (0) target = $region13
    $region12: #{tmgru_forward.1} parent=1 // pred_region
      _
    $region13: #{tmgru_forward.1} parent=1 // pred_fallthru
      _
    // Predicated region
    $region14: #{tmgru_forward.1} parent=1 // pred_check
      _
    $region15: #{tmgru_forward.1} parent=1 // pred_check_branch
      %21 = sbr.rel (0) target = $region17
    $region16: #{tmgru_forward.1} parent=1 // pred_region
      %s23 = ssub.s32 16896, 16896
      %24 = vsyncadd [#allocation3], %s23
      %s25 = sshll.u32 [#allocation2], 4
      %s26 = int_to_ptr.vmem [resolvable:$true] %s25
      %31 = dma.hbm_to_vmem [thread:$0]  %s3, 16896, %s26, [#allocation3], 64, 64, 4
    $region17: #{tmgru_forward.1} parent=1 // pred_fallthru
      _
    // Predicated region
    $region18: #{tmgru_forward.1} parent=1 // pred_check
      _
    $region19: #{tmgru_forward.1} parent=1 // pred_check_branch
      %33 = sbr.rel (0) target = $region21
    $region20: #{tmgru_forward.1} parent=1 // pred_region
      %s35 = ssub.s32 16896, 16896
      %36 = vsyncadd [#allocation5], %s35
      %s37 = sshll.u32 [#allocation4], 4
      %s38 = int_to_ptr.vmem [resolvable:$true] %s37
      %43 = dma.hbm_to_vmem [thread:$0]  %s4, 16896, %s38, [#allocation5], 64, 64, 4
    $region21: #{tmgru_forward.1} parent=1 // pred_fallthru
      _
    // Predicated region
    $region22: #{tmgru_forward.1} parent=1 // pred_check
      _
    $region23: #{tmgru_forward.1} parent=1 // pred_check_branch
      %45 = sbr.rel (0) target = $region25
    $region24: #{tmgru_forward.1} parent=1 // pred_region
      _
    $region25: #{tmgru_forward.1} parent=1 // pred_fallthru
      _
    // Predicated region
    $region26: #{tmgru_forward.1} parent=1 // pred_check
      _
    $region27: #{tmgru_forward.1} parent=1 // pred_check_branch
      %47 = sbr.rel (0) target = $region29
    $region28: #{tmgru_forward.1} parent=1 // pred_region
      _
    $region29: #{tmgru_forward.1} parent=1 // pred_fallthru
      _
    // Predicated region
    $region30: #{tmgru_forward.1} parent=1 // pred_check
      _
    $region31: #{tmgru_forward.1} parent=1 // pred_check_branch
      %49 = sbr.rel (0) target = $region33
    $region32: #{tmgru_forward.1} parent=1 // pred_region
      %50 = dma.done [#allocation3], 16896
    $region33: #{tmgru_forward.1} parent=1 // pred_fallthru
      _
    // Predicated region
    $region34: #{tmgru_forward.1} parent=1 // pred_check
      _
    $region35: #{tmgru_forward.1} parent=1 // pred_check_branch
      %52 = sbr.rel (0) target = $region37
    $region36: #{tmgru_forward.1} parent=1 // pred_region
      %53 = dma.done [#allocation5], 16896
    $region37: #{tmgru_forward.1} parent=1 // pred_fallthru
      _
    %v55 = vld [vmem:[%s0] sm:$0x1]
    %v56 = vld [vmem:[%s0 + $0x1] sm:$0x1]
    %v57 = vld [vmem:[%s0 + $0x2] sm:$0x1]
    %v58 = vld [vmem:[%s0 + $0x3] sm:$0x1]
    %v59 = vld [vmem:[%s0 + $0x4] sm:$0x1]
    %v60 = vld [vmem:[%s0 + $0x5] sm:$0x1]
    %v61 = vld [vmem:[%s0 + $0x6] sm:$0x1]
    %v62 = vld [vmem:[%s0 + $0x7] sm:$0x1]
    %v63 = vld [vmem:[%s0 + $0x8] sm:$0x1]
    %v64 = vld [vmem:[%s0 + $0x9] sm:$0x1]
    %v65 = vld [vmem:[%s0 + $0xa] sm:$0x1]
    %v66 = vld [vmem:[%s0 + $0xb] sm:$0x1]
    %v67 = vld [vmem:[%s0 + $0xc] sm:$0x1]
    %v68 = vld [vmem:[%s0 + $0xd] sm:$0x1]
    %v69 = vld [vmem:[%s0 + $0xe] sm:$0x1]
    %v70 = vld [vmem:[%s0 + $0xf] sm:$0x1]
    %v71 = vld [vmem:[%s0 + $0x10] sm:$0x1]
    %v72 = vld [vmem:[%s0 + $0x11] sm:$0x1]
    %v73 = vld [vmem:[%s0 + $0x12] sm:$0x1]
    %v74 = vld [vmem:[%s0 + $0x13] sm:$0x1]
    %v75 = vld [vmem:[%s0 + $0x14] sm:$0x1]
    %v76 = vld [vmem:[%s0 + $0x15] sm:$0x1]
    %v77 = vld [vmem:[%s0 + $0x16] sm:$0x1]
    %v78 = vld [vmem:[%s0 + $0x17] sm:$0x1]
    %v79 = vld [vmem:[%s0 + $0x18] sm:$0x1]
    %v80 = vld [vmem:[%s0 + $0x19] sm:$0x1]
    %v81 = vld [vmem:[%s0 + $0x1a] sm:$0x1]
    %v82 = vld [vmem:[%s0 + $0x1b] sm:$0x1]
    %v83 = vld [vmem:[%s0 + $0x1c] sm:$0x1]
    %v84 = vld [vmem:[%s0 + $0x1d] sm:$0x1]
    %v85 = vld [vmem:[%s0 + $0x1e] sm:$0x1]
    %v86 = vld [vmem:[%s0 + $0x1f] sm:$0x1]
    %v87 = vld [vmem:[%s0 + $0x20] sm:$0x1]
    %v88 = vpack.c.bf16 %v55, %v55
    %v89 = vpack.c.bf16 %v56, %v56
    %v90 = vpack.c.bf16 %v57, %v57
    %v91 = vpack.c.bf16 %v58, %v58
    %v92 = vpack.c.bf16 %v59, %v59
    %v93 = vpack.c.bf16 %v60, %v60
    %v94 = vpack.c.bf16 %v61, %v61
    %v95 = vpack.c.bf16 %v62, %v62
    %v96 = vpack.c.bf16 %v63, %v63
    %v97 = vpack.c.bf16 %v64, %v64
    %v98 = vpack.c.bf16 %v65, %v65
    %v99 = vpack.c.bf16 %v66, %v66
    %v100 = vpack.c.bf16 %v67, %v67
    %v101 = vpack.c.bf16 %v68, %v68
    %v102 = vpack.c.bf16 %v69, %v69
    %v103 = vpack.c.bf16 %v70, %v70
    %v104 = vpack.c.bf16 %v71, %v71
    %v105 = vpack.c.bf16 %v72, %v72
    %v106 = vpack.c.bf16 %v73, %v73
    %v107 = vpack.c.bf16 %v74, %v74
    %v108 = vpack.c.bf16 %v75, %v75
    %v109 = vpack.c.bf16 %v76, %v76
    %v110 = vpack.c.bf16 %v77, %v77
    %v111 = vpack.c.bf16 %v78, %v78
    %v112 = vpack.c.bf16 %v79, %v79
    %v113 = vpack.c.bf16 %v80, %v80
    %v114 = vpack.c.bf16 %v81, %v81
    %v115 = vpack.c.bf16 %v82, %v82
    %v116 = vpack.c.bf16 %v83, %v83
    %v117 = vpack.c.bf16 %v84, %v84
    %v118 = vpack.c.bf16 %v85, %v85
    %v119 = vpack.c.bf16 %v86, %v86
    %v120 = vpack.c.bf16 %v87, %v87
    %v121 = vunpack.c.l.bf16 %v88
    %v122 = vunpack.c.l.bf16 %v89
    %v123 = vunpack.c.l.bf16 %v90
    %v124 = vunpack.c.l.bf16 %v91
    %v125 = vunpack.c.l.bf16 %v92
    %v126 = vunpack.c.l.bf16 %v93
    %v127 = vunpack.c.l.bf16 %v94
    %v128 = vunpack.c.l.bf16 %v95
    %v129 = vunpack.c.l.bf16 %v96
    %v130 = vunpack.c.l.bf16 %v97
    %v131 = vunpack.c.l.bf16 %v98
    %v132 = vunpack.c.l.bf16 %v99
    %v133 = vunpack.c.l.bf16 %v100
    %v134 = vunpack.c.l.bf16 %v101
    %v135 = vunpack.c.l.bf16 %v102
    %v136 = vunpack.c.l.bf16 %v103
    %v137 = vunpack.c.l.bf16 %v104
    %v138 = vunpack.c.l.bf16 %v105
    %v139 = vunpack.c.l.bf16 %v106
    %v140 = vunpack.c.l.bf16 %v107
    %v141 = vunpack.c.l.bf16 %v108
    %v142 = vunpack.c.l.bf16 %v109
    %v143 = vunpack.c.l.bf16 %v110
    %v144 = vunpack.c.l.bf16 %v111
    %v145 = vunpack.c.l.bf16 %v112
    %v146 = vunpack.c.l.bf16 %v113
    %v147 = vunpack.c.l.bf16 %v114
    %v148 = vunpack.c.l.bf16 %v115
    %v149 = vunpack.c.l.bf16 %v116
    %v150 = vunpack.c.l.bf16 %v117
    %v151 = vunpack.c.l.bf16 %v118
    %v152 = vunpack.c.l.bf16 %v119
    %v153 = vunpack.c.l.bf16 %v120
    %v154 = vsub.f32 %v55, %v121
    %v155 = vsub.f32 %v56, %v122
    %v156 = vsub.f32 %v57, %v123
    %v157 = vsub.f32 %v58, %v124
    %v158 = vsub.f32 %v59, %v125
    %v159 = vsub.f32 %v60, %v126
    %v160 = vsub.f32 %v61, %v127
    %v161 = vsub.f32 %v62, %v128
    %v162 = vsub.f32 %v63, %v129
    %v163 = vsub.f32 %v64, %v130
    %v164 = vsub.f32 %v65, %v131
    %v165 = vsub.f32 %v66, %v132
    %v166 = vsub.f32 %v67, %v133
    %v167 = vsub.f32 %v68, %v134
    %v168 = vsub.f32 %v69, %v135
    %v169 = vsub.f32 %v70, %v136
    %v170 = vsub.f32 %v71, %v137
    %v171 = vsub.f32 %v72, %v138
    %v172 = vsub.f32 %v73, %v139
    %v173 = vsub.f32 %v74, %v140
    %v174 = vsub.f32 %v75, %v141
    %v175 = vsub.f32 %v76, %v142
    %v176 = vsub.f32 %v77, %v143
    %v177 = vsub.f32 %v78, %v144
    %v178 = vsub.f32 %v79, %v145
    %v179 = vsub.f32 %v80, %v146
    %v180 = vsub.f32 %v81, %v147
    %v181 = vsub.f32 %v82, %v148
    %v182 = vsub.f32 %v83, %v149
    %v183 = vsub.f32 %v84, %v150
    %v184 = vsub.f32 %v85, %v151
    %v185 = vsub.f32 %v86, %v152
    %v186 = vsub.f32 %v87, %v153
    %v187 = vpack.c.bf16 %v154, %v154
    %v188 = vpack.c.bf16 %v155, %v155
    %v189 = vpack.c.bf16 %v156, %v156
    %v190 = vpack.c.bf16 %v157, %v157
    %v191 = vpack.c.bf16 %v158, %v158
    %v192 = vpack.c.bf16 %v159, %v159
    %v193 = vpack.c.bf16 %v160, %v160
    %v194 = vpack.c.bf16 %v161, %v161
    %v195 = vpack.c.bf16 %v162, %v162
    %v196 = vpack.c.bf16 %v163, %v163
    %v197 = vpack.c.bf16 %v164, %v164
    %v198 = vpack.c.bf16 %v165, %v165
    %v199 = vpack.c.bf16 %v166, %v166
    %v200 = vpack.c.bf16 %v167, %v167
    %v201 = vpack.c.bf16 %v168, %v168
    %v202 = vpack.c.bf16 %v169, %v169
    %v203 = vpack.c.bf16 %v170, %v170
    %v204 = vpack.c.bf16 %v171, %v171
    %v205 = vpack.c.bf16 %v172, %v172
    %v206 = vpack.c.bf16 %v173, %v173
    %v207 = vpack.c.bf16 %v174, %v174
    %v208 = vpack.c.bf16 %v175, %v175
    %v209 = vpack.c.bf16 %v176, %v176
    %v210 = vpack.c.bf16 %v177, %v177
    %v211 = vpack.c.bf16 %v178, %v178
    %v212 = vpack.c.bf16 %v179, %v179
    %v213 = vpack.c.bf16 %v180, %v180
    %v214 = vpack.c.bf16 %v181, %v181
    %v215 = vpack.c.bf16 %v182, %v182
    %v216 = vpack.c.bf16 %v183, %v183
    %v217 = vpack.c.bf16 %v184, %v184
    %v218 = vpack.c.bf16 %v185, %v185
    %v219 = vpack.c.bf16 %v186, %v186
    %v220 = vld [vmem:[#allocation2] sm:$0xf]
    %v221 = vld [vmem:[#allocation2 + $0x4] sm:$0xf]
    %v222 = vld [vmem:[#allocation2 + $0x8] sm:$0xf]
    %v223 = vld [vmem:[#allocation2 + $0xc] sm:$0xf]
    %v224 = vld [vmem:[#allocation2 + $0x10] sm:$0xf]
    %v225 = vld [vmem:[#allocation2 + $0x14] sm:$0xf]
    %v226 = vld [vmem:[#allocation2 + $0x18] sm:$0xf]
    %v227 = vld [vmem:[#allocation2 + $0x1c] sm:$0xf]
    %v228 = vld [vmem:[#allocation2 + $0x20] sm:$0xf]
    %v229 = vld [vmem:[#allocation2 + $0x24] sm:$0xf]
    %v230 = vld [vmem:[#allocation2 + $0x28] sm:$0xf]
    %v231 = vld [vmem:[#allocation2 + $0x2c] sm:$0xf]
    %v232 = vld [vmem:[#allocation2 + $0x30] sm:$0xf]
    %v233 = vld [vmem:[#allocation2 + $0x34] sm:$0xf]
    %v234 = vld [vmem:[#allocation2 + $0x38] sm:$0xf]
    %v235 = vld [vmem:[#allocation2 + $0x3c] sm:$0xf]
    %v236 = vld [vmem:[#allocation2 + $0x40] sm:$0xf]
    %v237 = vld [vmem:[#allocation2 + $0x44] sm:$0xf]
    %v238 = vld [vmem:[#allocation2 + $0x48] sm:$0xf]
    %v239 = vld [vmem:[#allocation2 + $0x4c] sm:$0xf]
    %v240 = vld [vmem:[#allocation2 + $0x50] sm:$0xf]
    %v241 = vld [vmem:[#allocation2 + $0x54] sm:$0xf]
    %v242 = vld [vmem:[#allocation2 + $0x58] sm:$0xf]
    %v243 = vld [vmem:[#allocation2 + $0x5c] sm:$0xf]
    %v244 = vld [vmem:[#allocation2 + $0x60] sm:$0xf]
    %v245 = vld [vmem:[#allocation2 + $0x64] sm:$0xf]
    %v246 = vld [vmem:[#allocation2 + $0x68] sm:$0xf]
    %v247 = vld [vmem:[#allocation2 + $0x6c] sm:$0xf]
    %v248 = vld [vmem:[#allocation2 + $0x70] sm:$0xf]
    %v249 = vld [vmem:[#allocation2 + $0x74] sm:$0xf]
    %v250 = vld [vmem:[#allocation2 + $0x78] sm:$0xf]
    %v251 = vld [vmem:[#allocation2 + $0x7c] sm:$0xf]
    %v252 = vld [vmem:[#allocation2 + $0x80] sm:$0xf]
    %v253 = vld [vmem:[#allocation2 + $0x84] sm:$0xf]
    %v254 = vld [vmem:[#allocation2 + $0x88] sm:$0xf]
    %v255 = vld [vmem:[#allocation2 + $0x8c] sm:$0xf]
    %v256 = vld [vmem:[#allocation2 + $0x90] sm:$0xf]
    %v257 = vld [vmem:[#allocation2 + $0x94] sm:$0xf]
    %v258 = vld [vmem:[#allocation2 + $0x98] sm:$0xf]
    %v259 = vld [vmem:[#allocation2 + $0x9c] sm:$0xf]
    %v260 = vld [vmem:[#allocation2 + $0xa0] sm:$0xf]
    %v261 = vld [vmem:[#allocation2 + $0xa4] sm:$0xf]
    %v262 = vld [vmem:[#allocation2 + $0xa8] sm:$0xf]
    %v263 = vld [vmem:[#allocation2 + $0xac] sm:$0xf]
    %v264 = vld [vmem:[#allocation2 + $0xb0] sm:$0xf]
    %v265 = vld [vmem:[#allocation2 + $0xb4] sm:$0xf]
    %v266 = vld [vmem:[#allocation2 + $0xb8] sm:$0xf]
    %v267 = vld [vmem:[#allocation2 + $0xbc] sm:$0xf]
    %v268 = vld [vmem:[#allocation2 + $0xc0] sm:$0xf]
    %v269 = vld [vmem:[#allocation2 + $0xc4] sm:$0xf]
    %v270 = vld [vmem:[#allocation2 + $0xc8] sm:$0xf]
    %v271 = vld [vmem:[#allocation2 + $0xcc] sm:$0xf]
    %v272 = vld [vmem:[#allocation2 + $0xd0] sm:$0xf]
    %v273 = vld [vmem:[#allocation2 + $0xd4] sm:$0xf]
    %v274 = vld [vmem:[#allocation2 + $0xd8] sm:$0xf]
    %v275 = vld [vmem:[#allocation2 + $0xdc] sm:$0xf]
    %v276 = vld [vmem:[#allocation2 + $0xe0] sm:$0xf]
    %v277 = vld [vmem:[#allocation2 + $0xe4] sm:$0xf]
    %v278 = vld [vmem:[#allocation2 + $0xe8] sm:$0xf]
    %v279 = vld [vmem:[#allocation2 + $0xec] sm:$0xf]
    %v280 = vld [vmem:[#allocation2 + $0xf0] sm:$0xf]
    %v281 = vld [vmem:[#allocation2 + $0xf4] sm:$0xf]
    %v282 = vld [vmem:[#allocation2 + $0xf8] sm:$0xf]
    %v283 = vld [vmem:[#allocation2 + $0xfc] sm:$0xf]
    %v284 = vld [vmem:[#allocation2 + $0x100] sm:$0xf]
    %v285 = vld [vmem:[#allocation2 + $0x104] sm:$0xf]
    %v286 = vld [vmem:[#allocation2 + $0x108] sm:$0xf]
    %v287 = vld [vmem:[#allocation2 + $0x10c] sm:$0xf]
    %v288 = vld [vmem:[#allocation2 + $0x110] sm:$0xf]
    %v289 = vld [vmem:[#allocation2 + $0x114] sm:$0xf]
    %v290 = vld [vmem:[#allocation2 + $0x118] sm:$0xf]
    %v291 = vld [vmem:[#allocation2 + $0x11c] sm:$0xf]
    %v292 = vld [vmem:[#allocation2 + $0x120] sm:$0xf]
    %v293 = vld [vmem:[#allocation2 + $0x124] sm:$0xf]
    %v294 = vld [vmem:[#allocation2 + $0x128] sm:$0xf]
    %v295 = vld [vmem:[#allocation2 + $0x12c] sm:$0xf]
    %v296 = vld [vmem:[#allocation2 + $0x130] sm:$0xf]
    %v297 = vld [vmem:[#allocation2 + $0x134] sm:$0xf]
    %v298 = vld [vmem:[#allocation2 + $0x138] sm:$0xf]
    %v299 = vld [vmem:[#allocation2 + $0x13c] sm:$0xf]
    %v300 = vld [vmem:[#allocation2 + $0x140] sm:$0xf]
    %v301 = vld [vmem:[#allocation2 + $0x144] sm:$0xf]
    %v302 = vld [vmem:[#allocation2 + $0x148] sm:$0xf]
    %v303 = vld [vmem:[#allocation2 + $0x14c] sm:$0xf]
    %v304 = vld [vmem:[#allocation2 + $0x150] sm:$0xf]
    %v305 = vld [vmem:[#allocation2 + $0x154] sm:$0xf]
    %v306 = vld [vmem:[#allocation2 + $0x158] sm:$0xf]
    %v307 = vld [vmem:[#allocation2 + $0x15c] sm:$0xf]
    %v308 = vld [vmem:[#allocation2 + $0x160] sm:$0xf]
    %v309 = vld [vmem:[#allocation2 + $0x164] sm:$0xf]
    %v310 = vld [vmem:[#allocation2 + $0x168] sm:$0xf]
    %v311 = vld [vmem:[#allocation2 + $0x16c] sm:$0xf]
    %v312 = vld [vmem:[#allocation2 + $0x170] sm:$0xf]
    %v313 = vld [vmem:[#allocation2 + $0x174] sm:$0xf]
    %v314 = vld [vmem:[#allocation2 + $0x178] sm:$0xf]
    %v315 = vld [vmem:[#allocation2 + $0x17c] sm:$0xf]
    %v316 = vld [vmem:[#allocation2 + $0x180] sm:$0xf]
    %v317 = vld [vmem:[#allocation2 + $0x184] sm:$0xf]
    %v318 = vld [vmem:[#allocation2 + $0x188] sm:$0xf]
    %v319 = vld [vmem:[#allocation2 + $0x18c] sm:$0xf]
    %v320 = vld [vmem:[#allocation2 + $0x190] sm:$0xf]
    %v321 = vld [vmem:[#allocation2 + $0x194] sm:$0xf]
    %v322 = vld [vmem:[#allocation2 + $0x198] sm:$0xf]
    %v323 = vld [vmem:[#allocation2 + $0x19c] sm:$0xf]
    %v324 = vld [vmem:[#allocation2 + $0x1a0] sm:$0xf]
    %v325 = vld [vmem:[#allocation2 + $0x1a4] sm:$0xf]
    %v326 = vld [vmem:[#allocation2 + $0x1a8] sm:$0xf]
    %v327 = vld [vmem:[#allocation2 + $0x1ac] sm:$0xf]
    %v328 = vld [vmem:[#allocation2 + $0x1b0] sm:$0xf]
    %v329 = vld [vmem:[#allocation2 + $0x1b4] sm:$0xf]
    %v330 = vld [vmem:[#allocation2 + $0x1b8] sm:$0xf]
    %v331 = vld [vmem:[#allocation2 + $0x1bc] sm:$0xf]
    %v332 = vld [vmem:[#allocation2 + $0x1c0] sm:$0xf]
    %v333 = vld [vmem:[#allocation2 + $0x1c4] sm:$0xf]
    %v334 = vld [vmem:[#allocation2 + $0x1c8] sm:$0xf]
    %v335 = vld [vmem:[#allocation2 + $0x1cc] sm:$0xf]
    %v336 = vld [vmem:[#allocation2 + $0x1d0] sm:$0xf]
    %v337 = vld [vmem:[#allocation2 + $0x1d4] sm:$0xf]
    %v338 = vld [vmem:[#allocation2 + $0x1d8] sm:$0xf]
    %v339 = vld [vmem:[#allocation2 + $0x1dc] sm:$0xf]
    %v340 = vld [vmem:[#allocation2 + $0x1e0] sm:$0xf]
    %v341 = vld [vmem:[#allocation2 + $0x1e4] sm:$0xf]
    %v342 = vld [vmem:[#allocation2 + $0x1e8] sm:$0xf]
    %v343 = vld [vmem:[#allocation2 + $0x1ec] sm:$0xf]
    %v344 = vld [vmem:[#allocation2 + $0x1f0] sm:$0xf]
    %v345 = vld [vmem:[#allocation2 + $0x1f4] sm:$0xf]
    %v346 = vld [vmem:[#allocation2 + $0x1f8] sm:$0xf]
    %v347 = vld [vmem:[#allocation2 + $0x1fc] sm:$0xf]
    %v348 = vld [vmem:[#allocation2 + $0x200] sm:$0xf]
    %v349 = vld [vmem:[#allocation2 + $0x204] sm:$0xf]
    %v350 = vld [vmem:[#allocation2 + $0x208] sm:$0xf]
    %v351 = vld [vmem:[#allocation2 + $0x20c] sm:$0xf]
    %v352 = vld [vmem:[#allocation2 + $0x210] sm:$0xf]
    %v353 = vld [vmem:[#allocation2 + $0x214] sm:$0xf]
    %v354 = vld [vmem:[#allocation2 + $0x218] sm:$0xf]
    %v355 = vld [vmem:[#allocation2 + $0x21c] sm:$0xf]
    %v356 = vld [vmem:[#allocation2 + $0x220] sm:$0xf]
    %v357 = vld [vmem:[#allocation2 + $0x224] sm:$0xf]
    %v358 = vld [vmem:[#allocation2 + $0x228] sm:$0xf]
    %v359 = vld [vmem:[#allocation2 + $0x22c] sm:$0xf]
    %v360 = vld [vmem:[#allocation2 + $0x230] sm:$0xf]
    %v361 = vld [vmem:[#allocation2 + $0x234] sm:$0xf]
    %v362 = vld [vmem:[#allocation2 + $0x238] sm:$0xf]
    %v363 = vld [vmem:[#allocation2 + $0x23c] sm:$0xf]
    %v364 = vld [vmem:[#allocation2 + $0x240] sm:$0xf]
    %v365 = vld [vmem:[#allocation2 + $0x244] sm:$0xf]
    %v366 = vld [vmem:[#allocation2 + $0x248] sm:$0xf]
    %v367 = vld [vmem:[#allocation2 + $0x24c] sm:$0xf]
    %v368 = vld [vmem:[#allocation2 + $0x250] sm:$0xf]
    %v369 = vld [vmem:[#allocation2 + $0x254] sm:$0xf]
    %v370 = vld [vmem:[#allocation2 + $0x258] sm:$0xf]
    %v371 = vld [vmem:[#allocation2 + $0x25c] sm:$0xf]
    %v372 = vld [vmem:[#allocation2 + $0x260] sm:$0xf]
    %v373 = vld [vmem:[#allocation2 + $0x264] sm:$0xf]
    %v374 = vld [vmem:[#allocation2 + $0x268] sm:$0xf]
    %v375 = vld [vmem:[#allocation2 + $0x26c] sm:$0xf]
    %v376 = vld [vmem:[#allocation2 + $0x270] sm:$0xf]
    %v377 = vld [vmem:[#allocation2 + $0x274] sm:$0xf]
    %v378 = vld [vmem:[#allocation2 + $0x278] sm:$0xf]
    %v379 = vld [vmem:[#allocation2 + $0x27c] sm:$0xf]
    %v380 = vld [vmem:[#allocation2 + $0x280] sm:$0xf]
    %v381 = vld [vmem:[#allocation2 + $0x284] sm:$0xf]
    %v382 = vld [vmem:[#allocation2 + $0x288] sm:$0xf]
    %v383 = vld [vmem:[#allocation2 + $0x28c] sm:$0xf]
    %v384 = vld [vmem:[#allocation2 + $0x290] sm:$0xf]
    %v385 = vld [vmem:[#allocation2 + $0x294] sm:$0xf]
    %v386 = vld [vmem:[#allocation2 + $0x298] sm:$0xf]
    %v387 = vld [vmem:[#allocation2 + $0x29c] sm:$0xf]
    %v388 = vld [vmem:[#allocation2 + $0x2a0] sm:$0xf]
    %v389 = vld [vmem:[#allocation2 + $0x2a4] sm:$0xf]
    %v390 = vld [vmem:[#allocation2 + $0x2a8] sm:$0xf]
    %v391 = vld [vmem:[#allocation2 + $0x2ac] sm:$0xf]
    %v392 = vld [vmem:[#allocation2 + $0x2b0] sm:$0xf]
    %v393 = vld [vmem:[#allocation2 + $0x2b4] sm:$0xf]
    %v394 = vld [vmem:[#allocation2 + $0x2b8] sm:$0xf]
    %v395 = vld [vmem:[#allocation2 + $0x2bc] sm:$0xf]
    %v396 = vld [vmem:[#allocation2 + $0x2c0] sm:$0xf]
    %v397 = vld [vmem:[#allocation2 + $0x2c4] sm:$0xf]
    %v398 = vld [vmem:[#allocation2 + $0x2c8] sm:$0xf]
    %v399 = vld [vmem:[#allocation2 + $0x2cc] sm:$0xf]
    %v400 = vld [vmem:[#allocation2 + $0x2d0] sm:$0xf]
    %v401 = vld [vmem:[#allocation2 + $0x2d4] sm:$0xf]
    %v402 = vld [vmem:[#allocation2 + $0x2d8] sm:$0xf]
    %v403 = vld [vmem:[#allocation2 + $0x2dc] sm:$0xf]
    %v404 = vld [vmem:[#allocation2 + $0x2e0] sm:$0xf]
    %v405 = vld [vmem:[#allocation2 + $0x2e4] sm:$0xf]
    %v406 = vld [vmem:[#allocation2 + $0x2e8] sm:$0xf]
    %v407 = vld [vmem:[#allocation2 + $0x2ec] sm:$0xf]
    %v408 = vld [vmem:[#allocation2 + $0x2f0] sm:$0xf]
    %v409 = vld [vmem:[#allocation2 + $0x2f4] sm:$0xf]
    %v410 = vld [vmem:[#allocation2 + $0x2f8] sm:$0xf]
    %v411 = vld [vmem:[#allocation2 + $0x2fc] sm:$0xf]
    %v412 = vld [vmem:[#allocation2 + $0x300] sm:$0xf]
    %v413 = vld [vmem:[#allocation2 + $0x304] sm:$0xf]
    %v414 = vld [vmem:[#allocation2 + $0x308] sm:$0xf]
    %v415 = vld [vmem:[#allocation2 + $0x30c] sm:$0xf]
    %v416 = vld [vmem:[#allocation2 + $0x310] sm:$0xf]
    %v417 = vld [vmem:[#allocation2 + $0x314] sm:$0xf]
    %v418 = vld [vmem:[#allocation2 + $0x318] sm:$0xf]
    %v419 = vld [vmem:[#allocation2 + $0x31c] sm:$0xf]
    %v420 = vld [vmem:[#allocation2 + $0x320] sm:$0xf]
    %v421 = vld [vmem:[#allocation2 + $0x324] sm:$0xf]
    %v422 = vld [vmem:[#allocation2 + $0x328] sm:$0xf]
    %v423 = vld [vmem:[#allocation2 + $0x32c] sm:$0xf]
    %v424 = vld [vmem:[#allocation2 + $0x330] sm:$0xf]
    %v425 = vld [vmem:[#allocation2 + $0x334] sm:$0xf]
    %v426 = vld [vmem:[#allocation2 + $0x338] sm:$0xf]
    %v427 = vld [vmem:[#allocation2 + $0x33c] sm:$0xf]
    %v428 = vld [vmem:[#allocation2 + $0x340] sm:$0xf]
    %v429 = vld [vmem:[#allocation2 + $0x344] sm:$0xf]
    %v430 = vld [vmem:[#allocation2 + $0x348] sm:$0xf]
    %v431 = vld [vmem:[#allocation2 + $0x34c] sm:$0xf]
    %v432 = vld [vmem:[#allocation2 + $0x350] sm:$0xf]
    %v433 = vld [vmem:[#allocation2 + $0x354] sm:$0xf]
    %v434 = vld [vmem:[#allocation2 + $0x358] sm:$0xf]
    %v435 = vld [vmem:[#allocation2 + $0x35c] sm:$0xf]
    %v436 = vld [vmem:[#allocation2 + $0x360] sm:$0xf]
    %v437 = vld [vmem:[#allocation2 + $0x364] sm:$0xf]
    %v438 = vld [vmem:[#allocation2 + $0x368] sm:$0xf]
    %v439 = vld [vmem:[#allocation2 + $0x36c] sm:$0xf]
    %v440 = vld [vmem:[#allocation2 + $0x370] sm:$0xf]
    %v441 = vld [vmem:[#allocation2 + $0x374] sm:$0xf]
    %v442 = vld [vmem:[#allocation2 + $0x378] sm:$0xf]
    %v443 = vld [vmem:[#allocation2 + $0x37c] sm:$0xf]
    %v444 = vld [vmem:[#allocation2 + $0x380] sm:$0xf]
    %v445 = vld [vmem:[#allocation2 + $0x384] sm:$0xf]
    %v446 = vld [vmem:[#allocation2 + $0x388] sm:$0xf]
    %v447 = vld [vmem:[#allocation2 + $0x38c] sm:$0xf]
    %v448 = vld [vmem:[#allocation2 + $0x390] sm:$0xf]
    %v449 = vld [vmem:[#allocation2 + $0x394] sm:$0xf]
    %v450 = vld [vmem:[#allocation2 + $0x398] sm:$0xf]
    %v451 = vld [vmem:[#allocation2 + $0x39c] sm:$0xf]
    %v452 = vld [vmem:[#allocation2 + $0x3a0] sm:$0xf]
    %v453 = vld [vmem:[#allocation2 + $0x3a4] sm:$0xf]
    %v454 = vld [vmem:[#allocation2 + $0x3a8] sm:$0xf]
    %v455 = vld [vmem:[#allocation2 + $0x3ac] sm:$0xf]
    %v456 = vld [vmem:[#allocation2 + $0x3b0] sm:$0xf]
    %v457 = vld [vmem:[#allocation2 + $0x3b4] sm:$0xf]
    %v458 = vld [vmem:[#allocation2 + $0x3b8] sm:$0xf]
    %v459 = vld [vmem:[#allocation2 + $0x3bc] sm:$0xf]
    %v460 = vld [vmem:[#allocation2 + $0x3c0] sm:$0xf]
    %v461 = vld [vmem:[#allocation2 + $0x3c4] sm:$0xf]
    %v462 = vld [vmem:[#allocation2 + $0x3c8] sm:$0xf]
    %v463 = vld [vmem:[#allocation2 + $0x3cc] sm:$0xf]
    %v464 = vld [vmem:[#allocation2 + $0x3d0] sm:$0xf]
    %v465 = vld [vmem:[#allocation2 + $0x3d4] sm:$0xf]
    %v466 = vld [vmem:[#allocation2 + $0x3d8] sm:$0xf]
    %v467 = vld [vmem:[#allocation2 + $0x3dc] sm:$0xf]
    %v468 = vld [vmem:[#allocation2 + $0x3e0] sm:$0xf]
    %v469 = vld [vmem:[#allocation2 + $0x3e4] sm:$0xf]
    %v470 = vld [vmem:[#allocation2 + $0x3e8] sm:$0xf]
    %v471 = vld [vmem:[#allocation2 + $0x3ec] sm:$0xf]
    %v472 = vld [vmem:[#allocation2 + $0x3f0] sm:$0xf]
    %v473 = vld [vmem:[#allocation2 + $0x3f4] sm:$0xf]
    %v474 = vld [vmem:[#allocation2 + $0x3f8] sm:$0xf]
    %v475 = vld [vmem:[#allocation2 + $0x3fc] sm:$0xf]
    %v476 = vld [vmem:[#allocation2 + $0x400] sm:$0xf]
    %v477 = vld [vmem:[#allocation2 + $0x404] sm:$0xf]
    %v478 = vld [vmem:[#allocation2 + $0x408] sm:$0xf]
    %v479 = vld [vmem:[#allocation2 + $0x40c] sm:$0xf]
    %v480 = vld [vmem:[#allocation2 + $0x410] sm:$0xf]
    %v481 = vld [vmem:[#allocation2 + $0x414] sm:$0xf]
    %v482 = vld [vmem:[#allocation2 + $0x418] sm:$0xf]
    %v483 = vld [vmem:[#allocation2 + $0x41c] sm:$0xf]
    %v484 = vld [vmem:[#allocation4] sm:$0xf]
    %v485 = vld [vmem:[#allocation4 + $0x4] sm:$0xf]
    %v486 = vld [vmem:[#allocation4 + $0x8] sm:$0xf]
    %v487 = vld [vmem:[#allocation4 + $0xc] sm:$0xf]
    %v488 = vld [vmem:[#allocation4 + $0x10] sm:$0xf]
    %v489 = vld [vmem:[#allocation4 + $0x14] sm:$0xf]
    %v490 = vld [vmem:[#allocation4 + $0x18] sm:$0xf]
    %v491 = vld [vmem:[#allocation4 + $0x1c] sm:$0xf]
    %v492 = vld [vmem:[#allocation4 + $0x20] sm:$0xf]
    %v493 = vld [vmem:[#allocation4 + $0x24] sm:$0xf]
    %v494 = vld [vmem:[#allocation4 + $0x28] sm:$0xf]
    %v495 = vld [vmem:[#allocation4 + $0x2c] sm:$0xf]
    %v496 = vld [vmem:[#allocation4 + $0x30] sm:$0xf]
    %v497 = vld [vmem:[#allocation4 + $0x34] sm:$0xf]
    %v498 = vld [vmem:[#allocation4 + $0x38] sm:$0xf]
    %v499 = vld [vmem:[#allocation4 + $0x3c] sm:$0xf]
    %v500 = vld [vmem:[#allocation4 + $0x40] sm:$0xf]
    %v501 = vld [vmem:[#allocation4 + $0x44] sm:$0xf]
    %v502 = vld [vmem:[#allocation4 + $0x48] sm:$0xf]
    %v503 = vld [vmem:[#allocation4 + $0x4c] sm:$0xf]
    %v504 = vld [vmem:[#allocation4 + $0x50] sm:$0xf]
    %v505 = vld [vmem:[#allocation4 + $0x54] sm:$0xf]
    %v506 = vld [vmem:[#allocation4 + $0x58] sm:$0xf]
    %v507 = vld [vmem:[#allocation4 + $0x5c] sm:$0xf]
    %v508 = vld [vmem:[#allocation4 + $0x60] sm:$0xf]
    %v509 = vld [vmem:[#allocation4 + $0x64] sm:$0xf]
    %v510 = vld [vmem:[#allocation4 + $0x68] sm:$0xf]
    %v511 = vld [vmem:[#allocation4 + $0x6c] sm:$0xf]
    %v512 = vld [vmem:[#allocation4 + $0x70] sm:$0xf]
    %v513 = vld [vmem:[#allocation4 + $0x74] sm:$0xf]
    %v514 = vld [vmem:[#allocation4 + $0x78] sm:$0xf]
    %v515 = vld [vmem:[#allocation4 + $0x7c] sm:$0xf]
    %v516 = vld [vmem:[#allocation4 + $0x80] sm:$0xf]
    %v517 = vld [vmem:[#allocation4 + $0x84] sm:$0xf]
    %v518 = vld [vmem:[#allocation4 + $0x88] sm:$0xf]
    %v519 = vld [vmem:[#allocation4 + $0x8c] sm:$0xf]
    %v520 = vld [vmem:[#allocation4 + $0x90] sm:$0xf]
    %v521 = vld [vmem:[#allocation4 + $0x94] sm:$0xf]
    %v522 = vld [vmem:[#allocation4 + $0x98] sm:$0xf]
    %v523 = vld [vmem:[#allocation4 + $0x9c] sm:$0xf]
    %v524 = vld [vmem:[#allocation4 + $0xa0] sm:$0xf]
    %v525 = vld [vmem:[#allocation4 + $0xa4] sm:$0xf]
    %v526 = vld [vmem:[#allocation4 + $0xa8] sm:$0xf]
    %v527 = vld [vmem:[#allocation4 + $0xac] sm:$0xf]
    %v528 = vld [vmem:[#allocation4 + $0xb0] sm:$0xf]
    %v529 = vld [vmem:[#allocation4 + $0xb4] sm:$0xf]
    %v530 = vld [vmem:[#allocation4 + $0xb8] sm:$0xf]
    %v531 = vld [vmem:[#allocation4 + $0xbc] sm:$0xf]
    %v532 = vld [vmem:[#allocation4 + $0xc0] sm:$0xf]
    %v533 = vld [vmem:[#allocation4 + $0xc4] sm:$0xf]
    %v534 = vld [vmem:[#allocation4 + $0xc8] sm:$0xf]
    %v535 = vld [vmem:[#allocation4 + $0xcc] sm:$0xf]
    %v536 = vld [vmem:[#allocation4 + $0xd0] sm:$0xf]
    %v537 = vld [vmem:[#allocation4 + $0xd4] sm:$0xf]
    %v538 = vld [vmem:[#allocation4 + $0xd8] sm:$0xf]
    %v539 = vld [vmem:[#allocation4 + $0xdc] sm:$0xf]
    %v540 = vld [vmem:[#allocation4 + $0xe0] sm:$0xf]
    %v541 = vld [vmem:[#allocation4 + $0xe4] sm:$0xf]
    %v542 = vld [vmem:[#allocation4 + $0xe8] sm:$0xf]
    %v543 = vld [vmem:[#allocation4 + $0xec] sm:$0xf]
    %v544 = vld [vmem:[#allocation4 + $0xf0] sm:$0xf]
    %v545 = vld [vmem:[#allocation4 + $0xf4] sm:$0xf]
    %v546 = vld [vmem:[#allocation4 + $0xf8] sm:$0xf]
    %v547 = vld [vmem:[#allocation4 + $0xfc] sm:$0xf]
    %v548 = vld [vmem:[#allocation4 + $0x100] sm:$0xf]
    %v549 = vld [vmem:[#allocation4 + $0x104] sm:$0xf]
    %v550 = vld [vmem:[#allocation4 + $0x108] sm:$0xf]
    %v551 = vld [vmem:[#allocation4 + $0x10c] sm:$0xf]
    %v552 = vld [vmem:[#allocation4 + $0x110] sm:$0xf]
    %v553 = vld [vmem:[#allocation4 + $0x114] sm:$0xf]
    %v554 = vld [vmem:[#allocation4 + $0x118] sm:$0xf]
    %v555 = vld [vmem:[#allocation4 + $0x11c] sm:$0xf]
    %v556 = vld [vmem:[#allocation4 + $0x120] sm:$0xf]
    %v557 = vld [vmem:[#allocation4 + $0x124] sm:$0xf]
    %v558 = vld [vmem:[#allocation4 + $0x128] sm:$0xf]
    %v559 = vld [vmem:[#allocation4 + $0x12c] sm:$0xf]
    %v560 = vld [vmem:[#allocation4 + $0x130] sm:$0xf]
    %v561 = vld [vmem:[#allocation4 + $0x134] sm:$0xf]
    %v562 = vld [vmem:[#allocation4 + $0x138] sm:$0xf]
    %v563 = vld [vmem:[#allocation4 + $0x13c] sm:$0xf]
    %v564 = vld [vmem:[#allocation4 + $0x140] sm:$0xf]
    %v565 = vld [vmem:[#allocation4 + $0x144] sm:$0xf]
    %v566 = vld [vmem:[#allocation4 + $0x148] sm:$0xf]
    %v567 = vld [vmem:[#allocation4 + $0x14c] sm:$0xf]
    %v568 = vld [vmem:[#allocation4 + $0x150] sm:$0xf]
    %v569 = vld [vmem:[#allocation4 + $0x154] sm:$0xf]
    %v570 = vld [vmem:[#allocation4 + $0x158] sm:$0xf]
    %v571 = vld [vmem:[#allocation4 + $0x15c] sm:$0xf]
    %v572 = vld [vmem:[#allocation4 + $0x160] sm:$0xf]
    %v573 = vld [vmem:[#allocation4 + $0x164] sm:$0xf]
    %v574 = vld [vmem:[#allocation4 + $0x168] sm:$0xf]
    %v575 = vld [vmem:[#allocation4 + $0x16c] sm:$0xf]
    %v576 = vld [vmem:[#allocation4 + $0x170] sm:$0xf]
    %v577 = vld [vmem:[#allocation4 + $0x174] sm:$0xf]
    %v578 = vld [vmem:[#allocation4 + $0x178] sm:$0xf]
    %v579 = vld [vmem:[#allocation4 + $0x17c] sm:$0xf]
    %v580 = vld [vmem:[#allocation4 + $0x180] sm:$0xf]
    %v581 = vld [vmem:[#allocation4 + $0x184] sm:$0xf]
    %v582 = vld [vmem:[#allocation4 + $0x188] sm:$0xf]
    %v583 = vld [vmem:[#allocation4 + $0x18c] sm:$0xf]
    %v584 = vld [vmem:[#allocation4 + $0x190] sm:$0xf]
    %v585 = vld [vmem:[#allocation4 + $0x194] sm:$0xf]
    %v586 = vld [vmem:[#allocation4 + $0x198] sm:$0xf]
    %v587 = vld [vmem:[#allocation4 + $0x19c] sm:$0xf]
    %v588 = vld [vmem:[#allocation4 + $0x1a0] sm:$0xf]
    %v589 = vld [vmem:[#allocation4 + $0x1a4] sm:$0xf]
    %v590 = vld [vmem:[#allocation4 + $0x1a8] sm:$0xf]
    %v591 = vld [vmem:[#allocation4 + $0x1ac] sm:$0xf]
    %v592 = vld [vmem:[#allocation4 + $0x1b0] sm:$0xf]
    %v593 = vld [vmem:[#allocation4 + $0x1b4] sm:$0xf]
    %v594 = vld [vmem:[#allocation4 + $0x1b8] sm:$0xf]
    %v595 = vld [vmem:[#allocation4 + $0x1bc] sm:$0xf]
    %v596 = vld [vmem:[#allocation4 + $0x1c0] sm:$0xf]
    %v597 = vld [vmem:[#allocation4 + $0x1c4] sm:$0xf]
    %v598 = vld [vmem:[#allocation4 + $0x1c8] sm:$0xf]
    %v599 = vld [vmem:[#allocation4 + $0x1cc] sm:$0xf]
    %v600 = vld [vmem:[#allocation4 + $0x1d0] sm:$0xf]
    %v601 = vld [vmem:[#allocation4 + $0x1d4] sm:$0xf]
    %v602 = vld [vmem:[#allocation4 + $0x1d8] sm:$0xf]
    %v603 = vld [vmem:[#allocation4 + $0x1dc] sm:$0xf]
    %v604 = vld [vmem:[#allocation4 + $0x1e0] sm:$0xf]
    %v605 = vld [vmem:[#allocation4 + $0x1e4] sm:$0xf]
    %v606 = vld [vmem:[#allocation4 + $0x1e8] sm:$0xf]
    %v607 = vld [vmem:[#allocation4 + $0x1ec] sm:$0xf]
    %v608 = vld [vmem:[#allocation4 + $0x1f0] sm:$0xf]
    %v609 = vld [vmem:[#allocation4 + $0x1f4] sm:$0xf]
    %v610 = vld [vmem:[#allocation4 + $0x1f8] sm:$0xf]
    %v611 = vld [vmem:[#allocation4 + $0x1fc] sm:$0xf]
    %v612 = vld [vmem:[#allocation4 + $0x200] sm:$0xf]
    %v613 = vld [vmem:[#allocation4 + $0x204] sm:$0xf]
    %v614 = vld [vmem:[#allocation4 + $0x208] sm:$0xf]
    %v615 = vld [vmem:[#allocation4 + $0x20c] sm:$0xf]
    %v616 = vld [vmem:[#allocation4 + $0x210] sm:$0xf]
    %v617 = vld [vmem:[#allocation4 + $0x214] sm:$0xf]
    %v618 = vld [vmem:[#allocation4 + $0x218] sm:$0xf]
    %v619 = vld [vmem:[#allocation4 + $0x21c] sm:$0xf]
    %v620 = vld [vmem:[#allocation4 + $0x220] sm:$0xf]
    %v621 = vld [vmem:[#allocation4 + $0x224] sm:$0xf]
    %v622 = vld [vmem:[#allocation4 + $0x228] sm:$0xf]
    %v623 = vld [vmem:[#allocation4 + $0x22c] sm:$0xf]
    %v624 = vld [vmem:[#allocation4 + $0x230] sm:$0xf]
    %v625 = vld [vmem:[#allocation4 + $0x234] sm:$0xf]
    %v626 = vld [vmem:[#allocation4 + $0x238] sm:$0xf]
    %v627 = vld [vmem:[#allocation4 + $0x23c] sm:$0xf]
    %v628 = vld [vmem:[#allocation4 + $0x240] sm:$0xf]
    %v629 = vld [vmem:[#allocation4 + $0x244] sm:$0xf]
    %v630 = vld [vmem:[#allocation4 + $0x248] sm:$0xf]
    %v631 = vld [vmem:[#allocation4 + $0x24c] sm:$0xf]
    %v632 = vld [vmem:[#allocation4 + $0x250] sm:$0xf]
    %v633 = vld [vmem:[#allocation4 + $0x254] sm:$0xf]
    %v634 = vld [vmem:[#allocation4 + $0x258] sm:$0xf]
    %v635 = vld [vmem:[#allocation4 + $0x25c] sm:$0xf]
    %v636 = vld [vmem:[#allocation4 + $0x260] sm:$0xf]
    %v637 = vld [vmem:[#allocation4 + $0x264] sm:$0xf]
    %v638 = vld [vmem:[#allocation4 + $0x268] sm:$0xf]
    %v639 = vld [vmem:[#allocation4 + $0x26c] sm:$0xf]
    %v640 = vld [vmem:[#allocation4 + $0x270] sm:$0xf]
    %v641 = vld [vmem:[#allocation4 + $0x274] sm:$0xf]
    %v642 = vld [vmem:[#allocation4 + $0x278] sm:$0xf]
    %v643 = vld [vmem:[#allocation4 + $0x27c] sm:$0xf]
    %v644 = vld [vmem:[#allocation4 + $0x280] sm:$0xf]
    %v645 = vld [vmem:[#allocation4 + $0x284] sm:$0xf]
    %v646 = vld [vmem:[#allocation4 + $0x288] sm:$0xf]
    %v647 = vld [vmem:[#allocation4 + $0x28c] sm:$0xf]
    %v648 = vld [vmem:[#allocation4 + $0x290] sm:$0xf]
    %v649 = vld [vmem:[#allocation4 + $0x294] sm:$0xf]
    %v650 = vld [vmem:[#allocation4 + $0x298] sm:$0xf]
    %v651 = vld [vmem:[#allocation4 + $0x29c] sm:$0xf]
    %v652 = vld [vmem:[#allocation4 + $0x2a0] sm:$0xf]
    %v653 = vld [vmem:[#allocation4 + $0x2a4] sm:$0xf]
    %v654 = vld [vmem:[#allocation4 + $0x2a8] sm:$0xf]
    %v655 = vld [vmem:[#allocation4 + $0x2ac] sm:$0xf]
    %v656 = vld [vmem:[#allocation4 + $0x2b0] sm:$0xf]
    %v657 = vld [vmem:[#allocation4 + $0x2b4] sm:$0xf]
    %v658 = vld [vmem:[#allocation4 + $0x2b8] sm:$0xf]
    %v659 = vld [vmem:[#allocation4 + $0x2bc] sm:$0xf]
    %v660 = vld [vmem:[#allocation4 + $0x2c0] sm:$0xf]
    %v661 = vld [vmem:[#allocation4 + $0x2c4] sm:$0xf]
    %v662 = vld [vmem:[#allocation4 + $0x2c8] sm:$0xf]
    %v663 = vld [vmem:[#allocation4 + $0x2cc] sm:$0xf]
    %v664 = vld [vmem:[#allocation4 + $0x2d0] sm:$0xf]
    %v665 = vld [vmem:[#allocation4 + $0x2d4] sm:$0xf]
    %v666 = vld [vmem:[#allocation4 + $0x2d8] sm:$0xf]
    %v667 = vld [vmem:[#allocation4 + $0x2dc] sm:$0xf]
    %v668 = vld [vmem:[#allocation4 + $0x2e0] sm:$0xf]
    %v669 = vld [vmem:[#allocation4 + $0x2e4] sm:$0xf]
    %v670 = vld [vmem:[#allocation4 + $0x2e8] sm:$0xf]
    %v671 = vld [vmem:[#allocation4 + $0x2ec] sm:$0xf]
    %v672 = vld [vmem:[#allocation4 + $0x2f0] sm:$0xf]
    %v673 = vld [vmem:[#allocation4 + $0x2f4] sm:$0xf]
    %v674 = vld [vmem:[#allocation4 + $0x2f8] sm:$0xf]
    %v675 = vld [vmem:[#allocation4 + $0x2fc] sm:$0xf]
    %v676 = vld [vmem:[#allocation4 + $0x300] sm:$0xf]
    %v677 = vld [vmem:[#allocation4 + $0x304] sm:$0xf]
    %v678 = vld [vmem:[#allocation4 + $0x308] sm:$0xf]
    %v679 = vld [vmem:[#allocation4 + $0x30c] sm:$0xf]
    %v680 = vld [vmem:[#allocation4 + $0x310] sm:$0xf]
    %v681 = vld [vmem:[#allocation4 + $0x314] sm:$0xf]
    %v682 = vld [vmem:[#allocation4 + $0x318] sm:$0xf]
    %v683 = vld [vmem:[#allocation4 + $0x31c] sm:$0xf]
    %v684 = vld [vmem:[#allocation4 + $0x320] sm:$0xf]
    %v685 = vld [vmem:[#allocation4 + $0x324] sm:$0xf]
    %v686 = vld [vmem:[#allocation4 + $0x328] sm:$0xf]
    %v687 = vld [vmem:[#allocation4 + $0x32c] sm:$0xf]
    %v688 = vld [vmem:[#allocation4 + $0x330] sm:$0xf]
    %v689 = vld [vmem:[#allocation4 + $0x334] sm:$0xf]
    %v690 = vld [vmem:[#allocation4 + $0x338] sm:$0xf]
    %v691 = vld [vmem:[#allocation4 + $0x33c] sm:$0xf]
    %v692 = vld [vmem:[#allocation4 + $0x340] sm:$0xf]
    %v693 = vld [vmem:[#allocation4 + $0x344] sm:$0xf]
    %v694 = vld [vmem:[#allocation4 + $0x348] sm:$0xf]
    %v695 = vld [vmem:[#allocation4 + $0x34c] sm:$0xf]
    %v696 = vld [vmem:[#allocation4 + $0x350] sm:$0xf]
    %v697 = vld [vmem:[#allocation4 + $0x354] sm:$0xf]
    %v698 = vld [vmem:[#allocation4 + $0x358] sm:$0xf]
    %v699 = vld [vmem:[#allocation4 + $0x35c] sm:$0xf]
    %v700 = vld [vmem:[#allocation4 + $0x360] sm:$0xf]
    %v701 = vld [vmem:[#allocation4 + $0x364] sm:$0xf]
    %v702 = vld [vmem:[#allocation4 + $0x368] sm:$0xf]
    %v703 = vld [vmem:[#allocation4 + $0x36c] sm:$0xf]
    %v704 = vld [vmem:[#allocation4 + $0x370] sm:$0xf]
    %v705 = vld [vmem:[#allocation4 + $0x374] sm:$0xf]
    %v706 = vld [vmem:[#allocation4 + $0x378] sm:$0xf]
    %v707 = vld [vmem:[#allocation4 + $0x37c] sm:$0xf]
    %v708 = vld [vmem:[#allocation4 + $0x380] sm:$0xf]
    %v709 = vld [vmem:[#allocation4 + $0x384] sm:$0xf]
    %v710 = vld [vmem:[#allocation4 + $0x388] sm:$0xf]
    %v711 = vld [vmem:[#allocation4 + $0x38c] sm:$0xf]
    %v712 = vld [vmem:[#allocation4 + $0x390] sm:$0xf]
    %v713 = vld [vmem:[#allocation4 + $0x394] sm:$0xf]
    %v714 = vld [vmem:[#allocation4 + $0x398] sm:$0xf]
    %v715 = vld [vmem:[#allocation4 + $0x39c] sm:$0xf]
    %v716 = vld [vmem:[#allocation4 + $0x3a0] sm:$0xf]
    %v717 = vld [vmem:[#allocation4 + $0x3a4] sm:$0xf]
    %v718 = vld [vmem:[#allocation4 + $0x3a8] sm:$0xf]
    %v719 = vld [vmem:[#allocation4 + $0x3ac] sm:$0xf]
    %v720 = vld [vmem:[#allocation4 + $0x3b0] sm:$0xf]
    %v721 = vld [vmem:[#allocation4 + $0x3b4] sm:$0xf]
    %v722 = vld [vmem:[#allocation4 + $0x3b8] sm:$0xf]
    %v723 = vld [vmem:[#allocation4 + $0x3bc] sm:$0xf]
    %v724 = vld [vmem:[#allocation4 + $0x3c0] sm:$0xf]
    %v725 = vld [vmem:[#allocation4 + $0x3c4] sm:$0xf]
    %v726 = vld [vmem:[#allocation4 + $0x3c8] sm:$0xf]
    %v727 = vld [vmem:[#allocation4 + $0x3cc] sm:$0xf]
    %v728 = vld [vmem:[#allocation4 + $0x3d0] sm:$0xf]
    %v729 = vld [vmem:[#allocation4 + $0x3d4] sm:$0xf]
    %v730 = vld [vmem:[#allocation4 + $0x3d8] sm:$0xf]
    %v731 = vld [vmem:[#allocation4 + $0x3dc] sm:$0xf]
    %v732 = vld [vmem:[#allocation4 + $0x3e0] sm:$0xf]
    %v733 = vld [vmem:[#allocation4 + $0x3e4] sm:$0xf]
    %v734 = vld [vmem:[#allocation4 + $0x3e8] sm:$0xf]
    %v735 = vld [vmem:[#allocation4 + $0x3ec] sm:$0xf]
    %v736 = vld [vmem:[#allocation4 + $0x3f0] sm:$0xf]
    %v737 = vld [vmem:[#allocation4 + $0x3f4] sm:$0xf]
    %v738 = vld [vmem:[#allocation4 + $0x3f8] sm:$0xf]
    %v739 = vld [vmem:[#allocation4 + $0x3fc] sm:$0xf]
    %v740 = vld [vmem:[#allocation4 + $0x400] sm:$0xf]
    %v741 = vld [vmem:[#allocation4 + $0x404] sm:$0xf]
    %v742 = vld [vmem:[#allocation4 + $0x408] sm:$0xf]
    %v743 = vld [vmem:[#allocation4 + $0x40c] sm:$0xf]
    %v744 = vld [vmem:[#allocation4 + $0x410] sm:$0xf]
    %v745 = vld [vmem:[#allocation4 + $0x414] sm:$0xf]
    %v746 = vld [vmem:[#allocation4 + $0x418] sm:$0xf]
    %v747 = vld [vmem:[#allocation4 + $0x41c] sm:$0xf]
    %v756 = vunpack.c.l.b16 %v484
    %v757 = vunpack.c.l.b16 %v485
    %v758 = vunpack.c.l.b16 %v486
    %v759 = vunpack.c.l.b16 %v487
    %v760 = vunpack.c.l.b16 %v488
    %v761 = vunpack.c.l.b16 %v489
    %v762 = vunpack.c.l.b16 %v490
    %v763 = vunpack.c.l.b16 %v491
    %v764 = vpack.c.b16 %v757, %v756
    %v765 = vpack.c.b16 %v759, %v758
    %v766 = vpack.c.b16 %v761, %v760
    %v767 = vpack.c.b16 %v763, %v762
    %vm772 = vcmask 523264
    %v774 = vsel %vm772, %v88, 0
    %776 = vmatprep.subr.bf16.mxu0 0
    %777 = vmatpush1.bf16.msra.mxu0 0
    %778 = vmatprep.subr.bf16.mxu0 0
    %779 = vmatpush1.bf16.msra.mxu0 0
    %780 = vmatprep.subr.bf16.mxu0 0
    %781 = vmatpush1.bf16.msra.mxu0 0
    %782 = vmatprep.subr.bf16.mxu0 0
    %783 = vmatpush1.bf16.msra.mxu0 0
    %784 = vmatprep.subr.bf16.mxu0 0
    %785 = vmatpush1.bf16.msra.mxu0 %v767
    %786 = vmatprep.subr.bf16.mxu0 0
    %787 = vmatpush1.bf16.msra.mxu0 %v766
    %788 = vmatprep.subr.bf16.mxu0 0
    %789 = vmatpush1.bf16.msra.mxu0 %v765
    %790 = vmatprep.subr.bf16.mxu0 0
    %791 = vmatpush1.bf16.msra.mxu0 %v764
    %792 = vmatprep.subr.bf16.mxu0 0
    %793 = vmatpush2.bf16.msra.mxu0 0
    %794 = vmatprep.subr.bf16.mxu0 0
    %795 = vmatpush2.bf16.msra.mxu0 0
    %796 = vmatprep.subr.bf16.mxu0 0
    %797 = vmatpush2.bf16.msra.mxu0 0
    %798 = vmatprep.subr.bf16.mxu0 0
    %799 = vmatpush2.bf16.msra.mxu0 0
    %800 = vmatprep.subr.bf16.mxu0 0
    %801 = vmatpush2.bf16.msra.mxu0 0
    %802 = vmatprep.subr.bf16.mxu0 0
    %803 = vmatpush2.bf16.msra.mxu0 0
    %804 = vmatprep.subr.bf16.mxu0 0
    %805 = vmatpush2.bf16.msra.mxu0 0
    %806 = vmatprep.subr.bf16.mxu0 0
    %807 = vmatpush2.bf16.msra.mxu0 0
    %808 = vmatprep.mubr.bf16.mxu0 0
    %809 = vmatmul.mubr.bf16.gmra.mxu0 %v774
    %v810 = vpop.f32.mrf.mxu0
    %v811 = vadd.f32 0.0, %v810
    %v812 = vpop.f32.mrf.mxu0
    %v813 = vpop.f32.mrf.mxu0
    %v814 = vpop.f32.mrf.mxu0
    %815 = vdwg.mxu0
    %v824 = vunpack.c.l.b16 %v492
    %v825 = vunpack.c.l.b16 %v493
    %v826 = vunpack.c.l.b16 %v494
    %v827 = vunpack.c.l.b16 %v495
    %v828 = vunpack.c.l.b16 %v496
    %v829 = vunpack.c.l.b16 %v497
    %v830 = vunpack.c.l.b16 %v498
    %v831 = vunpack.c.l.b16 %v499
    %v832 = vpack.c.b16 %v825, %v824
    %v833 = vpack.c.b16 %v827, %v826
    %v834 = vpack.c.b16 %v829, %v828
    %v835 = vpack.c.b16 %v831, %v830
    %v841 = vsel %vm772, %v89, 0
    %843 = vmatprep.subr.bf16.mxu0 0
    %844 = vmatpush1.bf16.msra.mxu0 0
    %845 = vmatprep.subr.bf16.mxu0 0
    %846 = vmatpush1.bf16.msra.mxu0 0
    %847 = vmatprep.subr.bf16.mxu0 0
    %848 = vmatpush1.bf16.msra.mxu0 0
    %849 = vmatprep.subr.bf16.mxu0 0
    %850 = vmatpush1.bf16.msra.mxu0 0
    %851 = vmatprep.subr.bf16.mxu0 0
    %852 = vmatpush1.bf16.msra.mxu0 %v835
    %853 = vmatprep.subr.bf16.mxu0 0
    %854 = vmatpush1.bf16.msra.mxu0 %v834
    %855 = vmatprep.subr.bf16.mxu0 0
    %856 = vmatpush1.bf16.msra.mxu0 %v833
    %857 = vmatprep.subr.bf16.mxu0 0
    %858 = vmatpush1.bf16.msra.mxu0 %v832
    %859 = vmatprep.subr.bf16.mxu0 0
    %860 = vmatpush2.bf16.msra.mxu0 0
    %861 = vmatprep.subr.bf16.mxu0 0
    %862 = vmatpush2.bf16.msra.mxu0 0
    %863 = vmatprep.subr.bf16.mxu0 0
    %864 = vmatpush2.bf16.msra.mxu0 0
    %865 = vmatprep.subr.bf16.mxu0 0
    %866 = vmatpush2.bf16.msra.mxu0 0
    %867 = vmatprep.subr.bf16.mxu0 0
    %868 = vmatpush2.bf16.msra.mxu0 0
    %869 = vmatprep.subr.bf16.mxu0 0
    %870 = vmatpush2.bf16.msra.mxu0 0
    %871 = vmatprep.subr.bf16.mxu0 0
    %872 = vmatpush2.bf16.msra.mxu0 0
    %873 = vmatprep.subr.bf16.mxu0 0
    %874 = vmatpush2.bf16.msra.mxu0 0
    %875 = vmatprep.mubr.bf16.mxu0 0
    %876 = vmatmul.mubr.bf16.gmra.mxu0 %v841
    %v877 = vpop.f32.mrf.mxu0
    %v878 = vadd.f32 0.0, %v877
    %v879 = vpop.f32.mrf.mxu0
    %v880 = vpop.f32.mrf.mxu0
    %v881 = vpop.f32.mrf.mxu0
    %882 = vdwg.mxu0
    %v891 = vunpack.c.l.b16 %v500
    %v892 = vunpack.c.l.b16 %v501
    %v893 = vunpack.c.l.b16 %v502
    %v894 = vunpack.c.l.b16 %v503
    %v895 = vunpack.c.l.b16 %v504
    %v896 = vunpack.c.l.b16 %v505
    %v897 = vunpack.c.l.b16 %v506
    %v898 = vunpack.c.l.b16 %v507
    %v899 = vpack.c.b16 %v892, %v891
    %v900 = vpack.c.b16 %v894, %v893
    %v901 = vpack.c.b16 %v896, %v895
    %v902 = vpack.c.b16 %v898, %v897
    %v908 = vsel %vm772, %v90, 0
    %910 = vmatprep.subr.bf16.mxu0 0
    %911 = vmatpush1.bf16.msra.mxu0 0
    %912 = vmatprep.subr.bf16.mxu0 0
    %913 = vmatpush1.bf16.msra.mxu0 0
    %914 = vmatprep.subr.bf16.mxu0 0
    %915 = vmatpush1.bf16.msra.mxu0 0
    %916 = vmatprep.subr.bf16.mxu0 0
    %917 = vmatpush1.bf16.msra.mxu0 0
    %918 = vmatprep.subr.bf16.mxu0 0
    %919 = vmatpush1.bf16.msra.mxu0 %v902
    %920 = vmatprep.subr.bf16.mxu0 0
    %921 = vmatpush1.bf16.msra.mxu0 %v901
    %922 = vmatprep.subr.bf16.mxu0 0
    %923 = vmatpush1.bf16.msra.mxu0 %v900
    %924 = vmatprep.subr.bf16.mxu0 0
    %925 = vmatpush1.bf16.msra.mxu0 %v899
    %926 = vmatprep.subr.bf16.mxu0 0
    %927 = vmatpush2.bf16.msra.mxu0 0
    %928 = vmatprep.subr.bf16.mxu0 0
    %929 = vmatpush2.bf16.msra.mxu0 0
    %930 = vmatprep.subr.bf16.mxu0 0
    %931 = vmatpush2.bf16.msra.mxu0 0
    %932 = vmatprep.subr.bf16.mxu0 0
    %933 = vmatpush2.bf16.msra.mxu0 0
    %934 = vmatprep.subr.bf16.mxu0 0
    %935 = vmatpush2.bf16.msra.mxu0 0
    %936 = vmatprep.subr.bf16.mxu0 0
    %937 = vmatpush2.bf16.msra.mxu0 0
    %938 = vmatprep.subr.bf16.mxu0 0
    %939 = vmatpush2.bf16.msra.mxu0 0
    %940 = vmatprep.subr.bf16.mxu0 0
    %941 = vmatpush2.bf16.msra.mxu0 0
    %942 = vmatprep.mubr.bf16.mxu0 0
    %943 = vmatmul.mubr.bf16.gmra.mxu0 %v908
    %v944 = vpop.f32.mrf.mxu0
    %v945 = vadd.f32 0.0, %v944
    %v946 = vpop.f32.mrf.mxu0
    %v947 = vpop.f32.mrf.mxu0
    %v948 = vpop.f32.mrf.mxu0
    %949 = vdwg.mxu0
    %v958 = vunpack.c.l.b16 %v508
    %v959 = vunpack.c.l.b16 %v509
    %v960 = vunpack.c.l.b16 %v510
    %v961 = vunpack.c.l.b16 %v511
    %v962 = vunpack.c.l.b16 %v512
    %v963 = vunpack.c.l.b16 %v513
    %v964 = vunpack.c.l.b16 %v514
    %v965 = vunpack.c.l.b16 %v515
    %v966 = vpack.c.b16 %v959, %v958
    %v967 = vpack.c.b16 %v961, %v960
    %v968 = vpack.c.b16 %v963, %v962
    %v969 = vpack.c.b16 %v965, %v964
    %v975 = vsel %vm772, %v91, 0
    %977 = vmatprep.subr.bf16.mxu0 0
    %978 = vmatpush1.bf16.msra.mxu0 0
    %979 = vmatprep.subr.bf16.mxu0 0
    %980 = vmatpush1.bf16.msra.mxu0 0
    %981 = vmatprep.subr.bf16.mxu0 0
    %982 = vmatpush1.bf16.msra.mxu0 0
    %983 = vmatprep.subr.bf16.mxu0 0
    %984 = vmatpush1.bf16.msra.mxu0 0
    %985 = vmatprep.subr.bf16.mxu0 0
    %986 = vmatpush1.bf16.msra.mxu0 %v969
    %987 = vmatprep.subr.bf16.mxu0 0
    %988 = vmatpush1.bf16.msra.mxu0 %v968
    %989 = vmatprep.subr.bf16.mxu0 0
    %990 = vmatpush1.bf16.msra.mxu0 %v967
    %991 = vmatprep.subr.bf16.mxu0 0
    %992 = vmatpush1.bf16.msra.mxu0 %v966
    %993 = vmatprep.subr.bf16.mxu0 0
    %994 = vmatpush2.bf16.msra.mxu0 0
    %995 = vmatprep.subr.bf16.mxu0 0
    %996 = vmatpush2.bf16.msra.mxu0 0
    %997 = vmatprep.subr.bf16.mxu0 0
    %998 = vmatpush2.bf16.msra.mxu0 0
    %999 = vmatprep.subr.bf16.mxu0 0
    %1000 = vmatpush2.bf16.msra.mxu0 0
    %1001 = vmatprep.subr.bf16.mxu0 0
    %1002 = vmatpush2.bf16.msra.mxu0 0
    %1003 = vmatprep.subr.bf16.mxu0 0
    %1004 = vmatpush2.bf16.msra.mxu0 0
    %1005 = vmatprep.subr.bf16.mxu0 0
    %1006 = vmatpush2.bf16.msra.mxu0 0
    %1007 = vmatprep.subr.bf16.mxu0 0
    %1008 = vmatpush2.bf16.msra.mxu0 0
    %1009 = vmatprep.mubr.bf16.mxu0 0
    %1010 = vmatmul.mubr.bf16.gmra.mxu0 %v975
    %v1011 = vpop.f32.mrf.mxu0
    %v1012 = vadd.f32 0.0, %v1011
    %v1013 = vpop.f32.mrf.mxu0
    %v1014 = vpop.f32.mrf.mxu0
    %v1015 = vpop.f32.mrf.mxu0
    %1016 = vdwg.mxu0
    %v1025 = vunpack.c.l.b16 %v516
    %v1026 = vunpack.c.l.b16 %v517
    %v1027 = vunpack.c.l.b16 %v518
    %v1028 = vunpack.c.l.b16 %v519
    %v1029 = vunpack.c.l.b16 %v520
    %v1030 = vunpack.c.l.b16 %v521
    %v1031 = vunpack.c.l.b16 %v522
    %v1032 = vunpack.c.l.b16 %v523
    %v1033 = vpack.c.b16 %v1026, %v1025
    %v1034 = vpack.c.b16 %v1028, %v1027
    %v1035 = vpack.c.b16 %v1030, %v1029
    %v1036 = vpack.c.b16 %v1032, %v1031
    %v1042 = vsel %vm772, %v92, 0
    %1044 = vmatprep.subr.bf16.mxu0 0
    %1045 = vmatpush1.bf16.msra.mxu0 0
    %1046 = vmatprep.subr.bf16.mxu0 0
    %1047 = vmatpush1.bf16.msra.mxu0 0
    %1048 = vmatprep.subr.bf16.mxu0 0
    %1049 = vmatpush1.bf16.msra.mxu0 0
    %1050 = vmatprep.subr.bf16.mxu0 0
    %1051 = vmatpush1.bf16.msra.mxu0 0
    %1052 = vmatprep.subr.bf16.mxu0 0
    %1053 = vmatpush1.bf16.msra.mxu0 %v1036
    %1054 = vmatprep.subr.bf16.mxu0 0
    %1055 = vmatpush1.bf16.msra.mxu0 %v1035
    %1056 = vmatprep.subr.bf16.mxu0 0
    %1057 = vmatpush1.bf16.msra.mxu0 %v1034
    %1058 = vmatprep.subr.bf16.mxu0 0
    %1059 = vmatpush1.bf16.msra.mxu0 %v1033
    %1060 = vmatprep.subr.bf16.mxu0 0
    %1061 = vmatpush2.bf16.msra.mxu0 0
    %1062 = vmatprep.subr.bf16.mxu0 0
    %1063 = vmatpush2.bf16.msra.mxu0 0
    %1064 = vmatprep.subr.bf16.mxu0 0
    %1065 = vmatpush2.bf16.msra.mxu0 0
    %1066 = vmatprep.subr.bf16.mxu0 0
    %1067 = vmatpush2.bf16.msra.mxu0 0
    %1068 = vmatprep.subr.bf16.mxu0 0
    %1069 = vmatpush2.bf16.msra.mxu0 0
    %1070 = vmatprep.subr.bf16.mxu0 0
    %1071 = vmatpush2.bf16.msra.mxu0 0
    %1072 = vmatprep.subr.bf16.mxu0 0
    %1073 = vmatpush2.bf16.msra.mxu0 0
    %1074 = vmatprep.subr.bf16.mxu0 0
    %1075 = vmatpush2.bf16.msra.mxu0 0
    %1076 = vmatprep.mubr.bf16.mxu0 0
    %1077 = vmatmul.mubr.bf16.gmra.mxu0 %v1042
    %v1078 = vpop.f32.mrf.mxu0
    %v1079 = vadd.f32 0.0, %v1078
    %v1080 = vpop.f32.mrf.mxu0
    %v1081 = vpop.f32.mrf.mxu0
    %v1082 = vpop.f32.mrf.mxu0
    %1083 = vdwg.mxu0
    %v1092 = vunpack.c.l.b16 %v524
    %v1093 = vunpack.c.l.b16 %v525
    %v1094 = vunpack.c.l.b16 %v526
    %v1095 = vunpack.c.l.b16 %v527
    %v1096 = vunpack.c.l.b16 %v528
    %v1097 = vunpack.c.l.b16 %v529
    %v1098 = vunpack.c.l.b16 %v530
    %v1099 = vunpack.c.l.b16 %v531
    %v1100 = vpack.c.b16 %v1093, %v1092
    %v1101 = vpack.c.b16 %v1095, %v1094
    %v1102 = vpack.c.b16 %v1097, %v1096
    %v1103 = vpack.c.b16 %v1099, %v1098
    %v1109 = vsel %vm772, %v93, 0
    %1111 = vmatprep.subr.bf16.mxu0 0
    %1112 = vmatpush1.bf16.msra.mxu0 0
    %1113 = vmatprep.subr.bf16.mxu0 0
    %1114 = vmatpush1.bf16.msra.mxu0 0
    %1115 = vmatprep.subr.bf16.mxu0 0
    %1116 = vmatpush1.bf16.msra.mxu0 0
    %1117 = vmatprep.subr.bf16.mxu0 0
    %1118 = vmatpush1.bf16.msra.mxu0 0
    %1119 = vmatprep.subr.bf16.mxu0 0
    %1120 = vmatpush1.bf16.msra.mxu0 %v1103
    %1121 = vmatprep.subr.bf16.mxu0 0
    %1122 = vmatpush1.bf16.msra.mxu0 %v1102
    %1123 = vmatprep.subr.bf16.mxu0 0
    %1124 = vmatpush1.bf16.msra.mxu0 %v1101
    %1125 = vmatprep.subr.bf16.mxu0 0
    %1126 = vmatpush1.bf16.msra.mxu0 %v1100
    %1127 = vmatprep.subr.bf16.mxu0 0
    %1128 = vmatpush2.bf16.msra.mxu0 0
    %1129 = vmatprep.subr.bf16.mxu0 0
    %1130 = vmatpush2.bf16.msra.mxu0 0
    %1131 = vmatprep.subr.bf16.mxu0 0
    %1132 = vmatpush2.bf16.msra.mxu0 0
    %1133 = vmatprep.subr.bf16.mxu0 0
    %1134 = vmatpush2.bf16.msra.mxu0 0
    %1135 = vmatprep.subr.bf16.mxu0 0
    %1136 = vmatpush2.bf16.msra.mxu0 0
    %1137 = vmatprep.subr.bf16.mxu0 0
    %1138 = vmatpush2.bf16.msra.mxu0 0
    %1139 = vmatprep.subr.bf16.mxu0 0
    %1140 = vmatpush2.bf16.msra.mxu0 0
    %1141 = vmatprep.subr.bf16.mxu0 0
    %1142 = vmatpush2.bf16.msra.mxu0 0
    %1143 = vmatprep.mubr.bf16.mxu0 0
    %1144 = vmatmul.mubr.bf16.gmra.mxu0 %v1109
    %v1145 = vpop.f32.mrf.mxu0
    %v1146 = vadd.f32 0.0, %v1145
    %v1147 = vpop.f32.mrf.mxu0
    %v1148 = vpop.f32.mrf.mxu0
    %v1149 = vpop.f32.mrf.mxu0
    %1150 = vdwg.mxu0
    %v1159 = vunpack.c.l.b16 %v532
    %v1160 = vunpack.c.l.b16 %v533
    %v1161 = vunpack.c.l.b16 %v534
    %v1162 = vunpack.c.l.b16 %v535
    %v1163 = vunpack.c.l.b16 %v536
    %v1164 = vunpack.c.l.b16 %v537
    %v1165 = vunpack.c.l.b16 %v538
    %v1166 = vunpack.c.l.b16 %v539
    %v1167 = vpack.c.b16 %v1160, %v1159
    %v1168 = vpack.c.b16 %v1162, %v1161
    %v1169 = vpack.c.b16 %v1164, %v1163
    %v1170 = vpack.c.b16 %v1166, %v1165
    %v1176 = vsel %vm772, %v94, 0
    %1178 = vmatprep.subr.bf16.mxu0 0
    %1179 = vmatpush1.bf16.msra.mxu0 0
    %1180 = vmatprep.subr.bf16.mxu0 0
    %1181 = vmatpush1.bf16.msra.mxu0 0
    %1182 = vmatprep.subr.bf16.mxu0 0
    %1183 = vmatpush1.bf16.msra.mxu0 0
    %1184 = vmatprep.subr.bf16.mxu0 0
    %1185 = vmatpush1.bf16.msra.mxu0 0
    %1186 = vmatprep.subr.bf16.mxu0 0
    %1187 = vmatpush1.bf16.msra.mxu0 %v1170
    %1188 = vmatprep.subr.bf16.mxu0 0
    %1189 = vmatpush1.bf16.msra.mxu0 %v1169
    %1190 = vmatprep.subr.bf16.mxu0 0
    %1191 = vmatpush1.bf16.msra.mxu0 %v1168
    %1192 = vmatprep.subr.bf16.mxu0 0
    %1193 = vmatpush1.bf16.msra.mxu0 %v1167
    %1194 = vmatprep.subr.bf16.mxu0 0
    %1195 = vmatpush2.bf16.msra.mxu0 0
    %1196 = vmatprep.subr.bf16.mxu0 0
    %1197 = vmatpush2.bf16.msra.mxu0 0
    %1198 = vmatprep.subr.bf16.mxu0 0
    %1199 = vmatpush2.bf16.msra.mxu0 0
    %1200 = vmatprep.subr.bf16.mxu0 0
    %1201 = vmatpush2.bf16.msra.mxu0 0
    %1202 = vmatprep.subr.bf16.mxu0 0
    %1203 = vmatpush2.bf16.msra.mxu0 0
    %1204 = vmatprep.subr.bf16.mxu0 0
    %1205 = vmatpush2.bf16.msra.mxu0 0
    %1206 = vmatprep.subr.bf16.mxu0 0
    %1207 = vmatpush2.bf16.msra.mxu0 0
    %1208 = vmatprep.subr.bf16.mxu0 0
    %1209 = vmatpush2.bf16.msra.mxu0 0
    %1210 = vmatprep.mubr.bf16.mxu0 0
    %1211 = vmatmul.mubr.bf16.gmra.mxu0 %v1176
    %v1212 = vpop.f32.mrf.mxu0
    %v1213 = vadd.f32 0.0, %v1212
    %v1214 = vpop.f32.mrf.mxu0
    %v1215 = vpop.f32.mrf.mxu0
    %v1216 = vpop.f32.mrf.mxu0
    %1217 = vdwg.mxu0
    %v1226 = vunpack.c.l.b16 %v540
    %v1227 = vunpack.c.l.b16 %v541
    %v1228 = vunpack.c.l.b16 %v542
    %v1229 = vunpack.c.l.b16 %v543
    %v1230 = vunpack.c.l.b16 %v544
    %v1231 = vunpack.c.l.b16 %v545
    %v1232 = vunpack.c.l.b16 %v546
    %v1233 = vunpack.c.l.b16 %v547
    %v1234 = vpack.c.b16 %v1227, %v1226
    %v1235 = vpack.c.b16 %v1229, %v1228
    %v1236 = vpack.c.b16 %v1231, %v1230
    %v1237 = vpack.c.b16 %v1233, %v1232
    %v1243 = vsel %vm772, %v95, 0
    %1245 = vmatprep.subr.bf16.mxu0 0
    %1246 = vmatpush1.bf16.msra.mxu0 0
    %1247 = vmatprep.subr.bf16.mxu0 0
    %1248 = vmatpush1.bf16.msra.mxu0 0
    %1249 = vmatprep.subr.bf16.mxu0 0
    %1250 = vmatpush1.bf16.msra.mxu0 0
    %1251 = vmatprep.subr.bf16.mxu0 0
    %1252 = vmatpush1.bf16.msra.mxu0 0
    %1253 = vmatprep.subr.bf16.mxu0 0
    %1254 = vmatpush1.bf16.msra.mxu0 %v1237
    %1255 = vmatprep.subr.bf16.mxu0 0
    %1256 = vmatpush1.bf16.msra.mxu0 %v1236
    %1257 = vmatprep.subr.bf16.mxu0 0
    %1258 = vmatpush1.bf16.msra.mxu0 %v1235
    %1259 = vmatprep.subr.bf16.mxu0 0
    %1260 = vmatpush1.bf16.msra.mxu0 %v1234
    %1261 = vmatprep.subr.bf16.mxu0 0
    %1262 = vmatpush2.bf16.msra.mxu0 0
    %1263 = vmatprep.subr.bf16.mxu0 0
    %1264 = vmatpush2.bf16.msra.mxu0 0
    %1265 = vmatprep.subr.bf16.mxu0 0
    %1266 = vmatpush2.bf16.msra.mxu0 0
    %1267 = vmatprep.subr.bf16.mxu0 0
    %1268 = vmatpush2.bf16.msra.mxu0 0
    %1269 = vmatprep.subr.bf16.mxu0 0
    %1270 = vmatpush2.bf16.msra.mxu0 0
    %1271 = vmatprep.subr.bf16.mxu0 0
    %1272 = vmatpush2.bf16.msra.mxu0 0
    %1273 = vmatprep.subr.bf16.mxu0 0
    %1274 = vmatpush2.bf16.msra.mxu0 0
    %1275 = vmatprep.subr.bf16.mxu0 0
    %1276 = vmatpush2.bf16.msra.mxu0 0
    %1277 = vmatprep.mubr.bf16.mxu0 0
    %1278 = vmatmul.mubr.bf16.gmra.mxu0 %v1243
    %v1279 = vpop.f32.mrf.mxu0
    %v1280 = vadd.f32 0.0, %v1279
    %v1281 = vpop.f32.mrf.mxu0
    %v1282 = vpop.f32.mrf.mxu0
    %v1283 = vpop.f32.mrf.mxu0
    %1284 = vdwg.mxu0
    %v1293 = vunpack.c.l.b16 %v548
    %v1294 = vunpack.c.l.b16 %v549
    %v1295 = vunpack.c.l.b16 %v550
    %v1296 = vunpack.c.l.b16 %v551
    %v1297 = vunpack.c.l.b16 %v552
    %v1298 = vunpack.c.l.b16 %v553
    %v1299 = vunpack.c.l.b16 %v554
    %v1300 = vunpack.c.l.b16 %v555
    %v1301 = vpack.c.b16 %v1294, %v1293
    %v1302 = vpack.c.b16 %v1296, %v1295
    %v1303 = vpack.c.b16 %v1298, %v1297
    %v1304 = vpack.c.b16 %v1300, %v1299
    %v1310 = vsel %vm772, %v96, 0
    %1312 = vmatprep.subr.bf16.mxu0 0
    %1313 = vmatpush1.bf16.msra.mxu0 0
    %1314 = vmatprep.subr.bf16.mxu0 0
    %1315 = vmatpush1.bf16.msra.mxu0 0
    %1316 = vmatprep.subr.bf16.mxu0 0
    %1317 = vmatpush1.bf16.msra.mxu0 0
    %1318 = vmatprep.subr.bf16.mxu0 0
    %1319 = vmatpush1.bf16.msra.mxu0 0
    %1320 = vmatprep.subr.bf16.mxu0 0
    %1321 = vmatpush1.bf16.msra.mxu0 %v1304
    %1322 = vmatprep.subr.bf16.mxu0 0
    %1323 = vmatpush1.bf16.msra.mxu0 %v1303
    %1324 = vmatprep.subr.bf16.mxu0 0
    %1325 = vmatpush1.bf16.msra.mxu0 %v1302
    %1326 = vmatprep.subr.bf16.mxu0 0
    %1327 = vmatpush1.bf16.msra.mxu0 %v1301
    %1328 = vmatprep.subr.bf16.mxu0 0
    %1329 = vmatpush2.bf16.msra.mxu0 0
    %1330 = vmatprep.subr.bf16.mxu0 0
    %1331 = vmatpush2.bf16.msra.mxu0 0
    %1332 = vmatprep.subr.bf16.mxu0 0
    %1333 = vmatpush2.bf16.msra.mxu0 0
    %1334 = vmatprep.subr.bf16.mxu0 0
    %1335 = vmatpush2.bf16.msra.mxu0 0
    %1336 = vmatprep.subr.bf16.mxu0 0
    %1337 = vmatpush2.bf16.msra.mxu0 0
    %1338 = vmatprep.subr.bf16.mxu0 0
    %1339 = vmatpush2.bf16.msra.mxu0 0
    %1340 = vmatprep.subr.bf16.mxu0 0
    %1341 = vmatpush2.bf16.msra.mxu0 0
    %1342 = vmatprep.subr.bf16.mxu0 0
    %1343 = vmatpush2.bf16.msra.mxu0 0
    %1344 = vmatprep.mubr.bf16.mxu0 0
    %1345 = vmatmul.mubr.bf16.gmra.mxu0 %v1310
    %v1346 = vpop.f32.mrf.mxu0
    %v1347 = vadd.f32 0.0, %v1346
    %v1348 = vpop.f32.mrf.mxu0
    %v1349 = vpop.f32.mrf.mxu0
    %v1350 = vpop.f32.mrf.mxu0
    %1351 = vdwg.mxu0
    %v1360 = vunpack.c.l.b16 %v556
    %v1361 = vunpack.c.l.b16 %v557
    %v1362 = vunpack.c.l.b16 %v558
    %v1363 = vunpack.c.l.b16 %v559
    %v1364 = vunpack.c.l.b16 %v560
    %v1365 = vunpack.c.l.b16 %v561
    %v1366 = vunpack.c.l.b16 %v562
    %v1367 = vunpack.c.l.b16 %v563
    %v1368 = vpack.c.b16 %v1361, %v1360
    %v1369 = vpack.c.b16 %v1363, %v1362
    %v1370 = vpack.c.b16 %v1365, %v1364
    %v1371 = vpack.c.b16 %v1367, %v1366
    %v1377 = vsel %vm772, %v97, 0
    %1379 = vmatprep.subr.bf16.mxu0 0
    %1380 = vmatpush1.bf16.msra.mxu0 0
    %1381 = vmatprep.subr.bf16.mxu0 0
    %1382 = vmatpush1.bf16.msra.mxu0 0
    %1383 = vmatprep.subr.bf16.mxu0 0
    %1384 = vmatpush1.bf16.msra.mxu0 0
    %1385 = vmatprep.subr.bf16.mxu0 0
    %1386 = vmatpush1.bf16.msra.mxu0 0
    %1387 = vmatprep.subr.bf16.mxu0 0
    %1388 = vmatpush1.bf16.msra.mxu0 %v1371
    %1389 = vmatprep.subr.bf16.mxu0 0
    %1390 = vmatpush1.bf16.msra.mxu0 %v1370
    %1391 = vmatprep.subr.bf16.mxu0 0
    %1392 = vmatpush1.bf16.msra.mxu0 %v1369
    %1393 = vmatprep.subr.bf16.mxu0 0
    %1394 = vmatpush1.bf16.msra.mxu0 %v1368
    %1395 = vmatprep.subr.bf16.mxu0 0
    %1396 = vmatpush2.bf16.msra.mxu0 0
    %1397 = vmatprep.subr.bf16.mxu0 0
    %1398 = vmatpush2.bf16.msra.mxu0 0
    %1399 = vmatprep.subr.bf16.mxu0 0
    %1400 = vmatpush2.bf16.msra.mxu0 0
    %1401 = vmatprep.subr.bf16.mxu0 0
    %1402 = vmatpush2.bf16.msra.mxu0 0
    %1403 = vmatprep.subr.bf16.mxu0 0
    %1404 = vmatpush2.bf16.msra.mxu0 0
    %1405 = vmatprep.subr.bf16.mxu0 0
    %1406 = vmatpush2.bf16.msra.mxu0 0
    %1407 = vmatprep.subr.bf16.mxu0 0
    %1408 = vmatpush2.bf16.msra.mxu0 0
    %1409 = vmatprep.subr.bf16.mxu0 0
    %1410 = vmatpush2.bf16.msra.mxu0 0
    %1411 = vmatprep.mubr.bf16.mxu0 0
    %1412 = vmatmul.mubr.bf16.gmra.mxu0 %v1377
    %v1413 = vpop.f32.mrf.mxu0
    %v1414 = vadd.f32 0.0, %v1413
    %v1415 = vpop.f32.mrf.mxu0
    %v1416 = vpop.f32.mrf.mxu0
    %v1417 = vpop.f32.mrf.mxu0
    %1418 = vdwg.mxu0
    %v1427 = vunpack.c.l.b16 %v564
    %v1428 = vunpack.c.l.b16 %v565
    %v1429 = vunpack.c.l.b16 %v566
    %v1430 = vunpack.c.l.b16 %v567
    %v1431 = vunpack.c.l.b16 %v568
    %v1432 = vunpack.c.l.b16 %v569
    %v1433 = vunpack.c.l.b16 %v570
    %v1434 = vunpack.c.l.b16 %v571
    %v1435 = vpack.c.b16 %v1428, %v1427
    %v1436 = vpack.c.b16 %v1430, %v1429
    %v1437 = vpack.c.b16 %v1432, %v1431
    %v1438 = vpack.c.b16 %v1434, %v1433
    %v1444 = vsel %vm772, %v98, 0
    %1446 = vmatprep.subr.bf16.mxu0 0
    %1447 = vmatpush1.bf16.msra.mxu0 0
    %1448 = vmatprep.subr.bf16.mxu0 0
    %1449 = vmatpush1.bf16.msra.mxu0 0
    %1450 = vmatprep.subr.bf16.mxu0 0
    %1451 = vmatpush1.bf16.msra.mxu0 0
    %1452 = vmatprep.subr.bf16.mxu0 0
    %1453 = vmatpush1.bf16.msra.mxu0 0
    %1454 = vmatprep.subr.bf16.mxu0 0
    %1455 = vmatpush1.bf16.msra.mxu0 %v1438
    %1456 = vmatprep.subr.bf16.mxu0 0
    %1457 = vmatpush1.bf16.msra.mxu0 %v1437
    %1458 = vmatprep.subr.bf16.mxu0 0
    %1459 = vmatpush1.bf16.msra.mxu0 %v1436
    %1460 = vmatprep.subr.bf16.mxu0 0
    %1461 = vmatpush1.bf16.msra.mxu0 %v1435
    %1462 = vmatprep.subr.bf16.mxu0 0
    %1463 = vmatpush2.bf16.msra.mxu0 0
    %1464 = vmatprep.subr.bf16.mxu0 0
    %1465 = vmatpush2.bf16.msra.mxu0 0
    %1466 = vmatprep.subr.bf16.mxu0 0
    %1467 = vmatpush2.bf16.msra.mxu0 0
    %1468 = vmatprep.subr.bf16.mxu0 0
    %1469 = vmatpush2.bf16.msra.mxu0 0
    %1470 = vmatprep.subr.bf16.mxu0 0
    %1471 = vmatpush2.bf16.msra.mxu0 0
    %1472 = vmatprep.subr.bf16.mxu0 0
    %1473 = vmatpush2.bf16.msra.mxu0 0
    %1474 = vmatprep.subr.bf16.mxu0 0
    %1475 = vmatpush2.bf16.msra.mxu0 0
    %1476 = vmatprep.subr.bf16.mxu0 0
    %1477 = vmatpush2.bf16.msra.mxu0 0
    %1478 = vmatprep.mubr.bf16.mxu0 0
    %1479 = vmatmul.mubr.bf16.gmra.mxu0 %v1444
    %v1480 = vpop.f32.mrf.mxu0
    %v1481 = vadd.f32 0.0, %v1480
    %v1482 = vpop.f32.mrf.mxu0
    %v1483 = vpop.f32.mrf.mxu0
    %v1484 = vpop.f32.mrf.mxu0
    %1485 = vdwg.mxu0
    %v1494 = vunpack.c.l.b16 %v572
    %v1495 = vunpack.c.l.b16 %v573
    %v1496 = vunpack.c.l.b16 %v574
    %v1497 = vunpack.c.l.b16 %v575
    %v1498 = vunpack.c.l.b16 %v576
    %v1499 = vunpack.c.l.b16 %v577
    %v1500 = vunpack.c.l.b16 %v578
    %v1501 = vunpack.c.l.b16 %v579
    %v1502 = vpack.c.b16 %v1495, %v1494
    %v1503 = vpack.c.b16 %v1497, %v1496
    %v1504 = vpack.c.b16 %v1499, %v1498
    %v1505 = vpack.c.b16 %v1501, %v1500
    %v1511 = vsel %vm772, %v99, 0
    %1513 = vmatprep.subr.bf16.mxu0 0
    %1514 = vmatpush1.bf16.msra.mxu0 0
    %1515 = vmatprep.subr.bf16.mxu0 0
    %1516 = vmatpush1.bf16.msra.mxu0 0
    %1517 = vmatprep.subr.bf16.mxu0 0
    %1518 = vmatpush1.bf16.msra.mxu0 0
    %1519 = vmatprep.subr.bf16.mxu0 0
    %1520 = vmatpush1.bf16.msra.mxu0 0
    %1521 = vmatprep.subr.bf16.mxu0 0
    %1522 = vmatpush1.bf16.msra.mxu0 %v1505
    %1523 = vmatprep.subr.bf16.mxu0 0
    %1524 = vmatpush1.bf16.msra.mxu0 %v1504
    %1525 = vmatprep.subr.bf16.mxu0 0
    %1526 = vmatpush1.bf16.msra.mxu0 %v1503
    %1527 = vmatprep.subr.bf16.mxu0 0
    %1528 = vmatpush1.bf16.msra.mxu0 %v1502
    %1529 = vmatprep.subr.bf16.mxu0 0
    %1530 = vmatpush2.bf16.msra.mxu0 0
    %1531 = vmatprep.subr.bf16.mxu0 0
    %1532 = vmatpush2.bf16.msra.mxu0 0
    %1533 = vmatprep.subr.bf16.mxu0 0
    %1534 = vmatpush2.bf16.msra.mxu0 0
    %1535 = vmatprep.subr.bf16.mxu0 0
    %1536 = vmatpush2.bf16.msra.mxu0 0
    %1537 = vmatprep.subr.bf16.mxu0 0
    %1538 = vmatpush2.bf16.msra.mxu0 0
    %1539 = vmatprep.subr.bf16.mxu0 0
    %1540 = vmatpush2.bf16.msra.mxu0 0
    %1541 = vmatprep.subr.bf16.mxu0 0
    %1542 = vmatpush2.bf16.msra.mxu0 0
    %1543 = vmatprep.subr.bf16.mxu0 0
    %1544 = vmatpush2.bf16.msra.mxu0 0
    %1545 = vmatprep.mubr.bf16.mxu0 0
    %1546 = vmatmul.mubr.bf16.gmra.mxu0 %v1511
    %v1547 = vpop.f32.mrf.mxu0
    %v1548 = vadd.f32 0.0, %v1547
    %v1549 = vpop.f32.mrf.mxu0
    %v1550 = vpop.f32.mrf.mxu0
    %v1551 = vpop.f32.mrf.mxu0
    %1552 = vdwg.mxu0
    %v1561 = vunpack.c.l.b16 %v580
    %v1562 = vunpack.c.l.b16 %v581
    %v1563 = vunpack.c.l.b16 %v582
    %v1564 = vunpack.c.l.b16 %v583
    %v1565 = vunpack.c.l.b16 %v584
    %v1566 = vunpack.c.l.b16 %v585
    %v1567 = vunpack.c.l.b16 %v586
    %v1568 = vunpack.c.l.b16 %v587
    %v1569 = vpack.c.b16 %v1562, %v1561
    %v1570 = vpack.c.b16 %v1564, %v1563
    %v1571 = vpack.c.b16 %v1566, %v1565
    %v1572 = vpack.c.b16 %v1568, %v1567
    %v1578 = vsel %vm772, %v100, 0
    %1580 = vmatprep.subr.bf16.mxu0 0
    %1581 = vmatpush1.bf16.msra.mxu0 0
    %1582 = vmatprep.subr.bf16.mxu0 0
    %1583 = vmatpush1.bf16.msra.mxu0 0
    %1584 = vmatprep.subr.bf16.mxu0 0
    %1585 = vmatpush1.bf16.msra.mxu0 0
    %1586 = vmatprep.subr.bf16.mxu0 0
    %1587 = vmatpush1.bf16.msra.mxu0 0
    %1588 = vmatprep.subr.bf16.mxu0 0
    %1589 = vmatpush1.bf16.msra.mxu0 %v1572
    %1590 = vmatprep.subr.bf16.mxu0 0
    %1591 = vmatpush1.bf16.msra.mxu0 %v1571
    %1592 = vmatprep.subr.bf16.mxu0 0
    %1593 = vmatpush1.bf16.msra.mxu0 %v1570
    %1594 = vmatprep.subr.bf16.mxu0 0
    %1595 = vmatpush1.bf16.msra.mxu0 %v1569
    %1596 = vmatprep.subr.bf16.mxu0 0
    %1597 = vmatpush2.bf16.msra.mxu0 0
    %1598 = vmatprep.subr.bf16.mxu0 0
    %1599 = vmatpush2.bf16.msra.mxu0 0
    %1600 = vmatprep.subr.bf16.mxu0 0
    %1601 = vmatpush2.bf16.msra.mxu0 0
    %1602 = vmatprep.subr.bf16.mxu0 0
    %1603 = vmatpush2.bf16.msra.mxu0 0
    %1604 = vmatprep.subr.bf16.mxu0 0
    %1605 = vmatpush2.bf16.msra.mxu0 0
    %1606 = vmatprep.subr.bf16.mxu0 0
    %1607 = vmatpush2.bf16.msra.mxu0 0
    %1608 = vmatprep.subr.bf16.mxu0 0
    %1609 = vmatpush2.bf16.msra.mxu0 0
    %1610 = vmatprep.subr.bf16.mxu0 0
    %1611 = vmatpush2.bf16.msra.mxu0 0
    %1612 = vmatprep.mubr.bf16.mxu0 0
    %1613 = vmatmul.mubr.bf16.gmra.mxu0 %v1578
    %v1614 = vpop.f32.mrf.mxu0
    %v1615 = vadd.f32 0.0, %v1614
    %v1616 = vpop.f32.mrf.mxu0
    %v1617 = vpop.f32.mrf.mxu0
    %v1618 = vpop.f32.mrf.mxu0
    %1619 = vdwg.mxu0
    %v1628 = vunpack.c.l.b16 %v588
    %v1629 = vunpack.c.l.b16 %v589
    %v1630 = vunpack.c.l.b16 %v590
    %v1631 = vunpack.c.l.b16 %v591
    %v1632 = vunpack.c.l.b16 %v592
    %v1633 = vunpack.c.l.b16 %v593
    %v1634 = vunpack.c.l.b16 %v594
    %v1635 = vunpack.c.l.b16 %v595
    %v1636 = vpack.c.b16 %v1629, %v1628
    %v1637 = vpack.c.b16 %v1631, %v1630
    %v1638 = vpack.c.b16 %v1633, %v1632
    %v1639 = vpack.c.b16 %v1635, %v1634
    %v1645 = vsel %vm772, %v101, 0
    %1647 = vmatprep.subr.bf16.mxu0 0
    %1648 = vmatpush1.bf16.msra.mxu0 0
    %1649 = vmatprep.subr.bf16.mxu0 0
    %1650 = vmatpush1.bf16.msra.mxu0 0
    %1651 = vmatprep.subr.bf16.mxu0 0
    %1652 = vmatpush1.bf16.msra.mxu0 0
    %1653 = vmatprep.subr.bf16.mxu0 0
    %1654 = vmatpush1.bf16.msra.mxu0 0
    %1655 = vmatprep.subr.bf16.mxu0 0
    %1656 = vmatpush1.bf16.msra.mxu0 %v1639
    %1657 = vmatprep.subr.bf16.mxu0 0
    %1658 = vmatpush1.bf16.msra.mxu0 %v1638
    %1659 = vmatprep.subr.bf16.mxu0 0
    %1660 = vmatpush1.bf16.msra.mxu0 %v1637
    %1661 = vmatprep.subr.bf16.mxu0 0
    %1662 = vmatpush1.bf16.msra.mxu0 %v1636
    %1663 = vmatprep.subr.bf16.mxu0 0
    %1664 = vmatpush2.bf16.msra.mxu0 0
    %1665 = vmatprep.subr.bf16.mxu0 0
    %1666 = vmatpush2.bf16.msra.mxu0 0
    %1667 = vmatprep.subr.bf16.mxu0 0
    %1668 = vmatpush2.bf16.msra.mxu0 0
    %1669 = vmatprep.subr.bf16.mxu0 0
    %1670 = vmatpush2.bf16.msra.mxu0 0
    %1671 = vmatprep.subr.bf16.mxu0 0
    %1672 = vmatpush2.bf16.msra.mxu0 0
    %1673 = vmatprep.subr.bf16.mxu0 0
    %1674 = vmatpush2.bf16.msra.mxu0 0
    %1675 = vmatprep.subr.bf16.mxu0 0
    %1676 = vmatpush2.bf16.msra.mxu0 0
    %1677 = vmatprep.subr.bf16.mxu0 0
    %1678 = vmatpush2.bf16.msra.mxu0 0
    %1679 = vmatprep.mubr.bf16.mxu0 0
    %1680 = vmatmul.mubr.bf16.gmra.mxu0 %v1645
    %v1681 = vpop.f32.mrf.mxu0
    %v1682 = vadd.f32 0.0, %v1681
    %v1683 = vpop.f32.mrf.mxu0
    %v1684 = vpop.f32.mrf.mxu0
    %v1685 = vpop.f32.mrf.mxu0
    %1686 = vdwg.mxu0
    %v1695 = vunpack.c.l.b16 %v596
    %v1696 = vunpack.c.l.b16 %v597
    %v1697 = vunpack.c.l.b16 %v598
    %v1698 = vunpack.c.l.b16 %v599
    %v1699 = vunpack.c.l.b16 %v600
    %v1700 = vunpack.c.l.b16 %v601
    %v1701 = vunpack.c.l.b16 %v602
    %v1702 = vunpack.c.l.b16 %v603
    %v1703 = vpack.c.b16 %v1696, %v1695
    %v1704 = vpack.c.b16 %v1698, %v1697
    %v1705 = vpack.c.b16 %v1700, %v1699
    %v1706 = vpack.c.b16 %v1702, %v1701
    %v1712 = vsel %vm772, %v102, 0
    %1714 = vmatprep.subr.bf16.mxu0 0
    %1715 = vmatpush1.bf16.msra.mxu0 0
    %1716 = vmatprep.subr.bf16.mxu0 0
    %1717 = vmatpush1.bf16.msra.mxu0 0
    %1718 = vmatprep.subr.bf16.mxu0 0
    %1719 = vmatpush1.bf16.msra.mxu0 0
    %1720 = vmatprep.subr.bf16.mxu0 0
    %1721 = vmatpush1.bf16.msra.mxu0 0
    %1722 = vmatprep.subr.bf16.mxu0 0
    %1723 = vmatpush1.bf16.msra.mxu0 %v1706
    %1724 = vmatprep.subr.bf16.mxu0 0
    %1725 = vmatpush1.bf16.msra.mxu0 %v1705
    %1726 = vmatprep.subr.bf16.mxu0 0
    %1727 = vmatpush1.bf16.msra.mxu0 %v1704
    %1728 = vmatprep.subr.bf16.mxu0 0
    %1729 = vmatpush1.bf16.msra.mxu0 %v1703
    %1730 = vmatprep.subr.bf16.mxu0 0
    %1731 = vmatpush2.bf16.msra.mxu0 0
    %1732 = vmatprep.subr.bf16.mxu0 0
    %1733 = vmatpush2.bf16.msra.mxu0 0
    %1734 = vmatprep.subr.bf16.mxu0 0
    %1735 = vmatpush2.bf16.msra.mxu0 0
    %1736 = vmatprep.subr.bf16.mxu0 0
    %1737 = vmatpush2.bf16.msra.mxu0 0
    %1738 = vmatprep.subr.bf16.mxu0 0
    %1739 = vmatpush2.bf16.msra.mxu0 0
    %1740 = vmatprep.subr.bf16.mxu0 0
    %1741 = vmatpush2.bf16.msra.mxu0 0
    %1742 = vmatprep.subr.bf16.mxu0 0
    %1743 = vmatpush2.bf16.msra.mxu0 0
    %1744 = vmatprep.subr.bf16.mxu0 0
    %1745 = vmatpush2.bf16.msra.mxu0 0
    %1746 = vmatprep.mubr.bf16.mxu0 0
    %1747 = vmatmul.mubr.bf16.gmra.mxu0 %v1712
    %v1748 = vpop.f32.mrf.mxu0
    %v1749 = vadd.f32 0.0, %v1748
    %v1750 = vpop.f32.mrf.mxu0
    %v1751 = vpop.f32.mrf.mxu0
    %v1752 = vpop.f32.mrf.mxu0
    %1753 = vdwg.mxu0
    %v1762 = vunpack.c.l.b16 %v604
    %v1763 = vunpack.c.l.b16 %v605
    %v1764 = vunpack.c.l.b16 %v606
    %v1765 = vunpack.c.l.b16 %v607
    %v1766 = vunpack.c.l.b16 %v608
    %v1767 = vunpack.c.l.b16 %v609
    %v1768 = vunpack.c.l.b16 %v610
    %v1769 = vunpack.c.l.b16 %v611
    %v1770 = vpack.c.b16 %v1763, %v1762
    %v1771 = vpack.c.b16 %v1765, %v1764
    %v1772 = vpack.c.b16 %v1767, %v1766
    %v1773 = vpack.c.b16 %v1769, %v1768
    %v1779 = vsel %vm772, %v103, 0
    %1781 = vmatprep.subr.bf16.mxu0 0
    %1782 = vmatpush1.bf16.msra.mxu0 0
    %1783 = vmatprep.subr.bf16.mxu0 0
    %1784 = vmatpush1.bf16.msra.mxu0 0
    %1785 = vmatprep.subr.bf16.mxu0 0
    %1786 = vmatpush1.bf16.msra.mxu0 0
    %1787 = vmatprep.subr.bf16.mxu0 0
    %1788 = vmatpush1.bf16.msra.mxu0 0
    %1789 = vmatprep.subr.bf16.mxu0 0
    %1790 = vmatpush1.bf16.msra.mxu0 %v1773
    %1791 = vmatprep.subr.bf16.mxu0 0
    %1792 = vmatpush1.bf16.msra.mxu0 %v1772
    %1793 = vmatprep.subr.bf16.mxu0 0
    %1794 = vmatpush1.bf16.msra.mxu0 %v1771
    %1795 = vmatprep.subr.bf16.mxu0 0
    %1796 = vmatpush1.bf16.msra.mxu0 %v1770
    %1797 = vmatprep.subr.bf16.mxu0 0
    %1798 = vmatpush2.bf16.msra.mxu0 0
    %1799 = vmatprep.subr.bf16.mxu0 0
    %1800 = vmatpush2.bf16.msra.mxu0 0
    %1801 = vmatprep.subr.bf16.mxu0 0
    %1802 = vmatpush2.bf16.msra.mxu0 0
    %1803 = vmatprep.subr.bf16.mxu0 0
    %1804 = vmatpush2.bf16.msra.mxu0 0
    %1805 = vmatprep.subr.bf16.mxu0 0
    %1806 = vmatpush2.bf16.msra.mxu0 0
    %1807 = vmatprep.subr.bf16.mxu0 0
    %1808 = vmatpush2.bf16.msra.mxu0 0
    %1809 = vmatprep.subr.bf16.mxu0 0
    %1810 = vmatpush2.bf16.msra.mxu0 0
    %1811 = vmatprep.subr.bf16.mxu0 0
    %1812 = vmatpush2.bf16.msra.mxu0 0
    %1813 = vmatprep.mubr.bf16.mxu0 0
    %1814 = vmatmul.mubr.bf16.gmra.mxu0 %v1779
    %v1815 = vpop.f32.mrf.mxu0
    %v1816 = vadd.f32 0.0, %v1815
    %v1817 = vpop.f32.mrf.mxu0
    %v1818 = vpop.f32.mrf.mxu0
    %v1819 = vpop.f32.mrf.mxu0
    %1820 = vdwg.mxu0
    %v1829 = vunpack.c.l.b16 %v612
    %v1830 = vunpack.c.l.b16 %v613
    %v1831 = vunpack.c.l.b16 %v614
    %v1832 = vunpack.c.l.b16 %v615
    %v1833 = vunpack.c.l.b16 %v616
    %v1834 = vunpack.c.l.b16 %v617
    %v1835 = vunpack.c.l.b16 %v618
    %v1836 = vunpack.c.l.b16 %v619
    %v1837 = vpack.c.b16 %v1830, %v1829
    %v1838 = vpack.c.b16 %v1832, %v1831
    %v1839 = vpack.c.b16 %v1834, %v1833
    %v1840 = vpack.c.b16 %v1836, %v1835
    %v1846 = vsel %vm772, %v104, 0
    %1848 = vmatprep.subr.bf16.mxu0 0
    %1849 = vmatpush1.bf16.msra.mxu0 0
    %1850 = vmatprep.subr.bf16.mxu0 0
    %1851 = vmatpush1.bf16.msra.mxu0 0
    %1852 = vmatprep.subr.bf16.mxu0 0
    %1853 = vmatpush1.bf16.msra.mxu0 0
    %1854 = vmatprep.subr.bf16.mxu0 0
    %1855 = vmatpush1.bf16.msra.mxu0 0
    %1856 = vmatprep.subr.bf16.mxu0 0
    %1857 = vmatpush1.bf16.msra.mxu0 %v1840
    %1858 = vmatprep.subr.bf16.mxu0 0
    %1859 = vmatpush1.bf16.msra.mxu0 %v1839
    %1860 = vmatprep.subr.bf16.mxu0 0
    %1861 = vmatpush1.bf16.msra.mxu0 %v1838
    %1862 = vmatprep.subr.bf16.mxu0 0
    %1863 = vmatpush1.bf16.msra.mxu0 %v1837
    %1864 = vmatprep.subr.bf16.mxu0 0
    %1865 = vmatpush2.bf16.msra.mxu0 0
    %1866 = vmatprep.subr.bf16.mxu0 0
    %1867 = vmatpush2.bf16.msra.mxu0 0
    %1868 = vmatprep.subr.bf16.mxu0 0
    %1869 = vmatpush2.bf16.msra.mxu0 0
    %1870 = vmatprep.subr.bf16.mxu0 0
    %1871 = vmatpush2.bf16.msra.mxu0 0
    %1872 = vmatprep.subr.bf16.mxu0 0
    %1873 = vmatpush2.bf16.msra.mxu0 0
    %1874 = vmatprep.subr.bf16.mxu0 0
    %1875 = vmatpush2.bf16.msra.mxu0 0
    %1876 = vmatprep.subr.bf16.mxu0 0
    %1877 = vmatpush2.bf16.msra.mxu0 0
    %1878 = vmatprep.subr.bf16.mxu0 0
    %1879 = vmatpush2.bf16.msra.mxu0 0
    %1880 = vmatprep.mubr.bf16.mxu0 0
    %1881 = vmatmul.mubr.bf16.gmra.mxu0 %v1846
    %v1882 = vpop.f32.mrf.mxu0
    %v1883 = vadd.f32 0.0, %v1882
    %v1884 = vpop.f32.mrf.mxu0
    %v1885 = vpop.f32.mrf.mxu0
    %v1886 = vpop.f32.mrf.mxu0
    %1887 = vdwg.mxu0
    %v1896 = vunpack.c.l.b16 %v620
    %v1897 = vunpack.c.l.b16 %v621
    %v1898 = vunpack.c.l.b16 %v622
    %v1899 = vunpack.c.l.b16 %v623
    %v1900 = vunpack.c.l.b16 %v624
    %v1901 = vunpack.c.l.b16 %v625
    %v1902 = vunpack.c.l.b16 %v626
    %v1903 = vunpack.c.l.b16 %v627
    %v1904 = vpack.c.b16 %v1897, %v1896
    %v1905 = vpack.c.b16 %v1899, %v1898
    %v1906 = vpack.c.b16 %v1901, %v1900
    %v1907 = vpack.c.b16 %v1903, %v1902
    %v1913 = vsel %vm772, %v105, 0
    %1915 = vmatprep.subr.bf16.mxu0 0
    %1916 = vmatpush1.bf16.msra.mxu0 0
    %1917 = vmatprep.subr.bf16.mxu0 0
    %1918 = vmatpush1.bf16.msra.mxu0 0
    %1919 = vmatprep.subr.bf16.mxu0 0
    %1920 = vmatpush1.bf16.msra.mxu0 0
    %1921 = vmatprep.subr.bf16.mxu0 0
    %1922 = vmatpush1.bf16.msra.mxu0 0
    %1923 = vmatprep.subr.bf16.mxu0 0
    %1924 = vmatpush1.bf16.msra.mxu0 %v1907
    %1925 = vmatprep.subr.bf16.mxu0 0
    %1926 = vmatpush1.bf16.msra.mxu0 %v1906
    %1927 = vmatprep.subr.bf16.mxu0 0
    %1928 = vmatpush1.bf16.msra.mxu0 %v1905
    %1929 = vmatprep.subr.bf16.mxu0 0
    %1930 = vmatpush1.bf16.msra.mxu0 %v1904
    %1931 = vmatprep.subr.bf16.mxu0 0
    %1932 = vmatpush2.bf16.msra.mxu0 0
    %1933 = vmatprep.subr.bf16.mxu0 0
    %1934 = vmatpush2.bf16.msra.mxu0 0
    %1935 = vmatprep.subr.bf16.mxu0 0
    %1936 = vmatpush2.bf16.msra.mxu0 0
    %1937 = vmatprep.subr.bf16.mxu0 0
    %1938 = vmatpush2.bf16.msra.mxu0 0
    %1939 = vmatprep.subr.bf16.mxu0 0
    %1940 = vmatpush2.bf16.msra.mxu0 0
    %1941 = vmatprep.subr.bf16.mxu0 0
    %1942 = vmatpush2.bf16.msra.mxu0 0
    %1943 = vmatprep.subr.bf16.mxu0 0
    %1944 = vmatpush2.bf16.msra.mxu0 0
    %1945 = vmatprep.subr.bf16.mxu0 0
    %1946 = vmatpush2.bf16.msra.mxu0 0
    %1947 = vmatprep.mubr.bf16.mxu0 0
    %1948 = vmatmul.mubr.bf16.gmra.mxu0 %v1913
    %v1949 = vpop.f32.mrf.mxu0
    %v1950 = vadd.f32 0.0, %v1949
    %v1951 = vpop.f32.mrf.mxu0
    %v1952 = vpop.f32.mrf.mxu0
    %v1953 = vpop.f32.mrf.mxu0
    %1954 = vdwg.mxu0
    %v1963 = vunpack.c.l.b16 %v628
    %v1964 = vunpack.c.l.b16 %v629
    %v1965 = vunpack.c.l.b16 %v630
    %v1966 = vunpack.c.l.b16 %v631
    %v1967 = vunpack.c.l.b16 %v632
    %v1968 = vunpack.c.l.b16 %v633
    %v1969 = vunpack.c.l.b16 %v634
    %v1970 = vunpack.c.l.b16 %v635
    %v1971 = vpack.c.b16 %v1964, %v1963
    %v1972 = vpack.c.b16 %v1966, %v1965
    %v1973 = vpack.c.b16 %v1968, %v1967
    %v1974 = vpack.c.b16 %v1970, %v1969
    %v1980 = vsel %vm772, %v106, 0
    %1982 = vmatprep.subr.bf16.mxu0 0
    %1983 = vmatpush1.bf16.msra.mxu0 0
    %1984 = vmatprep.subr.bf16.mxu0 0
    %1985 = vmatpush1.bf16.msra.mxu0 0
    %1986 = vmatprep.subr.bf16.mxu0 0
    %1987 = vmatpush1.bf16.msra.mxu0 0
    %1988 = vmatprep.subr.bf16.mxu0 0
    %1989 = vmatpush1.bf16.msra.mxu0 0
    %1990 = vmatprep.subr.bf16.mxu0 0
    %1991 = vmatpush1.bf16.msra.mxu0 %v1974
    %1992 = vmatprep.subr.bf16.mxu0 0
    %1993 = vmatpush1.bf16.msra.mxu0 %v1973
    %1994 = vmatprep.subr.bf16.mxu0 0
    %1995 = vmatpush1.bf16.msra.mxu0 %v1972
    %1996 = vmatprep.subr.bf16.mxu0 0
    %1997 = vmatpush1.bf16.msra.mxu0 %v1971
    %1998 = vmatprep.subr.bf16.mxu0 0
    %1999 = vmatpush2.bf16.msra.mxu0 0
    %2000 = vmatprep.subr.bf16.mxu0 0
    %2001 = vmatpush2.bf16.msra.mxu0 0
    %2002 = vmatprep.subr.bf16.mxu0 0
    %2003 = vmatpush2.bf16.msra.mxu0 0
    %2004 = vmatprep.subr.bf16.mxu0 0
    %2005 = vmatpush2.bf16.msra.mxu0 0
    %2006 = vmatprep.subr.bf16.mxu0 0
    %2007 = vmatpush2.bf16.msra.mxu0 0
    %2008 = vmatprep.subr.bf16.mxu0 0
    %2009 = vmatpush2.bf16.msra.mxu0 0
    %2010 = vmatprep.subr.bf16.mxu0 0
    %2011 = vmatpush2.bf16.msra.mxu0 0
    %2012 = vmatprep.subr.bf16.mxu0 0
    %2013 = vmatpush2.bf16.msra.mxu0 0
    %2014 = vmatprep.mubr.bf16.mxu0 0
    %2015 = vmatmul.mubr.bf16.gmra.mxu0 %v1980
    %v2016 = vpop.f32.mrf.mxu0
    %v2017 = vadd.f32 0.0, %v2016
    %v2018 = vpop.f32.mrf.mxu0
    %v2019 = vpop.f32.mrf.mxu0
    %v2020 = vpop.f32.mrf.mxu0
    %2021 = vdwg.mxu0
    %v2030 = vunpack.c.l.b16 %v636
    %v2031 = vunpack.c.l.b16 %v637
    %v2032 = vunpack.c.l.b16 %v638
    %v2033 = vunpack.c.l.b16 %v639
    %v2034 = vunpack.c.l.b16 %v640
    %v2035 = vunpack.c.l.b16 %v641
    %v2036 = vunpack.c.l.b16 %v642
    %v2037 = vunpack.c.l.b16 %v643
    %v2038 = vpack.c.b16 %v2031, %v2030
    %v2039 = vpack.c.b16 %v2033, %v2032
    %v2040 = vpack.c.b16 %v2035, %v2034
    %v2041 = vpack.c.b16 %v2037, %v2036
    %v2047 = vsel %vm772, %v107, 0
    %2049 = vmatprep.subr.bf16.mxu0 0
    %2050 = vmatpush1.bf16.msra.mxu0 0
    %2051 = vmatprep.subr.bf16.mxu0 0
    %2052 = vmatpush1.bf16.msra.mxu0 0
    %2053 = vmatprep.subr.bf16.mxu0 0
    %2054 = vmatpush1.bf16.msra.mxu0 0
    %2055 = vmatprep.subr.bf16.mxu0 0
    %2056 = vmatpush1.bf16.msra.mxu0 0
    %2057 = vmatprep.subr.bf16.mxu0 0
    %2058 = vmatpush1.bf16.msra.mxu0 %v2041
    %2059 = vmatprep.subr.bf16.mxu0 0
    %2060 = vmatpush1.bf16.msra.mxu0 %v2040
    %2061 = vmatprep.subr.bf16.mxu0 0
    %2062 = vmatpush1.bf16.msra.mxu0 %v2039
    %2063 = vmatprep.subr.bf16.mxu0 0
    %2064 = vmatpush1.bf16.msra.mxu0 %v2038
    %2065 = vmatprep.subr.bf16.mxu0 0
    %2066 = vmatpush2.bf16.msra.mxu0 0
    %2067 = vmatprep.subr.bf16.mxu0 0
    %2068 = vmatpush2.bf16.msra.mxu0 0
    %2069 = vmatprep.subr.bf16.mxu0 0
    %2070 = vmatpush2.bf16.msra.mxu0 0
    %2071 = vmatprep.subr.bf16.mxu0 0
    %2072 = vmatpush2.bf16.msra.mxu0 0
    %2073 = vmatprep.subr.bf16.mxu0 0
    %2074 = vmatpush2.bf16.msra.mxu0 0
    %2075 = vmatprep.subr.bf16.mxu0 0
    %2076 = vmatpush2.bf16.msra.mxu0 0
    %2077 = vmatprep.subr.bf16.mxu0 0
    %2078 = vmatpush2.bf16.msra.mxu0 0
    %2079 = vmatprep.subr.bf16.mxu0 0
    %2080 = vmatpush2.bf16.msra.mxu0 0
    %2081 = vmatprep.mubr.bf16.mxu0 0
    %2082 = vmatmul.mubr.bf16.gmra.mxu0 %v2047
    %v2083 = vpop.f32.mrf.mxu0
    %v2084 = vadd.f32 0.0, %v2083
    %v2085 = vpop.f32.mrf.mxu0
    %v2086 = vpop.f32.mrf.mxu0
    %v2087 = vpop.f32.mrf.mxu0
    %2088 = vdwg.mxu0
    %v2097 = vunpack.c.l.b16 %v644
    %v2098 = vunpack.c.l.b16 %v645
    %v2099 = vunpack.c.l.b16 %v646
    %v2100 = vunpack.c.l.b16 %v647
    %v2101 = vunpack.c.l.b16 %v648
    %v2102 = vunpack.c.l.b16 %v649
    %v2103 = vunpack.c.l.b16 %v650
    %v2104 = vunpack.c.l.b16 %v651
    %v2105 = vpack.c.b16 %v2098, %v2097
    %v2106 = vpack.c.b16 %v2100, %v2099
    %v2107 = vpack.c.b16 %v2102, %v2101
    %v2108 = vpack.c.b16 %v2104, %v2103
    %v2114 = vsel %vm772, %v108, 0
    %2116 = vmatprep.subr.bf16.mxu0 0
    %2117 = vmatpush1.bf16.msra.mxu0 0
    %2118 = vmatprep.subr.bf16.mxu0 0
    %2119 = vmatpush1.bf16.msra.mxu0 0
    %2120 = vmatprep.subr.bf16.mxu0 0
    %2121 = vmatpush1.bf16.msra.mxu0 0
    %2122 = vmatprep.subr.bf16.mxu0 0
    %2123 = vmatpush1.bf16.msra.mxu0 0
    %2124 = vmatprep.subr.bf16.mxu0 0
    %2125 = vmatpush1.bf16.msra.mxu0 %v2108
    %2126 = vmatprep.subr.bf16.mxu0 0
    %2127 = vmatpush1.bf16.msra.mxu0 %v2107
    %2128 = vmatprep.subr.bf16.mxu0 0
    %2129 = vmatpush1.bf16.msra.mxu0 %v2106
    %2130 = vmatprep.subr.bf16.mxu0 0
    %2131 = vmatpush1.bf16.msra.mxu0 %v2105
    %2132 = vmatprep.subr.bf16.mxu0 0
    %2133 = vmatpush2.bf16.msra.mxu0 0
    %2134 = vmatprep.subr.bf16.mxu0 0
    %2135 = vmatpush2.bf16.msra.mxu0 0
    %2136 = vmatprep.subr.bf16.mxu0 0
    %2137 = vmatpush2.bf16.msra.mxu0 0
    %2138 = vmatprep.subr.bf16.mxu0 0
    %2139 = vmatpush2.bf16.msra.mxu0 0
    %2140 = vmatprep.subr.bf16.mxu0 0
    %2141 = vmatpush2.bf16.msra.mxu0 0
    %2142 = vmatprep.subr.bf16.mxu0 0
    %2143 = vmatpush2.bf16.msra.mxu0 0
    %2144 = vmatprep.subr.bf16.mxu0 0
    %2145 = vmatpush2.bf16.msra.mxu0 0
    %2146 = vmatprep.subr.bf16.mxu0 0
    %2147 = vmatpush2.bf16.msra.mxu0 0
    %2148 = vmatprep.mubr.bf16.mxu0 0
    %2149 = vmatmul.mubr.bf16.gmra.mxu0 %v2114
    %v2150 = vpop.f32.mrf.mxu0
    %v2151 = vadd.f32 0.0, %v2150
    %v2152 = vpop.f32.mrf.mxu0
    %v2153 = vpop.f32.mrf.mxu0
    %v2154 = vpop.f32.mrf.mxu0
    %2155 = vdwg.mxu0
    %v2164 = vunpack.c.l.b16 %v652
    %v2165 = vunpack.c.l.b16 %v653
    %v2166 = vunpack.c.l.b16 %v654
    %v2167 = vunpack.c.l.b16 %v655
    %v2168 = vunpack.c.l.b16 %v656
    %v2169 = vunpack.c.l.b16 %v657
    %v2170 = vunpack.c.l.b16 %v658
    %v2171 = vunpack.c.l.b16 %v659
    %v2172 = vpack.c.b16 %v2165, %v2164
    %v2173 = vpack.c.b16 %v2167, %v2166
    %v2174 = vpack.c.b16 %v2169, %v2168
    %v2175 = vpack.c.b16 %v2171, %v2170
    %v2181 = vsel %vm772, %v109, 0
    %2183 = vmatprep.subr.bf16.mxu0 0
    %2184 = vmatpush1.bf16.msra.mxu0 0
    %2185 = vmatprep.subr.bf16.mxu0 0
    %2186 = vmatpush1.bf16.msra.mxu0 0
    %2187 = vmatprep.subr.bf16.mxu0 0
    %2188 = vmatpush1.bf16.msra.mxu0 0
    %2189 = vmatprep.subr.bf16.mxu0 0
    %2190 = vmatpush1.bf16.msra.mxu0 0
    %2191 = vmatprep.subr.bf16.mxu0 0
    %2192 = vmatpush1.bf16.msra.mxu0 %v2175
    %2193 = vmatprep.subr.bf16.mxu0 0
    %2194 = vmatpush1.bf16.msra.mxu0 %v2174
    %2195 = vmatprep.subr.bf16.mxu0 0
    %2196 = vmatpush1.bf16.msra.mxu0 %v2173
    %2197 = vmatprep.subr.bf16.mxu0 0
    %2198 = vmatpush1.bf16.msra.mxu0 %v2172
    %2199 = vmatprep.subr.bf16.mxu0 0
    %2200 = vmatpush2.bf16.msra.mxu0 0
    %2201 = vmatprep.subr.bf16.mxu0 0
    %2202 = vmatpush2.bf16.msra.mxu0 0
    %2203 = vmatprep.subr.bf16.mxu0 0
    %2204 = vmatpush2.bf16.msra.mxu0 0
    %2205 = vmatprep.subr.bf16.mxu0 0
    %2206 = vmatpush2.bf16.msra.mxu0 0
    %2207 = vmatprep.subr.bf16.mxu0 0
    %2208 = vmatpush2.bf16.msra.mxu0 0
    %2209 = vmatprep.subr.bf16.mxu0 0
    %2210 = vmatpush2.bf16.msra.mxu0 0
    %2211 = vmatprep.subr.bf16.mxu0 0
    %2212 = vmatpush2.bf16.msra.mxu0 0
    %2213 = vmatprep.subr.bf16.mxu0 0
    %2214 = vmatpush2.bf16.msra.mxu0 0
    %2215 = vmatprep.mubr.bf16.mxu0 0
    %2216 = vmatmul.mubr.bf16.gmra.mxu0 %v2181
    %v2217 = vpop.f32.mrf.mxu0
    %v2218 = vadd.f32 0.0, %v2217
    %v2219 = vpop.f32.mrf.mxu0
    %v2220 = vpop.f32.mrf.mxu0
    %v2221 = vpop.f32.mrf.mxu0
    %2222 = vdwg.mxu0
    %v2231 = vunpack.c.l.b16 %v660
    %v2232 = vunpack.c.l.b16 %v661
    %v2233 = vunpack.c.l.b16 %v662
    %v2234 = vunpack.c.l.b16 %v663
    %v2235 = vunpack.c.l.b16 %v664
    %v2236 = vunpack.c.l.b16 %v665
    %v2237 = vunpack.c.l.b16 %v666
    %v2238 = vunpack.c.l.b16 %v667
    %v2239 = vpack.c.b16 %v2232, %v2231
    %v2240 = vpack.c.b16 %v2234, %v2233
    %v2241 = vpack.c.b16 %v2236, %v2235
    %v2242 = vpack.c.b16 %v2238, %v2237
    %v2248 = vsel %vm772, %v110, 0
    %2250 = vmatprep.subr.bf16.mxu0 0
    %2251 = vmatpush1.bf16.msra.mxu0 0
    %2252 = vmatprep.subr.bf16.mxu0 0
    %2253 = vmatpush1.bf16.msra.mxu0 0
    %2254 = vmatprep.subr.bf16.mxu0 0
    %2255 = vmatpush1.bf16.msra.mxu0 0
    %2256 = vmatprep.subr.bf16.mxu0 0
    %2257 = vmatpush1.bf16.msra.mxu0 0
    %2258 = vmatprep.subr.bf16.mxu0 0
    %2259 = vmatpush1.bf16.msra.mxu0 %v2242
    %2260 = vmatprep.subr.bf16.mxu0 0
    %2261 = vmatpush1.bf16.msra.mxu0 %v2241
    %2262 = vmatprep.subr.bf16.mxu0 0
    %2263 = vmatpush1.bf16.msra.mxu0 %v2240
    %2264 = vmatprep.subr.bf16.mxu0 0
    %2265 = vmatpush1.bf16.msra.mxu0 %v2239
    %2266 = vmatprep.subr.bf16.mxu0 0
    %2267 = vmatpush2.bf16.msra.mxu0 0
    %2268 = vmatprep.subr.bf16.mxu0 0
    %2269 = vmatpush2.bf16.msra.mxu0 0
    %2270 = vmatprep.subr.bf16.mxu0 0
    %2271 = vmatpush2.bf16.msra.mxu0 0
    %2272 = vmatprep.subr.bf16.mxu0 0
    %2273 = vmatpush2.bf16.msra.mxu0 0
    %2274 = vmatprep.subr.bf16.mxu0 0
    %2275 = vmatpush2.bf16.msra.mxu0 0
    %2276 = vmatprep.subr.bf16.mxu0 0
    %2277 = vmatpush2.bf16.msra.mxu0 0
    %2278 = vmatprep.subr.bf16.mxu0 0
    %2279 = vmatpush2.bf16.msra.mxu0 0
    %2280 = vmatprep.subr.bf16.mxu0 0
    %2281 = vmatpush2.bf16.msra.mxu0 0
    %2282 = vmatprep.mubr.bf16.mxu0 0
    %2283 = vmatmul.mubr.bf16.gmra.mxu0 %v2248
    %v2284 = vpop.f32.mrf.mxu0
    %v2285 = vadd.f32 0.0, %v2284
    %v2286 = vpop.f32.mrf.mxu0
    %v2287 = vpop.f32.mrf.mxu0
    %v2288 = vpop.f32.mrf.mxu0
    %2289 = vdwg.mxu0
    %v2298 = vunpack.c.l.b16 %v668
    %v2299 = vunpack.c.l.b16 %v669
    %v2300 = vunpack.c.l.b16 %v670
    %v2301 = vunpack.c.l.b16 %v671
    %v2302 = vunpack.c.l.b16 %v672
    %v2303 = vunpack.c.l.b16 %v673
    %v2304 = vunpack.c.l.b16 %v674
    %v2305 = vunpack.c.l.b16 %v675
    %v2306 = vpack.c.b16 %v2299, %v2298
    %v2307 = vpack.c.b16 %v2301, %v2300
    %v2308 = vpack.c.b16 %v2303, %v2302
    %v2309 = vpack.c.b16 %v2305, %v2304
    %v2315 = vsel %vm772, %v111, 0
    %2317 = vmatprep.subr.bf16.mxu0 0
    %2318 = vmatpush1.bf16.msra.mxu0 0
    %2319 = vmatprep.subr.bf16.mxu0 0
    %2320 = vmatpush1.bf16.msra.mxu0 0
    %2321 = vmatprep.subr.bf16.mxu0 0
    %2322 = vmatpush1.bf16.msra.mxu0 0
    %2323 = vmatprep.subr.bf16.mxu0 0
    %2324 = vmatpush1.bf16.msra.mxu0 0
    %2325 = vmatprep.subr.bf16.mxu0 0
    %2326 = vmatpush1.bf16.msra.mxu0 %v2309
    %2327 = vmatprep.subr.bf16.mxu0 0
    %2328 = vmatpush1.bf16.msra.mxu0 %v2308
    %2329 = vmatprep.subr.bf16.mxu0 0
    %2330 = vmatpush1.bf16.msra.mxu0 %v2307
    %2331 = vmatprep.subr.bf16.mxu0 0
    %2332 = vmatpush1.bf16.msra.mxu0 %v2306
    %2333 = vmatprep.subr.bf16.mxu0 0
    %2334 = vmatpush2.bf16.msra.mxu0 0
    %2335 = vmatprep.subr.bf16.mxu0 0
    %2336 = vmatpush2.bf16.msra.mxu0 0
    %2337 = vmatprep.subr.bf16.mxu0 0
    %2338 = vmatpush2.bf16.msra.mxu0 0
    %2339 = vmatprep.subr.bf16.mxu0 0
    %2340 = vmatpush2.bf16.msra.mxu0 0
    %2341 = vmatprep.subr.bf16.mxu0 0
    %2342 = vmatpush2.bf16.msra.mxu0 0
    %2343 = vmatprep.subr.bf16.mxu0 0
    %2344 = vmatpush2.bf16.msra.mxu0 0
    %2345 = vmatprep.subr.bf16.mxu0 0
    %2346 = vmatpush2.bf16.msra.mxu0 0
    %2347 = vmatprep.subr.bf16.mxu0 0
    %2348 = vmatpush2.bf16.msra.mxu0 0
    %2349 = vmatprep.mubr.bf16.mxu0 0
    %2350 = vmatmul.mubr.bf16.gmra.mxu0 %v2315
    %v2351 = vpop.f32.mrf.mxu0
    %v2352 = vadd.f32 0.0, %v2351
    %v2353 = vpop.f32.mrf.mxu0
    %v2354 = vpop.f32.mrf.mxu0
    %v2355 = vpop.f32.mrf.mxu0
    %2356 = vdwg.mxu0
    %v2365 = vunpack.c.l.b16 %v676
    %v2366 = vunpack.c.l.b16 %v677
    %v2367 = vunpack.c.l.b16 %v678
    %v2368 = vunpack.c.l.b16 %v679
    %v2369 = vunpack.c.l.b16 %v680
    %v2370 = vunpack.c.l.b16 %v681
    %v2371 = vunpack.c.l.b16 %v682
    %v2372 = vunpack.c.l.b16 %v683
    %v2373 = vpack.c.b16 %v2366, %v2365
    %v2374 = vpack.c.b16 %v2368, %v2367
    %v2375 = vpack.c.b16 %v2370, %v2369
    %v2376 = vpack.c.b16 %v2372, %v2371
    %v2382 = vsel %vm772, %v112, 0
    %2384 = vmatprep.subr.bf16.mxu0 0
    %2385 = vmatpush1.bf16.msra.mxu0 0
    %2386 = vmatprep.subr.bf16.mxu0 0
    %2387 = vmatpush1.bf16.msra.mxu0 0
    %2388 = vmatprep.subr.bf16.mxu0 0
    %2389 = vmatpush1.bf16.msra.mxu0 0
    %2390 = vmatprep.subr.bf16.mxu0 0
    %2391 = vmatpush1.bf16.msra.mxu0 0
    %2392 = vmatprep.subr.bf16.mxu0 0
    %2393 = vmatpush1.bf16.msra.mxu0 %v2376
    %2394 = vmatprep.subr.bf16.mxu0 0
    %2395 = vmatpush1.bf16.msra.mxu0 %v2375
    %2396 = vmatprep.subr.bf16.mxu0 0
    %2397 = vmatpush1.bf16.msra.mxu0 %v2374
    %2398 = vmatprep.subr.bf16.mxu0 0
    %2399 = vmatpush1.bf16.msra.mxu0 %v2373
    %2400 = vmatprep.subr.bf16.mxu0 0
    %2401 = vmatpush2.bf16.msra.mxu0 0
    %2402 = vmatprep.subr.bf16.mxu0 0
    %2403 = vmatpush2.bf16.msra.mxu0 0
    %2404 = vmatprep.subr.bf16.mxu0 0
    %2405 = vmatpush2.bf16.msra.mxu0 0
    %2406 = vmatprep.subr.bf16.mxu0 0
    %2407 = vmatpush2.bf16.msra.mxu0 0
    %2408 = vmatprep.subr.bf16.mxu0 0
    %2409 = vmatpush2.bf16.msra.mxu0 0
    %2410 = vmatprep.subr.bf16.mxu0 0
    %2411 = vmatpush2.bf16.msra.mxu0 0
    %2412 = vmatprep.subr.bf16.mxu0 0
    %2413 = vmatpush2.bf16.msra.mxu0 0
    %2414 = vmatprep.subr.bf16.mxu0 0
    %2415 = vmatpush2.bf16.msra.mxu0 0
    %2416 = vmatprep.mubr.bf16.mxu0 0
    %2417 = vmatmul.mubr.bf16.gmra.mxu0 %v2382
    %v2418 = vpop.f32.mrf.mxu0
    %v2419 = vadd.f32 0.0, %v2418
    %v2420 = vpop.f32.mrf.mxu0
    %v2421 = vpop.f32.mrf.mxu0
    %v2422 = vpop.f32.mrf.mxu0
    %2423 = vdwg.mxu0
    %v2432 = vunpack.c.l.b16 %v684
    %v2433 = vunpack.c.l.b16 %v685
    %v2434 = vunpack.c.l.b16 %v686
    %v2435 = vunpack.c.l.b16 %v687
    %v2436 = vunpack.c.l.b16 %v688
    %v2437 = vunpack.c.l.b16 %v689
    %v2438 = vunpack.c.l.b16 %v690
    %v2439 = vunpack.c.l.b16 %v691
    %v2440 = vpack.c.b16 %v2433, %v2432
    %v2441 = vpack.c.b16 %v2435, %v2434
    %v2442 = vpack.c.b16 %v2437, %v2436
    %v2443 = vpack.c.b16 %v2439, %v2438
    %v2449 = vsel %vm772, %v113, 0
    %2451 = vmatprep.subr.bf16.mxu0 0
    %2452 = vmatpush1.bf16.msra.mxu0 0
    %2453 = vmatprep.subr.bf16.mxu0 0
    %2454 = vmatpush1.bf16.msra.mxu0 0
    %2455 = vmatprep.subr.bf16.mxu0 0
    %2456 = vmatpush1.bf16.msra.mxu0 0
    %2457 = vmatprep.subr.bf16.mxu0 0
    %2458 = vmatpush1.bf16.msra.mxu0 0
    %2459 = vmatprep.subr.bf16.mxu0 0
    %2460 = vmatpush1.bf16.msra.mxu0 %v2443
    %2461 = vmatprep.subr.bf16.mxu0 0
    %2462 = vmatpush1.bf16.msra.mxu0 %v2442
    %2463 = vmatprep.subr.bf16.mxu0 0
    %2464 = vmatpush1.bf16.msra.mxu0 %v2441
    %2465 = vmatprep.subr.bf16.mxu0 0
    %2466 = vmatpush1.bf16.msra.mxu0 %v2440
    %2467 = vmatprep.subr.bf16.mxu0 0
    %2468 = vmatpush2.bf16.msra.mxu0 0
    %2469 = vmatprep.subr.bf16.mxu0 0
    %2470 = vmatpush2.bf16.msra.mxu0 0
    %2471 = vmatprep.subr.bf16.mxu0 0
    %2472 = vmatpush2.bf16.msra.mxu0 0
    %2473 = vmatprep.subr.bf16.mxu0 0
    %2474 = vmatpush2.bf16.msra.mxu0 0
    %2475 = vmatprep.subr.bf16.mxu0 0
    %2476 = vmatpush2.bf16.msra.mxu0 0
    %2477 = vmatprep.subr.bf16.mxu0 0
    %2478 = vmatpush2.bf16.msra.mxu0 0
    %2479 = vmatprep.subr.bf16.mxu0 0
    %2480 = vmatpush2.bf16.msra.mxu0 0
    %2481 = vmatprep.subr.bf16.mxu0 0
    %2482 = vmatpush2.bf16.msra.mxu0 0
    %2483 = vmatprep.mubr.bf16.mxu0 0
    %2484 = vmatmul.mubr.bf16.gmra.mxu0 %v2449
    %v2485 = vpop.f32.mrf.mxu0
    %v2486 = vadd.f32 0.0, %v2485
    %v2487 = vpop.f32.mrf.mxu0
    %v2488 = vpop.f32.mrf.mxu0
    %v2489 = vpop.f32.mrf.mxu0
    %2490 = vdwg.mxu0
    %v2499 = vunpack.c.l.b16 %v692
    %v2500 = vunpack.c.l.b16 %v693
    %v2501 = vunpack.c.l.b16 %v694
    %v2502 = vunpack.c.l.b16 %v695
    %v2503 = vunpack.c.l.b16 %v696
    %v2504 = vunpack.c.l.b16 %v697
    %v2505 = vunpack.c.l.b16 %v698
    %v2506 = vunpack.c.l.b16 %v699
    %v2507 = vpack.c.b16 %v2500, %v2499
    %v2508 = vpack.c.b16 %v2502, %v2501
    %v2509 = vpack.c.b16 %v2504, %v2503
    %v2510 = vpack.c.b16 %v2506, %v2505
    %v2516 = vsel %vm772, %v114, 0
    %2518 = vmatprep.subr.bf16.mxu0 0
    %2519 = vmatpush1.bf16.msra.mxu0 0
    %2520 = vmatprep.subr.bf16.mxu0 0
    %2521 = vmatpush1.bf16.msra.mxu0 0
    %2522 = vmatprep.subr.bf16.mxu0 0
    %2523 = vmatpush1.bf16.msra.mxu0 0
    %2524 = vmatprep.subr.bf16.mxu0 0
    %2525 = vmatpush1.bf16.msra.mxu0 0
    %2526 = vmatprep.subr.bf16.mxu0 0
    %2527 = vmatpush1.bf16.msra.mxu0 %v2510
    %2528 = vmatprep.subr.bf16.mxu0 0
    %2529 = vmatpush1.bf16.msra.mxu0 %v2509
    %2530 = vmatprep.subr.bf16.mxu0 0
    %2531 = vmatpush1.bf16.msra.mxu0 %v2508
    %2532 = vmatprep.subr.bf16.mxu0 0
    %2533 = vmatpush1.bf16.msra.mxu0 %v2507
    %2534 = vmatprep.subr.bf16.mxu0 0
    %2535 = vmatpush2.bf16.msra.mxu0 0
    %2536 = vmatprep.subr.bf16.mxu0 0
    %2537 = vmatpush2.bf16.msra.mxu0 0
    %2538 = vmatprep.subr.bf16.mxu0 0
    %2539 = vmatpush2.bf16.msra.mxu0 0
    %2540 = vmatprep.subr.bf16.mxu0 0
    %2541 = vmatpush2.bf16.msra.mxu0 0
    %2542 = vmatprep.subr.bf16.mxu0 0
    %2543 = vmatpush2.bf16.msra.mxu0 0
    %2544 = vmatprep.subr.bf16.mxu0 0
    %2545 = vmatpush2.bf16.msra.mxu0 0
    %2546 = vmatprep.subr.bf16.mxu0 0
    %2547 = vmatpush2.bf16.msra.mxu0 0
    %2548 = vmatprep.subr.bf16.mxu0 0
    %2549 = vmatpush2.bf16.msra.mxu0 0
    %2550 = vmatprep.mubr.bf16.mxu0 0
    %2551 = vmatmul.mubr.bf16.gmra.mxu0 %v2516
    %v2552 = vpop.f32.mrf.mxu0
    %v2553 = vadd.f32 0.0, %v2552
    %v2554 = vpop.f32.mrf.mxu0
    %v2555 = vpop.f32.mrf.mxu0
    %v2556 = vpop.f32.mrf.mxu0
    %2557 = vdwg.mxu0
    %v2566 = vunpack.c.l.b16 %v700
    %v2567 = vunpack.c.l.b16 %v701
    %v2568 = vunpack.c.l.b16 %v702
    %v2569 = vunpack.c.l.b16 %v703
    %v2570 = vunpack.c.l.b16 %v704
    %v2571 = vunpack.c.l.b16 %v705
    %v2572 = vunpack.c.l.b16 %v706
    %v2573 = vunpack.c.l.b16 %v707
    %v2574 = vpack.c.b16 %v2567, %v2566
    %v2575 = vpack.c.b16 %v2569, %v2568
    %v2576 = vpack.c.b16 %v2571, %v2570
    %v2577 = vpack.c.b16 %v2573, %v2572
    %v2583 = vsel %vm772, %v115, 0
    %2585 = vmatprep.subr.bf16.mxu0 0
    %2586 = vmatpush1.bf16.msra.mxu0 0
    %2587 = vmatprep.subr.bf16.mxu0 0
    %2588 = vmatpush1.bf16.msra.mxu0 0
    %2589 = vmatprep.subr.bf16.mxu0 0
    %2590 = vmatpush1.bf16.msra.mxu0 0
    %2591 = vmatprep.subr.bf16.mxu0 0
    %2592 = vmatpush1.bf16.msra.mxu0 0
    %2593 = vmatprep.subr.bf16.mxu0 0
    %2594 = vmatpush1.bf16.msra.mxu0 %v2577
    %2595 = vmatprep.subr.bf16.mxu0 0
    %2596 = vmatpush1.bf16.msra.mxu0 %v2576
    %2597 = vmatprep.subr.bf16.mxu0 0
    %2598 = vmatpush1.bf16.msra.mxu0 %v2575
    %2599 = vmatprep.subr.bf16.mxu0 0
    %2600 = vmatpush1.bf16.msra.mxu0 %v2574
    %2601 = vmatprep.subr.bf16.mxu0 0
    %2602 = vmatpush2.bf16.msra.mxu0 0
    %2603 = vmatprep.subr.bf16.mxu0 0
    %2604 = vmatpush2.bf16.msra.mxu0 0
    %2605 = vmatprep.subr.bf16.mxu0 0
    %2606 = vmatpush2.bf16.msra.mxu0 0
    %2607 = vmatprep.subr.bf16.mxu0 0
    %2608 = vmatpush2.bf16.msra.mxu0 0
    %2609 = vmatprep.subr.bf16.mxu0 0
    %2610 = vmatpush2.bf16.msra.mxu0 0
    %2611 = vmatprep.subr.bf16.mxu0 0
    %2612 = vmatpush2.bf16.msra.mxu0 0
    %2613 = vmatprep.subr.bf16.mxu0 0
    %2614 = vmatpush2.bf16.msra.mxu0 0
    %2615 = vmatprep.subr.bf16.mxu0 0
    %2616 = vmatpush2.bf16.msra.mxu0 0
    %2617 = vmatprep.mubr.bf16.mxu0 0
    %2618 = vmatmul.mubr.bf16.gmra.mxu0 %v2583
    %v2619 = vpop.f32.mrf.mxu0
    %v2620 = vadd.f32 0.0, %v2619
    %v2621 = vpop.f32.mrf.mxu0
    %v2622 = vpop.f32.mrf.mxu0
    %v2623 = vpop.f32.mrf.mxu0
    %2624 = vdwg.mxu0
    %v2633 = vunpack.c.l.b16 %v708
    %v2634 = vunpack.c.l.b16 %v709
    %v2635 = vunpack.c.l.b16 %v710
    %v2636 = vunpack.c.l.b16 %v711
    %v2637 = vunpack.c.l.b16 %v712
    %v2638 = vunpack.c.l.b16 %v713
    %v2639 = vunpack.c.l.b16 %v714
    %v2640 = vunpack.c.l.b16 %v715
    %v2641 = vpack.c.b16 %v2634, %v2633
    %v2642 = vpack.c.b16 %v2636, %v2635
    %v2643 = vpack.c.b16 %v2638, %v2637
    %v2644 = vpack.c.b16 %v2640, %v2639
    %v2650 = vsel %vm772, %v116, 0
    %2652 = vmatprep.subr.bf16.mxu0 0
    %2653 = vmatpush1.bf16.msra.mxu0 0
    %2654 = vmatprep.subr.bf16.mxu0 0
    %2655 = vmatpush1.bf16.msra.mxu0 0
    %2656 = vmatprep.subr.bf16.mxu0 0
    %2657 = vmatpush1.bf16.msra.mxu0 0
    %2658 = vmatprep.subr.bf16.mxu0 0
    %2659 = vmatpush1.bf16.msra.mxu0 0
    %2660 = vmatprep.subr.bf16.mxu0 0
    %2661 = vmatpush1.bf16.msra.mxu0 %v2644
    %2662 = vmatprep.subr.bf16.mxu0 0
    %2663 = vmatpush1.bf16.msra.mxu0 %v2643
    %2664 = vmatprep.subr.bf16.mxu0 0
    %2665 = vmatpush1.bf16.msra.mxu0 %v2642
    %2666 = vmatprep.subr.bf16.mxu0 0
    %2667 = vmatpush1.bf16.msra.mxu0 %v2641
    %2668 = vmatprep.subr.bf16.mxu0 0
    %2669 = vmatpush2.bf16.msra.mxu0 0
    %2670 = vmatprep.subr.bf16.mxu0 0
    %2671 = vmatpush2.bf16.msra.mxu0 0
    %2672 = vmatprep.subr.bf16.mxu0 0
    %2673 = vmatpush2.bf16.msra.mxu0 0
    %2674 = vmatprep.subr.bf16.mxu0 0
    %2675 = vmatpush2.bf16.msra.mxu0 0
    %2676 = vmatprep.subr.bf16.mxu0 0
    %2677 = vmatpush2.bf16.msra.mxu0 0
    %2678 = vmatprep.subr.bf16.mxu0 0
    %2679 = vmatpush2.bf16.msra.mxu0 0
    %2680 = vmatprep.subr.bf16.mxu0 0
    %2681 = vmatpush2.bf16.msra.mxu0 0
    %2682 = vmatprep.subr.bf16.mxu0 0
    %2683 = vmatpush2.bf16.msra.mxu0 0
    %2684 = vmatprep.mubr.bf16.mxu0 0
    %2685 = vmatmul.mubr.bf16.gmra.mxu0 %v2650
    %v2686 = vpop.f32.mrf.mxu0
    %v2687 = vadd.f32 0.0, %v2686
    %v2688 = vpop.f32.mrf.mxu0
    %v2689 = vpop.f32.mrf.mxu0
    %v2690 = vpop.f32.mrf.mxu0
    %2691 = vdwg.mxu0
    %v2700 = vunpack.c.l.b16 %v716
    %v2701 = vunpack.c.l.b16 %v717
    %v2702 = vunpack.c.l.b16 %v718
    %v2703 = vunpack.c.l.b16 %v719
    %v2704 = vunpack.c.l.b16 %v720
    %v2705 = vunpack.c.l.b16 %v721
    %v2706 = vunpack.c.l.b16 %v722
    %v2707 = vunpack.c.l.b16 %v723
    %v2708 = vpack.c.b16 %v2701, %v2700
    %v2709 = vpack.c.b16 %v2703, %v2702
    %v2710 = vpack.c.b16 %v2705, %v2704
    %v2711 = vpack.c.b16 %v2707, %v2706
    %v2717 = vsel %vm772, %v117, 0
    %2719 = vmatprep.subr.bf16.mxu0 0
    %2720 = vmatpush1.bf16.msra.mxu0 0
    %2721 = vmatprep.subr.bf16.mxu0 0
    %2722 = vmatpush1.bf16.msra.mxu0 0
    %2723 = vmatprep.subr.bf16.mxu0 0
    %2724 = vmatpush1.bf16.msra.mxu0 0
    %2725 = vmatprep.subr.bf16.mxu0 0
    %2726 = vmatpush1.bf16.msra.mxu0 0
    %2727 = vmatprep.subr.bf16.mxu0 0
    %2728 = vmatpush1.bf16.msra.mxu0 %v2711
    %2729 = vmatprep.subr.bf16.mxu0 0
    %2730 = vmatpush1.bf16.msra.mxu0 %v2710
    %2731 = vmatprep.subr.bf16.mxu0 0
    %2732 = vmatpush1.bf16.msra.mxu0 %v2709
    %2733 = vmatprep.subr.bf16.mxu0 0
    %2734 = vmatpush1.bf16.msra.mxu0 %v2708
    %2735 = vmatprep.subr.bf16.mxu0 0
    %2736 = vmatpush2.bf16.msra.mxu0 0
    %2737 = vmatprep.subr.bf16.mxu0 0
    %2738 = vmatpush2.bf16.msra.mxu0 0
    %2739 = vmatprep.subr.bf16.mxu0 0
    %2740 = vmatpush2.bf16.msra.mxu0 0
    %2741 = vmatprep.subr.bf16.mxu0 0
    %2742 = vmatpush2.bf16.msra.mxu0 0
    %2743 = vmatprep.subr.bf16.mxu0 0
    %2744 = vmatpush2.bf16.msra.mxu0 0
    %2745 = vmatprep.subr.bf16.mxu0 0
    %2746 = vmatpush2.bf16.msra.mxu0 0
    %2747 = vmatprep.subr.bf16.mxu0 0
    %2748 = vmatpush2.bf16.msra.mxu0 0
    %2749 = vmatprep.subr.bf16.mxu0 0
    %2750 = vmatpush2.bf16.msra.mxu0 0
    %2751 = vmatprep.mubr.bf16.mxu0 0
    %2752 = vmatmul.mubr.bf16.gmra.mxu0 %v2717
    %v2753 = vpop.f32.mrf.mxu0
    %v2754 = vadd.f32 0.0, %v2753
    %v2755 = vpop.f32.mrf.mxu0
    %v2756 = vpop.f32.mrf.mxu0
    %v2757 = vpop.f32.mrf.mxu0
    %2758 = vdwg.mxu0
    %v2767 = vunpack.c.l.b16 %v724
    %v2768 = vunpack.c.l.b16 %v725
    %v2769 = vunpack.c.l.b16 %v726
    %v2770 = vunpack.c.l.b16 %v727
    %v2771 = vunpack.c.l.b16 %v728
    %v2772 = vunpack.c.l.b16 %v729
    %v2773 = vunpack.c.l.b16 %v730
    %v2774 = vunpack.c.l.b16 %v731
    %v2775 = vpack.c.b16 %v2768, %v2767
    %v2776 = vpack.c.b16 %v2770, %v2769
    %v2777 = vpack.c.b16 %v2772, %v2771
    %v2778 = vpack.c.b16 %v2774, %v2773
    %v2784 = vsel %vm772, %v118, 0
    %2786 = vmatprep.subr.bf16.mxu0 0
    %2787 = vmatpush1.bf16.msra.mxu0 0
    %2788 = vmatprep.subr.bf16.mxu0 0
    %2789 = vmatpush1.bf16.msra.mxu0 0
    %2790 = vmatprep.subr.bf16.mxu0 0
    %2791 = vmatpush1.bf16.msra.mxu0 0
    %2792 = vmatprep.subr.bf16.mxu0 0
    %2793 = vmatpush1.bf16.msra.mxu0 0
    %2794 = vmatprep.subr.bf16.mxu0 0
    %2795 = vmatpush1.bf16.msra.mxu0 %v2778
    %2796 = vmatprep.subr.bf16.mxu0 0
    %2797 = vmatpush1.bf16.msra.mxu0 %v2777
    %2798 = vmatprep.subr.bf16.mxu0 0
    %2799 = vmatpush1.bf16.msra.mxu0 %v2776
    %2800 = vmatprep.subr.bf16.mxu0 0
    %2801 = vmatpush1.bf16.msra.mxu0 %v2775
    %2802 = vmatprep.subr.bf16.mxu0 0
    %2803 = vmatpush2.bf16.msra.mxu0 0
    %2804 = vmatprep.subr.bf16.mxu0 0
    %2805 = vmatpush2.bf16.msra.mxu0 0
    %2806 = vmatprep.subr.bf16.mxu0 0
    %2807 = vmatpush2.bf16.msra.mxu0 0
    %2808 = vmatprep.subr.bf16.mxu0 0
    %2809 = vmatpush2.bf16.msra.mxu0 0
    %2810 = vmatprep.subr.bf16.mxu0 0
    %2811 = vmatpush2.bf16.msra.mxu0 0
    %2812 = vmatprep.subr.bf16.mxu0 0
    %2813 = vmatpush2.bf16.msra.mxu0 0
    %2814 = vmatprep.subr.bf16.mxu0 0
    %2815 = vmatpush2.bf16.msra.mxu0 0
    %2816 = vmatprep.subr.bf16.mxu0 0
    %2817 = vmatpush2.bf16.msra.mxu0 0
    %2818 = vmatprep.mubr.bf16.mxu0 0
    %2819 = vmatmul.mubr.bf16.gmra.mxu0 %v2784
    %v2820 = vpop.f32.mrf.mxu0
    %v2821 = vadd.f32 0.0, %v2820
    %v2822 = vpop.f32.mrf.mxu0
    %v2823 = vpop.f32.mrf.mxu0
    %v2824 = vpop.f32.mrf.mxu0
    %2825 = vdwg.mxu0
    %v2834 = vunpack.c.l.b16 %v732
    %v2835 = vunpack.c.l.b16 %v733
    %v2836 = vunpack.c.l.b16 %v734
    %v2837 = vunpack.c.l.b16 %v735
    %v2838 = vunpack.c.l.b16 %v736
    %v2839 = vunpack.c.l.b16 %v737
    %v2840 = vunpack.c.l.b16 %v738
    %v2841 = vunpack.c.l.b16 %v739
    %v2842 = vpack.c.b16 %v2835, %v2834
    %v2843 = vpack.c.b16 %v2837, %v2836
    %v2844 = vpack.c.b16 %v2839, %v2838
    %v2845 = vpack.c.b16 %v2841, %v2840
    %v2851 = vsel %vm772, %v119, 0
    %2853 = vmatprep.subr.bf16.mxu0 0
    %2854 = vmatpush1.bf16.msra.mxu0 0
    %2855 = vmatprep.subr.bf16.mxu0 0
    %2856 = vmatpush1.bf16.msra.mxu0 0
    %2857 = vmatprep.subr.bf16.mxu0 0
    %2858 = vmatpush1.bf16.msra.mxu0 0
    %2859 = vmatprep.subr.bf16.mxu0 0
    %2860 = vmatpush1.bf16.msra.mxu0 0
    %2861 = vmatprep.subr.bf16.mxu0 0
    %2862 = vmatpush1.bf16.msra.mxu0 %v2845
    %2863 = vmatprep.subr.bf16.mxu0 0
    %2864 = vmatpush1.bf16.msra.mxu0 %v2844
    %2865 = vmatprep.subr.bf16.mxu0 0
    %2866 = vmatpush1.bf16.msra.mxu0 %v2843
    %2867 = vmatprep.subr.bf16.mxu0 0
    %2868 = vmatpush1.bf16.msra.mxu0 %v2842
    %2869 = vmatprep.subr.bf16.mxu0 0
    %2870 = vmatpush2.bf16.msra.mxu0 0
    %2871 = vmatprep.subr.bf16.mxu0 0
    %2872 = vmatpush2.bf16.msra.mxu0 0
    %2873 = vmatprep.subr.bf16.mxu0 0
    %2874 = vmatpush2.bf16.msra.mxu0 0
    %2875 = vmatprep.subr.bf16.mxu0 0
    %2876 = vmatpush2.bf16.msra.mxu0 0
    %2877 = vmatprep.subr.bf16.mxu0 0
    %2878 = vmatpush2.bf16.msra.mxu0 0
    %2879 = vmatprep.subr.bf16.mxu0 0
    %2880 = vmatpush2.bf16.msra.mxu0 0
    %2881 = vmatprep.subr.bf16.mxu0 0
    %2882 = vmatpush2.bf16.msra.mxu0 0
    %2883 = vmatprep.subr.bf16.mxu0 0
    %2884 = vmatpush2.bf16.msra.mxu0 0
    %2885 = vmatprep.mubr.bf16.mxu0 0
    %2886 = vmatmul.mubr.bf16.gmra.mxu0 %v2851
    %v2887 = vpop.f32.mrf.mxu0
    %v2888 = vadd.f32 0.0, %v2887
    %v2889 = vpop.f32.mrf.mxu0
    %v2890 = vpop.f32.mrf.mxu0
    %v2891 = vpop.f32.mrf.mxu0
    %2892 = vdwg.mxu0
    %v2901 = vunpack.c.l.b16 %v740
    %v2902 = vunpack.c.l.b16 %v741
    %v2903 = vunpack.c.l.b16 %v742
    %v2904 = vunpack.c.l.b16 %v743
    %v2905 = vunpack.c.l.b16 %v744
    %v2906 = vunpack.c.l.b16 %v745
    %v2907 = vunpack.c.l.b16 %v746
    %v2908 = vunpack.c.l.b16 %v747
    %v2909 = vpack.c.b16 %v2902, %v2901
    %v2910 = vpack.c.b16 %v2904, %v2903
    %v2911 = vpack.c.b16 %v2906, %v2905
    %v2912 = vpack.c.b16 %v2908, %v2907
    %v2918 = vsel %vm772, %v120, 0
    %2920 = vmatprep.subr.bf16.mxu0 0
    %2921 = vmatpush1.bf16.msra.mxu0 0
    %2922 = vmatprep.subr.bf16.mxu0 0
    %2923 = vmatpush1.bf16.msra.mxu0 0
    %2924 = vmatprep.subr.bf16.mxu0 0
    %2925 = vmatpush1.bf16.msra.mxu0 0
    %2926 = vmatprep.subr.bf16.mxu0 0
    %2927 = vmatpush1.bf16.msra.mxu0 0
    %2928 = vmatprep.subr.bf16.mxu0 0
    %2929 = vmatpush1.bf16.msra.mxu0 %v2912
    %2930 = vmatprep.subr.bf16.mxu0 0
    %2931 = vmatpush1.bf16.msra.mxu0 %v2911
    %2932 = vmatprep.subr.bf16.mxu0 0
    %2933 = vmatpush1.bf16.msra.mxu0 %v2910
    %2934 = vmatprep.subr.bf16.mxu0 0
    %2935 = vmatpush1.bf16.msra.mxu0 %v2909
    %2936 = vmatprep.subr.bf16.mxu0 0
    %2937 = vmatpush2.bf16.msra.mxu0 0
    %2938 = vmatprep.subr.bf16.mxu0 0
    %2939 = vmatpush2.bf16.msra.mxu0 0
    %2940 = vmatprep.subr.bf16.mxu0 0
    %2941 = vmatpush2.bf16.msra.mxu0 0
    %2942 = vmatprep.subr.bf16.mxu0 0
    %2943 = vmatpush2.bf16.msra.mxu0 0
    %2944 = vmatprep.subr.bf16.mxu0 0
    %2945 = vmatpush2.bf16.msra.mxu0 0
    %2946 = vmatprep.subr.bf16.mxu0 0
    %2947 = vmatpush2.bf16.msra.mxu0 0
    %2948 = vmatprep.subr.bf16.mxu0 0
    %2949 = vmatpush2.bf16.msra.mxu0 0
    %2950 = vmatprep.subr.bf16.mxu0 0
    %2951 = vmatpush2.bf16.msra.mxu0 0
    %2952 = vmatprep.mubr.bf16.mxu0 0
    %2953 = vmatmul.mubr.bf16.gmra.mxu0 %v2918
    %v2954 = vpop.f32.mrf.mxu0
    %v2955 = vadd.f32 0.0, %v2954
    %v2956 = vpop.f32.mrf.mxu0
    %v2957 = vpop.f32.mrf.mxu0
    %v2958 = vpop.f32.mrf.mxu0
    %2959 = vdwg.mxu0
    %v2968 = vunpack.c.l.b16 %v220
    %v2969 = vunpack.c.l.b16 %v221
    %v2970 = vunpack.c.l.b16 %v222
    %v2971 = vunpack.c.l.b16 %v223
    %v2972 = vunpack.c.l.b16 %v224
    %v2973 = vunpack.c.l.b16 %v225
    %v2974 = vunpack.c.l.b16 %v226
    %v2975 = vunpack.c.l.b16 %v227
    %v2976 = vpack.c.b16 %v2969, %v2968
    %v2977 = vpack.c.b16 %v2971, %v2970
    %v2978 = vpack.c.b16 %v2973, %v2972
    %v2979 = vpack.c.b16 %v2975, %v2974
    %2984 = vmatprep.subr.bf16.mxu0 0
    %2985 = vmatpush1.bf16.msra.mxu0 0
    %2986 = vmatprep.subr.bf16.mxu0 0
    %2987 = vmatpush1.bf16.msra.mxu0 0
    %2988 = vmatprep.subr.bf16.mxu0 0
    %2989 = vmatpush1.bf16.msra.mxu0 0
    %2990 = vmatprep.subr.bf16.mxu0 0
    %2991 = vmatpush1.bf16.msra.mxu0 0
    %2992 = vmatprep.subr.bf16.mxu0 0
    %2993 = vmatpush1.bf16.msra.mxu0 %v2979
    %2994 = vmatprep.subr.bf16.mxu0 0
    %2995 = vmatpush1.bf16.msra.mxu0 %v2978
    %2996 = vmatprep.subr.bf16.mxu0 0
    %2997 = vmatpush1.bf16.msra.mxu0 %v2977
    %2998 = vmatprep.subr.bf16.mxu0 0
    %2999 = vmatpush1.bf16.msra.mxu0 %v2976
    %3000 = vmatprep.subr.bf16.mxu0 0
    %3001 = vmatpush2.bf16.msra.mxu0 0
    %3002 = vmatprep.subr.bf16.mxu0 0
    %3003 = vmatpush2.bf16.msra.mxu0 0
    %3004 = vmatprep.subr.bf16.mxu0 0
    %3005 = vmatpush2.bf16.msra.mxu0 0
    %3006 = vmatprep.subr.bf16.mxu0 0
    %3007 = vmatpush2.bf16.msra.mxu0 0
    %3008 = vmatprep.subr.bf16.mxu0 0
    %3009 = vmatpush2.bf16.msra.mxu0 0
    %3010 = vmatprep.subr.bf16.mxu0 0
    %3011 = vmatpush2.bf16.msra.mxu0 0
    %3012 = vmatprep.subr.bf16.mxu0 0
    %3013 = vmatpush2.bf16.msra.mxu0 0
    %3014 = vmatprep.subr.bf16.mxu0 0
    %3015 = vmatpush2.bf16.msra.mxu0 0
    %3016 = vmatprep.mubr.bf16.mxu0 0
    %3017 = vmatmul.mubr.bf16.gmra.mxu0 %v774
    %v3018 = vpop.f32.mrf.mxu0
    %v3019 = vadd.f32 %v811, %v3018
    %v3020 = vpop.f32.mrf.mxu0
    %v3021 = vpop.f32.mrf.mxu0
    %v3022 = vpop.f32.mrf.mxu0
    %3023 = vdwg.mxu0
    %v3032 = vunpack.c.l.b16 %v228
    %v3033 = vunpack.c.l.b16 %v229
    %v3034 = vunpack.c.l.b16 %v230
    %v3035 = vunpack.c.l.b16 %v231
    %v3036 = vunpack.c.l.b16 %v232
    %v3037 = vunpack.c.l.b16 %v233
    %v3038 = vunpack.c.l.b16 %v234
    %v3039 = vunpack.c.l.b16 %v235
    %v3040 = vpack.c.b16 %v3033, %v3032
    %v3041 = vpack.c.b16 %v3035, %v3034
    %v3042 = vpack.c.b16 %v3037, %v3036
    %v3043 = vpack.c.b16 %v3039, %v3038
    %3048 = vmatprep.subr.bf16.mxu0 0
    %3049 = vmatpush1.bf16.msra.mxu0 0
    %3050 = vmatprep.subr.bf16.mxu0 0
    %3051 = vmatpush1.bf16.msra.mxu0 0
    %3052 = vmatprep.subr.bf16.mxu0 0
    %3053 = vmatpush1.bf16.msra.mxu0 0
    %3054 = vmatprep.subr.bf16.mxu0 0
    %3055 = vmatpush1.bf16.msra.mxu0 0
    %3056 = vmatprep.subr.bf16.mxu0 0
    %3057 = vmatpush1.bf16.msra.mxu0 %v3043
    %3058 = vmatprep.subr.bf16.mxu0 0
    %3059 = vmatpush1.bf16.msra.mxu0 %v3042
    %3060 = vmatprep.subr.bf16.mxu0 0
    %3061 = vmatpush1.bf16.msra.mxu0 %v3041
    %3062 = vmatprep.subr.bf16.mxu0 0
    %3063 = vmatpush1.bf16.msra.mxu0 %v3040
    %3064 = vmatprep.subr.bf16.mxu0 0
    %3065 = vmatpush2.bf16.msra.mxu0 0
    %3066 = vmatprep.subr.bf16.mxu0 0
    %3067 = vmatpush2.bf16.msra.mxu0 0
    %3068 = vmatprep.subr.bf16.mxu0 0
    %3069 = vmatpush2.bf16.msra.mxu0 0
    %3070 = vmatprep.subr.bf16.mxu0 0
    %3071 = vmatpush2.bf16.msra.mxu0 0
    %3072 = vmatprep.subr.bf16.mxu0 0
    %3073 = vmatpush2.bf16.msra.mxu0 0
    %3074 = vmatprep.subr.bf16.mxu0 0
    %3075 = vmatpush2.bf16.msra.mxu0 0
    %3076 = vmatprep.subr.bf16.mxu0 0
    %3077 = vmatpush2.bf16.msra.mxu0 0
    %3078 = vmatprep.subr.bf16.mxu0 0
    %3079 = vmatpush2.bf16.msra.mxu0 0
    %3080 = vmatprep.mubr.bf16.mxu0 0
    %3081 = vmatmul.mubr.bf16.gmra.mxu0 %v841
    %v3082 = vpop.f32.mrf.mxu0
    %v3083 = vadd.f32 %v878, %v3082
    %v3084 = vpop.f32.mrf.mxu0
    %v3085 = vpop.f32.mrf.mxu0
    %v3086 = vpop.f32.mrf.mxu0
    %3087 = vdwg.mxu0
    %v3096 = vunpack.c.l.b16 %v236
    %v3097 = vunpack.c.l.b16 %v237
    %v3098 = vunpack.c.l.b16 %v238
    %v3099 = vunpack.c.l.b16 %v239
    %v3100 = vunpack.c.l.b16 %v240
    %v3101 = vunpack.c.l.b16 %v241
    %v3102 = vunpack.c.l.b16 %v242
    %v3103 = vunpack.c.l.b16 %v243
    %v3104 = vpack.c.b16 %v3097, %v3096
    %v3105 = vpack.c.b16 %v3099, %v3098
    %v3106 = vpack.c.b16 %v3101, %v3100
    %v3107 = vpack.c.b16 %v3103, %v3102
    %3112 = vmatprep.subr.bf16.mxu0 0
    %3113 = vmatpush1.bf16.msra.mxu0 0
    %3114 = vmatprep.subr.bf16.mxu0 0
    %3115 = vmatpush1.bf16.msra.mxu0 0
    %3116 = vmatprep.subr.bf16.mxu0 0
    %3117 = vmatpush1.bf16.msra.mxu0 0
    %3118 = vmatprep.subr.bf16.mxu0 0
    %3119 = vmatpush1.bf16.msra.mxu0 0
    %3120 = vmatprep.subr.bf16.mxu0 0
    %3121 = vmatpush1.bf16.msra.mxu0 %v3107
    %3122 = vmatprep.subr.bf16.mxu0 0
    %3123 = vmatpush1.bf16.msra.mxu0 %v3106
    %3124 = vmatprep.subr.bf16.mxu0 0
    %3125 = vmatpush1.bf16.msra.mxu0 %v3105
    %3126 = vmatprep.subr.bf16.mxu0 0
    %3127 = vmatpush1.bf16.msra.mxu0 %v3104
    %3128 = vmatprep.subr.bf16.mxu0 0
    %3129 = vmatpush2.bf16.msra.mxu0 0
    %3130 = vmatprep.subr.bf16.mxu0 0
    %3131 = vmatpush2.bf16.msra.mxu0 0
    %3132 = vmatprep.subr.bf16.mxu0 0
    %3133 = vmatpush2.bf16.msra.mxu0 0
    %3134 = vmatprep.subr.bf16.mxu0 0
    %3135 = vmatpush2.bf16.msra.mxu0 0
    %3136 = vmatprep.subr.bf16.mxu0 0
    %3137 = vmatpush2.bf16.msra.mxu0 0
    %3138 = vmatprep.subr.bf16.mxu0 0
    %3139 = vmatpush2.bf16.msra.mxu0 0
    %3140 = vmatprep.subr.bf16.mxu0 0
    %3141 = vmatpush2.bf16.msra.mxu0 0
    %3142 = vmatprep.subr.bf16.mxu0 0
    %3143 = vmatpush2.bf16.msra.mxu0 0
    %3144 = vmatprep.mubr.bf16.mxu0 0
    %3145 = vmatmul.mubr.bf16.gmra.mxu0 %v908
    %v3146 = vpop.f32.mrf.mxu0
    %v3147 = vadd.f32 %v945, %v3146
    %v3148 = vpop.f32.mrf.mxu0
    %v3149 = vpop.f32.mrf.mxu0
    %v3150 = vpop.f32.mrf.mxu0
    %3151 = vdwg.mxu0
    %v3160 = vunpack.c.l.b16 %v244
    %v3161 = vunpack.c.l.b16 %v245
    %v3162 = vunpack.c.l.b16 %v246
    %v3163 = vunpack.c.l.b16 %v247
    %v3164 = vunpack.c.l.b16 %v248
    %v3165 = vunpack.c.l.b16 %v249
    %v3166 = vunpack.c.l.b16 %v250
    %v3167 = vunpack.c.l.b16 %v251
    %v3168 = vpack.c.b16 %v3161, %v3160
    %v3169 = vpack.c.b16 %v3163, %v3162
    %v3170 = vpack.c.b16 %v3165, %v3164
    %v3171 = vpack.c.b16 %v3167, %v3166
    %3176 = vmatprep.subr.bf16.mxu0 0
    %3177 = vmatpush1.bf16.msra.mxu0 0
    %3178 = vmatprep.subr.bf16.mxu0 0
    %3179 = vmatpush1.bf16.msra.mxu0 0
    %3180 = vmatprep.subr.bf16.mxu0 0
    %3181 = vmatpush1.bf16.msra.mxu0 0
    %3182 = vmatprep.subr.bf16.mxu0 0
    %3183 = vmatpush1.bf16.msra.mxu0 0
    %3184 = vmatprep.subr.bf16.mxu0 0
    %3185 = vmatpush1.bf16.msra.mxu0 %v3171
    %3186 = vmatprep.subr.bf16.mxu0 0
    %3187 = vmatpush1.bf16.msra.mxu0 %v3170
    %3188 = vmatprep.subr.bf16.mxu0 0
    %3189 = vmatpush1.bf16.msra.mxu0 %v3169
    %3190 = vmatprep.subr.bf16.mxu0 0
    %3191 = vmatpush1.bf16.msra.mxu0 %v3168
    %3192 = vmatprep.subr.bf16.mxu0 0
    %3193 = vmatpush2.bf16.msra.mxu0 0
    %3194 = vmatprep.subr.bf16.mxu0 0
    %3195 = vmatpush2.bf16.msra.mxu0 0
    %3196 = vmatprep.subr.bf16.mxu0 0
    %3197 = vmatpush2.bf16.msra.mxu0 0
    %3198 = vmatprep.subr.bf16.mxu0 0
    %3199 = vmatpush2.bf16.msra.mxu0 0
    %3200 = vmatprep.subr.bf16.mxu0 0
    %3201 = vmatpush2.bf16.msra.mxu0 0
    %3202 = vmatprep.subr.bf16.mxu0 0
    %3203 = vmatpush2.bf16.msra.mxu0 0
    %3204 = vmatprep.subr.bf16.mxu0 0
    %3205 = vmatpush2.bf16.msra.mxu0 0
    %3206 = vmatprep.subr.bf16.mxu0 0
    %3207 = vmatpush2.bf16.msra.mxu0 0
    %3208 = vmatprep.mubr.bf16.mxu0 0
    %3209 = vmatmul.mubr.bf16.gmra.mxu0 %v975
    %v3210 = vpop.f32.mrf.mxu0
    %v3211 = vadd.f32 %v1012, %v3210
    %v3212 = vpop.f32.mrf.mxu0
    %v3213 = vpop.f32.mrf.mxu0
    %v3214 = vpop.f32.mrf.mxu0
    %3215 = vdwg.mxu0
    %v3224 = vunpack.c.l.b16 %v252
    %v3225 = vunpack.c.l.b16 %v253
    %v3226 = vunpack.c.l.b16 %v254
    %v3227 = vunpack.c.l.b16 %v255
    %v3228 = vunpack.c.l.b16 %v256
    %v3229 = vunpack.c.l.b16 %v257
    %v3230 = vunpack.c.l.b16 %v258
    %v3231 = vunpack.c.l.b16 %v259
    %v3232 = vpack.c.b16 %v3225, %v3224
    %v3233 = vpack.c.b16 %v3227, %v3226
    %v3234 = vpack.c.b16 %v3229, %v3228
    %v3235 = vpack.c.b16 %v3231, %v3230
    %3240 = vmatprep.subr.bf16.mxu0 0
    %3241 = vmatpush1.bf16.msra.mxu0 0
    %3242 = vmatprep.subr.bf16.mxu0 0
    %3243 = vmatpush1.bf16.msra.mxu0 0
    %3244 = vmatprep.subr.bf16.mxu0 0
    %3245 = vmatpush1.bf16.msra.mxu0 0
    %3246 = vmatprep.subr.bf16.mxu0 0
    %3247 = vmatpush1.bf16.msra.mxu0 0
    %3248 = vmatprep.subr.bf16.mxu0 0
    %3249 = vmatpush1.bf16.msra.mxu0 %v3235
    %3250 = vmatprep.subr.bf16.mxu0 0
    %3251 = vmatpush1.bf16.msra.mxu0 %v3234
    %3252 = vmatprep.subr.bf16.mxu0 0
    %3253 = vmatpush1.bf16.msra.mxu0 %v3233
    %3254 = vmatprep.subr.bf16.mxu0 0
    %3255 = vmatpush1.bf16.msra.mxu0 %v3232
    %3256 = vmatprep.subr.bf16.mxu0 0
    %3257 = vmatpush2.bf16.msra.mxu0 0
    %3258 = vmatprep.subr.bf16.mxu0 0
    %3259 = vmatpush2.bf16.msra.mxu0 0
    %3260 = vmatprep.subr.bf16.mxu0 0
    %3261 = vmatpush2.bf16.msra.mxu0 0
    %3262 = vmatprep.subr.bf16.mxu0 0
    %3263 = vmatpush2.bf16.msra.mxu0 0
    %3264 = vmatprep.subr.bf16.mxu0 0
    %3265 = vmatpush2.bf16.msra.mxu0 0
    %3266 = vmatprep.subr.bf16.mxu0 0
    %3267 = vmatpush2.bf16.msra.mxu0 0
    %3268 = vmatprep.subr.bf16.mxu0 0
    %3269 = vmatpush2.bf16.msra.mxu0 0
    %3270 = vmatprep.subr.bf16.mxu0 0
    %3271 = vmatpush2.bf16.msra.mxu0 0
    %3272 = vmatprep.mubr.bf16.mxu0 0
    %3273 = vmatmul.mubr.bf16.gmra.mxu0 %v1042
    %v3274 = vpop.f32.mrf.mxu0
    %v3275 = vadd.f32 %v1079, %v3274
    %v3276 = vpop.f32.mrf.mxu0
    %v3277 = vpop.f32.mrf.mxu0
    %v3278 = vpop.f32.mrf.mxu0
    %3279 = vdwg.mxu0
    %v3288 = vunpack.c.l.b16 %v260
    %v3289 = vunpack.c.l.b16 %v261
    %v3290 = vunpack.c.l.b16 %v262
    %v3291 = vunpack.c.l.b16 %v263
    %v3292 = vunpack.c.l.b16 %v264
    %v3293 = vunpack.c.l.b16 %v265
    %v3294 = vunpack.c.l.b16 %v266
    %v3295 = vunpack.c.l.b16 %v267
    %v3296 = vpack.c.b16 %v3289, %v3288
    %v3297 = vpack.c.b16 %v3291, %v3290
    %v3298 = vpack.c.b16 %v3293, %v3292
    %v3299 = vpack.c.b16 %v3295, %v3294
    %3304 = vmatprep.subr.bf16.mxu0 0
    %3305 = vmatpush1.bf16.msra.mxu0 0
    %3306 = vmatprep.subr.bf16.mxu0 0
    %3307 = vmatpush1.bf16.msra.mxu0 0
    %3308 = vmatprep.subr.bf16.mxu0 0
    %3309 = vmatpush1.bf16.msra.mxu0 0
    %3310 = vmatprep.subr.bf16.mxu0 0
    %3311 = vmatpush1.bf16.msra.mxu0 0
    %3312 = vmatprep.subr.bf16.mxu0 0
    %3313 = vmatpush1.bf16.msra.mxu0 %v3299
    %3314 = vmatprep.subr.bf16.mxu0 0
    %3315 = vmatpush1.bf16.msra.mxu0 %v3298
    %3316 = vmatprep.subr.bf16.mxu0 0
    %3317 = vmatpush1.bf16.msra.mxu0 %v3297
    %3318 = vmatprep.subr.bf16.mxu0 0
    %3319 = vmatpush1.bf16.msra.mxu0 %v3296
    %3320 = vmatprep.subr.bf16.mxu0 0
    %3321 = vmatpush2.bf16.msra.mxu0 0
    %3322 = vmatprep.subr.bf16.mxu0 0
    %3323 = vmatpush2.bf16.msra.mxu0 0
    %3324 = vmatprep.subr.bf16.mxu0 0
    %3325 = vmatpush2.bf16.msra.mxu0 0
    %3326 = vmatprep.subr.bf16.mxu0 0
    %3327 = vmatpush2.bf16.msra.mxu0 0
    %3328 = vmatprep.subr.bf16.mxu0 0
    %3329 = vmatpush2.bf16.msra.mxu0 0
    %3330 = vmatprep.subr.bf16.mxu0 0
    %3331 = vmatpush2.bf16.msra.mxu0 0
    %3332 = vmatprep.subr.bf16.mxu0 0
    %3333 = vmatpush2.bf16.msra.mxu0 0
    %3334 = vmatprep.subr.bf16.mxu0 0
    %3335 = vmatpush2.bf16.msra.mxu0 0
    %3336 = vmatprep.mubr.bf16.mxu0 0
    %3337 = vmatmul.mubr.bf16.gmra.mxu0 %v1109
    %v3338 = vpop.f32.mrf.mxu0
    %v3339 = vadd.f32 %v1146, %v3338
    %v3340 = vpop.f32.mrf.mxu0
    %v3341 = vpop.f32.mrf.mxu0
    %v3342 = vpop.f32.mrf.mxu0
    %3343 = vdwg.mxu0
    %v3352 = vunpack.c.l.b16 %v268
    %v3353 = vunpack.c.l.b16 %v269
    %v3354 = vunpack.c.l.b16 %v270
    %v3355 = vunpack.c.l.b16 %v271
    %v3356 = vunpack.c.l.b16 %v272
    %v3357 = vunpack.c.l.b16 %v273
    %v3358 = vunpack.c.l.b16 %v274
    %v3359 = vunpack.c.l.b16 %v275
    %v3360 = vpack.c.b16 %v3353, %v3352
    %v3361 = vpack.c.b16 %v3355, %v3354
    %v3362 = vpack.c.b16 %v3357, %v3356
    %v3363 = vpack.c.b16 %v3359, %v3358
    %3368 = vmatprep.subr.bf16.mxu0 0
    %3369 = vmatpush1.bf16.msra.mxu0 0
    %3370 = vmatprep.subr.bf16.mxu0 0
    %3371 = vmatpush1.bf16.msra.mxu0 0
    %3372 = vmatprep.subr.bf16.mxu0 0
    %3373 = vmatpush1.bf16.msra.mxu0 0
    %3374 = vmatprep.subr.bf16.mxu0 0
    %3375 = vmatpush1.bf16.msra.mxu0 0
    %3376 = vmatprep.subr.bf16.mxu0 0
    %3377 = vmatpush1.bf16.msra.mxu0 %v3363
    %3378 = vmatprep.subr.bf16.mxu0 0
    %3379 = vmatpush1.bf16.msra.mxu0 %v3362
    %3380 = vmatprep.subr.bf16.mxu0 0
    %3381 = vmatpush1.bf16.msra.mxu0 %v3361
    %3382 = vmatprep.subr.bf16.mxu0 0
    %3383 = vmatpush1.bf16.msra.mxu0 %v3360
    %3384 = vmatprep.subr.bf16.mxu0 0
    %3385 = vmatpush2.bf16.msra.mxu0 0
    %3386 = vmatprep.subr.bf16.mxu0 0
    %3387 = vmatpush2.bf16.msra.mxu0 0
    %3388 = vmatprep.subr.bf16.mxu0 0
    %3389 = vmatpush2.bf16.msra.mxu0 0
    %3390 = vmatprep.subr.bf16.mxu0 0
    %3391 = vmatpush2.bf16.msra.mxu0 0
    %3392 = vmatprep.subr.bf16.mxu0 0
    %3393 = vmatpush2.bf16.msra.mxu0 0
    %3394 = vmatprep.subr.bf16.mxu0 0
    %3395 = vmatpush2.bf16.msra.mxu0 0
    %3396 = vmatprep.subr.bf16.mxu0 0
    %3397 = vmatpush2.bf16.msra.mxu0 0
    %3398 = vmatprep.subr.bf16.mxu0 0
    %3399 = vmatpush2.bf16.msra.mxu0 0
    %3400 = vmatprep.mubr.bf16.mxu0 0
    %3401 = vmatmul.mubr.bf16.gmra.mxu0 %v1176
    %v3402 = vpop.f32.mrf.mxu0
    %v3403 = vadd.f32 %v1213, %v3402
    %v3404 = vpop.f32.mrf.mxu0
    %v3405 = vpop.f32.mrf.mxu0
    %v3406 = vpop.f32.mrf.mxu0
    %3407 = vdwg.mxu0
    %v3416 = vunpack.c.l.b16 %v276
    %v3417 = vunpack.c.l.b16 %v277
    %v3418 = vunpack.c.l.b16 %v278
    %v3419 = vunpack.c.l.b16 %v279
    %v3420 = vunpack.c.l.b16 %v280
    %v3421 = vunpack.c.l.b16 %v281
    %v3422 = vunpack.c.l.b16 %v282
    %v3423 = vunpack.c.l.b16 %v283
    %v3424 = vpack.c.b16 %v3417, %v3416
    %v3425 = vpack.c.b16 %v3419, %v3418
    %v3426 = vpack.c.b16 %v3421, %v3420
    %v3427 = vpack.c.b16 %v3423, %v3422
    %3432 = vmatprep.subr.bf16.mxu0 0
    %3433 = vmatpush1.bf16.msra.mxu0 0
    %3434 = vmatprep.subr.bf16.mxu0 0
    %3435 = vmatpush1.bf16.msra.mxu0 0
    %3436 = vmatprep.subr.bf16.mxu0 0
    %3437 = vmatpush1.bf16.msra.mxu0 0
    %3438 = vmatprep.subr.bf16.mxu0 0
    %3439 = vmatpush1.bf16.msra.mxu0 0
    %3440 = vmatprep.subr.bf16.mxu0 0
    %3441 = vmatpush1.bf16.msra.mxu0 %v3427
    %3442 = vmatprep.subr.bf16.mxu0 0
    %3443 = vmatpush1.bf16.msra.mxu0 %v3426
    %3444 = vmatprep.subr.bf16.mxu0 0
    %3445 = vmatpush1.bf16.msra.mxu0 %v3425
    %3446 = vmatprep.subr.bf16.mxu0 0
    %3447 = vmatpush1.bf16.msra.mxu0 %v3424
    %3448 = vmatprep.subr.bf16.mxu0 0
    %3449 = vmatpush2.bf16.msra.mxu0 0
    %3450 = vmatprep.subr.bf16.mxu0 0
    %3451 = vmatpush2.bf16.msra.mxu0 0
    %3452 = vmatprep.subr.bf16.mxu0 0
    %3453 = vmatpush2.bf16.msra.mxu0 0
    %3454 = vmatprep.subr.bf16.mxu0 0
    %3455 = vmatpush2.bf16.msra.mxu0 0
    %3456 = vmatprep.subr.bf16.mxu0 0
    %3457 = vmatpush2.bf16.msra.mxu0 0
    %3458 = vmatprep.subr.bf16.mxu0 0
    %3459 = vmatpush2.bf16.msra.mxu0 0
    %3460 = vmatprep.subr.bf16.mxu0 0
    %3461 = vmatpush2.bf16.msra.mxu0 0
    %3462 = vmatprep.subr.bf16.mxu0 0
    %3463 = vmatpush2.bf16.msra.mxu0 0
    %3464 = vmatprep.mubr.bf16.mxu0 0
    %3465 = vmatmul.mubr.bf16.gmra.mxu0 %v1243
    %v3466 = vpop.f32.mrf.mxu0
    %v3467 = vadd.f32 %v1280, %v3466
    %v3468 = vpop.f32.mrf.mxu0
    %v3469 = vpop.f32.mrf.mxu0
    %v3470 = vpop.f32.mrf.mxu0
    %3471 = vdwg.mxu0
    %v3480 = vunpack.c.l.b16 %v284
    %v3481 = vunpack.c.l.b16 %v285
    %v3482 = vunpack.c.l.b16 %v286
    %v3483 = vunpack.c.l.b16 %v287
    %v3484 = vunpack.c.l.b16 %v288
    %v3485 = vunpack.c.l.b16 %v289
    %v3486 = vunpack.c.l.b16 %v290
    %v3487 = vunpack.c.l.b16 %v291
    %v3488 = vpack.c.b16 %v3481, %v3480
    %v3489 = vpack.c.b16 %v3483, %v3482
    %v3490 = vpack.c.b16 %v3485, %v3484
    %v3491 = vpack.c.b16 %v3487, %v3486
    %3496 = vmatprep.subr.bf16.mxu0 0
    %3497 = vmatpush1.bf16.msra.mxu0 0
    %3498 = vmatprep.subr.bf16.mxu0 0
    %3499 = vmatpush1.bf16.msra.mxu0 0
    %3500 = vmatprep.subr.bf16.mxu0 0
    %3501 = vmatpush1.bf16.msra.mxu0 0
    %3502 = vmatprep.subr.bf16.mxu0 0
    %3503 = vmatpush1.bf16.msra.mxu0 0
    %3504 = vmatprep.subr.bf16.mxu0 0
    %3505 = vmatpush1.bf16.msra.mxu0 %v3491
    %3506 = vmatprep.subr.bf16.mxu0 0
    %3507 = vmatpush1.bf16.msra.mxu0 %v3490
    %3508 = vmatprep.subr.bf16.mxu0 0
    %3509 = vmatpush1.bf16.msra.mxu0 %v3489
    %3510 = vmatprep.subr.bf16.mxu0 0
    %3511 = vmatpush1.bf16.msra.mxu0 %v3488
    %3512 = vmatprep.subr.bf16.mxu0 0
    %3513 = vmatpush2.bf16.msra.mxu0 0
    %3514 = vmatprep.subr.bf16.mxu0 0
    %3515 = vmatpush2.bf16.msra.mxu0 0
    %3516 = vmatprep.subr.bf16.mxu0 0
    %3517 = vmatpush2.bf16.msra.mxu0 0
    %3518 = vmatprep.subr.bf16.mxu0 0
    %3519 = vmatpush2.bf16.msra.mxu0 0
    %3520 = vmatprep.subr.bf16.mxu0 0
    %3521 = vmatpush2.bf16.msra.mxu0 0
    %3522 = vmatprep.subr.bf16.mxu0 0
    %3523 = vmatpush2.bf16.msra.mxu0 0
    %3524 = vmatprep.subr.bf16.mxu0 0
    %3525 = vmatpush2.bf16.msra.mxu0 0
    %3526 = vmatprep.subr.bf16.mxu0 0
    %3527 = vmatpush2.bf16.msra.mxu0 0
    %3528 = vmatprep.mubr.bf16.mxu0 0
    %3529 = vmatmul.mubr.bf16.gmra.mxu0 %v1310
    %v3530 = vpop.f32.mrf.mxu0
    %v3531 = vadd.f32 %v1347, %v3530
    %v3532 = vpop.f32.mrf.mxu0
    %v3533 = vpop.f32.mrf.mxu0
    %v3534 = vpop.f32.mrf.mxu0
    %3535 = vdwg.mxu0
    %v3544 = vunpack.c.l.b16 %v292
    %v3545 = vunpack.c.l.b16 %v293
    %v3546 = vunpack.c.l.b16 %v294
    %v3547 = vunpack.c.l.b16 %v295
    %v3548 = vunpack.c.l.b16 %v296
    %v3549 = vunpack.c.l.b16 %v297
    %v3550 = vunpack.c.l.b16 %v298
    %v3551 = vunpack.c.l.b16 %v299
    %v3552 = vpack.c.b16 %v3545, %v3544
    %v3553 = vpack.c.b16 %v3547, %v3546
    %v3554 = vpack.c.b16 %v3549, %v3548
    %v3555 = vpack.c.b16 %v3551, %v3550
    %3560 = vmatprep.subr.bf16.mxu0 0
    %3561 = vmatpush1.bf16.msra.mxu0 0
    %3562 = vmatprep.subr.bf16.mxu0 0
    %3563 = vmatpush1.bf16.msra.mxu0 0
    %3564 = vmatprep.subr.bf16.mxu0 0
    %3565 = vmatpush1.bf16.msra.mxu0 0
    %3566 = vmatprep.subr.bf16.mxu0 0
    %3567 = vmatpush1.bf16.msra.mxu0 0
    %3568 = vmatprep.subr.bf16.mxu0 0
    %3569 = vmatpush1.bf16.msra.mxu0 %v3555
    %3570 = vmatprep.subr.bf16.mxu0 0
    %3571 = vmatpush1.bf16.msra.mxu0 %v3554
    %3572 = vmatprep.subr.bf16.mxu0 0
    %3573 = vmatpush1.bf16.msra.mxu0 %v3553
    %3574 = vmatprep.subr.bf16.mxu0 0
    %3575 = vmatpush1.bf16.msra.mxu0 %v3552
    %3576 = vmatprep.subr.bf16.mxu0 0
    %3577 = vmatpush2.bf16.msra.mxu0 0
    %3578 = vmatprep.subr.bf16.mxu0 0
    %3579 = vmatpush2.bf16.msra.mxu0 0
    %3580 = vmatprep.subr.bf16.mxu0 0
    %3581 = vmatpush2.bf16.msra.mxu0 0
    %3582 = vmatprep.subr.bf16.mxu0 0
    %3583 = vmatpush2.bf16.msra.mxu0 0
    %3584 = vmatprep.subr.bf16.mxu0 0
    %3585 = vmatpush2.bf16.msra.mxu0 0
    %3586 = vmatprep.subr.bf16.mxu0 0
    %3587 = vmatpush2.bf16.msra.mxu0 0
    %3588 = vmatprep.subr.bf16.mxu0 0
    %3589 = vmatpush2.bf16.msra.mxu0 0
    %3590 = vmatprep.subr.bf16.mxu0 0
    %3591 = vmatpush2.bf16.msra.mxu0 0
    %3592 = vmatprep.mubr.bf16.mxu0 0
    %3593 = vmatmul.mubr.bf16.gmra.mxu0 %v1377
    %v3594 = vpop.f32.mrf.mxu0
    %v3595 = vadd.f32 %v1414, %v3594
    %v3596 = vpop.f32.mrf.mxu0
    %v3597 = vpop.f32.mrf.mxu0
    %v3598 = vpop.f32.mrf.mxu0
    %3599 = vdwg.mxu0
    %v3608 = vunpack.c.l.b16 %v300
    %v3609 = vunpack.c.l.b16 %v301
    %v3610 = vunpack.c.l.b16 %v302
    %v3611 = vunpack.c.l.b16 %v303
    %v3612 = vunpack.c.l.b16 %v304
    %v3613 = vunpack.c.l.b16 %v305
    %v3614 = vunpack.c.l.b16 %v306
    %v3615 = vunpack.c.l.b16 %v307
    %v3616 = vpack.c.b16 %v3609, %v3608
    %v3617 = vpack.c.b16 %v3611, %v3610
    %v3618 = vpack.c.b16 %v3613, %v3612
    %v3619 = vpack.c.b16 %v3615, %v3614
    %3624 = vmatprep.subr.bf16.mxu0 0
    %3625 = vmatpush1.bf16.msra.mxu0 0
    %3626 = vmatprep.subr.bf16.mxu0 0
    %3627 = vmatpush1.bf16.msra.mxu0 0
    %3628 = vmatprep.subr.bf16.mxu0 0
    %3629 = vmatpush1.bf16.msra.mxu0 0
    %3630 = vmatprep.subr.bf16.mxu0 0
    %3631 = vmatpush1.bf16.msra.mxu0 0
    %3632 = vmatprep.subr.bf16.mxu0 0
    %3633 = vmatpush1.bf16.msra.mxu0 %v3619
    %3634 = vmatprep.subr.bf16.mxu0 0
    %3635 = vmatpush1.bf16.msra.mxu0 %v3618
    %3636 = vmatprep.subr.bf16.mxu0 0
    %3637 = vmatpush1.bf16.msra.mxu0 %v3617
    %3638 = vmatprep.subr.bf16.mxu0 0
    %3639 = vmatpush1.bf16.msra.mxu0 %v3616
    %3640 = vmatprep.subr.bf16.mxu0 0
    %3641 = vmatpush2.bf16.msra.mxu0 0
    %3642 = vmatprep.subr.bf16.mxu0 0
    %3643 = vmatpush2.bf16.msra.mxu0 0
    %3644 = vmatprep.subr.bf16.mxu0 0
    %3645 = vmatpush2.bf16.msra.mxu0 0
    %3646 = vmatprep.subr.bf16.mxu0 0
    %3647 = vmatpush2.bf16.msra.mxu0 0
    %3648 = vmatprep.subr.bf16.mxu0 0
    %3649 = vmatpush2.bf16.msra.mxu0 0
    %3650 = vmatprep.subr.bf16.mxu0 0
    %3651 = vmatpush2.bf16.msra.mxu0 0
    %3652 = vmatprep.subr.bf16.mxu0 0
    %3653 = vmatpush2.bf16.msra.mxu0 0
    %3654 = vmatprep.subr.bf16.mxu0 0
    %3655 = vmatpush2.bf16.msra.mxu0 0
    %3656 = vmatprep.mubr.bf16.mxu0 0
    %3657 = vmatmul.mubr.bf16.gmra.mxu0 %v1444
    %v3658 = vpop.f32.mrf.mxu0
    %v3659 = vadd.f32 %v1481, %v3658
    %v3660 = vpop.f32.mrf.mxu0
    %v3661 = vpop.f32.mrf.mxu0
    %v3662 = vpop.f32.mrf.mxu0
    %3663 = vdwg.mxu0
    %v3672 = vunpack.c.l.b16 %v308
    %v3673 = vunpack.c.l.b16 %v309
    %v3674 = vunpack.c.l.b16 %v310
    %v3675 = vunpack.c.l.b16 %v311
    %v3676 = vunpack.c.l.b16 %v312
    %v3677 = vunpack.c.l.b16 %v313
    %v3678 = vunpack.c.l.b16 %v314
    %v3679 = vunpack.c.l.b16 %v315
    %v3680 = vpack.c.b16 %v3673, %v3672
    %v3681 = vpack.c.b16 %v3675, %v3674
    %v3682 = vpack.c.b16 %v3677, %v3676
    %v3683 = vpack.c.b16 %v3679, %v3678
    %3688 = vmatprep.subr.bf16.mxu0 0
    %3689 = vmatpush1.bf16.msra.mxu0 0
    %3690 = vmatprep.subr.bf16.mxu0 0
    %3691 = vmatpush1.bf16.msra.mxu0 0
    %3692 = vmatprep.subr.bf16.mxu0 0
    %3693 = vmatpush1.bf16.msra.mxu0 0
    %3694 = vmatprep.subr.bf16.mxu0 0
    %3695 = vmatpush1.bf16.msra.mxu0 0
    %3696 = vmatprep.subr.bf16.mxu0 0
    %3697 = vmatpush1.bf16.msra.mxu0 %v3683
    %3698 = vmatprep.subr.bf16.mxu0 0
    %3699 = vmatpush1.bf16.msra.mxu0 %v3682
    %3700 = vmatprep.subr.bf16.mxu0 0
    %3701 = vmatpush1.bf16.msra.mxu0 %v3681
    %3702 = vmatprep.subr.bf16.mxu0 0
    %3703 = vmatpush1.bf16.msra.mxu0 %v3680
    %3704 = vmatprep.subr.bf16.mxu0 0
    %3705 = vmatpush2.bf16.msra.mxu0 0
    %3706 = vmatprep.subr.bf16.mxu0 0
    %3707 = vmatpush2.bf16.msra.mxu0 0
    %3708 = vmatprep.subr.bf16.mxu0 0
    %3709 = vmatpush2.bf16.msra.mxu0 0
    %3710 = vmatprep.subr.bf16.mxu0 0
    %3711 = vmatpush2.bf16.msra.mxu0 0
    %3712 = vmatprep.subr.bf16.mxu0 0
    %3713 = vmatpush2.bf16.msra.mxu0 0
    %3714 = vmatprep.subr.bf16.mxu0 0
    %3715 = vmatpush2.bf16.msra.mxu0 0
    %3716 = vmatprep.subr.bf16.mxu0 0
    %3717 = vmatpush2.bf16.msra.mxu0 0
    %3718 = vmatprep.subr.bf16.mxu0 0
    %3719 = vmatpush2.bf16.msra.mxu0 0
    %3720 = vmatprep.mubr.bf16.mxu0 0
    %3721 = vmatmul.mubr.bf16.gmra.mxu0 %v1511
    %v3722 = vpop.f32.mrf.mxu0
    %v3723 = vadd.f32 %v1548, %v3722
    %v3724 = vpop.f32.mrf.mxu0
    %v3725 = vpop.f32.mrf.mxu0
    %v3726 = vpop.f32.mrf.mxu0
    %3727 = vdwg.mxu0
    %v3736 = vunpack.c.l.b16 %v316
    %v3737 = vunpack.c.l.b16 %v317
    %v3738 = vunpack.c.l.b16 %v318
    %v3739 = vunpack.c.l.b16 %v319
    %v3740 = vunpack.c.l.b16 %v320
    %v3741 = vunpack.c.l.b16 %v321
    %v3742 = vunpack.c.l.b16 %v322
    %v3743 = vunpack.c.l.b16 %v323
    %v3744 = vpack.c.b16 %v3737, %v3736
    %v3745 = vpack.c.b16 %v3739, %v3738
    %v3746 = vpack.c.b16 %v3741, %v3740
    %v3747 = vpack.c.b16 %v3743, %v3742
    %3752 = vmatprep.subr.bf16.mxu0 0
    %3753 = vmatpush1.bf16.msra.mxu0 0
    %3754 = vmatprep.subr.bf16.mxu0 0
    %3755 = vmatpush1.bf16.msra.mxu0 0
    %3756 = vmatprep.subr.bf16.mxu0 0
    %3757 = vmatpush1.bf16.msra.mxu0 0
    %3758 = vmatprep.subr.bf16.mxu0 0
    %3759 = vmatpush1.bf16.msra.mxu0 0
    %3760 = vmatprep.subr.bf16.mxu0 0
    %3761 = vmatpush1.bf16.msra.mxu0 %v3747
    %3762 = vmatprep.subr.bf16.mxu0 0
    %3763 = vmatpush1.bf16.msra.mxu0 %v3746
    %3764 = vmatprep.subr.bf16.mxu0 0
    %3765 = vmatpush1.bf16.msra.mxu0 %v3745
    %3766 = vmatprep.subr.bf16.mxu0 0
    %3767 = vmatpush1.bf16.msra.mxu0 %v3744
    %3768 = vmatprep.subr.bf16.mxu0 0
    %3769 = vmatpush2.bf16.msra.mxu0 0
    %3770 = vmatprep.subr.bf16.mxu0 0
    %3771 = vmatpush2.bf16.msra.mxu0 0
    %3772 = vmatprep.subr.bf16.mxu0 0
    %3773 = vmatpush2.bf16.msra.mxu0 0
    %3774 = vmatprep.subr.bf16.mxu0 0
    %3775 = vmatpush2.bf16.msra.mxu0 0
    %3776 = vmatprep.subr.bf16.mxu0 0
    %3777 = vmatpush2.bf16.msra.mxu0 0
    %3778 = vmatprep.subr.bf16.mxu0 0
    %3779 = vmatpush2.bf16.msra.mxu0 0
    %3780 = vmatprep.subr.bf16.mxu0 0
    %3781 = vmatpush2.bf16.msra.mxu0 0
    %3782 = vmatprep.subr.bf16.mxu0 0
    %3783 = vmatpush2.bf16.msra.mxu0 0
    %3784 = vmatprep.mubr.bf16.mxu0 0
    %3785 = vmatmul.mubr.bf16.gmra.mxu0 %v1578
    %v3786 = vpop.f32.mrf.mxu0
    %v3787 = vadd.f32 %v1615, %v3786
    %v3788 = vpop.f32.mrf.mxu0
    %v3789 = vpop.f32.mrf.mxu0
    %v3790 = vpop.f32.mrf.mxu0
    %3791 = vdwg.mxu0
    %v3800 = vunpack.c.l.b16 %v324
    %v3801 = vunpack.c.l.b16 %v325
    %v3802 = vunpack.c.l.b16 %v326
    %v3803 = vunpack.c.l.b16 %v327
    %v3804 = vunpack.c.l.b16 %v328
    %v3805 = vunpack.c.l.b16 %v329
    %v3806 = vunpack.c.l.b16 %v330
    %v3807 = vunpack.c.l.b16 %v331
    %v3808 = vpack.c.b16 %v3801, %v3800
    %v3809 = vpack.c.b16 %v3803, %v3802
    %v3810 = vpack.c.b16 %v3805, %v3804
    %v3811 = vpack.c.b16 %v3807, %v3806
    %3816 = vmatprep.subr.bf16.mxu0 0
    %3817 = vmatpush1.bf16.msra.mxu0 0
    %3818 = vmatprep.subr.bf16.mxu0 0
    %3819 = vmatpush1.bf16.msra.mxu0 0
    %3820 = vmatprep.subr.bf16.mxu0 0
    %3821 = vmatpush1.bf16.msra.mxu0 0
    %3822 = vmatprep.subr.bf16.mxu0 0
    %3823 = vmatpush1.bf16.msra.mxu0 0
    %3824 = vmatprep.subr.bf16.mxu0 0
    %3825 = vmatpush1.bf16.msra.mxu0 %v3811
    %3826 = vmatprep.subr.bf16.mxu0 0
    %3827 = vmatpush1.bf16.msra.mxu0 %v3810
    %3828 = vmatprep.subr.bf16.mxu0 0
    %3829 = vmatpush1.bf16.msra.mxu0 %v3809
    %3830 = vmatprep.subr.bf16.mxu0 0
    %3831 = vmatpush1.bf16.msra.mxu0 %v3808
    %3832 = vmatprep.subr.bf16.mxu0 0
    %3833 = vmatpush2.bf16.msra.mxu0 0
    %3834 = vmatprep.subr.bf16.mxu0 0
    %3835 = vmatpush2.bf16.msra.mxu0 0
    %3836 = vmatprep.subr.bf16.mxu0 0
    %3837 = vmatpush2.bf16.msra.mxu0 0
    %3838 = vmatprep.subr.bf16.mxu0 0
    %3839 = vmatpush2.bf16.msra.mxu0 0
    %3840 = vmatprep.subr.bf16.mxu0 0
    %3841 = vmatpush2.bf16.msra.mxu0 0
    %3842 = vmatprep.subr.bf16.mxu0 0
    %3843 = vmatpush2.bf16.msra.mxu0 0
    %3844 = vmatprep.subr.bf16.mxu0 0
    %3845 = vmatpush2.bf16.msra.mxu0 0
    %3846 = vmatprep.subr.bf16.mxu0 0
    %3847 = vmatpush2.bf16.msra.mxu0 0
    %3848 = vmatprep.mubr.bf16.mxu0 0
    %3849 = vmatmul.mubr.bf16.gmra.mxu0 %v1645
    %v3850 = vpop.f32.mrf.mxu0
    %v3851 = vadd.f32 %v1682, %v3850
    %v3852 = vpop.f32.mrf.mxu0
    %v3853 = vpop.f32.mrf.mxu0
    %v3854 = vpop.f32.mrf.mxu0
    %3855 = vdwg.mxu0
    %v3864 = vunpack.c.l.b16 %v332
    %v3865 = vunpack.c.l.b16 %v333
    %v3866 = vunpack.c.l.b16 %v334
    %v3867 = vunpack.c.l.b16 %v335
    %v3868 = vunpack.c.l.b16 %v336
    %v3869 = vunpack.c.l.b16 %v337
    %v3870 = vunpack.c.l.b16 %v338
    %v3871 = vunpack.c.l.b16 %v339
    %v3872 = vpack.c.b16 %v3865, %v3864
    %v3873 = vpack.c.b16 %v3867, %v3866
    %v3874 = vpack.c.b16 %v3869, %v3868
    %v3875 = vpack.c.b16 %v3871, %v3870
    %3880 = vmatprep.subr.bf16.mxu0 0
    %3881 = vmatpush1.bf16.msra.mxu0 0
    %3882 = vmatprep.subr.bf16.mxu0 0
    %3883 = vmatpush1.bf16.msra.mxu0 0
    %3884 = vmatprep.subr.bf16.mxu0 0
    %3885 = vmatpush1.bf16.msra.mxu0 0
    %3886 = vmatprep.subr.bf16.mxu0 0
    %3887 = vmatpush1.bf16.msra.mxu0 0
    %3888 = vmatprep.subr.bf16.mxu0 0
    %3889 = vmatpush1.bf16.msra.mxu0 %v3875
    %3890 = vmatprep.subr.bf16.mxu0 0
    %3891 = vmatpush1.bf16.msra.mxu0 %v3874
    %3892 = vmatprep.subr.bf16.mxu0 0
    %3893 = vmatpush1.bf16.msra.mxu0 %v3873
    %3894 = vmatprep.subr.bf16.mxu0 0
    %3895 = vmatpush1.bf16.msra.mxu0 %v3872
    %3896 = vmatprep.subr.bf16.mxu0 0
    %3897 = vmatpush2.bf16.msra.mxu0 0
    %3898 = vmatprep.subr.bf16.mxu0 0
    %3899 = vmatpush2.bf16.msra.mxu0 0
    %3900 = vmatprep.subr.bf16.mxu0 0
    %3901 = vmatpush2.bf16.msra.mxu0 0
    %3902 = vmatprep.subr.bf16.mxu0 0
    %3903 = vmatpush2.bf16.msra.mxu0 0
    %3904 = vmatprep.subr.bf16.mxu0 0
    %3905 = vmatpush2.bf16.msra.mxu0 0
    %3906 = vmatprep.subr.bf16.mxu0 0
    %3907 = vmatpush2.bf16.msra.mxu0 0
    %3908 = vmatprep.subr.bf16.mxu0 0
    %3909 = vmatpush2.bf16.msra.mxu0 0
    %3910 = vmatprep.subr.bf16.mxu0 0
    %3911 = vmatpush2.bf16.msra.mxu0 0
    %3912 = vmatprep.mubr.bf16.mxu0 0
    %3913 = vmatmul.mubr.bf16.gmra.mxu0 %v1712
    %v3914 = vpop.f32.mrf.mxu0
    %v3915 = vadd.f32 %v1749, %v3914
    %v3916 = vpop.f32.mrf.mxu0
    %v3917 = vpop.f32.mrf.mxu0
    %v3918 = vpop.f32.mrf.mxu0
    %3919 = vdwg.mxu0
    %v3928 = vunpack.c.l.b16 %v340
    %v3929 = vunpack.c.l.b16 %v341
    %v3930 = vunpack.c.l.b16 %v342
    %v3931 = vunpack.c.l.b16 %v343
    %v3932 = vunpack.c.l.b16 %v344
    %v3933 = vunpack.c.l.b16 %v345
    %v3934 = vunpack.c.l.b16 %v346
    %v3935 = vunpack.c.l.b16 %v347
    %v3936 = vpack.c.b16 %v3929, %v3928
    %v3937 = vpack.c.b16 %v3931, %v3930
    %v3938 = vpack.c.b16 %v3933, %v3932
    %v3939 = vpack.c.b16 %v3935, %v3934
    %3944 = vmatprep.subr.bf16.mxu0 0
    %3945 = vmatpush1.bf16.msra.mxu0 0
    %3946 = vmatprep.subr.bf16.mxu0 0
    %3947 = vmatpush1.bf16.msra.mxu0 0
    %3948 = vmatprep.subr.bf16.mxu0 0
    %3949 = vmatpush1.bf16.msra.mxu0 0
    %3950 = vmatprep.subr.bf16.mxu0 0
    %3951 = vmatpush1.bf16.msra.mxu0 0
    %3952 = vmatprep.subr.bf16.mxu0 0
    %3953 = vmatpush1.bf16.msra.mxu0 %v3939
    %3954 = vmatprep.subr.bf16.mxu0 0
    %3955 = vmatpush1.bf16.msra.mxu0 %v3938
    %3956 = vmatprep.subr.bf16.mxu0 0
    %3957 = vmatpush1.bf16.msra.mxu0 %v3937
    %3958 = vmatprep.subr.bf16.mxu0 0
    %3959 = vmatpush1.bf16.msra.mxu0 %v3936
    %3960 = vmatprep.subr.bf16.mxu0 0
    %3961 = vmatpush2.bf16.msra.mxu0 0
    %3962 = vmatprep.subr.bf16.mxu0 0
    %3963 = vmatpush2.bf16.msra.mxu0 0
    %3964 = vmatprep.subr.bf16.mxu0 0
    %3965 = vmatpush2.bf16.msra.mxu0 0
    %3966 = vmatprep.subr.bf16.mxu0 0
    %3967 = vmatpush2.bf16.msra.mxu0 0
    %3968 = vmatprep.subr.bf16.mxu0 0
    %3969 = vmatpush2.bf16.msra.mxu0 0
    %3970 = vmatprep.subr.bf16.mxu0 0
    %3971 = vmatpush2.bf16.msra.mxu0 0
    %3972 = vmatprep.subr.bf16.mxu0 0
    %3973 = vmatpush2.bf16.msra.mxu0 0
    %3974 = vmatprep.subr.bf16.mxu0 0
    %3975 = vmatpush2.bf16.msra.mxu0 0
    %3976 = vmatprep.mubr.bf16.mxu0 0
    %3977 = vmatmul.mubr.bf16.gmra.mxu0 %v1779
    %v3978 = vpop.f32.mrf.mxu0
    %v3979 = vadd.f32 %v1816, %v3978
    %v3980 = vpop.f32.mrf.mxu0
    %v3981 = vpop.f32.mrf.mxu0
    %v3982 = vpop.f32.mrf.mxu0
    %3983 = vdwg.mxu0
    %v3992 = vunpack.c.l.b16 %v348
    %v3993 = vunpack.c.l.b16 %v349
    %v3994 = vunpack.c.l.b16 %v350
    %v3995 = vunpack.c.l.b16 %v351
    %v3996 = vunpack.c.l.b16 %v352
    %v3997 = vunpack.c.l.b16 %v353
    %v3998 = vunpack.c.l.b16 %v354
    %v3999 = vunpack.c.l.b16 %v355
    %v4000 = vpack.c.b16 %v3993, %v3992
    %v4001 = vpack.c.b16 %v3995, %v3994
    %v4002 = vpack.c.b16 %v3997, %v3996
    %v4003 = vpack.c.b16 %v3999, %v3998
    %4008 = vmatprep.subr.bf16.mxu0 0
    %4009 = vmatpush1.bf16.msra.mxu0 0
    %4010 = vmatprep.subr.bf16.mxu0 0
    %4011 = vmatpush1.bf16.msra.mxu0 0
    %4012 = vmatprep.subr.bf16.mxu0 0
    %4013 = vmatpush1.bf16.msra.mxu0 0
    %4014 = vmatprep.subr.bf16.mxu0 0
    %4015 = vmatpush1.bf16.msra.mxu0 0
    %4016 = vmatprep.subr.bf16.mxu0 0
    %4017 = vmatpush1.bf16.msra.mxu0 %v4003
    %4018 = vmatprep.subr.bf16.mxu0 0
    %4019 = vmatpush1.bf16.msra.mxu0 %v4002
    %4020 = vmatprep.subr.bf16.mxu0 0
    %4021 = vmatpush1.bf16.msra.mxu0 %v4001
    %4022 = vmatprep.subr.bf16.mxu0 0
    %4023 = vmatpush1.bf16.msra.mxu0 %v4000
    %4024 = vmatprep.subr.bf16.mxu0 0
    %4025 = vmatpush2.bf16.msra.mxu0 0
    %4026 = vmatprep.subr.bf16.mxu0 0
    %4027 = vmatpush2.bf16.msra.mxu0 0
    %4028 = vmatprep.subr.bf16.mxu0 0
    %4029 = vmatpush2.bf16.msra.mxu0 0
    %4030 = vmatprep.subr.bf16.mxu0 0
    %4031 = vmatpush2.bf16.msra.mxu0 0
    %4032 = vmatprep.subr.bf16.mxu0 0
    %4033 = vmatpush2.bf16.msra.mxu0 0
    %4034 = vmatprep.subr.bf16.mxu0 0
    %4035 = vmatpush2.bf16.msra.mxu0 0
    %4036 = vmatprep.subr.bf16.mxu0 0
    %4037 = vmatpush2.bf16.msra.mxu0 0
    %4038 = vmatprep.subr.bf16.mxu0 0
    %4039 = vmatpush2.bf16.msra.mxu0 0
    %4040 = vmatprep.mubr.bf16.mxu0 0
    %4041 = vmatmul.mubr.bf16.gmra.mxu0 %v1846
    %v4042 = vpop.f32.mrf.mxu0
    %v4043 = vadd.f32 %v1883, %v4042
    %v4044 = vpop.f32.mrf.mxu0
    %v4045 = vpop.f32.mrf.mxu0
    %v4046 = vpop.f32.mrf.mxu0
    %4047 = vdwg.mxu0
    %v4056 = vunpack.c.l.b16 %v356
    %v4057 = vunpack.c.l.b16 %v357
    %v4058 = vunpack.c.l.b16 %v358
    %v4059 = vunpack.c.l.b16 %v359
    %v4060 = vunpack.c.l.b16 %v360
    %v4061 = vunpack.c.l.b16 %v361
    %v4062 = vunpack.c.l.b16 %v362
    %v4063 = vunpack.c.l.b16 %v363
    %v4064 = vpack.c.b16 %v4057, %v4056
    %v4065 = vpack.c.b16 %v4059, %v4058
    %v4066 = vpack.c.b16 %v4061, %v4060
    %v4067 = vpack.c.b16 %v4063, %v4062
    %4072 = vmatprep.subr.bf16.mxu0 0
    %4073 = vmatpush1.bf16.msra.mxu0 0
    %4074 = vmatprep.subr.bf16.mxu0 0
    %4075 = vmatpush1.bf16.msra.mxu0 0
    %4076 = vmatprep.subr.bf16.mxu0 0
    %4077 = vmatpush1.bf16.msra.mxu0 0
    %4078 = vmatprep.subr.bf16.mxu0 0
    %4079 = vmatpush1.bf16.msra.mxu0 0
    %4080 = vmatprep.subr.bf16.mxu0 0
    %4081 = vmatpush1.bf16.msra.mxu0 %v4067
    %4082 = vmatprep.subr.bf16.mxu0 0
    %4083 = vmatpush1.bf16.msra.mxu0 %v4066
    %4084 = vmatprep.subr.bf16.mxu0 0
    %4085 = vmatpush1.bf16.msra.mxu0 %v4065
    %4086 = vmatprep.subr.bf16.mxu0 0
    %4087 = vmatpush1.bf16.msra.mxu0 %v4064
    %4088 = vmatprep.subr.bf16.mxu0 0
    %4089 = vmatpush2.bf16.msra.mxu0 0
    %4090 = vmatprep.subr.bf16.mxu0 0
    %4091 = vmatpush2.bf16.msra.mxu0 0
    %4092 = vmatprep.subr.bf16.mxu0 0
    %4093 = vmatpush2.bf16.msra.mxu0 0
    %4094 = vmatprep.subr.bf16.mxu0 0
    %4095 = vmatpush2.bf16.msra.mxu0 0
    %4096 = vmatprep.subr.bf16.mxu0 0
    %4097 = vmatpush2.bf16.msra.mxu0 0
    %4098 = vmatprep.subr.bf16.mxu0 0
    %4099 = vmatpush2.bf16.msra.mxu0 0
    %4100 = vmatprep.subr.bf16.mxu0 0
    %4101 = vmatpush2.bf16.msra.mxu0 0
    %4102 = vmatprep.subr.bf16.mxu0 0
    %4103 = vmatpush2.bf16.msra.mxu0 0
    %4104 = vmatprep.mubr.bf16.mxu0 0
    %4105 = vmatmul.mubr.bf16.gmra.mxu0 %v1913
    %v4106 = vpop.f32.mrf.mxu0
    %v4107 = vadd.f32 %v1950, %v4106
    %v4108 = vpop.f32.mrf.mxu0
    %v4109 = vpop.f32.mrf.mxu0
    %v4110 = vpop.f32.mrf.mxu0
    %4111 = vdwg.mxu0
    %v4120 = vunpack.c.l.b16 %v364
    %v4121 = vunpack.c.l.b16 %v365
    %v4122 = vunpack.c.l.b16 %v366
    %v4123 = vunpack.c.l.b16 %v367
    %v4124 = vunpack.c.l.b16 %v368
    %v4125 = vunpack.c.l.b16 %v369
    %v4126 = vunpack.c.l.b16 %v370
    %v4127 = vunpack.c.l.b16 %v371
    %v4128 = vpack.c.b16 %v4121, %v4120
    %v4129 = vpack.c.b16 %v4123, %v4122
    %v4130 = vpack.c.b16 %v4125, %v4124
    %v4131 = vpack.c.b16 %v4127, %v4126
    %4136 = vmatprep.subr.bf16.mxu0 0
    %4137 = vmatpush1.bf16.msra.mxu0 0
    %4138 = vmatprep.subr.bf16.mxu0 0
    %4139 = vmatpush1.bf16.msra.mxu0 0
    %4140 = vmatprep.subr.bf16.mxu0 0
    %4141 = vmatpush1.bf16.msra.mxu0 0
    %4142 = vmatprep.subr.bf16.mxu0 0
    %4143 = vmatpush1.bf16.msra.mxu0 0
    %4144 = vmatprep.subr.bf16.mxu0 0
    %4145 = vmatpush1.bf16.msra.mxu0 %v4131
    %4146 = vmatprep.subr.bf16.mxu0 0
    %4147 = vmatpush1.bf16.msra.mxu0 %v4130
    %4148 = vmatprep.subr.bf16.mxu0 0
    %4149 = vmatpush1.bf16.msra.mxu0 %v4129
    %4150 = vmatprep.subr.bf16.mxu0 0
    %4151 = vmatpush1.bf16.msra.mxu0 %v4128
    %4152 = vmatprep.subr.bf16.mxu0 0
    %4153 = vmatpush2.bf16.msra.mxu0 0
    %4154 = vmatprep.subr.bf16.mxu0 0
    %4155 = vmatpush2.bf16.msra.mxu0 0
    %4156 = vmatprep.subr.bf16.mxu0 0
    %4157 = vmatpush2.bf16.msra.mxu0 0
    %4158 = vmatprep.subr.bf16.mxu0 0
    %4159 = vmatpush2.bf16.msra.mxu0 0
    %4160 = vmatprep.subr.bf16.mxu0 0
    %4161 = vmatpush2.bf16.msra.mxu0 0
    %4162 = vmatprep.subr.bf16.mxu0 0
    %4163 = vmatpush2.bf16.msra.mxu0 0
    %4164 = vmatprep.subr.bf16.mxu0 0
    %4165 = vmatpush2.bf16.msra.mxu0 0
    %4166 = vmatprep.subr.bf16.mxu0 0
    %4167 = vmatpush2.bf16.msra.mxu0 0
    %4168 = vmatprep.mubr.bf16.mxu0 0
    %4169 = vmatmul.mubr.bf16.gmra.mxu0 %v1980
    %v4170 = vpop.f32.mrf.mxu0
    %v4171 = vadd.f32 %v2017, %v4170
    %v4172 = vpop.f32.mrf.mxu0
    %v4173 = vpop.f32.mrf.mxu0
    %v4174 = vpop.f32.mrf.mxu0
    %4175 = vdwg.mxu0
    %v4184 = vunpack.c.l.b16 %v372
    %v4185 = vunpack.c.l.b16 %v373
    %v4186 = vunpack.c.l.b16 %v374
    %v4187 = vunpack.c.l.b16 %v375
    %v4188 = vunpack.c.l.b16 %v376
    %v4189 = vunpack.c.l.b16 %v377
    %v4190 = vunpack.c.l.b16 %v378
    %v4191 = vunpack.c.l.b16 %v379
    %v4192 = vpack.c.b16 %v4185, %v4184
    %v4193 = vpack.c.b16 %v4187, %v4186
    %v4194 = vpack.c.b16 %v4189, %v4188
    %v4195 = vpack.c.b16 %v4191, %v4190
    %4200 = vmatprep.subr.bf16.mxu0 0
    %4201 = vmatpush1.bf16.msra.mxu0 0
    %4202 = vmatprep.subr.bf16.mxu0 0
    %4203 = vmatpush1.bf16.msra.mxu0 0
    %4204 = vmatprep.subr.bf16.mxu0 0
    %4205 = vmatpush1.bf16.msra.mxu0 0
    %4206 = vmatprep.subr.bf16.mxu0 0
    %4207 = vmatpush1.bf16.msra.mxu0 0
    %4208 = vmatprep.subr.bf16.mxu0 0
    %4209 = vmatpush1.bf16.msra.mxu0 %v4195
    %4210 = vmatprep.subr.bf16.mxu0 0
    %4211 = vmatpush1.bf16.msra.mxu0 %v4194
    %4212 = vmatprep.subr.bf16.mxu0 0
    %4213 = vmatpush1.bf16.msra.mxu0 %v4193
    %4214 = vmatprep.subr.bf16.mxu0 0
    %4215 = vmatpush1.bf16.msra.mxu0 %v4192
    %4216 = vmatprep.subr.bf16.mxu0 0
    %4217 = vmatpush2.bf16.msra.mxu0 0
    %4218 = vmatprep.subr.bf16.mxu0 0
    %4219 = vmatpush2.bf16.msra.mxu0 0
    %4220 = vmatprep.subr.bf16.mxu0 0
    %4221 = vmatpush2.bf16.msra.mxu0 0
    %4222 = vmatprep.subr.bf16.mxu0 0
    %4223 = vmatpush2.bf16.msra.mxu0 0
    %4224 = vmatprep.subr.bf16.mxu0 0
    %4225 = vmatpush2.bf16.msra.mxu0 0
    %4226 = vmatprep.subr.bf16.mxu0 0
    %4227 = vmatpush2.bf16.msra.mxu0 0
    %4228 = vmatprep.subr.bf16.mxu0 0
    %4229 = vmatpush2.bf16.msra.mxu0 0
    %4230 = vmatprep.subr.bf16.mxu0 0
    %4231 = vmatpush2.bf16.msra.mxu0 0
    %4232 = vmatprep.mubr.bf16.mxu0 0
    %4233 = vmatmul.mubr.bf16.gmra.mxu0 %v2047
    %v4234 = vpop.f32.mrf.mxu0
    %v4235 = vadd.f32 %v2084, %v4234
    %v4236 = vpop.f32.mrf.mxu0
    %v4237 = vpop.f32.mrf.mxu0
    %v4238 = vpop.f32.mrf.mxu0
    %4239 = vdwg.mxu0
    %v4248 = vunpack.c.l.b16 %v380
    %v4249 = vunpack.c.l.b16 %v381
    %v4250 = vunpack.c.l.b16 %v382
    %v4251 = vunpack.c.l.b16 %v383
    %v4252 = vunpack.c.l.b16 %v384
    %v4253 = vunpack.c.l.b16 %v385
    %v4254 = vunpack.c.l.b16 %v386
    %v4255 = vunpack.c.l.b16 %v387
    %v4256 = vpack.c.b16 %v4249, %v4248
    %v4257 = vpack.c.b16 %v4251, %v4250
    %v4258 = vpack.c.b16 %v4253, %v4252
    %v4259 = vpack.c.b16 %v4255, %v4254
    %4264 = vmatprep.subr.bf16.mxu0 0
    %4265 = vmatpush1.bf16.msra.mxu0 0
    %4266 = vmatprep.subr.bf16.mxu0 0
    %4267 = vmatpush1.bf16.msra.mxu0 0
    %4268 = vmatprep.subr.bf16.mxu0 0
    %4269 = vmatpush1.bf16.msra.mxu0 0
    %4270 = vmatprep.subr.bf16.mxu0 0
    %4271 = vmatpush1.bf16.msra.mxu0 0
    %4272 = vmatprep.subr.bf16.mxu0 0
    %4273 = vmatpush1.bf16.msra.mxu0 %v4259
    %4274 = vmatprep.subr.bf16.mxu0 0
    %4275 = vmatpush1.bf16.msra.mxu0 %v4258
    %4276 = vmatprep.subr.bf16.mxu0 0
    %4277 = vmatpush1.bf16.msra.mxu0 %v4257
    %4278 = vmatprep.subr.bf16.mxu0 0
    %4279 = vmatpush1.bf16.msra.mxu0 %v4256
    %4280 = vmatprep.subr.bf16.mxu0 0
    %4281 = vmatpush2.bf16.msra.mxu0 0
    %4282 = vmatprep.subr.bf16.mxu0 0
    %4283 = vmatpush2.bf16.msra.mxu0 0
    %4284 = vmatprep.subr.bf16.mxu0 0
    %4285 = vmatpush2.bf16.msra.mxu0 0
    %4286 = vmatprep.subr.bf16.mxu0 0
    %4287 = vmatpush2.bf16.msra.mxu0 0
    %4288 = vmatprep.subr.bf16.mxu0 0
    %4289 = vmatpush2.bf16.msra.mxu0 0
    %4290 = vmatprep.subr.bf16.mxu0 0
    %4291 = vmatpush2.bf16.msra.mxu0 0
    %4292 = vmatprep.subr.bf16.mxu0 0
    %4293 = vmatpush2.bf16.msra.mxu0 0
    %4294 = vmatprep.subr.bf16.mxu0 0
    %4295 = vmatpush2.bf16.msra.mxu0 0
    %4296 = vmatprep.mubr.bf16.mxu0 0
    %4297 = vmatmul.mubr.bf16.gmra.mxu0 %v2114
    %v4298 = vpop.f32.mrf.mxu0
    %v4299 = vadd.f32 %v2151, %v4298
    %v4300 = vpop.f32.mrf.mxu0
    %v4301 = vpop.f32.mrf.mxu0
    %v4302 = vpop.f32.mrf.mxu0
    %4303 = vdwg.mxu0
    %v4312 = vunpack.c.l.b16 %v388
    %v4313 = vunpack.c.l.b16 %v389
    %v4314 = vunpack.c.l.b16 %v390
    %v4315 = vunpack.c.l.b16 %v391
    %v4316 = vunpack.c.l.b16 %v392
    %v4317 = vunpack.c.l.b16 %v393
    %v4318 = vunpack.c.l.b16 %v394
    %v4319 = vunpack.c.l.b16 %v395
    %v4320 = vpack.c.b16 %v4313, %v4312
    %v4321 = vpack.c.b16 %v4315, %v4314
    %v4322 = vpack.c.b16 %v4317, %v4316
    %v4323 = vpack.c.b16 %v4319, %v4318
    %4328 = vmatprep.subr.bf16.mxu0 0
    %4329 = vmatpush1.bf16.msra.mxu0 0
    %4330 = vmatprep.subr.bf16.mxu0 0
    %4331 = vmatpush1.bf16.msra.mxu0 0
    %4332 = vmatprep.subr.bf16.mxu0 0
    %4333 = vmatpush1.bf16.msra.mxu0 0
    %4334 = vmatprep.subr.bf16.mxu0 0
    %4335 = vmatpush1.bf16.msra.mxu0 0
    %4336 = vmatprep.subr.bf16.mxu0 0
    %4337 = vmatpush1.bf16.msra.mxu0 %v4323
    %4338 = vmatprep.subr.bf16.mxu0 0
    %4339 = vmatpush1.bf16.msra.mxu0 %v4322
    %4340 = vmatprep.subr.bf16.mxu0 0
    %4341 = vmatpush1.bf16.msra.mxu0 %v4321
    %4342 = vmatprep.subr.bf16.mxu0 0
    %4343 = vmatpush1.bf16.msra.mxu0 %v4320
    %4344 = vmatprep.subr.bf16.mxu0 0
    %4345 = vmatpush2.bf16.msra.mxu0 0
    %4346 = vmatprep.subr.bf16.mxu0 0
    %4347 = vmatpush2.bf16.msra.mxu0 0
    %4348 = vmatprep.subr.bf16.mxu0 0
    %4349 = vmatpush2.bf16.msra.mxu0 0
    %4350 = vmatprep.subr.bf16.mxu0 0
    %4351 = vmatpush2.bf16.msra.mxu0 0
    %4352 = vmatprep.subr.bf16.mxu0 0
    %4353 = vmatpush2.bf16.msra.mxu0 0
    %4354 = vmatprep.subr.bf16.mxu0 0
    %4355 = vmatpush2.bf16.msra.mxu0 0
    %4356 = vmatprep.subr.bf16.mxu0 0
    %4357 = vmatpush2.bf16.msra.mxu0 0
    %4358 = vmatprep.subr.bf16.mxu0 0
    %4359 = vmatpush2.bf16.msra.mxu0 0
    %4360 = vmatprep.mubr.bf16.mxu0 0
    %4361 = vmatmul.mubr.bf16.gmra.mxu0 %v2181
    %v4362 = vpop.f32.mrf.mxu0
    %v4363 = vadd.f32 %v2218, %v4362
    %v4364 = vpop.f32.mrf.mxu0
    %v4365 = vpop.f32.mrf.mxu0
    %v4366 = vpop.f32.mrf.mxu0
    %4367 = vdwg.mxu0
    %v4376 = vunpack.c.l.b16 %v396
    %v4377 = vunpack.c.l.b16 %v397
    %v4378 = vunpack.c.l.b16 %v398
    %v4379 = vunpack.c.l.b16 %v399
    %v4380 = vunpack.c.l.b16 %v400
    %v4381 = vunpack.c.l.b16 %v401
    %v4382 = vunpack.c.l.b16 %v402
    %v4383 = vunpack.c.l.b16 %v403
    %v4384 = vpack.c.b16 %v4377, %v4376
    %v4385 = vpack.c.b16 %v4379, %v4378
    %v4386 = vpack.c.b16 %v4381, %v4380
    %v4387 = vpack.c.b16 %v4383, %v4382
    %4392 = vmatprep.subr.bf16.mxu0 0
    %4393 = vmatpush1.bf16.msra.mxu0 0
    %4394 = vmatprep.subr.bf16.mxu0 0
    %4395 = vmatpush1.bf16.msra.mxu0 0
    %4396 = vmatprep.subr.bf16.mxu0 0
    %4397 = vmatpush1.bf16.msra.mxu0 0
    %4398 = vmatprep.subr.bf16.mxu0 0
    %4399 = vmatpush1.bf16.msra.mxu0 0
    %4400 = vmatprep.subr.bf16.mxu0 0
    %4401 = vmatpush1.bf16.msra.mxu0 %v4387
    %4402 = vmatprep.subr.bf16.mxu0 0
    %4403 = vmatpush1.bf16.msra.mxu0 %v4386
    %4404 = vmatprep.subr.bf16.mxu0 0
    %4405 = vmatpush1.bf16.msra.mxu0 %v4385
    %4406 = vmatprep.subr.bf16.mxu0 0
    %4407 = vmatpush1.bf16.msra.mxu0 %v4384
    %4408 = vmatprep.subr.bf16.mxu0 0
    %4409 = vmatpush2.bf16.msra.mxu0 0
    %4410 = vmatprep.subr.bf16.mxu0 0
    %4411 = vmatpush2.bf16.msra.mxu0 0
    %4412 = vmatprep.subr.bf16.mxu0 0
    %4413 = vmatpush2.bf16.msra.mxu0 0
    %4414 = vmatprep.subr.bf16.mxu0 0
    %4415 = vmatpush2.bf16.msra.mxu0 0
    %4416 = vmatprep.subr.bf16.mxu0 0
    %4417 = vmatpush2.bf16.msra.mxu0 0
    %4418 = vmatprep.subr.bf16.mxu0 0
    %4419 = vmatpush2.bf16.msra.mxu0 0
    %4420 = vmatprep.subr.bf16.mxu0 0
    %4421 = vmatpush2.bf16.msra.mxu0 0
    %4422 = vmatprep.subr.bf16.mxu0 0
    %4423 = vmatpush2.bf16.msra.mxu0 0
    %4424 = vmatprep.mubr.bf16.mxu0 0
    %4425 = vmatmul.mubr.bf16.gmra.mxu0 %v2248
    %v4426 = vpop.f32.mrf.mxu0
    %v4427 = vadd.f32 %v2285, %v4426
    %v4428 = vpop.f32.mrf.mxu0
    %v4429 = vpop.f32.mrf.mxu0
    %v4430 = vpop.f32.mrf.mxu0
    %4431 = vdwg.mxu0
    %v4440 = vunpack.c.l.b16 %v404
    %v4441 = vunpack.c.l.b16 %v405
    %v4442 = vunpack.c.l.b16 %v406
    %v4443 = vunpack.c.l.b16 %v407
    %v4444 = vunpack.c.l.b16 %v408
    %v4445 = vunpack.c.l.b16 %v409
    %v4446 = vunpack.c.l.b16 %v410
    %v4447 = vunpack.c.l.b16 %v411
    %v4448 = vpack.c.b16 %v4441, %v4440
    %v4449 = vpack.c.b16 %v4443, %v4442
    %v4450 = vpack.c.b16 %v4445, %v4444
    %v4451 = vpack.c.b16 %v4447, %v4446
    %4456 = vmatprep.subr.bf16.mxu0 0
    %4457 = vmatpush1.bf16.msra.mxu0 0
    %4458 = vmatprep.subr.bf16.mxu0 0
    %4459 = vmatpush1.bf16.msra.mxu0 0
    %4460 = vmatprep.subr.bf16.mxu0 0
    %4461 = vmatpush1.bf16.msra.mxu0 0
    %4462 = vmatprep.subr.bf16.mxu0 0
    %4463 = vmatpush1.bf16.msra.mxu0 0
    %4464 = vmatprep.subr.bf16.mxu0 0
    %4465 = vmatpush1.bf16.msra.mxu0 %v4451
    %4466 = vmatprep.subr.bf16.mxu0 0
    %4467 = vmatpush1.bf16.msra.mxu0 %v4450
    %4468 = vmatprep.subr.bf16.mxu0 0
    %4469 = vmatpush1.bf16.msra.mxu0 %v4449
    %4470 = vmatprep.subr.bf16.mxu0 0
    %4471 = vmatpush1.bf16.msra.mxu0 %v4448
    %4472 = vmatprep.subr.bf16.mxu0 0
    %4473 = vmatpush2.bf16.msra.mxu0 0
    %4474 = vmatprep.subr.bf16.mxu0 0
    %4475 = vmatpush2.bf16.msra.mxu0 0
    %4476 = vmatprep.subr.bf16.mxu0 0
    %4477 = vmatpush2.bf16.msra.mxu0 0
    %4478 = vmatprep.subr.bf16.mxu0 0
    %4479 = vmatpush2.bf16.msra.mxu0 0
    %4480 = vmatprep.subr.bf16.mxu0 0
    %4481 = vmatpush2.bf16.msra.mxu0 0
    %4482 = vmatprep.subr.bf16.mxu0 0
    %4483 = vmatpush2.bf16.msra.mxu0 0
    %4484 = vmatprep.subr.bf16.mxu0 0
    %4485 = vmatpush2.bf16.msra.mxu0 0
    %4486 = vmatprep.subr.bf16.mxu0 0
    %4487 = vmatpush2.bf16.msra.mxu0 0
    %4488 = vmatprep.mubr.bf16.mxu0 0
    %4489 = vmatmul.mubr.bf16.gmra.mxu0 %v2315
    %v4490 = vpop.f32.mrf.mxu0
    %v4491 = vadd.f32 %v2352, %v4490
    %v4492 = vpop.f32.mrf.mxu0
    %v4493 = vpop.f32.mrf.mxu0
    %v4494 = vpop.f32.mrf.mxu0
    %4495 = vdwg.mxu0
    %v4504 = vunpack.c.l.b16 %v412
    %v4505 = vunpack.c.l.b16 %v413
    %v4506 = vunpack.c.l.b16 %v414
    %v4507 = vunpack.c.l.b16 %v415
    %v4508 = vunpack.c.l.b16 %v416
    %v4509 = vunpack.c.l.b16 %v417
    %v4510 = vunpack.c.l.b16 %v418
    %v4511 = vunpack.c.l.b16 %v419
    %v4512 = vpack.c.b16 %v4505, %v4504
    %v4513 = vpack.c.b16 %v4507, %v4506
    %v4514 = vpack.c.b16 %v4509, %v4508
    %v4515 = vpack.c.b16 %v4511, %v4510
    %4520 = vmatprep.subr.bf16.mxu0 0
    %4521 = vmatpush1.bf16.msra.mxu0 0
    %4522 = vmatprep.subr.bf16.mxu0 0
    %4523 = vmatpush1.bf16.msra.mxu0 0
    %4524 = vmatprep.subr.bf16.mxu0 0
    %4525 = vmatpush1.bf16.msra.mxu0 0
    %4526 = vmatprep.subr.bf16.mxu0 0
    %4527 = vmatpush1.bf16.msra.mxu0 0
    %4528 = vmatprep.subr.bf16.mxu0 0
    %4529 = vmatpush1.bf16.msra.mxu0 %v4515
    %4530 = vmatprep.subr.bf16.mxu0 0
    %4531 = vmatpush1.bf16.msra.mxu0 %v4514
    %4532 = vmatprep.subr.bf16.mxu0 0
    %4533 = vmatpush1.bf16.msra.mxu0 %v4513
    %4534 = vmatprep.subr.bf16.mxu0 0
    %4535 = vmatpush1.bf16.msra.mxu0 %v4512
    %4536 = vmatprep.subr.bf16.mxu0 0
    %4537 = vmatpush2.bf16.msra.mxu0 0
    %4538 = vmatprep.subr.bf16.mxu0 0
    %4539 = vmatpush2.bf16.msra.mxu0 0
    %4540 = vmatprep.subr.bf16.mxu0 0
    %4541 = vmatpush2.bf16.msra.mxu0 0
    %4542 = vmatprep.subr.bf16.mxu0 0
    %4543 = vmatpush2.bf16.msra.mxu0 0
    %4544 = vmatprep.subr.bf16.mxu0 0
    %4545 = vmatpush2.bf16.msra.mxu0 0
    %4546 = vmatprep.subr.bf16.mxu0 0
    %4547 = vmatpush2.bf16.msra.mxu0 0
    %4548 = vmatprep.subr.bf16.mxu0 0
    %4549 = vmatpush2.bf16.msra.mxu0 0
    %4550 = vmatprep.subr.bf16.mxu0 0
    %4551 = vmatpush2.bf16.msra.mxu0 0
    %4552 = vmatprep.mubr.bf16.mxu0 0
    %4553 = vmatmul.mubr.bf16.gmra.mxu0 %v2382
    %v4554 = vpop.f32.mrf.mxu0
    %v4555 = vadd.f32 %v2419, %v4554
    %v4556 = vpop.f32.mrf.mxu0
    %v4557 = vpop.f32.mrf.mxu0
    %v4558 = vpop.f32.mrf.mxu0
    %4559 = vdwg.mxu0
    %v4568 = vunpack.c.l.b16 %v420
    %v4569 = vunpack.c.l.b16 %v421
    %v4570 = vunpack.c.l.b16 %v422
    %v4571 = vunpack.c.l.b16 %v423
    %v4572 = vunpack.c.l.b16 %v424
    %v4573 = vunpack.c.l.b16 %v425
    %v4574 = vunpack.c.l.b16 %v426
    %v4575 = vunpack.c.l.b16 %v427
    %v4576 = vpack.c.b16 %v4569, %v4568
    %v4577 = vpack.c.b16 %v4571, %v4570
    %v4578 = vpack.c.b16 %v4573, %v4572
    %v4579 = vpack.c.b16 %v4575, %v4574
    %4584 = vmatprep.subr.bf16.mxu0 0
    %4585 = vmatpush1.bf16.msra.mxu0 0
    %4586 = vmatprep.subr.bf16.mxu0 0
    %4587 = vmatpush1.bf16.msra.mxu0 0
    %4588 = vmatprep.subr.bf16.mxu0 0
    %4589 = vmatpush1.bf16.msra.mxu0 0
    %4590 = vmatprep.subr.bf16.mxu0 0
    %4591 = vmatpush1.bf16.msra.mxu0 0
    %4592 = vmatprep.subr.bf16.mxu0 0
    %4593 = vmatpush1.bf16.msra.mxu0 %v4579
    %4594 = vmatprep.subr.bf16.mxu0 0
    %4595 = vmatpush1.bf16.msra.mxu0 %v4578
    %4596 = vmatprep.subr.bf16.mxu0 0
    %4597 = vmatpush1.bf16.msra.mxu0 %v4577
    %4598 = vmatprep.subr.bf16.mxu0 0
    %4599 = vmatpush1.bf16.msra.mxu0 %v4576
    %4600 = vmatprep.subr.bf16.mxu0 0
    %4601 = vmatpush2.bf16.msra.mxu0 0
    %4602 = vmatprep.subr.bf16.mxu0 0
    %4603 = vmatpush2.bf16.msra.mxu0 0
    %4604 = vmatprep.subr.bf16.mxu0 0
    %4605 = vmatpush2.bf16.msra.mxu0 0
    %4606 = vmatprep.subr.bf16.mxu0 0
    %4607 = vmatpush2.bf16.msra.mxu0 0
    %4608 = vmatprep.subr.bf16.mxu0 0
    %4609 = vmatpush2.bf16.msra.mxu0 0
    %4610 = vmatprep.subr.bf16.mxu0 0
    %4611 = vmatpush2.bf16.msra.mxu0 0
    %4612 = vmatprep.subr.bf16.mxu0 0
    %4613 = vmatpush2.bf16.msra.mxu0 0
    %4614 = vmatprep.subr.bf16.mxu0 0
    %4615 = vmatpush2.bf16.msra.mxu0 0
    %4616 = vmatprep.mubr.bf16.mxu0 0
    %4617 = vmatmul.mubr.bf16.gmra.mxu0 %v2449
    %v4618 = vpop.f32.mrf.mxu0
    %v4619 = vadd.f32 %v2486, %v4618
    %v4620 = vpop.f32.mrf.mxu0
    %v4621 = vpop.f32.mrf.mxu0
    %v4622 = vpop.f32.mrf.mxu0
    %4623 = vdwg.mxu0
    %v4632 = vunpack.c.l.b16 %v428
    %v4633 = vunpack.c.l.b16 %v429
    %v4634 = vunpack.c.l.b16 %v430
    %v4635 = vunpack.c.l.b16 %v431
    %v4636 = vunpack.c.l.b16 %v432
    %v4637 = vunpack.c.l.b16 %v433
    %v4638 = vunpack.c.l.b16 %v434
    %v4639 = vunpack.c.l.b16 %v435
    %v4640 = vpack.c.b16 %v4633, %v4632
    %v4641 = vpack.c.b16 %v4635, %v4634
    %v4642 = vpack.c.b16 %v4637, %v4636
    %v4643 = vpack.c.b16 %v4639, %v4638
    %4648 = vmatprep.subr.bf16.mxu0 0
    %4649 = vmatpush1.bf16.msra.mxu0 0
    %4650 = vmatprep.subr.bf16.mxu0 0
    %4651 = vmatpush1.bf16.msra.mxu0 0
    %4652 = vmatprep.subr.bf16.mxu0 0
    %4653 = vmatpush1.bf16.msra.mxu0 0
    %4654 = vmatprep.subr.bf16.mxu0 0
    %4655 = vmatpush1.bf16.msra.mxu0 0
    %4656 = vmatprep.subr.bf16.mxu0 0
    %4657 = vmatpush1.bf16.msra.mxu0 %v4643
    %4658 = vmatprep.subr.bf16.mxu0 0
    %4659 = vmatpush1.bf16.msra.mxu0 %v4642
    %4660 = vmatprep.subr.bf16.mxu0 0
    %4661 = vmatpush1.bf16.msra.mxu0 %v4641
    %4662 = vmatprep.subr.bf16.mxu0 0
    %4663 = vmatpush1.bf16.msra.mxu0 %v4640
    %4664 = vmatprep.subr.bf16.mxu0 0
    %4665 = vmatpush2.bf16.msra.mxu0 0
    %4666 = vmatprep.subr.bf16.mxu0 0
    %4667 = vmatpush2.bf16.msra.mxu0 0
    %4668 = vmatprep.subr.bf16.mxu0 0
    %4669 = vmatpush2.bf16.msra.mxu0 0
    %4670 = vmatprep.subr.bf16.mxu0 0
    %4671 = vmatpush2.bf16.msra.mxu0 0
    %4672 = vmatprep.subr.bf16.mxu0 0
    %4673 = vmatpush2.bf16.msra.mxu0 0
    %4674 = vmatprep.subr.bf16.mxu0 0
    %4675 = vmatpush2.bf16.msra.mxu0 0
    %4676 = vmatprep.subr.bf16.mxu0 0
    %4677 = vmatpush2.bf16.msra.mxu0 0
    %4678 = vmatprep.subr.bf16.mxu0 0
    %4679 = vmatpush2.bf16.msra.mxu0 0
    %4680 = vmatprep.mubr.bf16.mxu0 0
    %4681 = vmatmul.mubr.bf16.gmra.mxu0 %v2516
    %v4682 = vpop.f32.mrf.mxu0
    %v4683 = vadd.f32 %v2553, %v4682
    %v4684 = vpop.f32.mrf.mxu0
    %v4685 = vpop.f32.mrf.mxu0
    %v4686 = vpop.f32.mrf.mxu0
    %4687 = vdwg.mxu0
    %v4696 = vunpack.c.l.b16 %v436
    %v4697 = vunpack.c.l.b16 %v437
    %v4698 = vunpack.c.l.b16 %v438
    %v4699 = vunpack.c.l.b16 %v439
    %v4700 = vunpack.c.l.b16 %v440
    %v4701 = vunpack.c.l.b16 %v441
    %v4702 = vunpack.c.l.b16 %v442
    %v4703 = vunpack.c.l.b16 %v443
    %v4704 = vpack.c.b16 %v4697, %v4696
    %v4705 = vpack.c.b16 %v4699, %v4698
    %v4706 = vpack.c.b16 %v4701, %v4700
    %v4707 = vpack.c.b16 %v4703, %v4702
    %4712 = vmatprep.subr.bf16.mxu0 0
    %4713 = vmatpush1.bf16.msra.mxu0 0
    %4714 = vmatprep.subr.bf16.mxu0 0
    %4715 = vmatpush1.bf16.msra.mxu0 0
    %4716 = vmatprep.subr.bf16.mxu0 0
    %4717 = vmatpush1.bf16.msra.mxu0 0
    %4718 = vmatprep.subr.bf16.mxu0 0
    %4719 = vmatpush1.bf16.msra.mxu0 0
    %4720 = vmatprep.subr.bf16.mxu0 0
    %4721 = vmatpush1.bf16.msra.mxu0 %v4707
    %4722 = vmatprep.subr.bf16.mxu0 0
    %4723 = vmatpush1.bf16.msra.mxu0 %v4706
    %4724 = vmatprep.subr.bf16.mxu0 0
    %4725 = vmatpush1.bf16.msra.mxu0 %v4705
    %4726 = vmatprep.subr.bf16.mxu0 0
    %4727 = vmatpush1.bf16.msra.mxu0 %v4704
    %4728 = vmatprep.subr.bf16.mxu0 0
    %4729 = vmatpush2.bf16.msra.mxu0 0
    %4730 = vmatprep.subr.bf16.mxu0 0
    %4731 = vmatpush2.bf16.msra.mxu0 0
    %4732 = vmatprep.subr.bf16.mxu0 0
    %4733 = vmatpush2.bf16.msra.mxu0 0
    %4734 = vmatprep.subr.bf16.mxu0 0
    %4735 = vmatpush2.bf16.msra.mxu0 0
    %4736 = vmatprep.subr.bf16.mxu0 0
    %4737 = vmatpush2.bf16.msra.mxu0 0
    %4738 = vmatprep.subr.bf16.mxu0 0
    %4739 = vmatpush2.bf16.msra.mxu0 0
    %4740 = vmatprep.subr.bf16.mxu0 0
    %4741 = vmatpush2.bf16.msra.mxu0 0
    %4742 = vmatprep.subr.bf16.mxu0 0
    %4743 = vmatpush2.bf16.msra.mxu0 0
    %4744 = vmatprep.mubr.bf16.mxu0 0
    %4745 = vmatmul.mubr.bf16.gmra.mxu0 %v2583
    %v4746 = vpop.f32.mrf.mxu0
    %v4747 = vadd.f32 %v2620, %v4746
    %v4748 = vpop.f32.mrf.mxu0
    %v4749 = vpop.f32.mrf.mxu0
    %v4750 = vpop.f32.mrf.mxu0
    %4751 = vdwg.mxu0
    %v4760 = vunpack.c.l.b16 %v444
    %v4761 = vunpack.c.l.b16 %v445
    %v4762 = vunpack.c.l.b16 %v446
    %v4763 = vunpack.c.l.b16 %v447
    %v4764 = vunpack.c.l.b16 %v448
    %v4765 = vunpack.c.l.b16 %v449
    %v4766 = vunpack.c.l.b16 %v450
    %v4767 = vunpack.c.l.b16 %v451
    %v4768 = vpack.c.b16 %v4761, %v4760
    %v4769 = vpack.c.b16 %v4763, %v4762
    %v4770 = vpack.c.b16 %v4765, %v4764
    %v4771 = vpack.c.b16 %v4767, %v4766
    %4776 = vmatprep.subr.bf16.mxu0 0
    %4777 = vmatpush1.bf16.msra.mxu0 0
    %4778 = vmatprep.subr.bf16.mxu0 0
    %4779 = vmatpush1.bf16.msra.mxu0 0
    %4780 = vmatprep.subr.bf16.mxu0 0
    %4781 = vmatpush1.bf16.msra.mxu0 0
    %4782 = vmatprep.subr.bf16.mxu0 0
    %4783 = vmatpush1.bf16.msra.mxu0 0
    %4784 = vmatprep.subr.bf16.mxu0 0
    %4785 = vmatpush1.bf16.msra.mxu0 %v4771
    %4786 = vmatprep.subr.bf16.mxu0 0
    %4787 = vmatpush1.bf16.msra.mxu0 %v4770
    %4788 = vmatprep.subr.bf16.mxu0 0
    %4789 = vmatpush1.bf16.msra.mxu0 %v4769
    %4790 = vmatprep.subr.bf16.mxu0 0
    %4791 = vmatpush1.bf16.msra.mxu0 %v4768
    %4792 = vmatprep.subr.bf16.mxu0 0
    %4793 = vmatpush2.bf16.msra.mxu0 0
    %4794 = vmatprep.subr.bf16.mxu0 0
    %4795 = vmatpush2.bf16.msra.mxu0 0
    %4796 = vmatprep.subr.bf16.mxu0 0
    %4797 = vmatpush2.bf16.msra.mxu0 0
    %4798 = vmatprep.subr.bf16.mxu0 0
    %4799 = vmatpush2.bf16.msra.mxu0 0
    %4800 = vmatprep.subr.bf16.mxu0 0
    %4801 = vmatpush2.bf16.msra.mxu0 0
    %4802 = vmatprep.subr.bf16.mxu0 0
    %4803 = vmatpush2.bf16.msra.mxu0 0
    %4804 = vmatprep.subr.bf16.mxu0 0
    %4805 = vmatpush2.bf16.msra.mxu0 0
    %4806 = vmatprep.subr.bf16.mxu0 0
    %4807 = vmatpush2.bf16.msra.mxu0 0
    %4808 = vmatprep.mubr.bf16.mxu0 0
    %4809 = vmatmul.mubr.bf16.gmra.mxu0 %v2650
    %v4810 = vpop.f32.mrf.mxu0
    %v4811 = vadd.f32 %v2687, %v4810
    %v4812 = vpop.f32.mrf.mxu0
    %v4813 = vpop.f32.mrf.mxu0
    %v4814 = vpop.f32.mrf.mxu0
    %4815 = vdwg.mxu0
    %v4824 = vunpack.c.l.b16 %v452
    %v4825 = vunpack.c.l.b16 %v453
    %v4826 = vunpack.c.l.b16 %v454
    %v4827 = vunpack.c.l.b16 %v455
    %v4828 = vunpack.c.l.b16 %v456
    %v4829 = vunpack.c.l.b16 %v457
    %v4830 = vunpack.c.l.b16 %v458
    %v4831 = vunpack.c.l.b16 %v459
    %v4832 = vpack.c.b16 %v4825, %v4824
    %v4833 = vpack.c.b16 %v4827, %v4826
    %v4834 = vpack.c.b16 %v4829, %v4828
    %v4835 = vpack.c.b16 %v4831, %v4830
    %4840 = vmatprep.subr.bf16.mxu0 0
    %4841 = vmatpush1.bf16.msra.mxu0 0
    %4842 = vmatprep.subr.bf16.mxu0 0
    %4843 = vmatpush1.bf16.msra.mxu0 0
    %4844 = vmatprep.subr.bf16.mxu0 0
    %4845 = vmatpush1.bf16.msra.mxu0 0
    %4846 = vmatprep.subr.bf16.mxu0 0
    %4847 = vmatpush1.bf16.msra.mxu0 0
    %4848 = vmatprep.subr.bf16.mxu0 0
    %4849 = vmatpush1.bf16.msra.mxu0 %v4835
    %4850 = vmatprep.subr.bf16.mxu0 0
    %4851 = vmatpush1.bf16.msra.mxu0 %v4834
    %4852 = vmatprep.subr.bf16.mxu0 0
    %4853 = vmatpush1.bf16.msra.mxu0 %v4833
    %4854 = vmatprep.subr.bf16.mxu0 0
    %4855 = vmatpush1.bf16.msra.mxu0 %v4832
    %4856 = vmatprep.subr.bf16.mxu0 0
    %4857 = vmatpush2.bf16.msra.mxu0 0
    %4858 = vmatprep.subr.bf16.mxu0 0
    %4859 = vmatpush2.bf16.msra.mxu0 0
    %4860 = vmatprep.subr.bf16.mxu0 0
    %4861 = vmatpush2.bf16.msra.mxu0 0
    %4862 = vmatprep.subr.bf16.mxu0 0
    %4863 = vmatpush2.bf16.msra.mxu0 0
    %4864 = vmatprep.subr.bf16.mxu0 0
    %4865 = vmatpush2.bf16.msra.mxu0 0
    %4866 = vmatprep.subr.bf16.mxu0 0
    %4867 = vmatpush2.bf16.msra.mxu0 0
    %4868 = vmatprep.subr.bf16.mxu0 0
    %4869 = vmatpush2.bf16.msra.mxu0 0
    %4870 = vmatprep.subr.bf16.mxu0 0
    %4871 = vmatpush2.bf16.msra.mxu0 0
    %4872 = vmatprep.mubr.bf16.mxu0 0
    %4873 = vmatmul.mubr.bf16.gmra.mxu0 %v2717
    %v4874 = vpop.f32.mrf.mxu0
    %v4875 = vadd.f32 %v2754, %v4874
    %v4876 = vpop.f32.mrf.mxu0
    %v4877 = vpop.f32.mrf.mxu0
    %v4878 = vpop.f32.mrf.mxu0
    %4879 = vdwg.mxu0
    %v4888 = vunpack.c.l.b16 %v460
    %v4889 = vunpack.c.l.b16 %v461
    %v4890 = vunpack.c.l.b16 %v462
    %v4891 = vunpack.c.l.b16 %v463
    %v4892 = vunpack.c.l.b16 %v464
    %v4893 = vunpack.c.l.b16 %v465
    %v4894 = vunpack.c.l.b16 %v466
    %v4895 = vunpack.c.l.b16 %v467
    %v4896 = vpack.c.b16 %v4889, %v4888
    %v4897 = vpack.c.b16 %v4891, %v4890
    %v4898 = vpack.c.b16 %v4893, %v4892
    %v4899 = vpack.c.b16 %v4895, %v4894
    %4904 = vmatprep.subr.bf16.mxu0 0
    %4905 = vmatpush1.bf16.msra.mxu0 0
    %4906 = vmatprep.subr.bf16.mxu0 0
    %4907 = vmatpush1.bf16.msra.mxu0 0
    %4908 = vmatprep.subr.bf16.mxu0 0
    %4909 = vmatpush1.bf16.msra.mxu0 0
    %4910 = vmatprep.subr.bf16.mxu0 0
    %4911 = vmatpush1.bf16.msra.mxu0 0
    %4912 = vmatprep.subr.bf16.mxu0 0
    %4913 = vmatpush1.bf16.msra.mxu0 %v4899
    %4914 = vmatprep.subr.bf16.mxu0 0
    %4915 = vmatpush1.bf16.msra.mxu0 %v4898
    %4916 = vmatprep.subr.bf16.mxu0 0
    %4917 = vmatpush1.bf16.msra.mxu0 %v4897
    %4918 = vmatprep.subr.bf16.mxu0 0
    %4919 = vmatpush1.bf16.msra.mxu0 %v4896
    %4920 = vmatprep.subr.bf16.mxu0 0
    %4921 = vmatpush2.bf16.msra.mxu0 0
    %4922 = vmatprep.subr.bf16.mxu0 0
    %4923 = vmatpush2.bf16.msra.mxu0 0
    %4924 = vmatprep.subr.bf16.mxu0 0
    %4925 = vmatpush2.bf16.msra.mxu0 0
    %4926 = vmatprep.subr.bf16.mxu0 0
    %4927 = vmatpush2.bf16.msra.mxu0 0
    %4928 = vmatprep.subr.bf16.mxu0 0
    %4929 = vmatpush2.bf16.msra.mxu0 0
    %4930 = vmatprep.subr.bf16.mxu0 0
    %4931 = vmatpush2.bf16.msra.mxu0 0
    %4932 = vmatprep.subr.bf16.mxu0 0
    %4933 = vmatpush2.bf16.msra.mxu0 0
    %4934 = vmatprep.subr.bf16.mxu0 0
    %4935 = vmatpush2.bf16.msra.mxu0 0
    %4936 = vmatprep.mubr.bf16.mxu0 0
    %4937 = vmatmul.mubr.bf16.gmra.mxu0 %v2784
    %v4938 = vpop.f32.mrf.mxu0
    %v4939 = vadd.f32 %v2821, %v4938
    %v4940 = vpop.f32.mrf.mxu0
    %v4941 = vpop.f32.mrf.mxu0
    %v4942 = vpop.f32.mrf.mxu0
    %4943 = vdwg.mxu0
    %v4952 = vunpack.c.l.b16 %v468
    %v4953 = vunpack.c.l.b16 %v469
    %v4954 = vunpack.c.l.b16 %v470
    %v4955 = vunpack.c.l.b16 %v471
    %v4956 = vunpack.c.l.b16 %v472
    %v4957 = vunpack.c.l.b16 %v473
    %v4958 = vunpack.c.l.b16 %v474
    %v4959 = vunpack.c.l.b16 %v475
    %v4960 = vpack.c.b16 %v4953, %v4952
    %v4961 = vpack.c.b16 %v4955, %v4954
    %v4962 = vpack.c.b16 %v4957, %v4956
    %v4963 = vpack.c.b16 %v4959, %v4958
    %4968 = vmatprep.subr.bf16.mxu0 0
    %4969 = vmatpush1.bf16.msra.mxu0 0
    %4970 = vmatprep.subr.bf16.mxu0 0
    %4971 = vmatpush1.bf16.msra.mxu0 0
    %4972 = vmatprep.subr.bf16.mxu0 0
    %4973 = vmatpush1.bf16.msra.mxu0 0
    %4974 = vmatprep.subr.bf16.mxu0 0
    %4975 = vmatpush1.bf16.msra.mxu0 0
    %4976 = vmatprep.subr.bf16.mxu0 0
    %4977 = vmatpush1.bf16.msra.mxu0 %v4963
    %4978 = vmatprep.subr.bf16.mxu0 0
    %4979 = vmatpush1.bf16.msra.mxu0 %v4962
    %4980 = vmatprep.subr.bf16.mxu0 0
    %4981 = vmatpush1.bf16.msra.mxu0 %v4961
    %4982 = vmatprep.subr.bf16.mxu0 0
    %4983 = vmatpush1.bf16.msra.mxu0 %v4960
    %4984 = vmatprep.subr.bf16.mxu0 0
    %4985 = vmatpush2.bf16.msra.mxu0 0
    %4986 = vmatprep.subr.bf16.mxu0 0
    %4987 = vmatpush2.bf16.msra.mxu0 0
    %4988 = vmatprep.subr.bf16.mxu0 0
    %4989 = vmatpush2.bf16.msra.mxu0 0
    %4990 = vmatprep.subr.bf16.mxu0 0
    %4991 = vmatpush2.bf16.msra.mxu0 0
    %4992 = vmatprep.subr.bf16.mxu0 0
    %4993 = vmatpush2.bf16.msra.mxu0 0
    %4994 = vmatprep.subr.bf16.mxu0 0
    %4995 = vmatpush2.bf16.msra.mxu0 0
    %4996 = vmatprep.subr.bf16.mxu0 0
    %4997 = vmatpush2.bf16.msra.mxu0 0
    %4998 = vmatprep.subr.bf16.mxu0 0
    %4999 = vmatpush2.bf16.msra.mxu0 0
    %5000 = vmatprep.mubr.bf16.mxu0 0
    %5001 = vmatmul.mubr.bf16.gmra.mxu0 %v2851
    %v5002 = vpop.f32.mrf.mxu0
    %v5003 = vadd.f32 %v2888, %v5002
    %v5004 = vpop.f32.mrf.mxu0
    %v5005 = vpop.f32.mrf.mxu0
    %v5006 = vpop.f32.mrf.mxu0
    %5007 = vdwg.mxu0
    %v5016 = vunpack.c.l.b16 %v476
    %v5017 = vunpack.c.l.b16 %v477
    %v5018 = vunpack.c.l.b16 %v478
    %v5019 = vunpack.c.l.b16 %v479
    %v5020 = vunpack.c.l.b16 %v480
    %v5021 = vunpack.c.l.b16 %v481
    %v5022 = vunpack.c.l.b16 %v482
    %v5023 = vunpack.c.l.b16 %v483
    %v5024 = vpack.c.b16 %v5017, %v5016
    %v5025 = vpack.c.b16 %v5019, %v5018
    %v5026 = vpack.c.b16 %v5021, %v5020
    %v5027 = vpack.c.b16 %v5023, %v5022
    %5032 = vmatprep.subr.bf16.mxu0 0
    %5033 = vmatpush1.bf16.msra.mxu0 0
    %5034 = vmatprep.subr.bf16.mxu0 0
    %5035 = vmatpush1.bf16.msra.mxu0 0
    %5036 = vmatprep.subr.bf16.mxu0 0
    %5037 = vmatpush1.bf16.msra.mxu0 0
    %5038 = vmatprep.subr.bf16.mxu0 0
    %5039 = vmatpush1.bf16.msra.mxu0 0
    %5040 = vmatprep.subr.bf16.mxu0 0
    %5041 = vmatpush1.bf16.msra.mxu0 %v5027
    %5042 = vmatprep.subr.bf16.mxu0 0
    %5043 = vmatpush1.bf16.msra.mxu0 %v5026
    %5044 = vmatprep.subr.bf16.mxu0 0
    %5045 = vmatpush1.bf16.msra.mxu0 %v5025
    %5046 = vmatprep.subr.bf16.mxu0 0
    %5047 = vmatpush1.bf16.msra.mxu0 %v5024
    %5048 = vmatprep.subr.bf16.mxu0 0
    %5049 = vmatpush2.bf16.msra.mxu0 0
    %5050 = vmatprep.subr.bf16.mxu0 0
    %5051 = vmatpush2.bf16.msra.mxu0 0
    %5052 = vmatprep.subr.bf16.mxu0 0
    %5053 = vmatpush2.bf16.msra.mxu0 0
    %5054 = vmatprep.subr.bf16.mxu0 0
    %5055 = vmatpush2.bf16.msra.mxu0 0
    %5056 = vmatprep.subr.bf16.mxu0 0
    %5057 = vmatpush2.bf16.msra.mxu0 0
    %5058 = vmatprep.subr.bf16.mxu0 0
    %5059 = vmatpush2.bf16.msra.mxu0 0
    %5060 = vmatprep.subr.bf16.mxu0 0
    %5061 = vmatpush2.bf16.msra.mxu0 0
    %5062 = vmatprep.subr.bf16.mxu0 0
    %5063 = vmatpush2.bf16.msra.mxu0 0
    %5064 = vmatprep.mubr.bf16.mxu0 0
    %5065 = vmatmul.mubr.bf16.gmra.mxu0 %v2918
    %v5066 = vpop.f32.mrf.mxu0
    %v5067 = vadd.f32 %v2955, %v5066
    %v5068 = vpop.f32.mrf.mxu0
    %v5069 = vpop.f32.mrf.mxu0
    %v5070 = vpop.f32.mrf.mxu0
    %5071 = vdwg.mxu0
    %v5073 = vsel %vm772, %v187, 0
    %5075 = vmatprep.subr.bf16.mxu0 0
    %5076 = vmatpush1.bf16.msra.mxu0 0
    %5077 = vmatprep.subr.bf16.mxu0 0
    %5078 = vmatpush1.bf16.msra.mxu0 0
    %5079 = vmatprep.subr.bf16.mxu0 0
    %5080 = vmatpush1.bf16.msra.mxu0 0
    %5081 = vmatprep.subr.bf16.mxu0 0
    %5082 = vmatpush1.bf16.msra.mxu0 0
    %5083 = vmatprep.subr.bf16.mxu0 0
    %5084 = vmatpush1.bf16.msra.mxu0 %v2979
    %5085 = vmatprep.subr.bf16.mxu0 0
    %5086 = vmatpush1.bf16.msra.mxu0 %v2978
    %5087 = vmatprep.subr.bf16.mxu0 0
    %5088 = vmatpush1.bf16.msra.mxu0 %v2977
    %5089 = vmatprep.subr.bf16.mxu0 0
    %5090 = vmatpush1.bf16.msra.mxu0 %v2976
    %5091 = vmatprep.subr.bf16.mxu0 0
    %5092 = vmatpush2.bf16.msra.mxu0 0
    %5093 = vmatprep.subr.bf16.mxu0 0
    %5094 = vmatpush2.bf16.msra.mxu0 0
    %5095 = vmatprep.subr.bf16.mxu0 0
    %5096 = vmatpush2.bf16.msra.mxu0 0
    %5097 = vmatprep.subr.bf16.mxu0 0
    %5098 = vmatpush2.bf16.msra.mxu0 0
    %5099 = vmatprep.subr.bf16.mxu0 0
    %5100 = vmatpush2.bf16.msra.mxu0 0
    %5101 = vmatprep.subr.bf16.mxu0 0
    %5102 = vmatpush2.bf16.msra.mxu0 0
    %5103 = vmatprep.subr.bf16.mxu0 0
    %5104 = vmatpush2.bf16.msra.mxu0 0
    %5105 = vmatprep.subr.bf16.mxu0 0
    %5106 = vmatpush2.bf16.msra.mxu0 0
    %5107 = vmatprep.mubr.bf16.mxu0 0
    %5108 = vmatmul.mubr.bf16.gmra.mxu0 %v5073
    %v5109 = vpop.f32.mrf.mxu0
    %v5110 = vadd.f32 0.0, %v5109
    %v5111 = vpop.f32.mrf.mxu0
    %v5112 = vpop.f32.mrf.mxu0
    %v5113 = vpop.f32.mrf.mxu0
    %5114 = vdwg.mxu0
    %v5116 = vsel %vm772, %v188, 0
    %5118 = vmatprep.subr.bf16.mxu0 0
    %5119 = vmatpush1.bf16.msra.mxu0 0
    %5120 = vmatprep.subr.bf16.mxu0 0
    %5121 = vmatpush1.bf16.msra.mxu0 0
    %5122 = vmatprep.subr.bf16.mxu0 0
    %5123 = vmatpush1.bf16.msra.mxu0 0
    %5124 = vmatprep.subr.bf16.mxu0 0
    %5125 = vmatpush1.bf16.msra.mxu0 0
    %5126 = vmatprep.subr.bf16.mxu0 0
    %5127 = vmatpush1.bf16.msra.mxu0 %v3043
    %5128 = vmatprep.subr.bf16.mxu0 0
    %5129 = vmatpush1.bf16.msra.mxu0 %v3042
    %5130 = vmatprep.subr.bf16.mxu0 0
    %5131 = vmatpush1.bf16.msra.mxu0 %v3041
    %5132 = vmatprep.subr.bf16.mxu0 0
    %5133 = vmatpush1.bf16.msra.mxu0 %v3040
    %5134 = vmatprep.subr.bf16.mxu0 0
    %5135 = vmatpush2.bf16.msra.mxu0 0
    %5136 = vmatprep.subr.bf16.mxu0 0
    %5137 = vmatpush2.bf16.msra.mxu0 0
    %5138 = vmatprep.subr.bf16.mxu0 0
    %5139 = vmatpush2.bf16.msra.mxu0 0
    %5140 = vmatprep.subr.bf16.mxu0 0
    %5141 = vmatpush2.bf16.msra.mxu0 0
    %5142 = vmatprep.subr.bf16.mxu0 0
    %5143 = vmatpush2.bf16.msra.mxu0 0
    %5144 = vmatprep.subr.bf16.mxu0 0
    %5145 = vmatpush2.bf16.msra.mxu0 0
    %5146 = vmatprep.subr.bf16.mxu0 0
    %5147 = vmatpush2.bf16.msra.mxu0 0
    %5148 = vmatprep.subr.bf16.mxu0 0
    %5149 = vmatpush2.bf16.msra.mxu0 0
    %5150 = vmatprep.mubr.bf16.mxu0 0
    %5151 = vmatmul.mubr.bf16.gmra.mxu0 %v5116
    %v5152 = vpop.f32.mrf.mxu0
    %v5153 = vadd.f32 0.0, %v5152
    %v5154 = vpop.f32.mrf.mxu0
    %v5155 = vpop.f32.mrf.mxu0
    %v5156 = vpop.f32.mrf.mxu0
    %5157 = vdwg.mxu0
    %v5159 = vsel %vm772, %v189, 0
    %5161 = vmatprep.subr.bf16.mxu0 0
    %5162 = vmatpush1.bf16.msra.mxu0 0
    %5163 = vmatprep.subr.bf16.mxu0 0
    %5164 = vmatpush1.bf16.msra.mxu0 0
    %5165 = vmatprep.subr.bf16.mxu0 0
    %5166 = vmatpush1.bf16.msra.mxu0 0
    %5167 = vmatprep.subr.bf16.mxu0 0
    %5168 = vmatpush1.bf16.msra.mxu0 0
    %5169 = vmatprep.subr.bf16.mxu0 0
    %5170 = vmatpush1.bf16.msra.mxu0 %v3107
    %5171 = vmatprep.subr.bf16.mxu0 0
    %5172 = vmatpush1.bf16.msra.mxu0 %v3106
    %5173 = vmatprep.subr.bf16.mxu0 0
    %5174 = vmatpush1.bf16.msra.mxu0 %v3105
    %5175 = vmatprep.subr.bf16.mxu0 0
    %5176 = vmatpush1.bf16.msra.mxu0 %v3104
    %5177 = vmatprep.subr.bf16.mxu0 0
    %5178 = vmatpush2.bf16.msra.mxu0 0
    %5179 = vmatprep.subr.bf16.mxu0 0
    %5180 = vmatpush2.bf16.msra.mxu0 0
    %5181 = vmatprep.subr.bf16.mxu0 0
    %5182 = vmatpush2.bf16.msra.mxu0 0
    %5183 = vmatprep.subr.bf16.mxu0 0
    %5184 = vmatpush2.bf16.msra.mxu0 0
    %5185 = vmatprep.subr.bf16.mxu0 0
    %5186 = vmatpush2.bf16.msra.mxu0 0
    %5187 = vmatprep.subr.bf16.mxu0 0
    %5188 = vmatpush2.bf16.msra.mxu0 0
    %5189 = vmatprep.subr.bf16.mxu0 0
    %5190 = vmatpush2.bf16.msra.mxu0 0
    %5191 = vmatprep.subr.bf16.mxu0 0
    %5192 = vmatpush2.bf16.msra.mxu0 0
    %5193 = vmatprep.mubr.bf16.mxu0 0
    %5194 = vmatmul.mubr.bf16.gmra.mxu0 %v5159
    %v5195 = vpop.f32.mrf.mxu0
    %v5196 = vadd.f32 0.0, %v5195
    %v5197 = vpop.f32.mrf.mxu0
    %v5198 = vpop.f32.mrf.mxu0
    %v5199 = vpop.f32.mrf.mxu0
    %5200 = vdwg.mxu0
    %v5202 = vsel %vm772, %v190, 0
    %5204 = vmatprep.subr.bf16.mxu0 0
    %5205 = vmatpush1.bf16.msra.mxu0 0
    %5206 = vmatprep.subr.bf16.mxu0 0
    %5207 = vmatpush1.bf16.msra.mxu0 0
    %5208 = vmatprep.subr.bf16.mxu0 0
    %5209 = vmatpush1.bf16.msra.mxu0 0
    %5210 = vmatprep.subr.bf16.mxu0 0
    %5211 = vmatpush1.bf16.msra.mxu0 0
    %5212 = vmatprep.subr.bf16.mxu0 0
    %5213 = vmatpush1.bf16.msra.mxu0 %v3171
    %5214 = vmatprep.subr.bf16.mxu0 0
    %5215 = vmatpush1.bf16.msra.mxu0 %v3170
    %5216 = vmatprep.subr.bf16.mxu0 0
    %5217 = vmatpush1.bf16.msra.mxu0 %v3169
    %5218 = vmatprep.subr.bf16.mxu0 0
    %5219 = vmatpush1.bf16.msra.mxu0 %v3168
    %5220 = vmatprep.subr.bf16.mxu0 0
    %5221 = vmatpush2.bf16.msra.mxu0 0
    %5222 = vmatprep.subr.bf16.mxu0 0
    %5223 = vmatpush2.bf16.msra.mxu0 0
    %5224 = vmatprep.subr.bf16.mxu0 0
    %5225 = vmatpush2.bf16.msra.mxu0 0
    %5226 = vmatprep.subr.bf16.mxu0 0
    %5227 = vmatpush2.bf16.msra.mxu0 0
    %5228 = vmatprep.subr.bf16.mxu0 0
    %5229 = vmatpush2.bf16.msra.mxu0 0
    %5230 = vmatprep.subr.bf16.mxu0 0
    %5231 = vmatpush2.bf16.msra.mxu0 0
    %5232 = vmatprep.subr.bf16.mxu0 0
    %5233 = vmatpush2.bf16.msra.mxu0 0
    %5234 = vmatprep.subr.bf16.mxu0 0
    %5235 = vmatpush2.bf16.msra.mxu0 0
    %5236 = vmatprep.mubr.bf16.mxu0 0
    %5237 = vmatmul.mubr.bf16.gmra.mxu0 %v5202
    %v5238 = vpop.f32.mrf.mxu0
    %v5239 = vadd.f32 0.0, %v5238
    %v5240 = vpop.f32.mrf.mxu0
    %v5241 = vpop.f32.mrf.mxu0
    %v5242 = vpop.f32.mrf.mxu0
    %5243 = vdwg.mxu0
    %v5245 = vsel %vm772, %v191, 0
    %5247 = vmatprep.subr.bf16.mxu0 0
    %5248 = vmatpush1.bf16.msra.mxu0 0
    %5249 = vmatprep.subr.bf16.mxu0 0
    %5250 = vmatpush1.bf16.msra.mxu0 0
    %5251 = vmatprep.subr.bf16.mxu0 0
    %5252 = vmatpush1.bf16.msra.mxu0 0
    %5253 = vmatprep.subr.bf16.mxu0 0
    %5254 = vmatpush1.bf16.msra.mxu0 0
    %5255 = vmatprep.subr.bf16.mxu0 0
    %5256 = vmatpush1.bf16.msra.mxu0 %v3235
    %5257 = vmatprep.subr.bf16.mxu0 0
    %5258 = vmatpush1.bf16.msra.mxu0 %v3234
    %5259 = vmatprep.subr.bf16.mxu0 0
    %5260 = vmatpush1.bf16.msra.mxu0 %v3233
    %5261 = vmatprep.subr.bf16.mxu0 0
    %5262 = vmatpush1.bf16.msra.mxu0 %v3232
    %5263 = vmatprep.subr.bf16.mxu0 0
    %5264 = vmatpush2.bf16.msra.mxu0 0
    %5265 = vmatprep.subr.bf16.mxu0 0
    %5266 = vmatpush2.bf16.msra.mxu0 0
    %5267 = vmatprep.subr.bf16.mxu0 0
    %5268 = vmatpush2.bf16.msra.mxu0 0
    %5269 = vmatprep.subr.bf16.mxu0 0
    %5270 = vmatpush2.bf16.msra.mxu0 0
    %5271 = vmatprep.subr.bf16.mxu0 0
    %5272 = vmatpush2.bf16.msra.mxu0 0
    %5273 = vmatprep.subr.bf16.mxu0 0
    %5274 = vmatpush2.bf16.msra.mxu0 0
    %5275 = vmatprep.subr.bf16.mxu0 0
    %5276 = vmatpush2.bf16.msra.mxu0 0
    %5277 = vmatprep.subr.bf16.mxu0 0
    %5278 = vmatpush2.bf16.msra.mxu0 0
    %5279 = vmatprep.mubr.bf16.mxu0 0
    %5280 = vmatmul.mubr.bf16.gmra.mxu0 %v5245
    %v5281 = vpop.f32.mrf.mxu0
    %v5282 = vadd.f32 0.0, %v5281
    %v5283 = vpop.f32.mrf.mxu0
    %v5284 = vpop.f32.mrf.mxu0
    %v5285 = vpop.f32.mrf.mxu0
    %5286 = vdwg.mxu0
    %v5288 = vsel %vm772, %v192, 0
    %5290 = vmatprep.subr.bf16.mxu0 0
    %5291 = vmatpush1.bf16.msra.mxu0 0
    %5292 = vmatprep.subr.bf16.mxu0 0
    %5293 = vmatpush1.bf16.msra.mxu0 0
    %5294 = vmatprep.subr.bf16.mxu0 0
    %5295 = vmatpush1.bf16.msra.mxu0 0
    %5296 = vmatprep.subr.bf16.mxu0 0
    %5297 = vmatpush1.bf16.msra.mxu0 0
    %5298 = vmatprep.subr.bf16.mxu0 0
    %5299 = vmatpush1.bf16.msra.mxu0 %v3299
    %5300 = vmatprep.subr.bf16.mxu0 0
    %5301 = vmatpush1.bf16.msra.mxu0 %v3298
    %5302 = vmatprep.subr.bf16.mxu0 0
    %5303 = vmatpush1.bf16.msra.mxu0 %v3297
    %5304 = vmatprep.subr.bf16.mxu0 0
    %5305 = vmatpush1.bf16.msra.mxu0 %v3296
    %5306 = vmatprep.subr.bf16.mxu0 0
    %5307 = vmatpush2.bf16.msra.mxu0 0
    %5308 = vmatprep.subr.bf16.mxu0 0
    %5309 = vmatpush2.bf16.msra.mxu0 0
    %5310 = vmatprep.subr.bf16.mxu0 0
    %5311 = vmatpush2.bf16.msra.mxu0 0
    %5312 = vmatprep.subr.bf16.mxu0 0
    %5313 = vmatpush2.bf16.msra.mxu0 0
    %5314 = vmatprep.subr.bf16.mxu0 0
    %5315 = vmatpush2.bf16.msra.mxu0 0
    %5316 = vmatprep.subr.bf16.mxu0 0
    %5317 = vmatpush2.bf16.msra.mxu0 0
    %5318 = vmatprep.subr.bf16.mxu0 0
    %5319 = vmatpush2.bf16.msra.mxu0 0
    %5320 = vmatprep.subr.bf16.mxu0 0
    %5321 = vmatpush2.bf16.msra.mxu0 0
    %5322 = vmatprep.mubr.bf16.mxu0 0
    %5323 = vmatmul.mubr.bf16.gmra.mxu0 %v5288
    %v5324 = vpop.f32.mrf.mxu0
    %v5325 = vadd.f32 0.0, %v5324
    %v5326 = vpop.f32.mrf.mxu0
    %v5327 = vpop.f32.mrf.mxu0
    %v5328 = vpop.f32.mrf.mxu0
    %5329 = vdwg.mxu0
    %v5331 = vsel %vm772, %v193, 0
    %5333 = vmatprep.subr.bf16.mxu0 0
    %5334 = vmatpush1.bf16.msra.mxu0 0
    %5335 = vmatprep.subr.bf16.mxu0 0
    %5336 = vmatpush1.bf16.msra.mxu0 0
    %5337 = vmatprep.subr.bf16.mxu0 0
    %5338 = vmatpush1.bf16.msra.mxu0 0
    %5339 = vmatprep.subr.bf16.mxu0 0
    %5340 = vmatpush1.bf16.msra.mxu0 0
    %5341 = vmatprep.subr.bf16.mxu0 0
    %5342 = vmatpush1.bf16.msra.mxu0 %v3363
    %5343 = vmatprep.subr.bf16.mxu0 0
    %5344 = vmatpush1.bf16.msra.mxu0 %v3362
    %5345 = vmatprep.subr.bf16.mxu0 0
    %5346 = vmatpush1.bf16.msra.mxu0 %v3361
    %5347 = vmatprep.subr.bf16.mxu0 0
    %5348 = vmatpush1.bf16.msra.mxu0 %v3360
    %5349 = vmatprep.subr.bf16.mxu0 0
    %5350 = vmatpush2.bf16.msra.mxu0 0
    %5351 = vmatprep.subr.bf16.mxu0 0
    %5352 = vmatpush2.bf16.msra.mxu0 0
    %5353 = vmatprep.subr.bf16.mxu0 0
    %5354 = vmatpush2.bf16.msra.mxu0 0
    %5355 = vmatprep.subr.bf16.mxu0 0
    %5356 = vmatpush2.bf16.msra.mxu0 0
    %5357 = vmatprep.subr.bf16.mxu0 0
    %5358 = vmatpush2.bf16.msra.mxu0 0
    %5359 = vmatprep.subr.bf16.mxu0 0
    %5360 = vmatpush2.bf16.msra.mxu0 0
    %5361 = vmatprep.subr.bf16.mxu0 0
    %5362 = vmatpush2.bf16.msra.mxu0 0
    %5363 = vmatprep.subr.bf16.mxu0 0
    %5364 = vmatpush2.bf16.msra.mxu0 0
    %5365 = vmatprep.mubr.bf16.mxu0 0
    %5366 = vmatmul.mubr.bf16.gmra.mxu0 %v5331
    %v5367 = vpop.f32.mrf.mxu0
    %v5368 = vadd.f32 0.0, %v5367
    %v5369 = vpop.f32.mrf.mxu0
    %v5370 = vpop.f32.mrf.mxu0
    %v5371 = vpop.f32.mrf.mxu0
    %5372 = vdwg.mxu0
    %v5374 = vsel %vm772, %v194, 0
    %5376 = vmatprep.subr.bf16.mxu0 0
    %5377 = vmatpush1.bf16.msra.mxu0 0
    %5378 = vmatprep.subr.bf16.mxu0 0
    %5379 = vmatpush1.bf16.msra.mxu0 0
    %5380 = vmatprep.subr.bf16.mxu0 0
    %5381 = vmatpush1.bf16.msra.mxu0 0
    %5382 = vmatprep.subr.bf16.mxu0 0
    %5383 = vmatpush1.bf16.msra.mxu0 0
    %5384 = vmatprep.subr.bf16.mxu0 0
    %5385 = vmatpush1.bf16.msra.mxu0 %v3427
    %5386 = vmatprep.subr.bf16.mxu0 0
    %5387 = vmatpush1.bf16.msra.mxu0 %v3426
    %5388 = vmatprep.subr.bf16.mxu0 0
    %5389 = vmatpush1.bf16.msra.mxu0 %v3425
    %5390 = vmatprep.subr.bf16.mxu0 0
    %5391 = vmatpush1.bf16.msra.mxu0 %v3424
    %5392 = vmatprep.subr.bf16.mxu0 0
    %5393 = vmatpush2.bf16.msra.mxu0 0
    %5394 = vmatprep.subr.bf16.mxu0 0
    %5395 = vmatpush2.bf16.msra.mxu0 0
    %5396 = vmatprep.subr.bf16.mxu0 0
    %5397 = vmatpush2.bf16.msra.mxu0 0
    %5398 = vmatprep.subr.bf16.mxu0 0
    %5399 = vmatpush2.bf16.msra.mxu0 0
    %5400 = vmatprep.subr.bf16.mxu0 0
    %5401 = vmatpush2.bf16.msra.mxu0 0
    %5402 = vmatprep.subr.bf16.mxu0 0
    %5403 = vmatpush2.bf16.msra.mxu0 0
    %5404 = vmatprep.subr.bf16.mxu0 0
    %5405 = vmatpush2.bf16.msra.mxu0 0
    %5406 = vmatprep.subr.bf16.mxu0 0
    %5407 = vmatpush2.bf16.msra.mxu0 0
    %5408 = vmatprep.mubr.bf16.mxu0 0
    %5409 = vmatmul.mubr.bf16.gmra.mxu0 %v5374
    %v5410 = vpop.f32.mrf.mxu0
    %v5411 = vadd.f32 0.0, %v5410
    %v5412 = vpop.f32.mrf.mxu0
    %v5413 = vpop.f32.mrf.mxu0
    %v5414 = vpop.f32.mrf.mxu0
    %5415 = vdwg.mxu0
    %v5417 = vsel %vm772, %v195, 0
    %5419 = vmatprep.subr.bf16.mxu0 0
    %5420 = vmatpush1.bf16.msra.mxu0 0
    %5421 = vmatprep.subr.bf16.mxu0 0
    %5422 = vmatpush1.bf16.msra.mxu0 0
    %5423 = vmatprep.subr.bf16.mxu0 0
    %5424 = vmatpush1.bf16.msra.mxu0 0
    %5425 = vmatprep.subr.bf16.mxu0 0
    %5426 = vmatpush1.bf16.msra.mxu0 0
    %5427 = vmatprep.subr.bf16.mxu0 0
    %5428 = vmatpush1.bf16.msra.mxu0 %v3491
    %5429 = vmatprep.subr.bf16.mxu0 0
    %5430 = vmatpush1.bf16.msra.mxu0 %v3490
    %5431 = vmatprep.subr.bf16.mxu0 0
    %5432 = vmatpush1.bf16.msra.mxu0 %v3489
    %5433 = vmatprep.subr.bf16.mxu0 0
    %5434 = vmatpush1.bf16.msra.mxu0 %v3488
    %5435 = vmatprep.subr.bf16.mxu0 0
    %5436 = vmatpush2.bf16.msra.mxu0 0
    %5437 = vmatprep.subr.bf16.mxu0 0
    %5438 = vmatpush2.bf16.msra.mxu0 0
    %5439 = vmatprep.subr.bf16.mxu0 0
    %5440 = vmatpush2.bf16.msra.mxu0 0
    %5441 = vmatprep.subr.bf16.mxu0 0
    %5442 = vmatpush2.bf16.msra.mxu0 0
    %5443 = vmatprep.subr.bf16.mxu0 0
    %5444 = vmatpush2.bf16.msra.mxu0 0
    %5445 = vmatprep.subr.bf16.mxu0 0
    %5446 = vmatpush2.bf16.msra.mxu0 0
    %5447 = vmatprep.subr.bf16.mxu0 0
    %5448 = vmatpush2.bf16.msra.mxu0 0
    %5449 = vmatprep.subr.bf16.mxu0 0
    %5450 = vmatpush2.bf16.msra.mxu0 0
    %5451 = vmatprep.mubr.bf16.mxu0 0
    %5452 = vmatmul.mubr.bf16.gmra.mxu0 %v5417
    %v5453 = vpop.f32.mrf.mxu0
    %v5454 = vadd.f32 0.0, %v5453
    %v5455 = vpop.f32.mrf.mxu0
    %v5456 = vpop.f32.mrf.mxu0
    %v5457 = vpop.f32.mrf.mxu0
    %5458 = vdwg.mxu0
    %v5460 = vsel %vm772, %v196, 0
    %5462 = vmatprep.subr.bf16.mxu0 0
    %5463 = vmatpush1.bf16.msra.mxu0 0
    %5464 = vmatprep.subr.bf16.mxu0 0
    %5465 = vmatpush1.bf16.msra.mxu0 0
    %5466 = vmatprep.subr.bf16.mxu0 0
    %5467 = vmatpush1.bf16.msra.mxu0 0
    %5468 = vmatprep.subr.bf16.mxu0 0
    %5469 = vmatpush1.bf16.msra.mxu0 0
    %5470 = vmatprep.subr.bf16.mxu0 0
    %5471 = vmatpush1.bf16.msra.mxu0 %v3555
    %5472 = vmatprep.subr.bf16.mxu0 0
    %5473 = vmatpush1.bf16.msra.mxu0 %v3554
    %5474 = vmatprep.subr.bf16.mxu0 0
    %5475 = vmatpush1.bf16.msra.mxu0 %v3553
    %5476 = vmatprep.subr.bf16.mxu0 0
    %5477 = vmatpush1.bf16.msra.mxu0 %v3552
    %5478 = vmatprep.subr.bf16.mxu0 0
    %5479 = vmatpush2.bf16.msra.mxu0 0
    %5480 = vmatprep.subr.bf16.mxu0 0
    %5481 = vmatpush2.bf16.msra.mxu0 0
    %5482 = vmatprep.subr.bf16.mxu0 0
    %5483 = vmatpush2.bf16.msra.mxu0 0
    %5484 = vmatprep.subr.bf16.mxu0 0
    %5485 = vmatpush2.bf16.msra.mxu0 0
    %5486 = vmatprep.subr.bf16.mxu0 0
    %5487 = vmatpush2.bf16.msra.mxu0 0
    %5488 = vmatprep.subr.bf16.mxu0 0
    %5489 = vmatpush2.bf16.msra.mxu0 0
    %5490 = vmatprep.subr.bf16.mxu0 0
    %5491 = vmatpush2.bf16.msra.mxu0 0
    %5492 = vmatprep.subr.bf16.mxu0 0
    %5493 = vmatpush2.bf16.msra.mxu0 0
    %5494 = vmatprep.mubr.bf16.mxu0 0
    %5495 = vmatmul.mubr.bf16.gmra.mxu0 %v5460
    %v5496 = vpop.f32.mrf.mxu0
    %v5497 = vadd.f32 0.0, %v5496
    %v5498 = vpop.f32.mrf.mxu0
    %v5499 = vpop.f32.mrf.mxu0
    %v5500 = vpop.f32.mrf.mxu0
    %5501 = vdwg.mxu0
    %v5503 = vsel %vm772, %v197, 0
    %5505 = vmatprep.subr.bf16.mxu0 0
    %5506 = vmatpush1.bf16.msra.mxu0 0
    %5507 = vmatprep.subr.bf16.mxu0 0
    %5508 = vmatpush1.bf16.msra.mxu0 0
    %5509 = vmatprep.subr.bf16.mxu0 0
    %5510 = vmatpush1.bf16.msra.mxu0 0
    %5511 = vmatprep.subr.bf16.mxu0 0
    %5512 = vmatpush1.bf16.msra.mxu0 0
    %5513 = vmatprep.subr.bf16.mxu0 0
    %5514 = vmatpush1.bf16.msra.mxu0 %v3619
    %5515 = vmatprep.subr.bf16.mxu0 0
    %5516 = vmatpush1.bf16.msra.mxu0 %v3618
    %5517 = vmatprep.subr.bf16.mxu0 0
    %5518 = vmatpush1.bf16.msra.mxu0 %v3617
    %5519 = vmatprep.subr.bf16.mxu0 0
    %5520 = vmatpush1.bf16.msra.mxu0 %v3616
    %5521 = vmatprep.subr.bf16.mxu0 0
    %5522 = vmatpush2.bf16.msra.mxu0 0
    %5523 = vmatprep.subr.bf16.mxu0 0
    %5524 = vmatpush2.bf16.msra.mxu0 0
    %5525 = vmatprep.subr.bf16.mxu0 0
    %5526 = vmatpush2.bf16.msra.mxu0 0
    %5527 = vmatprep.subr.bf16.mxu0 0
    %5528 = vmatpush2.bf16.msra.mxu0 0
    %5529 = vmatprep.subr.bf16.mxu0 0
    %5530 = vmatpush2.bf16.msra.mxu0 0
    %5531 = vmatprep.subr.bf16.mxu0 0
    %5532 = vmatpush2.bf16.msra.mxu0 0
    %5533 = vmatprep.subr.bf16.mxu0 0
    %5534 = vmatpush2.bf16.msra.mxu0 0
    %5535 = vmatprep.subr.bf16.mxu0 0
    %5536 = vmatpush2.bf16.msra.mxu0 0
    %5537 = vmatprep.mubr.bf16.mxu0 0
    %5538 = vmatmul.mubr.bf16.gmra.mxu0 %v5503
    %v5539 = vpop.f32.mrf.mxu0
    %v5540 = vadd.f32 0.0, %v5539
    %v5541 = vpop.f32.mrf.mxu0
    %v5542 = vpop.f32.mrf.mxu0
    %v5543 = vpop.f32.mrf.mxu0
    %5544 = vdwg.mxu0
    %v5546 = vsel %vm772, %v198, 0
    %5548 = vmatprep.subr.bf16.mxu0 0
    %5549 = vmatpush1.bf16.msra.mxu0 0
    %5550 = vmatprep.subr.bf16.mxu0 0
    %5551 = vmatpush1.bf16.msra.mxu0 0
    %5552 = vmatprep.subr.bf16.mxu0 0
    %5553 = vmatpush1.bf16.msra.mxu0 0
    %5554 = vmatprep.subr.bf16.mxu0 0
    %5555 = vmatpush1.bf16.msra.mxu0 0
    %5556 = vmatprep.subr.bf16.mxu0 0
    %5557 = vmatpush1.bf16.msra.mxu0 %v3683
    %5558 = vmatprep.subr.bf16.mxu0 0
    %5559 = vmatpush1.bf16.msra.mxu0 %v3682
    %5560 = vmatprep.subr.bf16.mxu0 0
    %5561 = vmatpush1.bf16.msra.mxu0 %v3681
    %5562 = vmatprep.subr.bf16.mxu0 0
    %5563 = vmatpush1.bf16.msra.mxu0 %v3680
    %5564 = vmatprep.subr.bf16.mxu0 0
    %5565 = vmatpush2.bf16.msra.mxu0 0
    %5566 = vmatprep.subr.bf16.mxu0 0
    %5567 = vmatpush2.bf16.msra.mxu0 0
    %5568 = vmatprep.subr.bf16.mxu0 0
    %5569 = vmatpush2.bf16.msra.mxu0 0
    %5570 = vmatprep.subr.bf16.mxu0 0
    %5571 = vmatpush2.bf16.msra.mxu0 0
    %5572 = vmatprep.subr.bf16.mxu0 0
    %5573 = vmatpush2.bf16.msra.mxu0 0
    %5574 = vmatprep.subr.bf16.mxu0 0
    %5575 = vmatpush2.bf16.msra.mxu0 0
    %5576 = vmatprep.subr.bf16.mxu0 0
    %5577 = vmatpush2.bf16.msra.mxu0 0
    %5578 = vmatprep.subr.bf16.mxu0 0
    %5579 = vmatpush2.bf16.msra.mxu0 0
    %5580 = vmatprep.mubr.bf16.mxu0 0
    %5581 = vmatmul.mubr.bf16.gmra.mxu0 %v5546
    %v5582 = vpop.f32.mrf.mxu0
    %v5583 = vadd.f32 0.0, %v5582
    %v5584 = vpop.f32.mrf.mxu0
    %v5585 = vpop.f32.mrf.mxu0
    %v5586 = vpop.f32.mrf.mxu0
    %5587 = vdwg.mxu0
    %v5589 = vsel %vm772, %v199, 0
    %5591 = vmatprep.subr.bf16.mxu0 0
    %5592 = vmatpush1.bf16.msra.mxu0 0
    %5593 = vmatprep.subr.bf16.mxu0 0
    %5594 = vmatpush1.bf16.msra.mxu0 0
    %5595 = vmatprep.subr.bf16.mxu0 0
    %5596 = vmatpush1.bf16.msra.mxu0 0
    %5597 = vmatprep.subr.bf16.mxu0 0
    %5598 = vmatpush1.bf16.msra.mxu0 0
    %5599 = vmatprep.subr.bf16.mxu0 0
    %5600 = vmatpush1.bf16.msra.mxu0 %v3747
    %5601 = vmatprep.subr.bf16.mxu0 0
    %5602 = vmatpush1.bf16.msra.mxu0 %v3746
    %5603 = vmatprep.subr.bf16.mxu0 0
    %5604 = vmatpush1.bf16.msra.mxu0 %v3745
    %5605 = vmatprep.subr.bf16.mxu0 0
    %5606 = vmatpush1.bf16.msra.mxu0 %v3744
    %5607 = vmatprep.subr.bf16.mxu0 0
    %5608 = vmatpush2.bf16.msra.mxu0 0
    %5609 = vmatprep.subr.bf16.mxu0 0
    %5610 = vmatpush2.bf16.msra.mxu0 0
    %5611 = vmatprep.subr.bf16.mxu0 0
    %5612 = vmatpush2.bf16.msra.mxu0 0
    %5613 = vmatprep.subr.bf16.mxu0 0
    %5614 = vmatpush2.bf16.msra.mxu0 0
    %5615 = vmatprep.subr.bf16.mxu0 0
    %5616 = vmatpush2.bf16.msra.mxu0 0
    %5617 = vmatprep.subr.bf16.mxu0 0
    %5618 = vmatpush2.bf16.msra.mxu0 0
    %5619 = vmatprep.subr.bf16.mxu0 0
    %5620 = vmatpush2.bf16.msra.mxu0 0
    %5621 = vmatprep.subr.bf16.mxu0 0
    %5622 = vmatpush2.bf16.msra.mxu0 0
    %5623 = vmatprep.mubr.bf16.mxu0 0
    %5624 = vmatmul.mubr.bf16.gmra.mxu0 %v5589
    %v5625 = vpop.f32.mrf.mxu0
    %v5626 = vadd.f32 0.0, %v5625
    %v5627 = vpop.f32.mrf.mxu0
    %v5628 = vpop.f32.mrf.mxu0
    %v5629 = vpop.f32.mrf.mxu0
    %5630 = vdwg.mxu0
    %v5632 = vsel %vm772, %v200, 0
    %5634 = vmatprep.subr.bf16.mxu0 0
    %5635 = vmatpush1.bf16.msra.mxu0 0
    %5636 = vmatprep.subr.bf16.mxu0 0
    %5637 = vmatpush1.bf16.msra.mxu0 0
    %5638 = vmatprep.subr.bf16.mxu0 0
    %5639 = vmatpush1.bf16.msra.mxu0 0
    %5640 = vmatprep.subr.bf16.mxu0 0
    %5641 = vmatpush1.bf16.msra.mxu0 0
    %5642 = vmatprep.subr.bf16.mxu0 0
    %5643 = vmatpush1.bf16.msra.mxu0 %v3811
    %5644 = vmatprep.subr.bf16.mxu0 0
    %5645 = vmatpush1.bf16.msra.mxu0 %v3810
    %5646 = vmatprep.subr.bf16.mxu0 0
    %5647 = vmatpush1.bf16.msra.mxu0 %v3809
    %5648 = vmatprep.subr.bf16.mxu0 0
    %5649 = vmatpush1.bf16.msra.mxu0 %v3808
    %5650 = vmatprep.subr.bf16.mxu0 0
    %5651 = vmatpush2.bf16.msra.mxu0 0
    %5652 = vmatprep.subr.bf16.mxu0 0
    %5653 = vmatpush2.bf16.msra.mxu0 0
    %5654 = vmatprep.subr.bf16.mxu0 0
    %5655 = vmatpush2.bf16.msra.mxu0 0
    %5656 = vmatprep.subr.bf16.mxu0 0
    %5657 = vmatpush2.bf16.msra.mxu0 0
    %5658 = vmatprep.subr.bf16.mxu0 0
    %5659 = vmatpush2.bf16.msra.mxu0 0
    %5660 = vmatprep.subr.bf16.mxu0 0
    %5661 = vmatpush2.bf16.msra.mxu0 0
    %5662 = vmatprep.subr.bf16.mxu0 0
    %5663 = vmatpush2.bf16.msra.mxu0 0
    %5664 = vmatprep.subr.bf16.mxu0 0
    %5665 = vmatpush2.bf16.msra.mxu0 0
    %5666 = vmatprep.mubr.bf16.mxu0 0
    %5667 = vmatmul.mubr.bf16.gmra.mxu0 %v5632
    %v5668 = vpop.f32.mrf.mxu0
    %v5669 = vadd.f32 0.0, %v5668
    %v5670 = vpop.f32.mrf.mxu0
    %v5671 = vpop.f32.mrf.mxu0
    %v5672 = vpop.f32.mrf.mxu0
    %5673 = vdwg.mxu0
    %v5675 = vsel %vm772, %v201, 0
    %5677 = vmatprep.subr.bf16.mxu0 0
    %5678 = vmatpush1.bf16.msra.mxu0 0
    %5679 = vmatprep.subr.bf16.mxu0 0
    %5680 = vmatpush1.bf16.msra.mxu0 0
    %5681 = vmatprep.subr.bf16.mxu0 0
    %5682 = vmatpush1.bf16.msra.mxu0 0
    %5683 = vmatprep.subr.bf16.mxu0 0
    %5684 = vmatpush1.bf16.msra.mxu0 0
    %5685 = vmatprep.subr.bf16.mxu0 0
    %5686 = vmatpush1.bf16.msra.mxu0 %v3875
    %5687 = vmatprep.subr.bf16.mxu0 0
    %5688 = vmatpush1.bf16.msra.mxu0 %v3874
    %5689 = vmatprep.subr.bf16.mxu0 0
    %5690 = vmatpush1.bf16.msra.mxu0 %v3873
    %5691 = vmatprep.subr.bf16.mxu0 0
    %5692 = vmatpush1.bf16.msra.mxu0 %v3872
    %5693 = vmatprep.subr.bf16.mxu0 0
    %5694 = vmatpush2.bf16.msra.mxu0 0
    %5695 = vmatprep.subr.bf16.mxu0 0
    %5696 = vmatpush2.bf16.msra.mxu0 0
    %5697 = vmatprep.subr.bf16.mxu0 0
    %5698 = vmatpush2.bf16.msra.mxu0 0
    %5699 = vmatprep.subr.bf16.mxu0 0
    %5700 = vmatpush2.bf16.msra.mxu0 0
    %5701 = vmatprep.subr.bf16.mxu0 0
    %5702 = vmatpush2.bf16.msra.mxu0 0
    %5703 = vmatprep.subr.bf16.mxu0 0
    %5704 = vmatpush2.bf16.msra.mxu0 0
    %5705 = vmatprep.subr.bf16.mxu0 0
    %5706 = vmatpush2.bf16.msra.mxu0 0
    %5707 = vmatprep.subr.bf16.mxu0 0
    %5708 = vmatpush2.bf16.msra.mxu0 0
    %5709 = vmatprep.mubr.bf16.mxu0 0
    %5710 = vmatmul.mubr.bf16.gmra.mxu0 %v5675
    %v5711 = vpop.f32.mrf.mxu0
    %v5712 = vadd.f32 0.0, %v5711
    %v5713 = vpop.f32.mrf.mxu0
    %v5714 = vpop.f32.mrf.mxu0
    %v5715 = vpop.f32.mrf.mxu0
    %5716 = vdwg.mxu0
    %v5718 = vsel %vm772, %v202, 0
    %5720 = vmatprep.subr.bf16.mxu0 0
    %5721 = vmatpush1.bf16.msra.mxu0 0
    %5722 = vmatprep.subr.bf16.mxu0 0
    %5723 = vmatpush1.bf16.msra.mxu0 0
    %5724 = vmatprep.subr.bf16.mxu0 0
    %5725 = vmatpush1.bf16.msra.mxu0 0
    %5726 = vmatprep.subr.bf16.mxu0 0
    %5727 = vmatpush1.bf16.msra.mxu0 0
    %5728 = vmatprep.subr.bf16.mxu0 0
    %5729 = vmatpush1.bf16.msra.mxu0 %v3939
    %5730 = vmatprep.subr.bf16.mxu0 0
    %5731 = vmatpush1.bf16.msra.mxu0 %v3938
    %5732 = vmatprep.subr.bf16.mxu0 0
    %5733 = vmatpush1.bf16.msra.mxu0 %v3937
    %5734 = vmatprep.subr.bf16.mxu0 0
    %5735 = vmatpush1.bf16.msra.mxu0 %v3936
    %5736 = vmatprep.subr.bf16.mxu0 0
    %5737 = vmatpush2.bf16.msra.mxu0 0
    %5738 = vmatprep.subr.bf16.mxu0 0
    %5739 = vmatpush2.bf16.msra.mxu0 0
    %5740 = vmatprep.subr.bf16.mxu0 0
    %5741 = vmatpush2.bf16.msra.mxu0 0
    %5742 = vmatprep.subr.bf16.mxu0 0
    %5743 = vmatpush2.bf16.msra.mxu0 0
    %5744 = vmatprep.subr.bf16.mxu0 0
    %5745 = vmatpush2.bf16.msra.mxu0 0
    %5746 = vmatprep.subr.bf16.mxu0 0
    %5747 = vmatpush2.bf16.msra.mxu0 0
    %5748 = vmatprep.subr.bf16.mxu0 0
    %5749 = vmatpush2.bf16.msra.mxu0 0
    %5750 = vmatprep.subr.bf16.mxu0 0
    %5751 = vmatpush2.bf16.msra.mxu0 0
    %5752 = vmatprep.mubr.bf16.mxu0 0
    %5753 = vmatmul.mubr.bf16.gmra.mxu0 %v5718
    %v5754 = vpop.f32.mrf.mxu0
    %v5755 = vadd.f32 0.0, %v5754
    %v5756 = vpop.f32.mrf.mxu0
    %v5757 = vpop.f32.mrf.mxu0
    %v5758 = vpop.f32.mrf.mxu0
    %5759 = vdwg.mxu0
    %v5761 = vsel %vm772, %v203, 0
    %5763 = vmatprep.subr.bf16.mxu0 0
    %5764 = vmatpush1.bf16.msra.mxu0 0
    %5765 = vmatprep.subr.bf16.mxu0 0
    %5766 = vmatpush1.bf16.msra.mxu0 0
    %5767 = vmatprep.subr.bf16.mxu0 0
    %5768 = vmatpush1.bf16.msra.mxu0 0
    %5769 = vmatprep.subr.bf16.mxu0 0
    %5770 = vmatpush1.bf16.msra.mxu0 0
    %5771 = vmatprep.subr.bf16.mxu0 0
    %5772 = vmatpush1.bf16.msra.mxu0 %v4003
    %5773 = vmatprep.subr.bf16.mxu0 0
    %5774 = vmatpush1.bf16.msra.mxu0 %v4002
    %5775 = vmatprep.subr.bf16.mxu0 0
    %5776 = vmatpush1.bf16.msra.mxu0 %v4001
    %5777 = vmatprep.subr.bf16.mxu0 0
    %5778 = vmatpush1.bf16.msra.mxu0 %v4000
    %5779 = vmatprep.subr.bf16.mxu0 0
    %5780 = vmatpush2.bf16.msra.mxu0 0
    %5781 = vmatprep.subr.bf16.mxu0 0
    %5782 = vmatpush2.bf16.msra.mxu0 0
    %5783 = vmatprep.subr.bf16.mxu0 0
    %5784 = vmatpush2.bf16.msra.mxu0 0
    %5785 = vmatprep.subr.bf16.mxu0 0
    %5786 = vmatpush2.bf16.msra.mxu0 0
    %5787 = vmatprep.subr.bf16.mxu0 0
    %5788 = vmatpush2.bf16.msra.mxu0 0
    %5789 = vmatprep.subr.bf16.mxu0 0
    %5790 = vmatpush2.bf16.msra.mxu0 0
    %5791 = vmatprep.subr.bf16.mxu0 0
    %5792 = vmatpush2.bf16.msra.mxu0 0
    %5793 = vmatprep.subr.bf16.mxu0 0
    %5794 = vmatpush2.bf16.msra.mxu0 0
    %5795 = vmatprep.mubr.bf16.mxu0 0
    %5796 = vmatmul.mubr.bf16.gmra.mxu0 %v5761
    %v5797 = vpop.f32.mrf.mxu0
    %v5798 = vadd.f32 0.0, %v5797
    %v5799 = vpop.f32.mrf.mxu0
    %v5800 = vpop.f32.mrf.mxu0
    %v5801 = vpop.f32.mrf.mxu0
    %5802 = vdwg.mxu0
    %v5804 = vsel %vm772, %v204, 0
    %5806 = vmatprep.subr.bf16.mxu0 0
    %5807 = vmatpush1.bf16.msra.mxu0 0
    %5808 = vmatprep.subr.bf16.mxu0 0
    %5809 = vmatpush1.bf16.msra.mxu0 0
    %5810 = vmatprep.subr.bf16.mxu0 0
    %5811 = vmatpush1.bf16.msra.mxu0 0
    %5812 = vmatprep.subr.bf16.mxu0 0
    %5813 = vmatpush1.bf16.msra.mxu0 0
    %5814 = vmatprep.subr.bf16.mxu0 0
    %5815 = vmatpush1.bf16.msra.mxu0 %v4067
    %5816 = vmatprep.subr.bf16.mxu0 0
    %5817 = vmatpush1.bf16.msra.mxu0 %v4066
    %5818 = vmatprep.subr.bf16.mxu0 0
    %5819 = vmatpush1.bf16.msra.mxu0 %v4065
    %5820 = vmatprep.subr.bf16.mxu0 0
    %5821 = vmatpush1.bf16.msra.mxu0 %v4064
    %5822 = vmatprep.subr.bf16.mxu0 0
    %5823 = vmatpush2.bf16.msra.mxu0 0
    %5824 = vmatprep.subr.bf16.mxu0 0
    %5825 = vmatpush2.bf16.msra.mxu0 0
    %5826 = vmatprep.subr.bf16.mxu0 0
    %5827 = vmatpush2.bf16.msra.mxu0 0
    %5828 = vmatprep.subr.bf16.mxu0 0
    %5829 = vmatpush2.bf16.msra.mxu0 0
    %5830 = vmatprep.subr.bf16.mxu0 0
    %5831 = vmatpush2.bf16.msra.mxu0 0
    %5832 = vmatprep.subr.bf16.mxu0 0
    %5833 = vmatpush2.bf16.msra.mxu0 0
    %5834 = vmatprep.subr.bf16.mxu0 0
    %5835 = vmatpush2.bf16.msra.mxu0 0
    %5836 = vmatprep.subr.bf16.mxu0 0
    %5837 = vmatpush2.bf16.msra.mxu0 0
    %5838 = vmatprep.mubr.bf16.mxu0 0
    %5839 = vmatmul.mubr.bf16.gmra.mxu0 %v5804
    %v5840 = vpop.f32.mrf.mxu0
    %v5841 = vadd.f32 0.0, %v5840
    %v5842 = vpop.f32.mrf.mxu0
    %v5843 = vpop.f32.mrf.mxu0
    %v5844 = vpop.f32.mrf.mxu0
    %5845 = vdwg.mxu0
    %v5847 = vsel %vm772, %v205, 0
    %5849 = vmatprep.subr.bf16.mxu0 0
    %5850 = vmatpush1.bf16.msra.mxu0 0
    %5851 = vmatprep.subr.bf16.mxu0 0
    %5852 = vmatpush1.bf16.msra.mxu0 0
    %5853 = vmatprep.subr.bf16.mxu0 0
    %5854 = vmatpush1.bf16.msra.mxu0 0
    %5855 = vmatprep.subr.bf16.mxu0 0
    %5856 = vmatpush1.bf16.msra.mxu0 0
    %5857 = vmatprep.subr.bf16.mxu0 0
    %5858 = vmatpush1.bf16.msra.mxu0 %v4131
    %5859 = vmatprep.subr.bf16.mxu0 0
    %5860 = vmatpush1.bf16.msra.mxu0 %v4130
    %5861 = vmatprep.subr.bf16.mxu0 0
    %5862 = vmatpush1.bf16.msra.mxu0 %v4129
    %5863 = vmatprep.subr.bf16.mxu0 0
    %5864 = vmatpush1.bf16.msra.mxu0 %v4128
    %5865 = vmatprep.subr.bf16.mxu0 0
    %5866 = vmatpush2.bf16.msra.mxu0 0
    %5867 = vmatprep.subr.bf16.mxu0 0
    %5868 = vmatpush2.bf16.msra.mxu0 0
    %5869 = vmatprep.subr.bf16.mxu0 0
    %5870 = vmatpush2.bf16.msra.mxu0 0
    %5871 = vmatprep.subr.bf16.mxu0 0
    %5872 = vmatpush2.bf16.msra.mxu0 0
    %5873 = vmatprep.subr.bf16.mxu0 0
    %5874 = vmatpush2.bf16.msra.mxu0 0
    %5875 = vmatprep.subr.bf16.mxu0 0
    %5876 = vmatpush2.bf16.msra.mxu0 0
    %5877 = vmatprep.subr.bf16.mxu0 0
    %5878 = vmatpush2.bf16.msra.mxu0 0
    %5879 = vmatprep.subr.bf16.mxu0 0
    %5880 = vmatpush2.bf16.msra.mxu0 0
    %5881 = vmatprep.mubr.bf16.mxu0 0
    %5882 = vmatmul.mubr.bf16.gmra.mxu0 %v5847
    %v5883 = vpop.f32.mrf.mxu0
    %v5884 = vadd.f32 0.0, %v5883
    %v5885 = vpop.f32.mrf.mxu0
    %v5886 = vpop.f32.mrf.mxu0
    %v5887 = vpop.f32.mrf.mxu0
    %5888 = vdwg.mxu0
    %v5890 = vsel %vm772, %v206, 0
    %5892 = vmatprep.subr.bf16.mxu0 0
    %5893 = vmatpush1.bf16.msra.mxu0 0
    %5894 = vmatprep.subr.bf16.mxu0 0
    %5895 = vmatpush1.bf16.msra.mxu0 0
    %5896 = vmatprep.subr.bf16.mxu0 0
    %5897 = vmatpush1.bf16.msra.mxu0 0
    %5898 = vmatprep.subr.bf16.mxu0 0
    %5899 = vmatpush1.bf16.msra.mxu0 0
    %5900 = vmatprep.subr.bf16.mxu0 0
    %5901 = vmatpush1.bf16.msra.mxu0 %v4195
    %5902 = vmatprep.subr.bf16.mxu0 0
    %5903 = vmatpush1.bf16.msra.mxu0 %v4194
    %5904 = vmatprep.subr.bf16.mxu0 0
    %5905 = vmatpush1.bf16.msra.mxu0 %v4193
    %5906 = vmatprep.subr.bf16.mxu0 0
    %5907 = vmatpush1.bf16.msra.mxu0 %v4192
    %5908 = vmatprep.subr.bf16.mxu0 0
    %5909 = vmatpush2.bf16.msra.mxu0 0
    %5910 = vmatprep.subr.bf16.mxu0 0
    %5911 = vmatpush2.bf16.msra.mxu0 0
    %5912 = vmatprep.subr.bf16.mxu0 0
    %5913 = vmatpush2.bf16.msra.mxu0 0
    %5914 = vmatprep.subr.bf16.mxu0 0
    %5915 = vmatpush2.bf16.msra.mxu0 0
    %5916 = vmatprep.subr.bf16.mxu0 0
    %5917 = vmatpush2.bf16.msra.mxu0 0
    %5918 = vmatprep.subr.bf16.mxu0 0
    %5919 = vmatpush2.bf16.msra.mxu0 0
    %5920 = vmatprep.subr.bf16.mxu0 0
    %5921 = vmatpush2.bf16.msra.mxu0 0
    %5922 = vmatprep.subr.bf16.mxu0 0
    %5923 = vmatpush2.bf16.msra.mxu0 0
    %5924 = vmatprep.mubr.bf16.mxu0 0
    %5925 = vmatmul.mubr.bf16.gmra.mxu0 %v5890
    %v5926 = vpop.f32.mrf.mxu0
    %v5927 = vadd.f32 0.0, %v5926
    %v5928 = vpop.f32.mrf.mxu0
    %v5929 = vpop.f32.mrf.mxu0
    %v5930 = vpop.f32.mrf.mxu0
    %5931 = vdwg.mxu0
    %v5933 = vsel %vm772, %v207, 0
    %5935 = vmatprep.subr.bf16.mxu0 0
    %5936 = vmatpush1.bf16.msra.mxu0 0
    %5937 = vmatprep.subr.bf16.mxu0 0
    %5938 = vmatpush1.bf16.msra.mxu0 0
    %5939 = vmatprep.subr.bf16.mxu0 0
    %5940 = vmatpush1.bf16.msra.mxu0 0
    %5941 = vmatprep.subr.bf16.mxu0 0
    %5942 = vmatpush1.bf16.msra.mxu0 0
    %5943 = vmatprep.subr.bf16.mxu0 0
    %5944 = vmatpush1.bf16.msra.mxu0 %v4259
    %5945 = vmatprep.subr.bf16.mxu0 0
    %5946 = vmatpush1.bf16.msra.mxu0 %v4258
    %5947 = vmatprep.subr.bf16.mxu0 0
    %5948 = vmatpush1.bf16.msra.mxu0 %v4257
    %5949 = vmatprep.subr.bf16.mxu0 0
    %5950 = vmatpush1.bf16.msra.mxu0 %v4256
    %5951 = vmatprep.subr.bf16.mxu0 0
    %5952 = vmatpush2.bf16.msra.mxu0 0
    %5953 = vmatprep.subr.bf16.mxu0 0
    %5954 = vmatpush2.bf16.msra.mxu0 0
    %5955 = vmatprep.subr.bf16.mxu0 0
    %5956 = vmatpush2.bf16.msra.mxu0 0
    %5957 = vmatprep.subr.bf16.mxu0 0
    %5958 = vmatpush2.bf16.msra.mxu0 0
    %5959 = vmatprep.subr.bf16.mxu0 0
    %5960 = vmatpush2.bf16.msra.mxu0 0
    %5961 = vmatprep.subr.bf16.mxu0 0
    %5962 = vmatpush2.bf16.msra.mxu0 0
    %5963 = vmatprep.subr.bf16.mxu0 0
    %5964 = vmatpush2.bf16.msra.mxu0 0
    %5965 = vmatprep.subr.bf16.mxu0 0
    %5966 = vmatpush2.bf16.msra.mxu0 0
    %5967 = vmatprep.mubr.bf16.mxu0 0
    %5968 = vmatmul.mubr.bf16.gmra.mxu0 %v5933
    %v5969 = vpop.f32.mrf.mxu0
    %v5970 = vadd.f32 0.0, %v5969
    %v5971 = vpop.f32.mrf.mxu0
    %v5972 = vpop.f32.mrf.mxu0
    %v5973 = vpop.f32.mrf.mxu0
    %5974 = vdwg.mxu0
    %v5976 = vsel %vm772, %v208, 0
    %5978 = vmatprep.subr.bf16.mxu0 0
    %5979 = vmatpush1.bf16.msra.mxu0 0
    %5980 = vmatprep.subr.bf16.mxu0 0
    %5981 = vmatpush1.bf16.msra.mxu0 0
    %5982 = vmatprep.subr.bf16.mxu0 0
    %5983 = vmatpush1.bf16.msra.mxu0 0
    %5984 = vmatprep.subr.bf16.mxu0 0
    %5985 = vmatpush1.bf16.msra.mxu0 0
    %5986 = vmatprep.subr.bf16.mxu0 0
    %5987 = vmatpush1.bf16.msra.mxu0 %v4323
    %5988 = vmatprep.subr.bf16.mxu0 0
    %5989 = vmatpush1.bf16.msra.mxu0 %v4322
    %5990 = vmatprep.subr.bf16.mxu0 0
    %5991 = vmatpush1.bf16.msra.mxu0 %v4321
    %5992 = vmatprep.subr.bf16.mxu0 0
    %5993 = vmatpush1.bf16.msra.mxu0 %v4320
    %5994 = vmatprep.subr.bf16.mxu0 0
    %5995 = vmatpush2.bf16.msra.mxu0 0
    %5996 = vmatprep.subr.bf16.mxu0 0
    %5997 = vmatpush2.bf16.msra.mxu0 0
    %5998 = vmatprep.subr.bf16.mxu0 0
    %5999 = vmatpush2.bf16.msra.mxu0 0
    %6000 = vmatprep.subr.bf16.mxu0 0
    %6001 = vmatpush2.bf16.msra.mxu0 0
    %6002 = vmatprep.subr.bf16.mxu0 0
    %6003 = vmatpush2.bf16.msra.mxu0 0
    %6004 = vmatprep.subr.bf16.mxu0 0
    %6005 = vmatpush2.bf16.msra.mxu0 0
    %6006 = vmatprep.subr.bf16.mxu0 0
    %6007 = vmatpush2.bf16.msra.mxu0 0
    %6008 = vmatprep.subr.bf16.mxu0 0
    %6009 = vmatpush2.bf16.msra.mxu0 0
    %6010 = vmatprep.mubr.bf16.mxu0 0
    %6011 = vmatmul.mubr.bf16.gmra.mxu0 %v5976
    %v6012 = vpop.f32.mrf.mxu0
    %v6013 = vadd.f32 0.0, %v6012
    %v6014 = vpop.f32.mrf.mxu0
    %v6015 = vpop.f32.mrf.mxu0
    %v6016 = vpop.f32.mrf.mxu0
    %6017 = vdwg.mxu0
    %v6019 = vsel %vm772, %v209, 0
    %6021 = vmatprep.subr.bf16.mxu0 0
    %6022 = vmatpush1.bf16.msra.mxu0 0
    %6023 = vmatprep.subr.bf16.mxu0 0
    %6024 = vmatpush1.bf16.msra.mxu0 0
    %6025 = vmatprep.subr.bf16.mxu0 0
    %6026 = vmatpush1.bf16.msra.mxu0 0
    %6027 = vmatprep.subr.bf16.mxu0 0
    %6028 = vmatpush1.bf16.msra.mxu0 0
    %6029 = vmatprep.subr.bf16.mxu0 0
    %6030 = vmatpush1.bf16.msra.mxu0 %v4387
    %6031 = vmatprep.subr.bf16.mxu0 0
    %6032 = vmatpush1.bf16.msra.mxu0 %v4386
    %6033 = vmatprep.subr.bf16.mxu0 0
    %6034 = vmatpush1.bf16.msra.mxu0 %v4385
    %6035 = vmatprep.subr.bf16.mxu0 0
    %6036 = vmatpush1.bf16.msra.mxu0 %v4384
    %6037 = vmatprep.subr.bf16.mxu0 0
    %6038 = vmatpush2.bf16.msra.mxu0 0
    %6039 = vmatprep.subr.bf16.mxu0 0
    %6040 = vmatpush2.bf16.msra.mxu0 0
    %6041 = vmatprep.subr.bf16.mxu0 0
    %6042 = vmatpush2.bf16.msra.mxu0 0
    %6043 = vmatprep.subr.bf16.mxu0 0
    %6044 = vmatpush2.bf16.msra.mxu0 0
    %6045 = vmatprep.subr.bf16.mxu0 0
    %6046 = vmatpush2.bf16.msra.mxu0 0
    %6047 = vmatprep.subr.bf16.mxu0 0
    %6048 = vmatpush2.bf16.msra.mxu0 0
    %6049 = vmatprep.subr.bf16.mxu0 0
    %6050 = vmatpush2.bf16.msra.mxu0 0
    %6051 = vmatprep.subr.bf16.mxu0 0
    %6052 = vmatpush2.bf16.msra.mxu0 0
    %6053 = vmatprep.mubr.bf16.mxu0 0
    %6054 = vmatmul.mubr.bf16.gmra.mxu0 %v6019
    %v6055 = vpop.f32.mrf.mxu0
    %v6056 = vadd.f32 0.0, %v6055
    %v6057 = vpop.f32.mrf.mxu0
    %v6058 = vpop.f32.mrf.mxu0
    %v6059 = vpop.f32.mrf.mxu0
    %6060 = vdwg.mxu0
    %v6062 = vsel %vm772, %v210, 0
    %6064 = vmatprep.subr.bf16.mxu0 0
    %6065 = vmatpush1.bf16.msra.mxu0 0
    %6066 = vmatprep.subr.bf16.mxu0 0
    %6067 = vmatpush1.bf16.msra.mxu0 0
    %6068 = vmatprep.subr.bf16.mxu0 0
    %6069 = vmatpush1.bf16.msra.mxu0 0
    %6070 = vmatprep.subr.bf16.mxu0 0
    %6071 = vmatpush1.bf16.msra.mxu0 0
    %6072 = vmatprep.subr.bf16.mxu0 0
    %6073 = vmatpush1.bf16.msra.mxu0 %v4451
    %6074 = vmatprep.subr.bf16.mxu0 0
    %6075 = vmatpush1.bf16.msra.mxu0 %v4450
    %6076 = vmatprep.subr.bf16.mxu0 0
    %6077 = vmatpush1.bf16.msra.mxu0 %v4449
    %6078 = vmatprep.subr.bf16.mxu0 0
    %6079 = vmatpush1.bf16.msra.mxu0 %v4448
    %6080 = vmatprep.subr.bf16.mxu0 0
    %6081 = vmatpush2.bf16.msra.mxu0 0
    %6082 = vmatprep.subr.bf16.mxu0 0
    %6083 = vmatpush2.bf16.msra.mxu0 0
    %6084 = vmatprep.subr.bf16.mxu0 0
    %6085 = vmatpush2.bf16.msra.mxu0 0
    %6086 = vmatprep.subr.bf16.mxu0 0
    %6087 = vmatpush2.bf16.msra.mxu0 0
    %6088 = vmatprep.subr.bf16.mxu0 0
    %6089 = vmatpush2.bf16.msra.mxu0 0
    %6090 = vmatprep.subr.bf16.mxu0 0
    %6091 = vmatpush2.bf16.msra.mxu0 0
    %6092 = vmatprep.subr.bf16.mxu0 0
    %6093 = vmatpush2.bf16.msra.mxu0 0
    %6094 = vmatprep.subr.bf16.mxu0 0
    %6095 = vmatpush2.bf16.msra.mxu0 0
    %6096 = vmatprep.mubr.bf16.mxu0 0
    %6097 = vmatmul.mubr.bf16.gmra.mxu0 %v6062
    %v6098 = vpop.f32.mrf.mxu0
    %v6099 = vadd.f32 0.0, %v6098
    %v6100 = vpop.f32.mrf.mxu0
    %v6101 = vpop.f32.mrf.mxu0
    %v6102 = vpop.f32.mrf.mxu0
    %6103 = vdwg.mxu0
    %v6105 = vsel %vm772, %v211, 0
    %6107 = vmatprep.subr.bf16.mxu0 0
    %6108 = vmatpush1.bf16.msra.mxu0 0
    %6109 = vmatprep.subr.bf16.mxu0 0
    %6110 = vmatpush1.bf16.msra.mxu0 0
    %6111 = vmatprep.subr.bf16.mxu0 0
    %6112 = vmatpush1.bf16.msra.mxu0 0
    %6113 = vmatprep.subr.bf16.mxu0 0
    %6114 = vmatpush1.bf16.msra.mxu0 0
    %6115 = vmatprep.subr.bf16.mxu0 0
    %6116 = vmatpush1.bf16.msra.mxu0 %v4515
    %6117 = vmatprep.subr.bf16.mxu0 0
    %6118 = vmatpush1.bf16.msra.mxu0 %v4514
    %6119 = vmatprep.subr.bf16.mxu0 0
    %6120 = vmatpush1.bf16.msra.mxu0 %v4513
    %6121 = vmatprep.subr.bf16.mxu0 0
    %6122 = vmatpush1.bf16.msra.mxu0 %v4512
    %6123 = vmatprep.subr.bf16.mxu0 0
    %6124 = vmatpush2.bf16.msra.mxu0 0
    %6125 = vmatprep.subr.bf16.mxu0 0
    %6126 = vmatpush2.bf16.msra.mxu0 0
    %6127 = vmatprep.subr.bf16.mxu0 0
    %6128 = vmatpush2.bf16.msra.mxu0 0
    %6129 = vmatprep.subr.bf16.mxu0 0
    %6130 = vmatpush2.bf16.msra.mxu0 0
    %6131 = vmatprep.subr.bf16.mxu0 0
    %6132 = vmatpush2.bf16.msra.mxu0 0
    %6133 = vmatprep.subr.bf16.mxu0 0
    %6134 = vmatpush2.bf16.msra.mxu0 0
    %6135 = vmatprep.subr.bf16.mxu0 0
    %6136 = vmatpush2.bf16.msra.mxu0 0
    %6137 = vmatprep.subr.bf16.mxu0 0
    %6138 = vmatpush2.bf16.msra.mxu0 0
    %6139 = vmatprep.mubr.bf16.mxu0 0
    %6140 = vmatmul.mubr.bf16.gmra.mxu0 %v6105
    %v6141 = vpop.f32.mrf.mxu0
    %v6142 = vadd.f32 0.0, %v6141
    %v6143 = vpop.f32.mrf.mxu0
    %v6144 = vpop.f32.mrf.mxu0
    %v6145 = vpop.f32.mrf.mxu0
    %6146 = vdwg.mxu0
    %v6148 = vsel %vm772, %v212, 0
    %6150 = vmatprep.subr.bf16.mxu0 0
    %6151 = vmatpush1.bf16.msra.mxu0 0
    %6152 = vmatprep.subr.bf16.mxu0 0
    %6153 = vmatpush1.bf16.msra.mxu0 0
    %6154 = vmatprep.subr.bf16.mxu0 0
    %6155 = vmatpush1.bf16.msra.mxu0 0
    %6156 = vmatprep.subr.bf16.mxu0 0
    %6157 = vmatpush1.bf16.msra.mxu0 0
    %6158 = vmatprep.subr.bf16.mxu0 0
    %6159 = vmatpush1.bf16.msra.mxu0 %v4579
    %6160 = vmatprep.subr.bf16.mxu0 0
    %6161 = vmatpush1.bf16.msra.mxu0 %v4578
    %6162 = vmatprep.subr.bf16.mxu0 0
    %6163 = vmatpush1.bf16.msra.mxu0 %v4577
    %6164 = vmatprep.subr.bf16.mxu0 0
    %6165 = vmatpush1.bf16.msra.mxu0 %v4576
    %6166 = vmatprep.subr.bf16.mxu0 0
    %6167 = vmatpush2.bf16.msra.mxu0 0
    %6168 = vmatprep.subr.bf16.mxu0 0
    %6169 = vmatpush2.bf16.msra.mxu0 0
    %6170 = vmatprep.subr.bf16.mxu0 0
    %6171 = vmatpush2.bf16.msra.mxu0 0
    %6172 = vmatprep.subr.bf16.mxu0 0
    %6173 = vmatpush2.bf16.msra.mxu0 0
    %6174 = vmatprep.subr.bf16.mxu0 0
    %6175 = vmatpush2.bf16.msra.mxu0 0
    %6176 = vmatprep.subr.bf16.mxu0 0
    %6177 = vmatpush2.bf16.msra.mxu0 0
    %6178 = vmatprep.subr.bf16.mxu0 0
    %6179 = vmatpush2.bf16.msra.mxu0 0
    %6180 = vmatprep.subr.bf16.mxu0 0
    %6181 = vmatpush2.bf16.msra.mxu0 0
    %6182 = vmatprep.mubr.bf16.mxu0 0
    %6183 = vmatmul.mubr.bf16.gmra.mxu0 %v6148
    %v6184 = vpop.f32.mrf.mxu0
    %v6185 = vadd.f32 0.0, %v6184
    %v6186 = vpop.f32.mrf.mxu0
    %v6187 = vpop.f32.mrf.mxu0
    %v6188 = vpop.f32.mrf.mxu0
    %6189 = vdwg.mxu0
    %v6191 = vsel %vm772, %v213, 0
    %6193 = vmatprep.subr.bf16.mxu0 0
    %6194 = vmatpush1.bf16.msra.mxu0 0
    %6195 = vmatprep.subr.bf16.mxu0 0
    %6196 = vmatpush1.bf16.msra.mxu0 0
    %6197 = vmatprep.subr.bf16.mxu0 0
    %6198 = vmatpush1.bf16.msra.mxu0 0
    %6199 = vmatprep.subr.bf16.mxu0 0
    %6200 = vmatpush1.bf16.msra.mxu0 0
    %6201 = vmatprep.subr.bf16.mxu0 0
    %6202 = vmatpush1.bf16.msra.mxu0 %v4643
    %6203 = vmatprep.subr.bf16.mxu0 0
    %6204 = vmatpush1.bf16.msra.mxu0 %v4642
    %6205 = vmatprep.subr.bf16.mxu0 0
    %6206 = vmatpush1.bf16.msra.mxu0 %v4641
    %6207 = vmatprep.subr.bf16.mxu0 0
    %6208 = vmatpush1.bf16.msra.mxu0 %v4640
    %6209 = vmatprep.subr.bf16.mxu0 0
    %6210 = vmatpush2.bf16.msra.mxu0 0
    %6211 = vmatprep.subr.bf16.mxu0 0
    %6212 = vmatpush2.bf16.msra.mxu0 0
    %6213 = vmatprep.subr.bf16.mxu0 0
    %6214 = vmatpush2.bf16.msra.mxu0 0
    %6215 = vmatprep.subr.bf16.mxu0 0
    %6216 = vmatpush2.bf16.msra.mxu0 0
    %6217 = vmatprep.subr.bf16.mxu0 0
    %6218 = vmatpush2.bf16.msra.mxu0 0
    %6219 = vmatprep.subr.bf16.mxu0 0
    %6220 = vmatpush2.bf16.msra.mxu0 0
    %6221 = vmatprep.subr.bf16.mxu0 0
    %6222 = vmatpush2.bf16.msra.mxu0 0
    %6223 = vmatprep.subr.bf16.mxu0 0
    %6224 = vmatpush2.bf16.msra.mxu0 0
    %6225 = vmatprep.mubr.bf16.mxu0 0
    %6226 = vmatmul.mubr.bf16.gmra.mxu0 %v6191
    %v6227 = vpop.f32.mrf.mxu0
    %v6228 = vadd.f32 0.0, %v6227
    %v6229 = vpop.f32.mrf.mxu0
    %v6230 = vpop.f32.mrf.mxu0
    %v6231 = vpop.f32.mrf.mxu0
    %6232 = vdwg.mxu0
    %v6234 = vsel %vm772, %v214, 0
    %6236 = vmatprep.subr.bf16.mxu0 0
    %6237 = vmatpush1.bf16.msra.mxu0 0
    %6238 = vmatprep.subr.bf16.mxu0 0
    %6239 = vmatpush1.bf16.msra.mxu0 0
    %6240 = vmatprep.subr.bf16.mxu0 0
    %6241 = vmatpush1.bf16.msra.mxu0 0
    %6242 = vmatprep.subr.bf16.mxu0 0
    %6243 = vmatpush1.bf16.msra.mxu0 0
    %6244 = vmatprep.subr.bf16.mxu0 0
    %6245 = vmatpush1.bf16.msra.mxu0 %v4707
    %6246 = vmatprep.subr.bf16.mxu0 0
    %6247 = vmatpush1.bf16.msra.mxu0 %v4706
    %6248 = vmatprep.subr.bf16.mxu0 0
    %6249 = vmatpush1.bf16.msra.mxu0 %v4705
    %6250 = vmatprep.subr.bf16.mxu0 0
    %6251 = vmatpush1.bf16.msra.mxu0 %v4704
    %6252 = vmatprep.subr.bf16.mxu0 0
    %6253 = vmatpush2.bf16.msra.mxu0 0
    %6254 = vmatprep.subr.bf16.mxu0 0
    %6255 = vmatpush2.bf16.msra.mxu0 0
    %6256 = vmatprep.subr.bf16.mxu0 0
    %6257 = vmatpush2.bf16.msra.mxu0 0
    %6258 = vmatprep.subr.bf16.mxu0 0
    %6259 = vmatpush2.bf16.msra.mxu0 0
    %6260 = vmatprep.subr.bf16.mxu0 0
    %6261 = vmatpush2.bf16.msra.mxu0 0
    %6262 = vmatprep.subr.bf16.mxu0 0
    %6263 = vmatpush2.bf16.msra.mxu0 0
    %6264 = vmatprep.subr.bf16.mxu0 0
    %6265 = vmatpush2.bf16.msra.mxu0 0
    %6266 = vmatprep.subr.bf16.mxu0 0
    %6267 = vmatpush2.bf16.msra.mxu0 0
    %6268 = vmatprep.mubr.bf16.mxu0 0
    %6269 = vmatmul.mubr.bf16.gmra.mxu0 %v6234
    %v6270 = vpop.f32.mrf.mxu0
    %v6271 = vadd.f32 0.0, %v6270
    %v6272 = vpop.f32.mrf.mxu0
    %v6273 = vpop.f32.mrf.mxu0
    %v6274 = vpop.f32.mrf.mxu0
    %6275 = vdwg.mxu0
    %v6277 = vsel %vm772, %v215, 0
    %6279 = vmatprep.subr.bf16.mxu0 0
    %6280 = vmatpush1.bf16.msra.mxu0 0
    %6281 = vmatprep.subr.bf16.mxu0 0
    %6282 = vmatpush1.bf16.msra.mxu0 0
    %6283 = vmatprep.subr.bf16.mxu0 0
    %6284 = vmatpush1.bf16.msra.mxu0 0
    %6285 = vmatprep.subr.bf16.mxu0 0
    %6286 = vmatpush1.bf16.msra.mxu0 0
    %6287 = vmatprep.subr.bf16.mxu0 0
    %6288 = vmatpush1.bf16.msra.mxu0 %v4771
    %6289 = vmatprep.subr.bf16.mxu0 0
    %6290 = vmatpush1.bf16.msra.mxu0 %v4770
    %6291 = vmatprep.subr.bf16.mxu0 0
    %6292 = vmatpush1.bf16.msra.mxu0 %v4769
    %6293 = vmatprep.subr.bf16.mxu0 0
    %6294 = vmatpush1.bf16.msra.mxu0 %v4768
    %6295 = vmatprep.subr.bf16.mxu0 0
    %6296 = vmatpush2.bf16.msra.mxu0 0
    %6297 = vmatprep.subr.bf16.mxu0 0
    %6298 = vmatpush2.bf16.msra.mxu0 0
    %6299 = vmatprep.subr.bf16.mxu0 0
    %6300 = vmatpush2.bf16.msra.mxu0 0
    %6301 = vmatprep.subr.bf16.mxu0 0
    %6302 = vmatpush2.bf16.msra.mxu0 0
    %6303 = vmatprep.subr.bf16.mxu0 0
    %6304 = vmatpush2.bf16.msra.mxu0 0
    %6305 = vmatprep.subr.bf16.mxu0 0
    %6306 = vmatpush2.bf16.msra.mxu0 0
    %6307 = vmatprep.subr.bf16.mxu0 0
    %6308 = vmatpush2.bf16.msra.mxu0 0
    %6309 = vmatprep.subr.bf16.mxu0 0
    %6310 = vmatpush2.bf16.msra.mxu0 0
    %6311 = vmatprep.mubr.bf16.mxu0 0
    %6312 = vmatmul.mubr.bf16.gmra.mxu0 %v6277
    %v6313 = vpop.f32.mrf.mxu0
    %v6314 = vadd.f32 0.0, %v6313
    %v6315 = vpop.f32.mrf.mxu0
    %v6316 = vpop.f32.mrf.mxu0
    %v6317 = vpop.f32.mrf.mxu0
    %6318 = vdwg.mxu0
    %v6320 = vsel %vm772, %v216, 0
    %6322 = vmatprep.subr.bf16.mxu0 0
    %6323 = vmatpush1.bf16.msra.mxu0 0
    %6324 = vmatprep.subr.bf16.mxu0 0
    %6325 = vmatpush1.bf16.msra.mxu0 0
    %6326 = vmatprep.subr.bf16.mxu0 0
    %6327 = vmatpush1.bf16.msra.mxu0 0
    %6328 = vmatprep.subr.bf16.mxu0 0
    %6329 = vmatpush1.bf16.msra.mxu0 0
    %6330 = vmatprep.subr.bf16.mxu0 0
    %6331 = vmatpush1.bf16.msra.mxu0 %v4835
    %6332 = vmatprep.subr.bf16.mxu0 0
    %6333 = vmatpush1.bf16.msra.mxu0 %v4834
    %6334 = vmatprep.subr.bf16.mxu0 0
    %6335 = vmatpush1.bf16.msra.mxu0 %v4833
    %6336 = vmatprep.subr.bf16.mxu0 0
    %6337 = vmatpush1.bf16.msra.mxu0 %v4832
    %6338 = vmatprep.subr.bf16.mxu0 0
    %6339 = vmatpush2.bf16.msra.mxu0 0
    %6340 = vmatprep.subr.bf16.mxu0 0
    %6341 = vmatpush2.bf16.msra.mxu0 0
    %6342 = vmatprep.subr.bf16.mxu0 0
    %6343 = vmatpush2.bf16.msra.mxu0 0
    %6344 = vmatprep.subr.bf16.mxu0 0
    %6345 = vmatpush2.bf16.msra.mxu0 0
    %6346 = vmatprep.subr.bf16.mxu0 0
    %6347 = vmatpush2.bf16.msra.mxu0 0
    %6348 = vmatprep.subr.bf16.mxu0 0
    %6349 = vmatpush2.bf16.msra.mxu0 0
    %6350 = vmatprep.subr.bf16.mxu0 0
    %6351 = vmatpush2.bf16.msra.mxu0 0
    %6352 = vmatprep.subr.bf16.mxu0 0
    %6353 = vmatpush2.bf16.msra.mxu0 0
    %6354 = vmatprep.mubr.bf16.mxu0 0
    %6355 = vmatmul.mubr.bf16.gmra.mxu0 %v6320
    %v6356 = vpop.f32.mrf.mxu0
    %v6357 = vadd.f32 0.0, %v6356
    %v6358 = vpop.f32.mrf.mxu0
    %v6359 = vpop.f32.mrf.mxu0
    %v6360 = vpop.f32.mrf.mxu0
    %6361 = vdwg.mxu0
    %v6363 = vsel %vm772, %v217, 0
    %6365 = vmatprep.subr.bf16.mxu0 0
    %6366 = vmatpush1.bf16.msra.mxu0 0
    %6367 = vmatprep.subr.bf16.mxu0 0
    %6368 = vmatpush1.bf16.msra.mxu0 0
    %6369 = vmatprep.subr.bf16.mxu0 0
    %6370 = vmatpush1.bf16.msra.mxu0 0
    %6371 = vmatprep.subr.bf16.mxu0 0
    %6372 = vmatpush1.bf16.msra.mxu0 0
    %6373 = vmatprep.subr.bf16.mxu0 0
    %6374 = vmatpush1.bf16.msra.mxu0 %v4899
    %6375 = vmatprep.subr.bf16.mxu0 0
    %6376 = vmatpush1.bf16.msra.mxu0 %v4898
    %6377 = vmatprep.subr.bf16.mxu0 0
    %6378 = vmatpush1.bf16.msra.mxu0 %v4897
    %6379 = vmatprep.subr.bf16.mxu0 0
    %6380 = vmatpush1.bf16.msra.mxu0 %v4896
    %6381 = vmatprep.subr.bf16.mxu0 0
    %6382 = vmatpush2.bf16.msra.mxu0 0
    %6383 = vmatprep.subr.bf16.mxu0 0
    %6384 = vmatpush2.bf16.msra.mxu0 0
    %6385 = vmatprep.subr.bf16.mxu0 0
    %6386 = vmatpush2.bf16.msra.mxu0 0
    %6387 = vmatprep.subr.bf16.mxu0 0
    %6388 = vmatpush2.bf16.msra.mxu0 0
    %6389 = vmatprep.subr.bf16.mxu0 0
    %6390 = vmatpush2.bf16.msra.mxu0 0
    %6391 = vmatprep.subr.bf16.mxu0 0
    %6392 = vmatpush2.bf16.msra.mxu0 0
    %6393 = vmatprep.subr.bf16.mxu0 0
    %6394 = vmatpush2.bf16.msra.mxu0 0
    %6395 = vmatprep.subr.bf16.mxu0 0
    %6396 = vmatpush2.bf16.msra.mxu0 0
    %6397 = vmatprep.mubr.bf16.mxu0 0
    %6398 = vmatmul.mubr.bf16.gmra.mxu0 %v6363
    %v6399 = vpop.f32.mrf.mxu0
    %v6400 = vadd.f32 0.0, %v6399
    %v6401 = vpop.f32.mrf.mxu0
    %v6402 = vpop.f32.mrf.mxu0
    %v6403 = vpop.f32.mrf.mxu0
    %6404 = vdwg.mxu0
    %v6406 = vsel %vm772, %v218, 0
    %6408 = vmatprep.subr.bf16.mxu0 0
    %6409 = vmatpush1.bf16.msra.mxu0 0
    %6410 = vmatprep.subr.bf16.mxu0 0
    %6411 = vmatpush1.bf16.msra.mxu0 0
    %6412 = vmatprep.subr.bf16.mxu0 0
    %6413 = vmatpush1.bf16.msra.mxu0 0
    %6414 = vmatprep.subr.bf16.mxu0 0
    %6415 = vmatpush1.bf16.msra.mxu0 0
    %6416 = vmatprep.subr.bf16.mxu0 0
    %6417 = vmatpush1.bf16.msra.mxu0 %v4963
    %6418 = vmatprep.subr.bf16.mxu0 0
    %6419 = vmatpush1.bf16.msra.mxu0 %v4962
    %6420 = vmatprep.subr.bf16.mxu0 0
    %6421 = vmatpush1.bf16.msra.mxu0 %v4961
    %6422 = vmatprep.subr.bf16.mxu0 0
    %6423 = vmatpush1.bf16.msra.mxu0 %v4960
    %6424 = vmatprep.subr.bf16.mxu0 0
    %6425 = vmatpush2.bf16.msra.mxu0 0
    %6426 = vmatprep.subr.bf16.mxu0 0
    %6427 = vmatpush2.bf16.msra.mxu0 0
    %6428 = vmatprep.subr.bf16.mxu0 0
    %6429 = vmatpush2.bf16.msra.mxu0 0
    %6430 = vmatprep.subr.bf16.mxu0 0
    %6431 = vmatpush2.bf16.msra.mxu0 0
    %6432 = vmatprep.subr.bf16.mxu0 0
    %6433 = vmatpush2.bf16.msra.mxu0 0
    %6434 = vmatprep.subr.bf16.mxu0 0
    %6435 = vmatpush2.bf16.msra.mxu0 0
    %6436 = vmatprep.subr.bf16.mxu0 0
    %6437 = vmatpush2.bf16.msra.mxu0 0
    %6438 = vmatprep.subr.bf16.mxu0 0
    %6439 = vmatpush2.bf16.msra.mxu0 0
    %6440 = vmatprep.mubr.bf16.mxu0 0
    %6441 = vmatmul.mubr.bf16.gmra.mxu0 %v6406
    %v6442 = vpop.f32.mrf.mxu0
    %v6443 = vadd.f32 0.0, %v6442
    %v6444 = vpop.f32.mrf.mxu0
    %v6445 = vpop.f32.mrf.mxu0
    %v6446 = vpop.f32.mrf.mxu0
    %6447 = vdwg.mxu0
    %v6449 = vsel %vm772, %v219, 0
    %6451 = vmatprep.subr.bf16.mxu0 0
    %6452 = vmatpush1.bf16.msra.mxu0 0
    %6453 = vmatprep.subr.bf16.mxu0 0
    %6454 = vmatpush1.bf16.msra.mxu0 0
    %6455 = vmatprep.subr.bf16.mxu0 0
    %6456 = vmatpush1.bf16.msra.mxu0 0
    %6457 = vmatprep.subr.bf16.mxu0 0
    %6458 = vmatpush1.bf16.msra.mxu0 0
    %6459 = vmatprep.subr.bf16.mxu0 0
    %6460 = vmatpush1.bf16.msra.mxu0 %v5027
    %6461 = vmatprep.subr.bf16.mxu0 0
    %6462 = vmatpush1.bf16.msra.mxu0 %v5026
    %6463 = vmatprep.subr.bf16.mxu0 0
    %6464 = vmatpush1.bf16.msra.mxu0 %v5025
    %6465 = vmatprep.subr.bf16.mxu0 0
    %6466 = vmatpush1.bf16.msra.mxu0 %v5024
    %6467 = vmatprep.subr.bf16.mxu0 0
    %6468 = vmatpush2.bf16.msra.mxu0 0
    %6469 = vmatprep.subr.bf16.mxu0 0
    %6470 = vmatpush2.bf16.msra.mxu0 0
    %6471 = vmatprep.subr.bf16.mxu0 0
    %6472 = vmatpush2.bf16.msra.mxu0 0
    %6473 = vmatprep.subr.bf16.mxu0 0
    %6474 = vmatpush2.bf16.msra.mxu0 0
    %6475 = vmatprep.subr.bf16.mxu0 0
    %6476 = vmatpush2.bf16.msra.mxu0 0
    %6477 = vmatprep.subr.bf16.mxu0 0
    %6478 = vmatpush2.bf16.msra.mxu0 0
    %6479 = vmatprep.subr.bf16.mxu0 0
    %6480 = vmatpush2.bf16.msra.mxu0 0
    %6481 = vmatprep.subr.bf16.mxu0 0
    %6482 = vmatpush2.bf16.msra.mxu0 0
    %6483 = vmatprep.mubr.bf16.mxu0 0
    %6484 = vmatmul.mubr.bf16.gmra.mxu0 %v6449
    %v6485 = vpop.f32.mrf.mxu0
    %v6486 = vadd.f32 0.0, %v6485
    %v6487 = vpop.f32.mrf.mxu0
    %v6488 = vpop.f32.mrf.mxu0
    %v6489 = vpop.f32.mrf.mxu0
    %6490 = vdwg.mxu0
    %v6491 = vadd.f32 %v3019, %v5110
    %v6492 = vadd.f32 %v3083, %v5153
    %v6493 = vadd.f32 %v3147, %v5196
    %v6494 = vadd.f32 %v3211, %v5239
    %v6495 = vadd.f32 %v3275, %v5282
    %v6496 = vadd.f32 %v3339, %v5325
    %v6497 = vadd.f32 %v3403, %v5368
    %v6498 = vadd.f32 %v3467, %v5411
    %v6499 = vadd.f32 %v3531, %v5454
    %v6500 = vadd.f32 %v3595, %v5497
    %v6501 = vadd.f32 %v3659, %v5540
    %v6502 = vadd.f32 %v3723, %v5583
    %v6503 = vadd.f32 %v3787, %v5626
    %v6504 = vadd.f32 %v3851, %v5669
    %v6505 = vadd.f32 %v3915, %v5712
    %v6506 = vadd.f32 %v3979, %v5755
    %v6507 = vadd.f32 %v4043, %v5798
    %v6508 = vadd.f32 %v4107, %v5841
    %v6509 = vadd.f32 %v4171, %v5884
    %v6510 = vadd.f32 %v4235, %v5927
    %v6511 = vadd.f32 %v4299, %v5970
    %v6512 = vadd.f32 %v4363, %v6013
    %v6513 = vadd.f32 %v4427, %v6056
    %v6514 = vadd.f32 %v4491, %v6099
    %v6515 = vadd.f32 %v4555, %v6142
    %v6516 = vadd.f32 %v4619, %v6185
    %v6517 = vadd.f32 %v4683, %v6228
    %v6518 = vadd.f32 %v4747, %v6271
    %v6519 = vadd.f32 %v4811, %v6314
    %v6520 = vadd.f32 %v4875, %v6357
    %v6521 = vadd.f32 %v4939, %v6400
    %v6522 = vadd.f32 %v5003, %v6443
    %v6523 = vadd.f32 %v5067, %v6486
    %v6524 = vld [vmem:[%s5] sm:$0xff]
    %v6525 = vld [vmem:[%s5 + $0x8] sm:$0xff]
    %v6526 = vld [vmem:[%s5 + $0x10] sm:$0xff]
    %v6527 = vld [vmem:[%s5 + $0x18] sm:$0xff]
    %v6528 = vld [vmem:[%s5 + $0x20] sm:$0x1]
    %v6529 = vld [vmem:[%s2] sm:$0xff]
    %v6530 = vld [vmem:[%s2 + $0x8] sm:$0xff]
    %v6531 = vld [vmem:[%s2 + $0x10] sm:$0xff]
    %v6532 = vld [vmem:[%s2 + $0x18] sm:$0xff]
    %v6533 = vld [vmem:[%s2 + $0x20] sm:$0x1]
    %6535 = vset.pattern.permute.xlu0 0
    %6536 = vperm.xlu0 %6535, %v6529
    %v6537 = vpop.permute.xlu0 %6536
    %6540 = vset.pattern.permute.xlu0 0
    %6541 = vperm.xlu0 %6540, %v6530
    %v6542 = vpop.permute.xlu0 %6541
    %6545 = vset.pattern.permute.xlu0 0
    %6546 = vperm.xlu0 %6545, %v6531
    %v6547 = vpop.permute.xlu0 %6546
    %6550 = vset.pattern.permute.xlu0 0
    %6551 = vperm.xlu0 %6550, %v6532
    %v6552 = vpop.permute.xlu0 %6551
    %6555 = vset.pattern.permute.xlu0 0
    %6556 = vperm.xlu0 %6555, %v6533
    %v6557 = vpop.permute.xlu0 %6556
    %v6559 = vmul.f32 %v6524, %v6537
    %v6560 = vmul.f32 %v6525, %v6542
    %v6561 = vmul.f32 %v6526, %v6547
    %v6562 = vmul.f32 %v6527, %v6552
    %v6563 = vmul.f32 %v6528, %v6557
    %v6569 = vrot.slane %v6559, 1
    %v6570 = vrot.slane %v6559, 2
    %v6571 = vrot.slane %v6559, 3
    %v6572 = vrot.slane %v6559, 4
    %v6573 = vrot.slane %v6559, 5
    %v6574 = vrot.slane %v6559, 6
    %v6575 = vrot.slane %v6559, 7
    %v6576 = vrot.slane %v6560, 1
    %v6577 = vrot.slane %v6560, 2
    %v6578 = vrot.slane %v6560, 3
    %v6579 = vrot.slane %v6560, 4
    %v6580 = vrot.slane %v6560, 5
    %v6581 = vrot.slane %v6560, 6
    %v6582 = vrot.slane %v6560, 7
    %v6583 = vrot.slane %v6561, 1
    %v6584 = vrot.slane %v6561, 2
    %v6585 = vrot.slane %v6561, 3
    %v6586 = vrot.slane %v6561, 4
    %v6587 = vrot.slane %v6561, 5
    %v6588 = vrot.slane %v6561, 6
    %v6589 = vrot.slane %v6561, 7
    %v6590 = vrot.slane %v6562, 1
    %v6591 = vrot.slane %v6562, 2
    %v6592 = vrot.slane %v6562, 3
    %v6593 = vrot.slane %v6562, 4
    %v6594 = vrot.slane %v6562, 5
    %v6595 = vrot.slane %v6562, 6
    %v6596 = vrot.slane %v6562, 7
    %v6630 = vadd.f32 %v6491, %v6559
    %v6631 = vadd.f32 %v6492, %v6569
    %v6632 = vadd.f32 %v6493, %v6570
    %v6633 = vadd.f32 %v6494, %v6571
    %v6634 = vadd.f32 %v6495, %v6572
    %v6635 = vadd.f32 %v6496, %v6573
    %v6636 = vadd.f32 %v6497, %v6574
    %v6637 = vadd.f32 %v6498, %v6575
    %v6638 = vadd.f32 %v6499, %v6560
    %v6639 = vadd.f32 %v6500, %v6576
    %v6640 = vadd.f32 %v6501, %v6577
    %v6641 = vadd.f32 %v6502, %v6578
    %v6642 = vadd.f32 %v6503, %v6579
    %v6643 = vadd.f32 %v6504, %v6580
    %v6644 = vadd.f32 %v6505, %v6581
    %v6645 = vadd.f32 %v6506, %v6582
    %v6646 = vadd.f32 %v6507, %v6561
    %v6647 = vadd.f32 %v6508, %v6583
    %v6648 = vadd.f32 %v6509, %v6584
    %v6649 = vadd.f32 %v6510, %v6585
    %v6650 = vadd.f32 %v6511, %v6586
    %v6651 = vadd.f32 %v6512, %v6587
    %v6652 = vadd.f32 %v6513, %v6588
    %v6653 = vadd.f32 %v6514, %v6589
    %v6654 = vadd.f32 %v6515, %v6562
    %v6655 = vadd.f32 %v6516, %v6590
    %v6656 = vadd.f32 %v6517, %v6591
    %v6657 = vadd.f32 %v6518, %v6592
    %v6658 = vadd.f32 %v6519, %v6593
    %v6659 = vadd.f32 %v6520, %v6594
    %v6660 = vadd.f32 %v6521, %v6595
    %v6661 = vadd.f32 %v6522, %v6596
    %v6662 = vadd.f32 %v6523, %v6563
    %v6663 = vld [vmem:[%s6] sm:$0x1]
    %v6665 = vlaneseq
    %v6666 = vshrl.u32 %v6665, 7
    %v6667 = vsub.s32 0, %v6666
    %v6668 = vrot.slane %v6663, %v6667
    %v6670 = vadd.f32 %v6630, %v6668
    %v6671 = vadd.f32 %v6631, %v6668
    %v6672 = vadd.f32 %v6632, %v6668
    %v6673 = vadd.f32 %v6633, %v6668
    %v6674 = vadd.f32 %v6634, %v6668
    %v6675 = vadd.f32 %v6635, %v6668
    %v6676 = vadd.f32 %v6636, %v6668
    %v6677 = vadd.f32 %v6637, %v6668
    %v6678 = vadd.f32 %v6638, %v6668
    %v6679 = vadd.f32 %v6639, %v6668
    %v6680 = vadd.f32 %v6640, %v6668
    %v6681 = vadd.f32 %v6641, %v6668
    %v6682 = vadd.f32 %v6642, %v6668
    %v6683 = vadd.f32 %v6643, %v6668
    %v6684 = vadd.f32 %v6644, %v6668
    %v6685 = vadd.f32 %v6645, %v6668
    %v6686 = vadd.f32 %v6646, %v6668
    %v6687 = vadd.f32 %v6647, %v6668
    %v6688 = vadd.f32 %v6648, %v6668
    %v6689 = vadd.f32 %v6649, %v6668
    %v6690 = vadd.f32 %v6650, %v6668
    %v6691 = vadd.f32 %v6651, %v6668
    %v6692 = vadd.f32 %v6652, %v6668
    %v6693 = vadd.f32 %v6653, %v6668
    %v6694 = vadd.f32 %v6654, %v6668
    %v6695 = vadd.f32 %v6655, %v6668
    %v6696 = vadd.f32 %v6656, %v6668
    %v6697 = vadd.f32 %v6657, %v6668
    %v6698 = vadd.f32 %v6658, %v6668
    %v6699 = vadd.f32 %v6659, %v6668
    %v6700 = vadd.f32 %v6660, %v6668
    %v6701 = vadd.f32 %v6661, %v6668
    %v6702 = vadd.f32 %v6662, %v6668
    %v6703 = vxor.u32 %v6670, 2147483648
    %v6704 = vxor.u32 %v6671, 2147483648
    %v6705 = vxor.u32 %v6672, 2147483648
    %v6706 = vxor.u32 %v6673, 2147483648
    %v6707 = vxor.u32 %v6674, 2147483648
    %v6708 = vxor.u32 %v6675, 2147483648
    %v6709 = vxor.u32 %v6676, 2147483648
    %v6710 = vxor.u32 %v6677, 2147483648
    %v6711 = vxor.u32 %v6678, 2147483648
    %v6712 = vxor.u32 %v6679, 2147483648
    %v6713 = vxor.u32 %v6680, 2147483648
    %v6714 = vxor.u32 %v6681, 2147483648
    %v6715 = vxor.u32 %v6682, 2147483648
    %v6716 = vxor.u32 %v6683, 2147483648
    %v6717 = vxor.u32 %v6684, 2147483648
    %v6718 = vxor.u32 %v6685, 2147483648
    %v6719 = vxor.u32 %v6686, 2147483648
    %v6720 = vxor.u32 %v6687, 2147483648
    %v6721 = vxor.u32 %v6688, 2147483648
    %v6722 = vxor.u32 %v6689, 2147483648
    %v6723 = vxor.u32 %v6690, 2147483648
    %v6724 = vxor.u32 %v6691, 2147483648
    %v6725 = vxor.u32 %v6692, 2147483648
    %v6726 = vxor.u32 %v6693, 2147483648
    %v6727 = vxor.u32 %v6694, 2147483648
    %v6728 = vxor.u32 %v6695, 2147483648
    %v6729 = vxor.u32 %v6696, 2147483648
    %v6730 = vxor.u32 %v6697, 2147483648
    %v6731 = vxor.u32 %v6698, 2147483648
    %v6732 = vxor.u32 %v6699, 2147483648
    %v6733 = vxor.u32 %v6700, 2147483648
    %v6734 = vxor.u32 %v6701, 2147483648
    %v6735 = vxor.u32 %v6702, 2147483648
    %v6736 = vmul.f32 %v6703, 1.442695
    %v6737 = vpow.pop %v6736
    %v6738 = vmul.f32 %v6704, 1.442695
    %v6739 = vpow.pop %v6738
    %v6740 = vmul.f32 %v6705, 1.442695
    %v6741 = vpow.pop %v6740
    %v6742 = vmul.f32 %v6706, 1.442695
    %v6743 = vpow.pop %v6742
    %v6744 = vmul.f32 %v6707, 1.442695
    %v6745 = vpow.pop %v6744
    %v6746 = vmul.f32 %v6708, 1.442695
    %v6747 = vpow.pop %v6746
    %v6748 = vmul.f32 %v6709, 1.442695
    %v6749 = vpow.pop %v6748
    %v6750 = vmul.f32 %v6710, 1.442695
    %v6751 = vpow.pop %v6750
    %v6752 = vmul.f32 %v6711, 1.442695
    %v6753 = vpow.pop %v6752
    %v6754 = vmul.f32 %v6712, 1.442695
    %v6755 = vpow.pop %v6754
    %v6756 = vmul.f32 %v6713, 1.442695
    %v6757 = vpow.pop %v6756
    %v6758 = vmul.f32 %v6714, 1.442695
    %v6759 = vpow.pop %v6758
    %v6760 = vmul.f32 %v6715, 1.442695
    %v6761 = vpow.pop %v6760
    %v6762 = vmul.f32 %v6716, 1.442695
    %v6763 = vpow.pop %v6762
    %v6764 = vmul.f32 %v6717, 1.442695
    %v6765 = vpow.pop %v6764
    %v6766 = vmul.f32 %v6718, 1.442695
    %v6767 = vpow.pop %v6766
    %v6768 = vmul.f32 %v6719, 1.442695
    %v6769 = vpow.pop %v6768
    %v6770 = vmul.f32 %v6720, 1.442695
    %v6771 = vpow.pop %v6770
    %v6772 = vmul.f32 %v6721, 1.442695
    %v6773 = vpow.pop %v6772
    %v6774 = vmul.f32 %v6722, 1.442695
    %v6775 = vpow.pop %v6774
    %v6776 = vmul.f32 %v6723, 1.442695
    %v6777 = vpow.pop %v6776
    %v6778 = vmul.f32 %v6724, 1.442695
    %v6779 = vpow.pop %v6778
    %v6780 = vmul.f32 %v6725, 1.442695
    %v6781 = vpow.pop %v6780
    %v6782 = vmul.f32 %v6726, 1.442695
    %v6783 = vpow.pop %v6782
    %v6784 = vmul.f32 %v6727, 1.442695
    %v6785 = vpow.pop %v6784
    %v6786 = vmul.f32 %v6728, 1.442695
    %v6787 = vpow.pop %v6786
    %v6788 = vmul.f32 %v6729, 1.442695
    %v6789 = vpow.pop %v6788
    %v6790 = vmul.f32 %v6730, 1.442695
    %v6791 = vpow.pop %v6790
    %v6792 = vmul.f32 %v6731, 1.442695
    %v6793 = vpow.pop %v6792
    %v6794 = vmul.f32 %v6732, 1.442695
    %v6795 = vpow.pop %v6794
    %v6796 = vmul.f32 %v6733, 1.442695
    %v6797 = vpow.pop %v6796
    %v6798 = vmul.f32 %v6734, 1.442695
    %v6799 = vpow.pop %v6798
    %v6800 = vmul.f32 %v6735, 1.442695
    %v6801 = vpow.pop %v6800
    %v6802 = vadd.f32 %v6737, 1.0
    %v6803 = vadd.f32 %v6739, 1.0
    %v6804 = vadd.f32 %v6741, 1.0
    %v6805 = vadd.f32 %v6743, 1.0
    %v6806 = vadd.f32 %v6745, 1.0
    %v6807 = vadd.f32 %v6747, 1.0
    %v6808 = vadd.f32 %v6749, 1.0
    %v6809 = vadd.f32 %v6751, 1.0
    %v6810 = vadd.f32 %v6753, 1.0
    %v6811 = vadd.f32 %v6755, 1.0
    %v6812 = vadd.f32 %v6757, 1.0
    %v6813 = vadd.f32 %v6759, 1.0
    %v6814 = vadd.f32 %v6761, 1.0
    %v6815 = vadd.f32 %v6763, 1.0
    %v6816 = vadd.f32 %v6765, 1.0
    %v6817 = vadd.f32 %v6767, 1.0
    %v6818 = vadd.f32 %v6769, 1.0
    %v6819 = vadd.f32 %v6771, 1.0
    %v6820 = vadd.f32 %v6773, 1.0
    %v6821 = vadd.f32 %v6775, 1.0
    %v6822 = vadd.f32 %v6777, 1.0
    %v6823 = vadd.f32 %v6779, 1.0
    %v6824 = vadd.f32 %v6781, 1.0
    %v6825 = vadd.f32 %v6783, 1.0
    %v6826 = vadd.f32 %v6785, 1.0
    %v6827 = vadd.f32 %v6787, 1.0
    %v6828 = vadd.f32 %v6789, 1.0
    %v6829 = vadd.f32 %v6791, 1.0
    %v6830 = vadd.f32 %v6793, 1.0
    %v6831 = vadd.f32 %v6795, 1.0
    %v6832 = vadd.f32 %v6797, 1.0
    %v6833 = vadd.f32 %v6799, 1.0
    %v6834 = vadd.f32 %v6801, 1.0
    %v6835 = vrcp.pop %v6802
    %v6836 = vmul.f32 1.0, %v6835
    %v6837 = vrcp.pop %v6803
    %v6838 = vmul.f32 1.0, %v6837
    %v6839 = vrcp.pop %v6804
    %v6840 = vmul.f32 1.0, %v6839
    %v6841 = vrcp.pop %v6805
    %v6842 = vmul.f32 1.0, %v6841
    %v6843 = vrcp.pop %v6806
    %v6844 = vmul.f32 1.0, %v6843
    %v6845 = vrcp.pop %v6807
    %v6846 = vmul.f32 1.0, %v6845
    %v6847 = vrcp.pop %v6808
    %v6848 = vmul.f32 1.0, %v6847
    %v6849 = vrcp.pop %v6809
    %v6850 = vmul.f32 1.0, %v6849
    %v6851 = vrcp.pop %v6810
    %v6852 = vmul.f32 1.0, %v6851
    %v6853 = vrcp.pop %v6811
    %v6854 = vmul.f32 1.0, %v6853
    %v6855 = vrcp.pop %v6812
    %v6856 = vmul.f32 1.0, %v6855
    %v6857 = vrcp.pop %v6813
    %v6858 = vmul.f32 1.0, %v6857
    %v6859 = vrcp.pop %v6814
    %v6860 = vmul.f32 1.0, %v6859
    %v6861 = vrcp.pop %v6815
    %v6862 = vmul.f32 1.0, %v6861
    %v6863 = vrcp.pop %v6816
    %v6864 = vmul.f32 1.0, %v6863
    %v6865 = vrcp.pop %v6817
    %v6866 = vmul.f32 1.0, %v6865
    %v6867 = vrcp.pop %v6818
    %v6868 = vmul.f32 1.0, %v6867
    %v6869 = vrcp.pop %v6819
    %v6870 = vmul.f32 1.0, %v6869
    %v6871 = vrcp.pop %v6820
    %v6872 = vmul.f32 1.0, %v6871
    %v6873 = vrcp.pop %v6821
    %v6874 = vmul.f32 1.0, %v6873
    %v6875 = vrcp.pop %v6822
    %v6876 = vmul.f32 1.0, %v6875
    %v6877 = vrcp.pop %v6823
    %v6878 = vmul.f32 1.0, %v6877
    %v6879 = vrcp.pop %v6824
    %v6880 = vmul.f32 1.0, %v6879
    %v6881 = vrcp.pop %v6825
    %v6882 = vmul.f32 1.0, %v6881
    %v6883 = vrcp.pop %v6826
    %v6884 = vmul.f32 1.0, %v6883
    %v6885 = vrcp.pop %v6827
    %v6886 = vmul.f32 1.0, %v6885
    %v6887 = vrcp.pop %v6828
    %v6888 = vmul.f32 1.0, %v6887
    %v6889 = vrcp.pop %v6829
    %v6890 = vmul.f32 1.0, %v6889
    %v6891 = vrcp.pop %v6830
    %v6892 = vmul.f32 1.0, %v6891
    %v6893 = vrcp.pop %v6831
    %v6894 = vmul.f32 1.0, %v6893
    %v6895 = vrcp.pop %v6832
    %v6896 = vmul.f32 1.0, %v6895
    %v6897 = vrcp.pop %v6833
    %v6898 = vmul.f32 1.0, %v6897
    %v6899 = vrcp.pop %v6834
    %v6900 = vmul.f32 1.0, %v6899
    %6934 = vrot.lane.b32.xlu0 %v6670, 96
    %v6935 = vpop.permute.xlu0 %6934
    %6936 = vrot.lane.b32.xlu0 %v6671, 96
    %v6937 = vpop.permute.xlu0 %6936
    %6938 = vrot.lane.b32.xlu0 %v6672, 96
    %v6939 = vpop.permute.xlu0 %6938
    %6940 = vrot.lane.b32.xlu0 %v6673, 96
    %v6941 = vpop.permute.xlu0 %6940
    %6942 = vrot.lane.b32.xlu0 %v6674, 96
    %v6943 = vpop.permute.xlu0 %6942
    %6944 = vrot.lane.b32.xlu0 %v6675, 96
    %v6945 = vpop.permute.xlu0 %6944
    %6946 = vrot.lane.b32.xlu0 %v6676, 96
    %v6947 = vpop.permute.xlu0 %6946
    %6948 = vrot.lane.b32.xlu0 %v6677, 96
    %v6949 = vpop.permute.xlu0 %6948
    %6950 = vrot.lane.b32.xlu0 %v6678, 96
    %v6951 = vpop.permute.xlu0 %6950
    %6952 = vrot.lane.b32.xlu0 %v6679, 96
    %v6953 = vpop.permute.xlu0 %6952
    %6954 = vrot.lane.b32.xlu0 %v6680, 96
    %v6955 = vpop.permute.xlu0 %6954
    %6956 = vrot.lane.b32.xlu0 %v6681, 96
    %v6957 = vpop.permute.xlu0 %6956
    %6958 = vrot.lane.b32.xlu0 %v6682, 96
    %v6959 = vpop.permute.xlu0 %6958
    %6960 = vrot.lane.b32.xlu0 %v6683, 96
    %v6961 = vpop.permute.xlu0 %6960
    %6962 = vrot.lane.b32.xlu0 %v6684, 96
    %v6963 = vpop.permute.xlu0 %6962
    %6964 = vrot.lane.b32.xlu0 %v6685, 96
    %v6965 = vpop.permute.xlu0 %6964
    %6966 = vrot.lane.b32.xlu0 %v6686, 96
    %v6967 = vpop.permute.xlu0 %6966
    %6968 = vrot.lane.b32.xlu0 %v6687, 96
    %v6969 = vpop.permute.xlu0 %6968
    %6970 = vrot.lane.b32.xlu0 %v6688, 96
    %v6971 = vpop.permute.xlu0 %6970
    %6972 = vrot.lane.b32.xlu0 %v6689, 96
    %v6973 = vpop.permute.xlu0 %6972
    %6974 = vrot.lane.b32.xlu0 %v6690, 96
    %v6975 = vpop.permute.xlu0 %6974
    %6976 = vrot.lane.b32.xlu0 %v6691, 96
    %v6977 = vpop.permute.xlu0 %6976
    %6978 = vrot.lane.b32.xlu0 %v6692, 96
    %v6979 = vpop.permute.xlu0 %6978
    %6980 = vrot.lane.b32.xlu0 %v6693, 96
    %v6981 = vpop.permute.xlu0 %6980
    %6982 = vrot.lane.b32.xlu0 %v6694, 96
    %v6983 = vpop.permute.xlu0 %6982
    %6984 = vrot.lane.b32.xlu0 %v6695, 96
    %v6985 = vpop.permute.xlu0 %6984
    %6986 = vrot.lane.b32.xlu0 %v6696, 96
    %v6987 = vpop.permute.xlu0 %6986
    %6988 = vrot.lane.b32.xlu0 %v6697, 96
    %v6989 = vpop.permute.xlu0 %6988
    %6990 = vrot.lane.b32.xlu0 %v6698, 96
    %v6991 = vpop.permute.xlu0 %6990
    %6992 = vrot.lane.b32.xlu0 %v6699, 96
    %v6993 = vpop.permute.xlu0 %6992
    %6994 = vrot.lane.b32.xlu0 %v6700, 96
    %v6995 = vpop.permute.xlu0 %6994
    %6996 = vrot.lane.b32.xlu0 %v6701, 96
    %v6997 = vpop.permute.xlu0 %6996
    %6998 = vrot.lane.b32.xlu0 %v6702, 96
    %v6999 = vpop.permute.xlu0 %6998
    %v7033 = vmul.f32 %v6836, %v6935
    %v7034 = vmul.f32 %v6838, %v6937
    %v7035 = vmul.f32 %v6840, %v6939
    %v7036 = vmul.f32 %v6842, %v6941
    %v7037 = vmul.f32 %v6844, %v6943
    %v7038 = vmul.f32 %v6846, %v6945
    %v7039 = vmul.f32 %v6848, %v6947
    %v7040 = vmul.f32 %v6850, %v6949
    %v7041 = vmul.f32 %v6852, %v6951
    %v7042 = vmul.f32 %v6854, %v6953
    %v7043 = vmul.f32 %v6856, %v6955
    %v7044 = vmul.f32 %v6858, %v6957
    %v7045 = vmul.f32 %v6860, %v6959
    %v7046 = vmul.f32 %v6862, %v6961
    %v7047 = vmul.f32 %v6864, %v6963
    %v7048 = vmul.f32 %v6866, %v6965
    %v7049 = vmul.f32 %v6868, %v6967
    %v7050 = vmul.f32 %v6870, %v6969
    %v7051 = vmul.f32 %v6872, %v6971
    %v7052 = vmul.f32 %v6874, %v6973
    %v7053 = vmul.f32 %v6876, %v6975
    %v7054 = vmul.f32 %v6878, %v6977
    %v7055 = vmul.f32 %v6880, %v6979
    %v7056 = vmul.f32 %v6882, %v6981
    %v7057 = vmul.f32 %v6884, %v6983
    %v7058 = vmul.f32 %v6886, %v6985
    %v7059 = vmul.f32 %v6888, %v6987
    %v7060 = vmul.f32 %v6890, %v6989
    %v7061 = vmul.f32 %v6892, %v6991
    %v7062 = vmul.f32 %v6894, %v6993
    %v7063 = vmul.f32 %v6896, %v6995
    %v7064 = vmul.f32 %v6898, %v6997
    %v7065 = vmul.f32 %v6900, %v6999
    %7066 = vrot.lane.b32.xlu0 %v6670, 64
    %v7067 = vpop.permute.xlu0 %7066
    %7068 = vrot.lane.b32.xlu0 %v6671, 64
    %v7069 = vpop.permute.xlu0 %7068
    %7070 = vrot.lane.b32.xlu0 %v6672, 64
    %v7071 = vpop.permute.xlu0 %7070
    %7072 = vrot.lane.b32.xlu0 %v6673, 64
    %v7073 = vpop.permute.xlu0 %7072
    %7074 = vrot.lane.b32.xlu0 %v6674, 64
    %v7075 = vpop.permute.xlu0 %7074
    %7076 = vrot.lane.b32.xlu0 %v6675, 64
    %v7077 = vpop.permute.xlu0 %7076
    %7078 = vrot.lane.b32.xlu0 %v6676, 64
    %v7079 = vpop.permute.xlu0 %7078
    %7080 = vrot.lane.b32.xlu0 %v6677, 64
    %v7081 = vpop.permute.xlu0 %7080
    %7082 = vrot.lane.b32.xlu0 %v6678, 64
    %v7083 = vpop.permute.xlu0 %7082
    %7084 = vrot.lane.b32.xlu0 %v6679, 64
    %v7085 = vpop.permute.xlu0 %7084
    %7086 = vrot.lane.b32.xlu0 %v6680, 64
    %v7087 = vpop.permute.xlu0 %7086
    %7088 = vrot.lane.b32.xlu0 %v6681, 64
    %v7089 = vpop.permute.xlu0 %7088
    %7090 = vrot.lane.b32.xlu0 %v6682, 64
    %v7091 = vpop.permute.xlu0 %7090
    %7092 = vrot.lane.b32.xlu0 %v6683, 64
    %v7093 = vpop.permute.xlu0 %7092
    %7094 = vrot.lane.b32.xlu0 %v6684, 64
    %v7095 = vpop.permute.xlu0 %7094
    %7096 = vrot.lane.b32.xlu0 %v6685, 64
    %v7097 = vpop.permute.xlu0 %7096
    %7098 = vrot.lane.b32.xlu0 %v6686, 64
    %v7099 = vpop.permute.xlu0 %7098
    %7100 = vrot.lane.b32.xlu0 %v6687, 64
    %v7101 = vpop.permute.xlu0 %7100
    %7102 = vrot.lane.b32.xlu0 %v6688, 64
    %v7103 = vpop.permute.xlu0 %7102
    %7104 = vrot.lane.b32.xlu0 %v6689, 64
    %v7105 = vpop.permute.xlu0 %7104
    %7106 = vrot.lane.b32.xlu0 %v6690, 64
    %v7107 = vpop.permute.xlu0 %7106
    %7108 = vrot.lane.b32.xlu0 %v6691, 64
    %v7109 = vpop.permute.xlu0 %7108
    %7110 = vrot.lane.b32.xlu0 %v6692, 64
    %v7111 = vpop.permute.xlu0 %7110
    %7112 = vrot.lane.b32.xlu0 %v6693, 64
    %v7113 = vpop.permute.xlu0 %7112
    %7114 = vrot.lane.b32.xlu0 %v6694, 64
    %v7115 = vpop.permute.xlu0 %7114
    %7116 = vrot.lane.b32.xlu0 %v6695, 64
    %v7117 = vpop.permute.xlu0 %7116
    %7118 = vrot.lane.b32.xlu0 %v6696, 64
    %v7119 = vpop.permute.xlu0 %7118
    %7120 = vrot.lane.b32.xlu0 %v6697, 64
    %v7121 = vpop.permute.xlu0 %7120
    %7122 = vrot.lane.b32.xlu0 %v6698, 64
    %v7123 = vpop.permute.xlu0 %7122
    %7124 = vrot.lane.b32.xlu0 %v6699, 64
    %v7125 = vpop.permute.xlu0 %7124
    %7126 = vrot.lane.b32.xlu0 %v6700, 64
    %v7127 = vpop.permute.xlu0 %7126
    %7128 = vrot.lane.b32.xlu0 %v6701, 64
    %v7129 = vpop.permute.xlu0 %7128
    %7130 = vrot.lane.b32.xlu0 %v6702, 64
    %v7131 = vpop.permute.xlu0 %7130
    %v7165 = vadd.f32 %v7033, %v7067
    %v7166 = vadd.f32 %v7034, %v7069
    %v7167 = vadd.f32 %v7035, %v7071
    %v7168 = vadd.f32 %v7036, %v7073
    %v7169 = vadd.f32 %v7037, %v7075
    %v7170 = vadd.f32 %v7038, %v7077
    %v7171 = vadd.f32 %v7039, %v7079
    %v7172 = vadd.f32 %v7040, %v7081
    %v7173 = vadd.f32 %v7041, %v7083
    %v7174 = vadd.f32 %v7042, %v7085
    %v7175 = vadd.f32 %v7043, %v7087
    %v7176 = vadd.f32 %v7044, %v7089
    %v7177 = vadd.f32 %v7045, %v7091
    %v7178 = vadd.f32 %v7046, %v7093
    %v7179 = vadd.f32 %v7047, %v7095
    %v7180 = vadd.f32 %v7048, %v7097
    %v7181 = vadd.f32 %v7049, %v7099
    %v7182 = vadd.f32 %v7050, %v7101
    %v7183 = vadd.f32 %v7051, %v7103
    %v7184 = vadd.f32 %v7052, %v7105
    %v7185 = vadd.f32 %v7053, %v7107
    %v7186 = vadd.f32 %v7054, %v7109
    %v7187 = vadd.f32 %v7055, %v7111
    %v7188 = vadd.f32 %v7056, %v7113
    %v7189 = vadd.f32 %v7057, %v7115
    %v7190 = vadd.f32 %v7058, %v7117
    %v7191 = vadd.f32 %v7059, %v7119
    %v7192 = vadd.f32 %v7060, %v7121
    %v7193 = vadd.f32 %v7061, %v7123
    %v7194 = vadd.f32 %v7062, %v7125
    %v7195 = vadd.f32 %v7063, %v7127
    %v7196 = vadd.f32 %v7064, %v7129
    %v7197 = vadd.f32 %v7065, %v7131
    %v7198 = vtanh.pop %v7165
    %v7199 = vtanh.pop %v7166
    %v7200 = vtanh.pop %v7167
    %v7201 = vtanh.pop %v7168
    %v7202 = vtanh.pop %v7169
    %v7203 = vtanh.pop %v7170
    %v7204 = vtanh.pop %v7171
    %v7205 = vtanh.pop %v7172
    %v7206 = vtanh.pop %v7173
    %v7207 = vtanh.pop %v7174
    %v7208 = vtanh.pop %v7175
    %v7209 = vtanh.pop %v7176
    %v7210 = vtanh.pop %v7177
    %v7211 = vtanh.pop %v7178
    %v7212 = vtanh.pop %v7179
    %v7213 = vtanh.pop %v7180
    %v7214 = vtanh.pop %v7181
    %v7215 = vtanh.pop %v7182
    %v7216 = vtanh.pop %v7183
    %v7217 = vtanh.pop %v7184
    %v7218 = vtanh.pop %v7185
    %v7219 = vtanh.pop %v7186
    %v7220 = vtanh.pop %v7187
    %v7221 = vtanh.pop %v7188
    %v7222 = vtanh.pop %v7189
    %v7223 = vtanh.pop %v7190
    %v7224 = vtanh.pop %v7191
    %v7225 = vtanh.pop %v7192
    %v7226 = vtanh.pop %v7193
    %v7227 = vtanh.pop %v7194
    %v7228 = vtanh.pop %v7195
    %v7229 = vtanh.pop %v7196
    %v7230 = vtanh.pop %v7197
    %v7231 = vld [vmem:[%s1] sm:$0xff]
    %v7232 = vld [vmem:[%s1 + $0x8] sm:$0xff]
    %v7233 = vld [vmem:[%s1 + $0x10] sm:$0xff]
    %v7234 = vld [vmem:[%s1 + $0x18] sm:$0xff]
    %v7235 = vld [vmem:[%s1 + $0x20] sm:$0x1]
    %v7241 = vrot.slane %v7231, 1
    %v7242 = vrot.slane %v7231, 2
    %v7243 = vrot.slane %v7231, 3
    %v7244 = vrot.slane %v7231, 4
    %v7245 = vrot.slane %v7231, 5
    %v7246 = vrot.slane %v7231, 6
    %v7247 = vrot.slane %v7231, 7
    %v7248 = vrot.slane %v7232, 1
    %v7249 = vrot.slane %v7232, 2
    %v7250 = vrot.slane %v7232, 3
    %v7251 = vrot.slane %v7232, 4
    %v7252 = vrot.slane %v7232, 5
    %v7253 = vrot.slane %v7232, 6
    %v7254 = vrot.slane %v7232, 7
    %v7255 = vrot.slane %v7233, 1
    %v7256 = vrot.slane %v7233, 2
    %v7257 = vrot.slane %v7233, 3
    %v7258 = vrot.slane %v7233, 4
    %v7259 = vrot.slane %v7233, 5
    %v7260 = vrot.slane %v7233, 6
    %v7261 = vrot.slane %v7233, 7
    %v7262 = vrot.slane %v7234, 1
    %v7263 = vrot.slane %v7234, 2
    %v7264 = vrot.slane %v7234, 3
    %v7265 = vrot.slane %v7234, 4
    %v7266 = vrot.slane %v7234, 5
    %v7267 = vrot.slane %v7234, 6
    %v7268 = vrot.slane %v7234, 7
    %v7302 = vmul.f32 %v6836, %v7231
    %v7303 = vmul.f32 %v6838, %v7241
    %v7304 = vmul.f32 %v6840, %v7242
    %v7305 = vmul.f32 %v6842, %v7243
    %v7306 = vmul.f32 %v6844, %v7244
    %v7307 = vmul.f32 %v6846, %v7245
    %v7308 = vmul.f32 %v6848, %v7246
    %v7309 = vmul.f32 %v6850, %v7247
    %v7310 = vmul.f32 %v6852, %v7232
    %v7311 = vmul.f32 %v6854, %v7248
    %v7312 = vmul.f32 %v6856, %v7249
    %v7313 = vmul.f32 %v6858, %v7250
    %v7314 = vmul.f32 %v6860, %v7251
    %v7315 = vmul.f32 %v6862, %v7252
    %v7316 = vmul.f32 %v6864, %v7253
    %v7317 = vmul.f32 %v6866, %v7254
    %v7318 = vmul.f32 %v6868, %v7233
    %v7319 = vmul.f32 %v6870, %v7255
    %v7320 = vmul.f32 %v6872, %v7256
    %v7321 = vmul.f32 %v6874, %v7257
    %v7322 = vmul.f32 %v6876, %v7258
    %v7323 = vmul.f32 %v6878, %v7259
    %v7324 = vmul.f32 %v6880, %v7260
    %v7325 = vmul.f32 %v6882, %v7261
    %v7326 = vmul.f32 %v6884, %v7234
    %v7327 = vmul.f32 %v6886, %v7262
    %v7328 = vmul.f32 %v6888, %v7263
    %v7329 = vmul.f32 %v6890, %v7264
    %v7330 = vmul.f32 %v6892, %v7265
    %v7331 = vmul.f32 %v6894, %v7266
    %v7332 = vmul.f32 %v6896, %v7267
    %v7333 = vmul.f32 %v6898, %v7268
    %v7334 = vmul.f32 %v6900, %v7235
    %v7335 = vsub.f32 1.0, %v6836
    %v7336 = vsub.f32 1.0, %v6838
    %v7337 = vsub.f32 1.0, %v6840
    %v7338 = vsub.f32 1.0, %v6842
    %v7339 = vsub.f32 1.0, %v6844
    %v7340 = vsub.f32 1.0, %v6846
    %v7341 = vsub.f32 1.0, %v6848
    %v7342 = vsub.f32 1.0, %v6850
    %v7343 = vsub.f32 1.0, %v6852
    %v7344 = vsub.f32 1.0, %v6854
    %v7345 = vsub.f32 1.0, %v6856
    %v7346 = vsub.f32 1.0, %v6858
    %v7347 = vsub.f32 1.0, %v6860
    %v7348 = vsub.f32 1.0, %v6862
    %v7349 = vsub.f32 1.0, %v6864
    %v7350 = vsub.f32 1.0, %v6866
    %v7351 = vsub.f32 1.0, %v6868
    %v7352 = vsub.f32 1.0, %v6870
    %v7353 = vsub.f32 1.0, %v6872
    %v7354 = vsub.f32 1.0, %v6874
    %v7355 = vsub.f32 1.0, %v6876
    %v7356 = vsub.f32 1.0, %v6878
    %v7357 = vsub.f32 1.0, %v6880
    %v7358 = vsub.f32 1.0, %v6882
    %v7359 = vsub.f32 1.0, %v6884
    %v7360 = vsub.f32 1.0, %v6886
    %v7361 = vsub.f32 1.0, %v6888
    %v7362 = vsub.f32 1.0, %v6890
    %v7363 = vsub.f32 1.0, %v6892
    %v7364 = vsub.f32 1.0, %v6894
    %v7365 = vsub.f32 1.0, %v6896
    %v7366 = vsub.f32 1.0, %v6898
    %v7367 = vsub.f32 1.0, %v6900
    %7401 = vrot.lane.b32.xlu0 %v7198, 96
    %v7402 = vpop.permute.xlu0 %7401
    %7403 = vrot.lane.b32.xlu0 %v7199, 96
    %v7404 = vpop.permute.xlu0 %7403
    %7405 = vrot.lane.b32.xlu0 %v7200, 96
    %v7406 = vpop.permute.xlu0 %7405
    %7407 = vrot.lane.b32.xlu0 %v7201, 96
    %v7408 = vpop.permute.xlu0 %7407
    %7409 = vrot.lane.b32.xlu0 %v7202, 96
    %v7410 = vpop.permute.xlu0 %7409
    %7411 = vrot.lane.b32.xlu0 %v7203, 96
    %v7412 = vpop.permute.xlu0 %7411
    %7413 = vrot.lane.b32.xlu0 %v7204, 96
    %v7414 = vpop.permute.xlu0 %7413
    %7415 = vrot.lane.b32.xlu0 %v7205, 96
    %v7416 = vpop.permute.xlu0 %7415
    %7417 = vrot.lane.b32.xlu0 %v7206, 96
    %v7418 = vpop.permute.xlu0 %7417
    %7419 = vrot.lane.b32.xlu0 %v7207, 96
    %v7420 = vpop.permute.xlu0 %7419
    %7421 = vrot.lane.b32.xlu0 %v7208, 96
    %v7422 = vpop.permute.xlu0 %7421
    %7423 = vrot.lane.b32.xlu0 %v7209, 96
    %v7424 = vpop.permute.xlu0 %7423
    %7425 = vrot.lane.b32.xlu0 %v7210, 96
    %v7426 = vpop.permute.xlu0 %7425
    %7427 = vrot.lane.b32.xlu0 %v7211, 96
    %v7428 = vpop.permute.xlu0 %7427
    %7429 = vrot.lane.b32.xlu0 %v7212, 96
    %v7430 = vpop.permute.xlu0 %7429
    %7431 = vrot.lane.b32.xlu0 %v7213, 96
    %v7432 = vpop.permute.xlu0 %7431
    %7433 = vrot.lane.b32.xlu0 %v7214, 96
    %v7434 = vpop.permute.xlu0 %7433
    %7435 = vrot.lane.b32.xlu0 %v7215, 96
    %v7436 = vpop.permute.xlu0 %7435
    %7437 = vrot.lane.b32.xlu0 %v7216, 96
    %v7438 = vpop.permute.xlu0 %7437
    %7439 = vrot.lane.b32.xlu0 %v7217, 96
    %v7440 = vpop.permute.xlu0 %7439
    %7441 = vrot.lane.b32.xlu0 %v7218, 96
    %v7442 = vpop.permute.xlu0 %7441
    %7443 = vrot.lane.b32.xlu0 %v7219, 96
    %v7444 = vpop.permute.xlu0 %7443
    %7445 = vrot.lane.b32.xlu0 %v7220, 96
    %v7446 = vpop.permute.xlu0 %7445
    %7447 = vrot.lane.b32.xlu0 %v7221, 96
    %v7448 = vpop.permute.xlu0 %7447
    %7449 = vrot.lane.b32.xlu0 %v7222, 96
    %v7450 = vpop.permute.xlu0 %7449
    %7451 = vrot.lane.b32.xlu0 %v7223, 96
    %v7452 = vpop.permute.xlu0 %7451
    %7453 = vrot.lane.b32.xlu0 %v7224, 96
    %v7454 = vpop.permute.xlu0 %7453
    %7455 = vrot.lane.b32.xlu0 %v7225, 96
    %v7456 = vpop.permute.xlu0 %7455
    %7457 = vrot.lane.b32.xlu0 %v7226, 96
    %v7458 = vpop.permute.xlu0 %7457
    %7459 = vrot.lane.b32.xlu0 %v7227, 96
    %v7460 = vpop.permute.xlu0 %7459
    %7461 = vrot.lane.b32.xlu0 %v7228, 96
    %v7462 = vpop.permute.xlu0 %7461
    %7463 = vrot.lane.b32.xlu0 %v7229, 96
    %v7464 = vpop.permute.xlu0 %7463
    %7465 = vrot.lane.b32.xlu0 %v7230, 96
    %v7466 = vpop.permute.xlu0 %7465
    %v7500 = vmul.f32 %v7335, %v7402
    %v7501 = vmul.f32 %v7336, %v7404
    %v7502 = vmul.f32 %v7337, %v7406
    %v7503 = vmul.f32 %v7338, %v7408
    %v7504 = vmul.f32 %v7339, %v7410
    %v7505 = vmul.f32 %v7340, %v7412
    %v7506 = vmul.f32 %v7341, %v7414
    %v7507 = vmul.f32 %v7342, %v7416
    %v7508 = vmul.f32 %v7343, %v7418
    %v7509 = vmul.f32 %v7344, %v7420
    %v7510 = vmul.f32 %v7345, %v7422
    %v7511 = vmul.f32 %v7346, %v7424
    %v7512 = vmul.f32 %v7347, %v7426
    %v7513 = vmul.f32 %v7348, %v7428
    %v7514 = vmul.f32 %v7349, %v7430
    %v7515 = vmul.f32 %v7350, %v7432
    %v7516 = vmul.f32 %v7351, %v7434
    %v7517 = vmul.f32 %v7352, %v7436
    %v7518 = vmul.f32 %v7353, %v7438
    %v7519 = vmul.f32 %v7354, %v7440
    %v7520 = vmul.f32 %v7355, %v7442
    %v7521 = vmul.f32 %v7356, %v7444
    %v7522 = vmul.f32 %v7357, %v7446
    %v7523 = vmul.f32 %v7358, %v7448
    %v7524 = vmul.f32 %v7359, %v7450
    %v7525 = vmul.f32 %v7360, %v7452
    %v7526 = vmul.f32 %v7361, %v7454
    %v7527 = vmul.f32 %v7362, %v7456
    %v7528 = vmul.f32 %v7363, %v7458
    %v7529 = vmul.f32 %v7364, %v7460
    %v7530 = vmul.f32 %v7365, %v7462
    %v7531 = vmul.f32 %v7366, %v7464
    %v7532 = vmul.f32 %v7367, %v7466
    %v7533 = vadd.f32 %v7302, %v7500
    %v7534 = vadd.f32 %v7303, %v7501
    %v7535 = vadd.f32 %v7304, %v7502
    %v7536 = vadd.f32 %v7305, %v7503
    %v7537 = vadd.f32 %v7306, %v7504
    %v7538 = vadd.f32 %v7307, %v7505
    %v7539 = vadd.f32 %v7308, %v7506
    %v7540 = vadd.f32 %v7309, %v7507
    %v7541 = vadd.f32 %v7310, %v7508
    %v7542 = vadd.f32 %v7311, %v7509
    %v7543 = vadd.f32 %v7312, %v7510
    %v7544 = vadd.f32 %v7313, %v7511
    %v7545 = vadd.f32 %v7314, %v7512
    %v7546 = vadd.f32 %v7315, %v7513
    %v7547 = vadd.f32 %v7316, %v7514
    %v7548 = vadd.f32 %v7317, %v7515
    %v7549 = vadd.f32 %v7318, %v7516
    %v7550 = vadd.f32 %v7319, %v7517
    %v7551 = vadd.f32 %v7320, %v7518
    %v7552 = vadd.f32 %v7321, %v7519
    %v7553 = vadd.f32 %v7322, %v7520
    %v7554 = vadd.f32 %v7323, %v7521
    %v7555 = vadd.f32 %v7324, %v7522
    %v7556 = vadd.f32 %v7325, %v7523
    %v7557 = vadd.f32 %v7326, %v7524
    %v7558 = vadd.f32 %v7327, %v7525
    %v7559 = vadd.f32 %v7328, %v7526
    %v7560 = vadd.f32 %v7329, %v7527
    %v7561 = vadd.f32 %v7330, %v7528
    %v7562 = vadd.f32 %v7331, %v7529
    %v7563 = vadd.f32 %v7332, %v7530
    %v7564 = vadd.f32 %v7333, %v7531
    %v7565 = vadd.f32 %v7334, %v7532
    %v7599 = vrot.slane %v7534, 7
    %vm7600 = vcmask 1041409
    %v7601 = vsel %vm7600, %v7599, %v7533
    %v7602 = vrot.slane %v7535, 6
    %vm7603 = vcmask 1042434
    %v7604 = vsel %vm7603, %v7602, %v7601
    %v7605 = vrot.slane %v7536, 5
    %vm7606 = vcmask 1043459
    %v7607 = vsel %vm7606, %v7605, %v7604
    %v7608 = vrot.slane %v7537, 4
    %vm7609 = vcmask 1044484
    %v7610 = vsel %vm7609, %v7608, %v7607
    %v7611 = vrot.slane %v7538, 3
    %vm7612 = vcmask 1045509
    %v7613 = vsel %vm7612, %v7611, %v7610
    %v7614 = vrot.slane %v7539, 2
    %vm7615 = vcmask 1046534
    %v7616 = vsel %vm7615, %v7614, %v7613
    %v7617 = vrot.slane %v7540, 1
    %vm7618 = vcmask 1047559
    %v7619 = vsel %vm7618, %v7617, %v7616
    %v7620 = vrot.slane %v7542, 7
    %v7621 = vsel %vm7600, %v7620, %v7541
    %v7622 = vrot.slane %v7543, 6
    %v7623 = vsel %vm7603, %v7622, %v7621
    %v7624 = vrot.slane %v7544, 5
    %v7625 = vsel %vm7606, %v7624, %v7623
    %v7626 = vrot.slane %v7545, 4
    %v7627 = vsel %vm7609, %v7626, %v7625
    %v7628 = vrot.slane %v7546, 3
    %v7629 = vsel %vm7612, %v7628, %v7627
    %v7630 = vrot.slane %v7547, 2
    %v7631 = vsel %vm7615, %v7630, %v7629
    %v7632 = vrot.slane %v7548, 1
    %v7633 = vsel %vm7618, %v7632, %v7631
    %v7634 = vrot.slane %v7550, 7
    %v7635 = vsel %vm7600, %v7634, %v7549
    %v7636 = vrot.slane %v7551, 6
    %v7637 = vsel %vm7603, %v7636, %v7635
    %v7638 = vrot.slane %v7552, 5
    %v7639 = vsel %vm7606, %v7638, %v7637
    %v7640 = vrot.slane %v7553, 4
    %v7641 = vsel %vm7609, %v7640, %v7639
    %v7642 = vrot.slane %v7554, 3
    %v7643 = vsel %vm7612, %v7642, %v7641
    %v7644 = vrot.slane %v7555, 2
    %v7645 = vsel %vm7615, %v7644, %v7643
    %v7646 = vrot.slane %v7556, 1
    %v7647 = vsel %vm7618, %v7646, %v7645
    %v7648 = vrot.slane %v7558, 7
    %v7649 = vsel %vm7600, %v7648, %v7557
    %v7650 = vrot.slane %v7559, 6
    %v7651 = vsel %vm7603, %v7650, %v7649
    %v7652 = vrot.slane %v7560, 5
    %v7653 = vsel %vm7606, %v7652, %v7651
    %v7654 = vrot.slane %v7561, 4
    %v7655 = vsel %vm7609, %v7654, %v7653
    %v7656 = vrot.slane %v7562, 3
    %v7657 = vsel %vm7612, %v7656, %v7655
    %v7658 = vrot.slane %v7563, 2
    %v7659 = vsel %vm7615, %v7658, %v7657
    %v7660 = vrot.slane %v7564, 1
    %v7661 = vsel %vm7618, %v7660, %v7659
    %vm7667 = vcmask 261120
    %7668 = vst.msk [vmem:[%s7] sm:$0xff] %vm7667, %v7619
    %7669 = vst.msk [vmem:[%s7 + $0x8] sm:$0xff] %vm7667, %v7633
    %7670 = vst.msk [vmem:[%s7 + $0x10] sm:$0xff] %vm7667, %v7647
    %7671 = vst.msk [vmem:[%s7 + $0x18] sm:$0xff] %vm7667, %v7661
    %vm7672 = vcmask 253952
    %7673 = vst.msk [vmem:[%s7 + $0x20] sm:$0x1] %vm7672, %v7565
    // Predicated region
    $region38: #{tmgru_forward.1} parent=1 // pred_check
      _
    $region39: #{tmgru_forward.1} parent=1 // pred_check_branch
      %7675 = sbr.rel (0) target = $region41
    $region40: #{tmgru_forward.1} parent=1 // pred_region
      _
    $region41: #{tmgru_forward.1} parent=1 // pred_fallthru
      _
    // Predicated region
    $region42: #{tmgru_forward.1} parent=1 // pred_check
      _
    $region43: #{tmgru_forward.1} parent=1 // pred_check_branch
      %7677 = sbr.rel (0) target = $region45
    $region44: #{tmgru_forward.1} parent=1 // pred_region
      _
    $region45: #{tmgru_forward.1} parent=1 // pred_fallthru
      _
    %7678 = vsyncpa [#allocation3], 1
    %7679 = vsyncpa [#allocation5], 1

</llo_original>
